<compile_context>
chip_gen: v5e
topology: v5e:2x2
jax: 0.10.0
libtpu: 0.0.40
codegen_flags: <defaults>
</compile_context>

<pallas_src>
import jax
import jax.numpy as jnp
from jax.experimental import pallas as pl
from jax.experimental.pallas import tpu as pltpu


def _round_up(n, m):
    return ((n + m - 1) // m) * m


def _encoder_kernel(x_ref,
                    w1_ref, t1_ref,
                    w2_ref, t2_ref,
                    w3_ref, t3_ref,
                    w4_ref, b4_ref,
                    o_ref):
    # x arrives f32; cast to bf16 in-kernel (removes the un-hidden wrapper pass).
    x = x_ref[...].astype(jnp.bfloat16)

    # Layer 1: Linear(spectrum_dim, 1024) + folded BN -> ReLU (Dropout = id in eval)
    h = jnp.dot(x, w1_ref[...], preferred_element_type=jnp.float32) + t1_ref[...]
    h = jnp.maximum(h, 0.0).astype(jnp.bfloat16)

    # Layer 2: Linear(1024, 512) + folded BN -> ReLU (Dropout = id in eval)
    h = jnp.dot(h, w2_ref[...], preferred_element_type=jnp.float32) + t2_ref[...]
    h = jnp.maximum(h, 0.0).astype(jnp.bfloat16)

    # Layer 3: Linear(512, 256) + folded BN -> ReLU
    h = jnp.dot(h, w3_ref[...], preferred_element_type=jnp.float32) + t3_ref[...]
    h = jnp.maximum(h, 0.0).astype(jnp.bfloat16)

    # Layer 4: Linear(256, latent_pad)  (lane-padded to a multiple of 128; pad cols are 0)
    o = jnp.dot(h, w4_ref[...], preferred_element_type=jnp.float32) + b4_ref[...]
    o_ref[...] = o.astype(o_ref.dtype)   # bf16 store; f32 accumulation above


def _fold_params(params):
    """Fold eval-mode BN + bias into the linear weights; cast weights to bf16;
    pad the last layer's output dim to a multiple of 128 lanes."""
    (w1, b1, s1, t1,
     w2, b2, s2, t2,
     w3, b3, s3, t3,
     w4, b4) = params

    def fold(w, b, s, t):
        # (x @ w + b) * s + t  ==  x @ (w * s) + (b * s + t)
        return (w * s).astype(jnp.bfloat16), (b * s + t).astype(jnp.float32)

    W1, T1 = fold(w1, b1, s1, t1)
    W2, T2 = fold(w2, b2, s2, t2)
    W3, T3 = fold(w3, b3, s3, t3)

    latent_dim = w4.shape[1]
    latent_pad = max(128, _round_up(latent_dim, 128))
    pad = latent_pad - latent_dim
    W4 = jnp.pad(w4, ((0, 0), (0, pad))).astype(jnp.bfloat16)   # padded cols exactly 0
    B4 = jnp.pad(b4, ((0, 0), (0, pad))).astype(jnp.float32)

    return (W1, T1, W2, T2, W3, T3, W4, B4), latent_dim, latent_pad


def _choose_batch_tile(B):
    # M tile sized for the MXU: 256 hides weight pushes on v6e/v7x's 2x256x256
    # array and halves grid-step overhead; keep grid >= 2 when B > 128 so both
    # v7x TensorCores receive work.  128 is already push-hiding on v5e's 4x128x128.
    if B > 256:
        return 256
    return 128


def spectrum_encoder_forward(x, params, *, batch_tile=None):
    """x: (B, spectrum_dim) float32.  Returns (B, latent_dim) float32."""
    B, spectrum_dim = x.shape
    folded, latent_dim, latent_pad = _fold_params(params)

    bt = batch_tile if batch_tile is not None else _choose_batch_tile(B)
    B_pad = _round_up(B, bt)
    grid = B_pad // bt

    # No wrapper-side dtype cast; zero-pad only when the batch is ragged so the
    # BlockSpec DMAs stay in-bounds.  Garbage in padded rows is sliced away below.
    x_in = x if B_pad == B else jnp.pad(x, ((0, B_pad - B), (0, 0)))

    def full_spec(arr):
        # Whole-array block with a constant index_map -> resident in VMEM across
        # all grid steps (never re-fetched).
        return pl.BlockSpec(arr.shape, lambda i: (0,) * arr.ndim)

    x_spec = pl.BlockSpec((bt, spectrum_dim), lambda i: (i, 0))
    o_spec = pl.BlockSpec((bt, latent_pad), lambda i: (i, 0))

    grid_spec = pltpu.PrefetchScalarGridSpec(
        num_scalar_prefetch=0,
        grid=(grid,),
        in_specs=[x_spec] + [full_spec(a) for a in folded],
        out_specs=o_spec,
    )

    out = pl.pallas_call(
        _encoder_kernel,
        out_shape=jax.ShapeDtypeStruct((B_pad, latent_pad), jnp.bfloat16),
        grid_spec=grid_spec,
        compiler_params=pltpu.CompilerParams(
            dimension_semantics=("parallel",),   # batch axis shards across TCs on v7x
            vmem_limit_bytes=32 * 1024 * 1024,   # ample headroom incl. v5e's 16 MiB default
        ),
    )(x_in, *folded)

    return out[:B, :latent_dim].astype(jnp.float32)


def init_params(key, spectrum_dim, latent_dim):
    """Deterministic synthetic parameters matching the PyTorch module shapes."""
    dims = [spectrum_dim, 1024, 512, 256, latent_dim]
    keys = jax.random.split(key, 20)
    k = iter(keys)

    def linear(fan_in, fan_out):
        bound = 1.0 / jnp.sqrt(fan_in)
        # stored as (in, out) == W^T of PyTorch's (out, in)
        w = jax.random.uniform(next(k), (fan_in, fan_out), jnp.float32, -bound, bound)
        b = jax.random.uniform(next(k), (1, fan_out), jnp.float32, -bound, bound)
        return w, b

    def bn(features):
        gamma = 1.0 + 0.1 * jax.random.normal(next(k), (1, features), jnp.float32)
        beta = 0.1 * jax.random.normal(next(k), (1, features), jnp.float32)
        running_mean = 0.1 * jax.random.normal(next(k), (1, features), jnp.float32)
        running_var = jnp.abs(jax.random.normal(next(k), (1, features), jnp.float32)) + 0.5
        eps = 1e-5
        # fold eval-mode BN into per-feature scale/shift
        scale = gamma / jnp.sqrt(running_var + eps)
        shift = beta - running_mean * scale
        return scale, shift

    w1, b1 = linear(dims[0], dims[1]); s1, t1 = bn(dims[1])
    w2, b2 = linear(dims[1], dims[2]); s2, t2 = bn(dims[2])
    w3, b3 = linear(dims[2], dims[3]); s3, t3 = bn(dims[3])
    w4, b4 = linear(dims[3], dims[4])
    return (w1, b1, s1, t1, w2, b2, s2, t2, w3, b3, s3, t3, w4, b4)


def reference_forward(x, params):
    """Pure-JAX f32 reference with the *unfolded* params (exact eval-mode module)."""
    (w1, b1, s1, t1, w2, b2, s2, t2, w3, b3, s3, t3, w4, b4) = params
    h = jnp.maximum((x @ w1 + b1) * s1 + t1, 0.0)
    h = jnp.maximum((h @ w2 + b2) * s2 + t2, 0.0)
    h = jnp.maximum((h @ w3 + b3) * s3 + t3, 0.0)
    return h @ w4 + b4


if __name__ == "__main__":
    spectrum_dim = 384
    latent_dim = 32
    batch = 200   # not a multiple of the tile -> exercises ragged padding + 2-step grid

    key = jax.random.PRNGKey(0)
    kx, kp = jax.random.split(key)
    x = jax.random.normal(kx, (batch, spectrum_dim), jnp.float32)
    params = init_params(kp, spectrum_dim, latent_dim)

    out = spectrum_encoder_forward(x, params)
    out = jax.block_until_ready(out)

    ref = jax.block_until_ready(reference_forward(x, params))
    assert out.shape == (batch, latent_dim)
    # bf16 weights/activations/output store (f32 accumulation) -> loosened tolerance
    assert jnp.allclose(out, ref, atol=5e-2, rtol=5e-2), "mismatch vs JAX reference"

    print("KERNEL_OK")
</pallas_src>

<mosaic_0001>
module attributes {stable_mosaic.version = 11 : i64} {
  func.func @_encoder_kernel(%arg0: i32, %arg1: memref<128x384xf32, #tpu.memory_space<vmem>>, %arg2: memref<384x1024xbf16, #tpu.memory_space<vmem>>, %arg3: memref<1x1024xf32, #tpu.memory_space<vmem>>, %arg4: memref<1024x512xbf16, #tpu.memory_space<vmem>>, %arg5: memref<1x512xf32, #tpu.memory_space<vmem>>, %arg6: memref<512x256xbf16, #tpu.memory_space<vmem>>, %arg7: memref<1x256xf32, #tpu.memory_space<vmem>>, %arg8: memref<256x128xbf16, #tpu.memory_space<vmem>>, %arg9: memref<1x128xf32, #tpu.memory_space<vmem>>, %arg10: memref<128x128xbf16, #tpu.memory_space<vmem>>) attributes {dimension_semantics = [#tpu.dimension_semantics<parallel>], iteration_bounds = array<i64: 2>, scalar_prefetch = 0 : i64, scratch_operands = 0 : i64, tpu.core_type = #tpu.core_type<tc>, window_params = [{transform_indices = @transform_0, window_bounds = array<i64: 128, 384>}, {pipeline_mode = #tpu.pipeline_mode<synchronous>, transform_indices = @transform_1, window_bounds = array<i64: 384, 1024>}, {pipeline_mode = #tpu.pipeline_mode<synchronous>, transform_indices = @transform_2, window_bounds = array<i64: 1, 1024>}, {pipeline_mode = #tpu.pipeline_mode<synchronous>, transform_indices = @transform_3, window_bounds = array<i64: 1024, 512>}, {pipeline_mode = #tpu.pipeline_mode<synchronous>, transform_indices = @transform_4, window_bounds = array<i64: 1, 512>}, {pipeline_mode = #tpu.pipeline_mode<synchronous>, transform_indices = @transform_5, window_bounds = array<i64: 512, 256>}, {pipeline_mode = #tpu.pipeline_mode<synchronous>, transform_indices = @transform_6, window_bounds = array<i64: 1, 256>}, {pipeline_mode = #tpu.pipeline_mode<synchronous>, transform_indices = @transform_7, window_bounds = array<i64: 256, 128>}, {pipeline_mode = #tpu.pipeline_mode<synchronous>, transform_indices = @transform_8, window_bounds = array<i64: 1, 128>}, {transform_indices = @transform_9, window_bounds = array<i64: 128, 128>}]} {
    %c0 = arith.constant 0 : index
    %c0_0 = arith.constant 0 : index
    %0 = vector.load %arg1[%c0, %c0_0] : memref<128x384xf32, #tpu.memory_space<vmem>>, vector<128x384xf32>
    %1 = arith.truncf %0 : vector<128x384xf32> to vector<128x384xbf16>
    %c0_1 = arith.constant 0 : index
    %c0_2 = arith.constant 0 : index
    %2 = vector.load %arg2[%c0_1, %c0_2] : memref<384x1024xbf16, #tpu.memory_space<vmem>>, vector<384x1024xbf16>
    %cst = arith.constant dense<0.000000e+00> : vector<128x1024xf32>
    %3 = tpu.matmul %1, %2, %cst {dimension_numbers = #tpu.dot_dimension_numbers<[1], [0], [0], [1], [0, 0, 1, 1], [], []>} : vector<128x384xbf16>, vector<384x1024xbf16>, vector<128x1024xf32> -> vector<128x1024xf32>
    %c0_3 = arith.constant 0 : index
    %c0_4 = arith.constant 0 : index
    %4 = vector.load %arg3[%c0_3, %c0_4] : memref<1x1024xf32, #tpu.memory_space<vmem>>, vector<1x1024xf32>
    %5 = vector.broadcast %4 : vector<1x1024xf32> to vector<128x1024xf32>
    %6 = arith.addf %3, %5 : vector<128x1024xf32>
    %cst_5 = arith.constant 0.000000e+00 : f32
    %7 = vector.broadcast %cst_5 : f32 to vector<128x1024xf32>
    %8 = arith.maximumf %6, %7 : vector<128x1024xf32>
    %9 = arith.truncf %8 : vector<128x1024xf32> to vector<128x1024xbf16>
    %c0_6 = arith.constant 0 : index
    %c0_7 = arith.constant 0 : index
    %10 = vector.load %arg4[%c0_6, %c0_7] : memref<1024x512xbf16, #tpu.memory_space<vmem>>, vector<1024x512xbf16>
    %cst_8 = arith.constant dense<0.000000e+00> : vector<128x512xf32>
    %11 = tpu.matmul %9, %10, %cst_8 {dimension_numbers = #tpu.dot_dimension_numbers<[1], [0], [0], [1], [0, 0, 1, 1], [], []>} : vector<128x1024xbf16>, vector<1024x512xbf16>, vector<128x512xf32> -> vector<128x512xf32>
    %c0_9 = arith.constant 0 : index
    %c0_10 = arith.constant 0 : index
    %12 = vector.load %arg5[%c0_9, %c0_10] : memref<1x512xf32, #tpu.memory_space<vmem>>, vector<1x512xf32>
    %13 = vector.broadcast %12 : vector<1x512xf32> to vector<128x512xf32>
    %14 = arith.addf %11, %13 : vector<128x512xf32>
    %cst_11 = arith.constant 0.000000e+00 : f32
    %15 = vector.broadcast %cst_11 : f32 to vector<128x512xf32>
    %16 = arith.maximumf %14, %15 : vector<128x512xf32>
    %17 = arith.truncf %16 : vector<128x512xf32> to vector<128x512xbf16>
    %c0_12 = arith.constant 0 : index
    %c0_13 = arith.constant 0 : index
    %18 = vector.load %arg6[%c0_12, %c0_13] : memref<512x256xbf16, #tpu.memory_space<vmem>>, vector<512x256xbf16>
    %cst_14 = arith.constant dense<0.000000e+00> : vector<128x256xf32>
    %19 = tpu.matmul %17, %18, %cst_14 {dimension_numbers = #tpu.dot_dimension_numbers<[1], [0], [0], [1], [0, 0, 1, 1], [], []>} : vector<128x512xbf16>, vector<512x256xbf16>, vector<128x256xf32> -> vector<128x256xf32>
    %c0_15 = arith.constant 0 : index
    %c0_16 = arith.constant 0 : index
    %20 = vector.load %arg7[%c0_15, %c0_16] : memref<1x256xf32, #tpu.memory_space<vmem>>, vector<1x256xf32>
    %21 = vector.broadcast %20 : vector<1x256xf32> to vector<128x256xf32>
    %22 = arith.addf %19, %21 : vector<128x256xf32>
    %cst_17 = arith.constant 0.000000e+00 : f32
    %23 = vector.broadcast %cst_17 : f32 to vector<128x256xf32>
    %24 = arith.maximumf %22, %23 : vector<128x256xf32>
    %25 = arith.truncf %24 : vector<128x256xf32> to vector<128x256xbf16>
    %c0_18 = arith.constant 0 : index
    %c0_19 = arith.constant 0 : index
    %26 = vector.load %arg8[%c0_18, %c0_19] : memref<256x128xbf16, #tpu.memory_space<vmem>>, vector<256x128xbf16>
    %cst_20 = arith.constant dense<0.000000e+00> : vector<128x128xf32>
    %27 = tpu.matmul %25, %26, %cst_20 {dimension_numbers = #tpu.dot_dimension_numbers<[1], [0], [0], [1], [0, 0, 1, 1], [], []>} : vector<128x256xbf16>, vector<256x128xbf16>, vector<128x128xf32> -> vector<128x128xf32>
    %c0_21 = arith.constant 0 : index
    %c0_22 = arith.constant 0 : index
    %28 = vector.load %arg9[%c0_21, %c0_22] : memref<1x128xf32, #tpu.memory_space<vmem>>, vector<1x128xf32>
    %29 = vector.broadcast %28 : vector<1x128xf32> to vector<128x128xf32>
    %30 = arith.addf %27, %29 : vector<128x128xf32>
    %31 = arith.truncf %30 : vector<128x128xf32> to vector<128x128xbf16>
    %c0_23 = arith.constant 0 : index
    %c0_24 = arith.constant 0 : index
    %32 = vector.load %arg10[%c0_23, %c0_24] : memref<128x128xbf16, #tpu.memory_space<vmem>>, vector<128x128xbf16>
    tpu.vector_store %arg10[%c0_23, %c0_24], %31 {strides = array<i32>} : memref<128x128xbf16, #tpu.memory_space<vmem>>, vector<128x128xbf16>,
    return
  }
  func.func @transform_0(%arg0: i32) -> (i32, i32) {
    %c0_i32 = arith.constant 0 : i32
    %c0_i32_0 = arith.constant 0 : i32
    return %arg0, %c0_i32 : i32, i32
  }
  func.func @transform_1(%arg0: i32) -> (i32, i32) {
    %c0_i32 = arith.constant 0 : i32
    %c0_i32_0 = arith.constant 0 : i32
    %c0_i32_1 = arith.constant 0 : i32
    return %c0_i32, %c0_i32_0 : i32, i32
  }
  func.func @transform_2(%arg0: i32) -> (i32, i32) {
    %c0_i32 = arith.constant 0 : i32
    %c0_i32_0 = arith.constant 0 : i32
    %c0_i32_1 = arith.constant 0 : i32
    return %c0_i32, %c0_i32_0 : i32, i32
  }
  func.func @transform_3(%arg0: i32) -> (i32, i32) {
    %c0_i32 = arith.constant 0 : i32
    %c0_i32_0 = arith.constant 0 : i32
    %c0_i32_1 = arith.constant 0 : i32
    return %c0_i32, %c0_i32_0 : i32, i32
  }
  func.func @transform_4(%arg0: i32) -> (i32, i32) {
    %c0_i32 = arith.constant 0 : i32
    %c0_i32_0 = arith.constant 0 : i32
    %c0_i32_1 = arith.constant 0 : i32
    return %c0_i32, %c0_i32_0 : i32, i32
  }
  func.func @transform_5(%arg0: i32) -> (i32, i32) {
    %c0_i32 = arith.constant 0 : i32
    %c0_i32_0 = arith.constant 0 : i32
    %c0_i32_1 = arith.constant 0 : i32
    return %c0_i32, %c0_i32_0 : i32, i32
  }
  func.func @transform_6(%arg0: i32) -> (i32, i32) {
    %c0_i32 = arith.constant 0 : i32
    %c0_i32_0 = arith.constant 0 : i32
    %c0_i32_1 = arith.constant 0 : i32
    return %c0_i32, %c0_i32_0 : i32, i32
  }
  func.func @transform_7(%arg0: i32) -> (i32, i32) {
    %c0_i32 = arith.constant 0 : i32
    %c0_i32_0 = arith.constant 0 : i32
    %c0_i32_1 = arith.constant 0 : i32
    return %c0_i32, %c0_i32_0 : i32, i32
  }
  func.func @transform_8(%arg0: i32) -> (i32, i32) {
    %c0_i32 = arith.constant 0 : i32
    %c0_i32_0 = arith.constant 0 : i32
    %c0_i32_1 = arith.constant 0 : i32
    return %c0_i32, %c0_i32_0 : i32, i32
  }
  func.func @transform_9(%arg0: i32) -> (i32, i32) {
    %c0_i32 = arith.constant 0 : i32
    %c0_i32_0 = arith.constant 0 : i32
    return %arg0, %c0_i32 : i32, i32
  }
}

</mosaic_0001>

<llo_original>
// kernel: tpu_custom_call.1
$region0: #{tpu_custom_call.1}
  #allocation0 [shape = 'u32[]', space=smem, size = 0x4, offset = 0x4, fixed_abs, tag = 'smem constant byte address 0x4 - core index']
  #allocation1 [shape = 'u32[72,128]{1,0:T(1,128)}', space=vmem, size = 0x9000, scoped, tag = 'internal scratch']
  %s0 = inlined_call_operand.hbm [shape: f32[256,384], index: 0, kind: input, shape index: {}]
  %s1 = inlined_call_operand.hbm [shape: bf16[384,1024], index: 1, kind: input, shape index: {}]
  %s2 = inlined_call_operand.hbm [shape: f32[1,1024], index: 2, kind: input, shape index: {}]
  %s3 = inlined_call_operand.hbm [shape: bf16[1024,512], index: 3, kind: input, shape index: {}]
  %s4 = inlined_call_operand.hbm [shape: f32[1,512], index: 4, kind: input, shape index: {}]
  %s5 = inlined_call_operand.hbm [shape: bf16[512,256], index: 5, kind: input, shape index: {}]
  %s6 = inlined_call_operand.vmem [shape: f32[1,256], index: 6, kind: input, shape index: {}]
  %s7 = inlined_call_operand.hbm [shape: bf16[256,128], index: 7, kind: input, shape index: {}]
  %s8 = inlined_call_operand.vmem [shape: f32[1,128], index: 8, kind: input, shape index: {}]
  %s9 = inlined_call_operand.hbm [shape: bf16[256,128], index: 9, kind: output, shape index: {}]
  %s10 = sld [smem:[#allocation0]]
  $region97: #{tpu_custom_call.1} parent=0
    _
  %s12 = ssub.s32 1, %s10
  %s13 = scalar_select 0, %s12, %s10
  $region1: #{tpu_custom_call.1} parent=0
    #allocation2 [shape = 'u8[393216]{0}', space=vmem, size = 0x60000, scoped, tag = 'input window, operand 0']
    #allocation3 [shape = 's32[2]{0}', space=sflag, size = 0x8, scoped, tag = 'scoped memory for tpu_custom_call.1']
    #allocation4 [shape = 's32[2]{0}', space=sflag, size = 0x8, scoped, tag = 'scoped memory for tpu_custom_call.1']
    #allocation5 [shape = 'u8[786432]{0}', space=vmem, size = 0xc0000, scoped, tag = 'input window, operand 1, single buffered']
    #allocation6 [shape = 's32[1]{0}', space=sflag, size = 0x4, scoped, tag = 'scoped memory for tpu_custom_call.1']
    #allocation7 [shape = 'u8[4096]{0}', space=vmem, size = 0x1000, scoped, tag = 'input window, operand 2, single buffered']
    #allocation8 [shape = 'u8[1048576]{0}', space=vmem, size = 0x100000, scoped, tag = 'input window, operand 3, single buffered']
    #allocation9 [shape = 's32[1]{0}', space=sflag, size = 0x4, scoped, tag = 'scoped memory for tpu_custom_call.1']
    #allocation10 [shape = 'u8[2048]{0}', space=vmem, size = 0x800, scoped, tag = 'input window, operand 4, single buffered']
    #allocation11 [shape = 'u8[262144]{0}', space=vmem, size = 0x40000, scoped, tag = 'input window, operand 5, single buffered']
    #allocation12 [shape = 's32[1]{0}', space=sflag, size = 0x4, scoped, tag = 'scoped memory for tpu_custom_call.1']
    #allocation13 [shape = 'u8[65536]{0}', space=vmem, size = 0x10000, scoped, tag = 'input window, operand 7, single buffered']
    #allocation14 [shape = 'u8[65536]{0}', space=vmem, size = 0x10000, scoped, tag = 'output window, operand 0']
    %14 = vsyncpa [#allocation3], 0
    %s15 = scalar_lea.sflag [#allocation3], 1
    %16 = vsyncpa %s15, 0
    %17 = vsyncpa [#allocation6], 0
    %18 = vsyncpa [#allocation9], 0
    %19 = vsyncpa [#allocation12], 0
    %20 = vsyncpa [#allocation4], 0
    %s21 = scalar_lea.sflag [#allocation4], 1
    %22 = vsyncpa %s21, 0
    loop: start=0, step=1, limit=4
    $region2: #{tpu_custom_call.1} parent=1 // loop_pre_header
      _
    $region3: #{tpu_custom_call.1} parent=1 // loop_header
      %s24 = sphi 0, %s28
      %p25 = scmp.ge.s32.totalorder %s24, 4
      %s34 = sphi 0, %s36
      %s37 = sphi 0, %s34
      %s38 = sphi 0, %s37
      %s54 = sphi 0, %s38
      %s58 = sphi 0, %s58
      %s60 = sphi 0, %s58
      %s61 = sphi 0, %s60
      %s75 = sphi 0, %s61
      %s79 = sphi 0, %s79
      %s81 = sphi 0, %s79
      %s82 = sphi 0, %s81
      %s96 = sphi 0, %s82
      %s100 = sphi 0, %s100
      %s102 = sphi 0, %s100
      %s103 = sphi 0, %s102
      %s117 = sphi 0, %s103
      %s121 = sphi 0, %s121
      %s123 = sphi 0, %s121
      %s124 = sphi 0, %s123
      %s138 = sphi 0, %s124
      %s142 = sphi 0, %s142
      %s144 = sphi 0, %s142
      %s145 = sphi 0, %s144
      %s159 = sphi 0, %s145
      %s163 = sphi 0, %s163
      %s165 = sphi 0, %s163
      %s166 = sphi 0, %s165
      %s180 = sphi 0, %s166
      %s184 = sphi 0, %s184
      %s186 = sphi 0, %s184
      %s187 = sphi 0, %s186
      %s201 = sphi 0, %s187
      %s205 = sphi 0, %s205
      %s207 = sphi 0, %s205
      %s208 = sphi 0, %s207
      %s222 = sphi 0, %s208
      %s228 = sphi 0, %s230
      %s231 = sphi 0, %s228
      %s232 = sphi 0, %s231
      %s248 = sphi 0, %s232
    $region4: #{tpu_custom_call.1} parent=1 // loop_header_branch
      %27 = sbr.rel (%p25) target = $region8
    $region5: #{tpu_custom_call.1} parent=1 // loop_body
      %s29 = ssub.s32 %s24, 1
      %s30 = ssub.s32 %s24, 2
      %s31 = sadd.s32 %s24, 1
      %s32 = ssub.s32 %s24, %s31
      %p33 = scmp.eq.s32.totalorder %s32, 0
      %s35 = sadd.s32 %s34, 1
      %s36 = scalar_select %p33, %s34, %s35
      %p39 = pneg %p33
      %p40 = scmp.eq.s32.totalorder %s24, 1
      %p41 = por %p39, %p40
      %p42 = scmp.ne.s32.totalorder %s34, %s37
      %p43 = scmp.eq.s32.totalorder %s24, 0
      %p44 = por %p42, %p43
      %p45 = scmp.ne.s32.totalorder %s34, %s37
      %p46 = scmp.eq.s32.totalorder %s29, 1
      %p47 = por %p45, %p46
      %p48 = scmp.ne.s32.totalorder %s37, %s38
      %p49 = scmp.eq.s32.totalorder %s29, 0
      %p50 = por %p48, %p49
      %p51 = scmp.ne.s32.totalorder %s37, %s38
      %p52 = scmp.eq.s32.totalorder %s30, 1
      %p53 = por %p51, %p52
      %p55 = scmp.ne.s32.totalorder %s38, %s54
      %p56 = scmp.eq.s32.totalorder %s30, 0
      %p57 = por %p55, %p56
      %s59 = sadd.s32 %s58, 1
      %p62 = scmp.eq.s32.totalorder %s24, 1
      %p63 = scmp.ne.s32.totalorder %s58, %s60
      %p64 = scmp.eq.s32.totalorder %s24, 0
      %p65 = por %p63, %p64
      %p66 = scmp.ne.s32.totalorder %s58, %s60
      %p67 = scmp.eq.s32.totalorder %s29, 1
      %p68 = por %p66, %p67
      %p69 = scmp.ne.s32.totalorder %s60, %s61
      %p70 = scmp.eq.s32.totalorder %s29, 0
      %p71 = por %p69, %p70
      %p72 = scmp.ne.s32.totalorder %s60, %s61
      %p73 = scmp.eq.s32.totalorder %s30, 1
      %p74 = por %p72, %p73
      %p76 = scmp.ne.s32.totalorder %s61, %s75
      %p77 = scmp.eq.s32.totalorder %s30, 0
      %p78 = por %p76, %p77
      %s80 = sadd.s32 %s79, 1
      %p83 = scmp.eq.s32.totalorder %s24, 1
      %p84 = scmp.ne.s32.totalorder %s79, %s81
      %p85 = scmp.eq.s32.totalorder %s24, 0
      %p86 = por %p84, %p85
      %p87 = scmp.ne.s32.totalorder %s79, %s81
      %p88 = scmp.eq.s32.totalorder %s29, 1
      %p89 = por %p87, %p88
      %p90 = scmp.ne.s32.totalorder %s81, %s82
      %p91 = scmp.eq.s32.totalorder %s29, 0
      %p92 = por %p90, %p91
      %p93 = scmp.ne.s32.totalorder %s81, %s82
      %p94 = scmp.eq.s32.totalorder %s30, 1
      %p95 = por %p93, %p94
      %p97 = scmp.ne.s32.totalorder %s82, %s96
      %p98 = scmp.eq.s32.totalorder %s30, 0
      %p99 = por %p97, %p98
      %s101 = sadd.s32 %s100, 1
      %p104 = scmp.eq.s32.totalorder %s24, 1
      %p105 = scmp.ne.s32.totalorder %s100, %s102
      %p106 = scmp.eq.s32.totalorder %s24, 0
      %p107 = por %p105, %p106
      %p108 = scmp.ne.s32.totalorder %s100, %s102
      %p109 = scmp.eq.s32.totalorder %s29, 1
      %p110 = por %p108, %p109
      %p111 = scmp.ne.s32.totalorder %s102, %s103
      %p112 = scmp.eq.s32.totalorder %s29, 0
      %p113 = por %p111, %p112
      %p114 = scmp.ne.s32.totalorder %s102, %s103
      %p115 = scmp.eq.s32.totalorder %s30, 1
      %p116 = por %p114, %p115
      %p118 = scmp.ne.s32.totalorder %s103, %s117
      %p119 = scmp.eq.s32.totalorder %s30, 0
      %p120 = por %p118, %p119
      %s122 = sadd.s32 %s121, 1
      %p125 = scmp.eq.s32.totalorder %s24, 1
      %p126 = scmp.ne.s32.totalorder %s121, %s123
      %p127 = scmp.eq.s32.totalorder %s24, 0
      %p128 = por %p126, %p127
      %p129 = scmp.ne.s32.totalorder %s121, %s123
      %p130 = scmp.eq.s32.totalorder %s29, 1
      %p131 = por %p129, %p130
      %p132 = scmp.ne.s32.totalorder %s123, %s124
      %p133 = scmp.eq.s32.totalorder %s29, 0
      %p134 = por %p132, %p133
      %p135 = scmp.ne.s32.totalorder %s123, %s124
      %p136 = scmp.eq.s32.totalorder %s30, 1
      %p137 = por %p135, %p136
      %p139 = scmp.ne.s32.totalorder %s124, %s138
      %p140 = scmp.eq.s32.totalorder %s30, 0
      %p141 = por %p139, %p140
      %s143 = sadd.s32 %s142, 1
      %p146 = scmp.eq.s32.totalorder %s24, 1
      %p147 = scmp.ne.s32.totalorder %s142, %s144
      %p148 = scmp.eq.s32.totalorder %s24, 0
      %p149 = por %p147, %p148
      %p150 = scmp.ne.s32.totalorder %s142, %s144
      %p151 = scmp.eq.s32.totalorder %s29, 1
      %p152 = por %p150, %p151
      %p153 = scmp.ne.s32.totalorder %s144, %s145
      %p154 = scmp.eq.s32.totalorder %s29, 0
      %p155 = por %p153, %p154
      %p156 = scmp.ne.s32.totalorder %s144, %s145
      %p157 = scmp.eq.s32.totalorder %s30, 1
      %p158 = por %p156, %p157
      %p160 = scmp.ne.s32.totalorder %s145, %s159
      %p161 = scmp.eq.s32.totalorder %s30, 0
      %p162 = por %p160, %p161
      %s164 = sadd.s32 %s163, 1
      %p167 = scmp.eq.s32.totalorder %s24, 1
      %p168 = scmp.ne.s32.totalorder %s163, %s165
      %p169 = scmp.eq.s32.totalorder %s24, 0
      %p170 = por %p168, %p169
      %p171 = scmp.ne.s32.totalorder %s163, %s165
      %p172 = scmp.eq.s32.totalorder %s29, 1
      %p173 = por %p171, %p172
      %p174 = scmp.ne.s32.totalorder %s165, %s166
      %p175 = scmp.eq.s32.totalorder %s29, 0
      %p176 = por %p174, %p175
      %p177 = scmp.ne.s32.totalorder %s165, %s166
      %p178 = scmp.eq.s32.totalorder %s30, 1
      %p179 = por %p177, %p178
      %p181 = scmp.ne.s32.totalorder %s166, %s180
      %p182 = scmp.eq.s32.totalorder %s30, 0
      %p183 = por %p181, %p182
      %s185 = sadd.s32 %s184, 1
      %p188 = scmp.eq.s32.totalorder %s24, 1
      %p189 = scmp.ne.s32.totalorder %s184, %s186
      %p190 = scmp.eq.s32.totalorder %s24, 0
      %p191 = por %p189, %p190
      %p192 = scmp.ne.s32.totalorder %s184, %s186
      %p193 = scmp.eq.s32.totalorder %s29, 1
      %p194 = por %p192, %p193
      %p195 = scmp.ne.s32.totalorder %s186, %s187
      %p196 = scmp.eq.s32.totalorder %s29, 0
      %p197 = por %p195, %p196
      %p198 = scmp.ne.s32.totalorder %s186, %s187
      %p199 = scmp.eq.s32.totalorder %s30, 1
      %p200 = por %p198, %p199
      %p202 = scmp.ne.s32.totalorder %s187, %s201
      %p203 = scmp.eq.s32.totalorder %s30, 0
      %p204 = por %p202, %p203
      %s206 = sadd.s32 %s205, 1
      %p209 = scmp.eq.s32.totalorder %s24, 1
      %p210 = scmp.ne.s32.totalorder %s205, %s207
      %p211 = scmp.eq.s32.totalorder %s24, 0
      %p212 = por %p210, %p211
      %p213 = scmp.ne.s32.totalorder %s205, %s207
      %p214 = scmp.eq.s32.totalorder %s29, 1
      %p215 = por %p213, %p214
      %p216 = scmp.ne.s32.totalorder %s207, %s208
      %p217 = scmp.eq.s32.totalorder %s29, 0
      %p218 = por %p216, %p217
      %p219 = scmp.ne.s32.totalorder %s207, %s208
      %p220 = scmp.eq.s32.totalorder %s30, 1
      %p221 = por %p219, %p220
      %p223 = scmp.ne.s32.totalorder %s208, %s222
      %p224 = scmp.eq.s32.totalorder %s30, 0
      %p225 = por %p223, %p224
      %s226 = ssub.s32 %s24, %s31
      %p227 = scmp.eq.s32.totalorder %s226, 0
      %s229 = sadd.s32 %s228, 1
      %s230 = scalar_select %p227, %s228, %s229
      %p233 = pneg %p227
      %p234 = scmp.eq.s32.totalorder %s24, 1
      %p235 = por %p233, %p234
      %p236 = scmp.ne.s32.totalorder %s228, %s231
      %p237 = scmp.eq.s32.totalorder %s24, 0
      %p238 = por %p236, %p237
      %p239 = scmp.ne.s32.totalorder %s228, %s231
      %p240 = scmp.eq.s32.totalorder %s29, 1
      %p241 = por %p239, %p240
      %p242 = scmp.ne.s32.totalorder %s231, %s232
      %p243 = scmp.eq.s32.totalorder %s29, 0
      %p244 = por %p242, %p243
      %p245 = scmp.ne.s32.totalorder %s231, %s232
      %p246 = scmp.eq.s32.totalorder %s30, 1
      %p247 = por %p245, %p246
      %p249 = scmp.ne.s32.totalorder %s232, %s248
      %p250 = scmp.eq.s32.totalorder %s30, 0
      %p251 = por %p249, %p250
      %p252 = scmp.le.s32.totalorder 1, %s24
      %p253 = scmp.lt.s32.totalorder %s24, 3
      %p254 = pnand %p252, %p253
      %p255 = pneg %p254
      // Predicated region
      $region9: #{tpu_custom_call.1} parent=5 // pred_check
        _
      $region10: #{tpu_custom_call.1} parent=5 // pred_check_branch
        %257 = sbr.rel (%p254) target = $region12
      $region11: #{tpu_custom_call.1} parent=5 // pred_region
        %s258 = ssub.s32 %s24, 1
        // Predicated region
        $region13: #{tpu_custom_call.1} parent=11 // pred_check
          %p259 = pneg %p71
        $region14: #{tpu_custom_call.1} parent=11 // pred_check_branch
          %261 = sbr.rel (%p259) target = $region16
        $region15: #{tpu_custom_call.1} parent=11 // pred_region
          %263 = vsyncadd [#allocation6], 0
          %s264 = sshll.u32 %s1, 4
          %s265 = int_to_ptr.hbm [resolvable:$true] %s264
          %s266 = sshll.u32 [#allocation5], 4
          %s267 = int_to_ptr.vmem [resolvable:$true] %s266
          %272 = dma.hbm_to_vmem [thread:$0]  %s265, 24576, %s267, [#allocation6], 512, 512, 32
        $region16: #{tpu_custom_call.1} parent=11 // pred_fallthru
          _
        // Predicated region
        $region17: #{tpu_custom_call.1} parent=11 // pred_check
          %p273 = pneg %p92
        $region18: #{tpu_custom_call.1} parent=11 // pred_check_branch
          %275 = sbr.rel (%p273) target = $region20
        $region19: #{tpu_custom_call.1} parent=11 // pred_region
          %277 = vsyncadd [#allocation6], 0
          %s279 = sshll.u32 %s2, 4
          %s280 = int_to_ptr.hbm [resolvable:$true] %s279
          %s281 = sshll.u32 [#allocation7], 4
          %s282 = int_to_ptr.vmem [resolvable:$true] %s281
          %284 = dma.hbm_to_vmem [thread:$0]  %s280, 128, %s282, [#allocation6]
        $region20: #{tpu_custom_call.1} parent=11 // pred_fallthru
          _
        // Predicated region
        $region21: #{tpu_custom_call.1} parent=11 // pred_check
          %p285 = pneg %p113
        $region22: #{tpu_custom_call.1} parent=11 // pred_check_branch
          %287 = sbr.rel (%p285) target = $region24
        $region23: #{tpu_custom_call.1} parent=11 // pred_region
          %289 = vsyncadd [#allocation9], 0
          %s290 = sshll.u32 %s3, 4
          %s291 = int_to_ptr.hbm [resolvable:$true] %s290
          %s292 = sshll.u32 [#allocation8], 4
          %s293 = int_to_ptr.vmem [resolvable:$true] %s292
          %298 = dma.hbm_to_vmem [thread:$0]  %s291, 32768, %s293, [#allocation9], 256, 256, 16
        $region24: #{tpu_custom_call.1} parent=11 // pred_fallthru
          _
        // Predicated region
        $region25: #{tpu_custom_call.1} parent=11 // pred_check
          %p299 = pneg %p134
        $region26: #{tpu_custom_call.1} parent=11 // pred_check_branch
          %301 = sbr.rel (%p299) target = $region28
        $region27: #{tpu_custom_call.1} parent=11 // pred_region
          %303 = vsyncadd [#allocation9], 0
          %s305 = sshll.u32 %s4, 4
          %s306 = int_to_ptr.hbm [resolvable:$true] %s305
          %s307 = sshll.u32 [#allocation10], 4
          %s308 = int_to_ptr.vmem [resolvable:$true] %s307
          %310 = dma.hbm_to_vmem [thread:$0]  %s306, 64, %s308, [#allocation9]
        $region28: #{tpu_custom_call.1} parent=11 // pred_fallthru
          _
        // Predicated region
        $region29: #{tpu_custom_call.1} parent=11 // pred_check
          %p311 = pneg %p155
        $region30: #{tpu_custom_call.1} parent=11 // pred_check_branch
          %313 = sbr.rel (%p311) target = $region32
        $region31: #{tpu_custom_call.1} parent=11 // pred_region
          %315 = vsyncadd [#allocation12], 0
          %s316 = sshll.u32 %s5, 4
          %s317 = int_to_ptr.hbm [resolvable:$true] %s316
          %s318 = sshll.u32 [#allocation11], 4
          %s319 = int_to_ptr.vmem [resolvable:$true] %s318
          %324 = dma.hbm_to_vmem [thread:$0]  %s317, 8192, %s319, [#allocation12], 128, 128, 8
        $region32: #{tpu_custom_call.1} parent=11 // pred_fallthru
          _
        // Predicated region
        $region33: #{tpu_custom_call.1} parent=11 // pred_check
          %p325 = pneg %p176
        $region34: #{tpu_custom_call.1} parent=11 // pred_check_branch
          %327 = sbr.rel (%p325) target = $region36
        $region35: #{tpu_custom_call.1} parent=11 // pred_region
          _
        $region36: #{tpu_custom_call.1} parent=11 // pred_fallthru
          _
        // Predicated region
        $region37: #{tpu_custom_call.1} parent=11 // pred_check
          %p328 = pneg %p197
        $region38: #{tpu_custom_call.1} parent=11 // pred_check_branch
          %330 = sbr.rel (%p328) target = $region40
        $region39: #{tpu_custom_call.1} parent=11 // pred_region
          %332 = vsyncadd [#allocation12], 0
          %s333 = sshll.u32 %s7, 4
          %s334 = int_to_ptr.hbm [resolvable:$true] %s333
          %s335 = sshll.u32 [#allocation13], 4
          %s336 = int_to_ptr.vmem [resolvable:$true] %s335
          %341 = dma.hbm_to_vmem [thread:$0]  %s334, 2048, %s336, [#allocation12], 64, 64, 4
        $region40: #{tpu_custom_call.1} parent=11 // pred_fallthru
          _
        // Predicated region
        $region41: #{tpu_custom_call.1} parent=11 // pred_check
          %p342 = pneg %p218
        $region42: #{tpu_custom_call.1} parent=11 // pred_check_branch
          %344 = sbr.rel (%p342) target = $region44
        $region43: #{tpu_custom_call.1} parent=11 // pred_region
          _
        $region44: #{tpu_custom_call.1} parent=11 // pred_fallthru
          _
      $region12: #{tpu_custom_call.1} parent=5 // pred_fallthru
        _
      %p345 = scmp.lt.s32.totalorder %s24, 2
      // Predicated region
      $region45: #{tpu_custom_call.1} parent=5 // pred_check
        %p346 = pneg %p345
      $region46: #{tpu_custom_call.1} parent=5 // pred_check_branch
        %348 = sbr.rel (%p346) target = $region48
      $region47: #{tpu_custom_call.1} parent=5 // pred_region
        // Predicated region
        $region49: #{tpu_custom_call.1} parent=47 // pred_check
          %p349 = pneg %p44
        $region50: #{tpu_custom_call.1} parent=47 // pred_check_branch
          %351 = sbr.rel (%p349) target = $region52
        $region51: #{tpu_custom_call.1} parent=47 // pred_region
          %s352 = sand.u32 %s34, 1
          %s353 = scalar_lea.sflag [#allocation3], %s352
          %s354 = sand.u32 %s34, 1
          %s355 = smul.addr %s354, 384
          %s356 = scalar_lea.vmem [#allocation2], %s355
          %s357 = smul.u32 16, %s24
          %359 = vsyncadd %s353, 0
          %s360 = smul.addr %s357, 3
          %s361 = smul.addr %s360, 8
          %s362 = scalar_lea.hbm %s0, %s361
          %s363 = sshll.u32 %s362, 4
          %s364 = int_to_ptr.hbm [resolvable:$true] %s363
          %s365 = sshll.u32 %s356, 4
          %s366 = int_to_ptr.vmem [resolvable:$true] %s365
          %371 = dma.hbm_to_vmem [thread:$0]  %s364, 6144, %s366, %s353, 384, 384, 24
        $region52: #{tpu_custom_call.1} parent=47 // pred_fallthru
          _
      $region48: #{tpu_custom_call.1} parent=5 // pred_fallthru
        _
      %p372 = scmp.le.s32.totalorder 1, %s24
      %p373 = scmp.lt.s32.totalorder %s24, 3
      %p374 = pnand %p372, %p373
      %p375 = pneg %p374
      // Predicated region
      $region53: #{tpu_custom_call.1} parent=5 // pred_check
        _
      $region54: #{tpu_custom_call.1} parent=5 // pred_check_branch
        %377 = sbr.rel (%p374) target = $region56
      $region55: #{tpu_custom_call.1} parent=5 // pred_region
        %s378 = ssub.s32 %s24, 1
        %s379 = sand.u32 %s37, 1
        %s380 = scalar_lea.sflag [#allocation3], %s379
        %s381 = sand.u32 %s37, 1
        %s382 = smul.addr %s381, 384
        %s383 = scalar_lea.vmem [#allocation2], %s382
        // Predicated region
        $region57: #{tpu_custom_call.1} parent=55 // pred_check
          %p384 = pneg %p50
        $region58: #{tpu_custom_call.1} parent=55 // pred_check_branch
          %386 = sbr.rel (%p384) target = $region60
        $region59: #{tpu_custom_call.1} parent=55 // pred_region
          %388 = dma.done %s380, 6144
        $region60: #{tpu_custom_call.1} parent=55 // pred_fallthru
          _
        // Predicated region
        $region61: #{tpu_custom_call.1} parent=55 // pred_check
          %p389 = pneg %p71
        $region62: #{tpu_custom_call.1} parent=55 // pred_check_branch
          %391 = sbr.rel (%p389) target = $region64
        $region63: #{tpu_custom_call.1} parent=55 // pred_region
          %393 = dma.done [#allocation6], 24576
        $region64: #{tpu_custom_call.1} parent=55 // pred_fallthru
          _
        // Predicated region
        $region65: #{tpu_custom_call.1} parent=55 // pred_check
          %p394 = pneg %p92
        $region66: #{tpu_custom_call.1} parent=55 // pred_check_branch
          %396 = sbr.rel (%p394) target = $region68
        $region67: #{tpu_custom_call.1} parent=55 // pred_region
          %398 = dma.done [#allocation6], 128
        $region68: #{tpu_custom_call.1} parent=55 // pred_fallthru
          _
        // Predicated region
        $region69: #{tpu_custom_call.1} parent=55 // pred_check
          %p399 = pneg %p113
        $region70: #{tpu_custom_call.1} parent=55 // pred_check_branch
          %401 = sbr.rel (%p399) target = $region72
        $region71: #{tpu_custom_call.1} parent=55 // pred_region
          %403 = dma.done [#allocation9], 32768
        $region72: #{tpu_custom_call.1} parent=55 // pred_fallthru
          _
        // Predicated region
        $region73: #{tpu_custom_call.1} parent=55 // pred_check
          %p404 = pneg %p134
        $region74: #{tpu_custom_call.1} parent=55 // pred_check_branch
          %406 = sbr.rel (%p404) target = $region76
        $region75: #{tpu_custom_call.1} parent=55 // pred_region
          %408 = dma.done [#allocation9], 64
        $region76: #{tpu_custom_call.1} parent=55 // pred_fallthru
          _
        // Predicated region
        $region77: #{tpu_custom_call.1} parent=55 // pred_check
          %p409 = pneg %p155
        $region78: #{tpu_custom_call.1} parent=55 // pred_check_branch
          %411 = sbr.rel (%p409) target = $region80
        $region79: #{tpu_custom_call.1} parent=55 // pred_region
          %413 = dma.done [#allocation12], 8192
        $region80: #{tpu_custom_call.1} parent=55 // pred_fallthru
          _
        // Predicated region
        $region81: #{tpu_custom_call.1} parent=55 // pred_check
          %p414 = pneg %p197
        $region82: #{tpu_custom_call.1} parent=55 // pred_check_branch
          %416 = sbr.rel (%p414) target = $region84
        $region83: #{tpu_custom_call.1} parent=55 // pred_region
          %418 = dma.done [#allocation12], 2048
        $region84: #{tpu_custom_call.1} parent=55 // pred_fallthru
          _
        %s419 = sand.u32 %s37, 1
        %s420 = scalar_lea.sflag [#allocation3], %s419
        %s421 = sand.u32 %s37, 1
        %s422 = smul.addr %s421, 384
        %s423 = scalar_lea.vmem [#allocation2], %s422
        %p424 = pneg %p50
        %p425 = pneg %p47
        %p426 = pneg %p71
        %p427 = pneg %p68
        %p428 = pneg %p92
        %p429 = pneg %p89
        %p430 = pneg %p113
        %p431 = pneg %p110
        %p432 = pneg %p134
        %p433 = pneg %p131
        %p434 = pneg %p155
        %p435 = pneg %p152
        %p436 = pneg %p176
        %p437 = pneg %p173
        %p438 = pneg %p197
        %p439 = pneg %p194
        %p440 = pneg %p218
        %p441 = pneg %p215
        %p442 = pneg %p244
        %p443 = pneg %p241
        %s444 = sand.u32 %s231, 1
        %s445 = scalar_lea.sflag [#allocation4], %s444
        %s446 = sand.u32 %s231, 1
        %s447 = smul.addr %s446, 64
        %s448 = scalar_lea.vmem [#allocation14], %s447
        %s449 = smul.u32 16, %s29
        %s450 = smul.u32 16, %s29
        %v451 = vld [vmem:[%s383] sm:$0xff]
        %v452 = vld [vmem:[%s383 + $0x8] sm:$0xff]
        %v453 = vld [vmem:[%s383 + $0x10] sm:$0xff]
        %v454 = vld [vmem:[%s383 + $0x18] sm:$0xff]
        %v455 = vld [vmem:[%s383 + $0x20] sm:$0xff]
        %v456 = vld [vmem:[%s383 + $0x28] sm:$0xff]
        %v457 = vld [vmem:[%s383 + $0x30] sm:$0xff]
        %v458 = vld [vmem:[%s383 + $0x38] sm:$0xff]
        %v459 = vld [vmem:[%s383 + $0x40] sm:$0xff]
        %v460 = vld [vmem:[%s383 + $0x48] sm:$0xff]
        %v461 = vld [vmem:[%s383 + $0x50] sm:$0xff]
        %v462 = vld [vmem:[%s383 + $0x58] sm:$0xff]
        %v463 = vld [vmem:[%s383 + $0x60] sm:$0xff]
        %v464 = vld [vmem:[%s383 + $0x68] sm:$0xff]
        %v465 = vld [vmem:[%s383 + $0x70] sm:$0xff]
        %v466 = vld [vmem:[%s383 + $0x78] sm:$0xff]
        %v467 = vld [vmem:[%s383 + $0x80] sm:$0xff]
        %v468 = vld [vmem:[%s383 + $0x88] sm:$0xff]
        %v469 = vld [vmem:[%s383 + $0x90] sm:$0xff]
        %v470 = vld [vmem:[%s383 + $0x98] sm:$0xff]
        %v471 = vld [vmem:[%s383 + $0xa0] sm:$0xff]
        %v472 = vld [vmem:[%s383 + $0xa8] sm:$0xff]
        %v473 = vld [vmem:[%s383 + $0xb0] sm:$0xff]
        %v474 = vld [vmem:[%s383 + $0xb8] sm:$0xff]
        %v475 = vld [vmem:[%s383 + $0xc0] sm:$0xff]
        %v476 = vld [vmem:[%s383 + $0xc8] sm:$0xff]
        %v477 = vld [vmem:[%s383 + $0xd0] sm:$0xff]
        %v478 = vld [vmem:[%s383 + $0xd8] sm:$0xff]
        %v479 = vld [vmem:[%s383 + $0xe0] sm:$0xff]
        %v480 = vld [vmem:[%s383 + $0xe8] sm:$0xff]
        %v481 = vld [vmem:[%s383 + $0xf0] sm:$0xff]
        %v482 = vld [vmem:[%s383 + $0xf8] sm:$0xff]
        %v483 = vld [vmem:[%s383 + $0x100] sm:$0xff]
        %v484 = vld [vmem:[%s383 + $0x108] sm:$0xff]
        %v485 = vld [vmem:[%s383 + $0x110] sm:$0xff]
        %v486 = vld [vmem:[%s383 + $0x118] sm:$0xff]
        %v487 = vld [vmem:[%s383 + $0x120] sm:$0xff]
        %v488 = vld [vmem:[%s383 + $0x128] sm:$0xff]
        %v489 = vld [vmem:[%s383 + $0x130] sm:$0xff]
        %v490 = vld [vmem:[%s383 + $0x138] sm:$0xff]
        %v491 = vld [vmem:[%s383 + $0x140] sm:$0xff]
        %v492 = vld [vmem:[%s383 + $0x148] sm:$0xff]
        %v493 = vld [vmem:[%s383 + $0x150] sm:$0xff]
        %v494 = vld [vmem:[%s383 + $0x158] sm:$0xff]
        %v495 = vld [vmem:[%s383 + $0x160] sm:$0xff]
        %v496 = vld [vmem:[%s383 + $0x168] sm:$0xff]
        %v497 = vld [vmem:[%s383 + $0x170] sm:$0xff]
        %v498 = vld [vmem:[%s383 + $0x178] sm:$0xff]
        %v499 = vpack.c.bf16 %v454, %v451
        %v500 = vpack.c.bf16 %v455, %v452
        %v501 = vpack.c.bf16 %v456, %v453
        %v502 = vpack.c.bf16 %v460, %v457
        %v503 = vpack.c.bf16 %v461, %v458
        %v504 = vpack.c.bf16 %v462, %v459
        %v505 = vpack.c.bf16 %v466, %v463
        %v506 = vpack.c.bf16 %v467, %v464
        %v507 = vpack.c.bf16 %v468, %v465
        %v508 = vpack.c.bf16 %v472, %v469
        %v509 = vpack.c.bf16 %v473, %v470
        %v510 = vpack.c.bf16 %v474, %v471
        %v511 = vpack.c.bf16 %v478, %v475
        %v512 = vpack.c.bf16 %v479, %v476
        %v513 = vpack.c.bf16 %v480, %v477
        %v514 = vpack.c.bf16 %v484, %v481
        %v515 = vpack.c.bf16 %v485, %v482
        %v516 = vpack.c.bf16 %v486, %v483
        %v517 = vpack.c.bf16 %v490, %v487
        %v518 = vpack.c.bf16 %v491, %v488
        %v519 = vpack.c.bf16 %v492, %v489
        %v520 = vpack.c.bf16 %v496, %v493
        %v521 = vpack.c.bf16 %v497, %v494
        %v522 = vpack.c.bf16 %v498, %v495
        %v523 = vld [vmem:[#allocation5] sm:$0xff]
        %v524 = vld [vmem:[#allocation5 + $0x8] sm:$0xff]
        %v525 = vld [vmem:[#allocation5 + $0x10] sm:$0xff]
        %v526 = vld [vmem:[#allocation5 + $0x18] sm:$0xff]
        %v527 = vld [vmem:[#allocation5 + $0x20] sm:$0xff]
        %v528 = vld [vmem:[#allocation5 + $0x28] sm:$0xff]
        %v529 = vld [vmem:[#allocation5 + $0x30] sm:$0xff]
        %v530 = vld [vmem:[#allocation5 + $0x38] sm:$0xff]
        %v531 = vld [vmem:[#allocation5 + $0x40] sm:$0xff]
        %v532 = vld [vmem:[#allocation5 + $0x48] sm:$0xff]
        %v533 = vld [vmem:[#allocation5 + $0x50] sm:$0xff]
        %v534 = vld [vmem:[#allocation5 + $0x58] sm:$0xff]
        %v535 = vld [vmem:[#allocation5 + $0x60] sm:$0xff]
        %v536 = vld [vmem:[#allocation5 + $0x68] sm:$0xff]
        %v537 = vld [vmem:[#allocation5 + $0x70] sm:$0xff]
        %v538 = vld [vmem:[#allocation5 + $0x78] sm:$0xff]
        %v539 = vld [vmem:[#allocation5 + $0x80] sm:$0xff]
        %v540 = vld [vmem:[#allocation5 + $0x88] sm:$0xff]
        %v541 = vld [vmem:[#allocation5 + $0x90] sm:$0xff]
        %v542 = vld [vmem:[#allocation5 + $0x98] sm:$0xff]
        %v543 = vld [vmem:[#allocation5 + $0xa0] sm:$0xff]
        %v544 = vld [vmem:[#allocation5 + $0xa8] sm:$0xff]
        %v545 = vld [vmem:[#allocation5 + $0xb0] sm:$0xff]
        %v546 = vld [vmem:[#allocation5 + $0xb8] sm:$0xff]
        %v547 = vld [vmem:[#allocation5 + $0xc0] sm:$0xff]
        %v548 = vld [vmem:[#allocation5 + $0xc8] sm:$0xff]
        %v549 = vld [vmem:[#allocation5 + $0xd0] sm:$0xff]
        %v550 = vld [vmem:[#allocation5 + $0xd8] sm:$0xff]
        %v551 = vld [vmem:[#allocation5 + $0xe0] sm:$0xff]
        %v552 = vld [vmem:[#allocation5 + $0xe8] sm:$0xff]
        %v553 = vld [vmem:[#allocation5 + $0xf0] sm:$0xff]
        %v554 = vld [vmem:[#allocation5 + $0xf8] sm:$0xff]
        %v555 = vld [vmem:[#allocation5 + $0x100] sm:$0xff]
        %v556 = vld [vmem:[#allocation5 + $0x108] sm:$0xff]
        %v557 = vld [vmem:[#allocation5 + $0x110] sm:$0xff]
        %v558 = vld [vmem:[#allocation5 + $0x118] sm:$0xff]
        %v559 = vld [vmem:[#allocation5 + $0x120] sm:$0xff]
        %v560 = vld [vmem:[#allocation5 + $0x128] sm:$0xff]
        %v561 = vld [vmem:[#allocation5 + $0x130] sm:$0xff]
        %v562 = vld [vmem:[#allocation5 + $0x138] sm:$0xff]
        %v563 = vld [vmem:[#allocation5 + $0x140] sm:$0xff]
        %v564 = vld [vmem:[#allocation5 + $0x148] sm:$0xff]
        %v565 = vld [vmem:[#allocation5 + $0x150] sm:$0xff]
        %v566 = vld [vmem:[#allocation5 + $0x158] sm:$0xff]
        %v567 = vld [vmem:[#allocation5 + $0x160] sm:$0xff]
        %v568 = vld [vmem:[#allocation5 + $0x168] sm:$0xff]
        %v569 = vld [vmem:[#allocation5 + $0x170] sm:$0xff]
        %v570 = vld [vmem:[#allocation5 + $0x178] sm:$0xff]
        %v571 = vld [vmem:[#allocation5 + $0x180] sm:$0xff]
        %v572 = vld [vmem:[#allocation5 + $0x188] sm:$0xff]
        %v573 = vld [vmem:[#allocation5 + $0x190] sm:$0xff]
        %v574 = vld [vmem:[#allocation5 + $0x198] sm:$0xff]
        %v575 = vld [vmem:[#allocation5 + $0x1a0] sm:$0xff]
        %v576 = vld [vmem:[#allocation5 + $0x1a8] sm:$0xff]
        %v577 = vld [vmem:[#allocation5 + $0x1b0] sm:$0xff]
        %v578 = vld [vmem:[#allocation5 + $0x1b8] sm:$0xff]
        %v579 = vld [vmem:[#allocation5 + $0x1c0] sm:$0xff]
        %v580 = vld [vmem:[#allocation5 + $0x1c8] sm:$0xff]
        %v581 = vld [vmem:[#allocation5 + $0x1d0] sm:$0xff]
        %v582 = vld [vmem:[#allocation5 + $0x1d8] sm:$0xff]
        %v583 = vld [vmem:[#allocation5 + $0x1e0] sm:$0xff]
        %v584 = vld [vmem:[#allocation5 + $0x1e8] sm:$0xff]
        %v585 = vld [vmem:[#allocation5 + $0x1f0] sm:$0xff]
        %v586 = vld [vmem:[#allocation5 + $0x1f8] sm:$0xff]
        %v587 = vld [vmem:[#allocation5 + $0x200] sm:$0xff]
        %v588 = vld [vmem:[#allocation5 + $0x208] sm:$0xff]
        %v589 = vld [vmem:[#allocation5 + $0x210] sm:$0xff]
        %v590 = vld [vmem:[#allocation5 + $0x218] sm:$0xff]
        %v591 = vld [vmem:[#allocation5 + $0x220] sm:$0xff]
        %v592 = vld [vmem:[#allocation5 + $0x228] sm:$0xff]
        %v593 = vld [vmem:[#allocation5 + $0x230] sm:$0xff]
        %v594 = vld [vmem:[#allocation5 + $0x238] sm:$0xff]
        %v595 = vld [vmem:[#allocation5 + $0x240] sm:$0xff]
        %v596 = vld [vmem:[#allocation5 + $0x248] sm:$0xff]
        %v597 = vld [vmem:[#allocation5 + $0x250] sm:$0xff]
        %v598 = vld [vmem:[#allocation5 + $0x258] sm:$0xff]
        %v599 = vld [vmem:[#allocation5 + $0x260] sm:$0xff]
        %v600 = vld [vmem:[#allocation5 + $0x268] sm:$0xff]
        %v601 = vld [vmem:[#allocation5 + $0x270] sm:$0xff]
        %v602 = vld [vmem:[#allocation5 + $0x278] sm:$0xff]
        %v603 = vld [vmem:[#allocation5 + $0x280] sm:$0xff]
        %v604 = vld [vmem:[#allocation5 + $0x288] sm:$0xff]
        %v605 = vld [vmem:[#allocation5 + $0x290] sm:$0xff]
        %v606 = vld [vmem:[#allocation5 + $0x298] sm:$0xff]
        %v607 = vld [vmem:[#allocation5 + $0x2a0] sm:$0xff]
        %v608 = vld [vmem:[#allocation5 + $0x2a8] sm:$0xff]
        %v609 = vld [vmem:[#allocation5 + $0x2b0] sm:$0xff]
        %v610 = vld [vmem:[#allocation5 + $0x2b8] sm:$0xff]
        %v611 = vld [vmem:[#allocation5 + $0x2c0] sm:$0xff]
        %v612 = vld [vmem:[#allocation5 + $0x2c8] sm:$0xff]
        %v613 = vld [vmem:[#allocation5 + $0x2d0] sm:$0xff]
        %v614 = vld [vmem:[#allocation5 + $0x2d8] sm:$0xff]
        %v615 = vld [vmem:[#allocation5 + $0x2e0] sm:$0xff]
        %v616 = vld [vmem:[#allocation5 + $0x2e8] sm:$0xff]
        %v617 = vld [vmem:[#allocation5 + $0x2f0] sm:$0xff]
        %v618 = vld [vmem:[#allocation5 + $0x2f8] sm:$0xff]
        %v619 = vld [vmem:[#allocation5 + $0x300] sm:$0xff]
        %v620 = vld [vmem:[#allocation5 + $0x308] sm:$0xff]
        %v621 = vld [vmem:[#allocation5 + $0x310] sm:$0xff]
        %v622 = vld [vmem:[#allocation5 + $0x318] sm:$0xff]
        %v623 = vld [vmem:[#allocation5 + $0x320] sm:$0xff]
        %v624 = vld [vmem:[#allocation5 + $0x328] sm:$0xff]
        %v625 = vld [vmem:[#allocation5 + $0x330] sm:$0xff]
        %v626 = vld [vmem:[#allocation5 + $0x338] sm:$0xff]
        %v627 = vld [vmem:[#allocation5 + $0x340] sm:$0xff]
        %v628 = vld [vmem:[#allocation5 + $0x348] sm:$0xff]
        %v629 = vld [vmem:[#allocation5 + $0x350] sm:$0xff]
        %v630 = vld [vmem:[#allocation5 + $0x358] sm:$0xff]
        %v631 = vld [vmem:[#allocation5 + $0x360] sm:$0xff]
        %v632 = vld [vmem:[#allocation5 + $0x368] sm:$0xff]
        %v633 = vld [vmem:[#allocation5 + $0x370] sm:$0xff]
        %v634 = vld [vmem:[#allocation5 + $0x378] sm:$0xff]
        %v635 = vld [vmem:[#allocation5 + $0x380] sm:$0xff]
        %v636 = vld [vmem:[#allocation5 + $0x388] sm:$0xff]
        %v637 = vld [vmem:[#allocation5 + $0x390] sm:$0xff]
        %v638 = vld [vmem:[#allocation5 + $0x398] sm:$0xff]
        %v639 = vld [vmem:[#allocation5 + $0x3a0] sm:$0xff]
        %v640 = vld [vmem:[#allocation5 + $0x3a8] sm:$0xff]
        %v641 = vld [vmem:[#allocation5 + $0x3b0] sm:$0xff]
        %v642 = vld [vmem:[#allocation5 + $0x3b8] sm:$0xff]
        %v643 = vld [vmem:[#allocation5 + $0x3c0] sm:$0xff]
        %v644 = vld [vmem:[#allocation5 + $0x3c8] sm:$0xff]
        %v645 = vld [vmem:[#allocation5 + $0x3d0] sm:$0xff]
        %v646 = vld [vmem:[#allocation5 + $0x3d8] sm:$0xff]
        %v647 = vld [vmem:[#allocation5 + $0x3e0] sm:$0xff]
        %v648 = vld [vmem:[#allocation5 + $0x3e8] sm:$0xff]
        %v649 = vld [vmem:[#allocation5 + $0x3f0] sm:$0xff]
        %v650 = vld [vmem:[#allocation5 + $0x3f8] sm:$0xff]
        %v651 = vld [vmem:[#allocation5 + $0x400] sm:$0xff]
        %v652 = vld [vmem:[#allocation5 + $0x408] sm:$0xff]
        %v653 = vld [vmem:[#allocation5 + $0x410] sm:$0xff]
        %v654 = vld [vmem:[#allocation5 + $0x418] sm:$0xff]
        %v655 = vld [vmem:[#allocation5 + $0x420] sm:$0xff]
        %v656 = vld [vmem:[#allocation5 + $0x428] sm:$0xff]
        %v657 = vld [vmem:[#allocation5 + $0x430] sm:$0xff]
        %v658 = vld [vmem:[#allocation5 + $0x438] sm:$0xff]
        %v659 = vld [vmem:[#allocation5 + $0x440] sm:$0xff]
        %v660 = vld [vmem:[#allocation5 + $0x448] sm:$0xff]
        %v661 = vld [vmem:[#allocation5 + $0x450] sm:$0xff]
        %v662 = vld [vmem:[#allocation5 + $0x458] sm:$0xff]
        %v663 = vld [vmem:[#allocation5 + $0x460] sm:$0xff]
        %v664 = vld [vmem:[#allocation5 + $0x468] sm:$0xff]
        %v665 = vld [vmem:[#allocation5 + $0x470] sm:$0xff]
        %v666 = vld [vmem:[#allocation5 + $0x478] sm:$0xff]
        %v667 = vld [vmem:[#allocation5 + $0x480] sm:$0xff]
        %v668 = vld [vmem:[#allocation5 + $0x488] sm:$0xff]
        %v669 = vld [vmem:[#allocation5 + $0x490] sm:$0xff]
        %v670 = vld [vmem:[#allocation5 + $0x498] sm:$0xff]
        %v671 = vld [vmem:[#allocation5 + $0x4a0] sm:$0xff]
        %v672 = vld [vmem:[#allocation5 + $0x4a8] sm:$0xff]
        %v673 = vld [vmem:[#allocation5 + $0x4b0] sm:$0xff]
        %v674 = vld [vmem:[#allocation5 + $0x4b8] sm:$0xff]
        %v675 = vld [vmem:[#allocation5 + $0x4c0] sm:$0xff]
        %v676 = vld [vmem:[#allocation5 + $0x4c8] sm:$0xff]
        %v677 = vld [vmem:[#allocation5 + $0x4d0] sm:$0xff]
        %v678 = vld [vmem:[#allocation5 + $0x4d8] sm:$0xff]
        %v679 = vld [vmem:[#allocation5 + $0x4e0] sm:$0xff]
        %v680 = vld [vmem:[#allocation5 + $0x4e8] sm:$0xff]
        %v681 = vld [vmem:[#allocation5 + $0x4f0] sm:$0xff]
        %v682 = vld [vmem:[#allocation5 + $0x4f8] sm:$0xff]
        %v683 = vld [vmem:[#allocation5 + $0x500] sm:$0xff]
        %v684 = vld [vmem:[#allocation5 + $0x508] sm:$0xff]
        %v685 = vld [vmem:[#allocation5 + $0x510] sm:$0xff]
        %v686 = vld [vmem:[#allocation5 + $0x518] sm:$0xff]
        %v687 = vld [vmem:[#allocation5 + $0x520] sm:$0xff]
        %v688 = vld [vmem:[#allocation5 + $0x528] sm:$0xff]
        %v689 = vld [vmem:[#allocation5 + $0x530] sm:$0xff]
        %v690 = vld [vmem:[#allocation5 + $0x538] sm:$0xff]
        %v691 = vld [vmem:[#allocation5 + $0x540] sm:$0xff]
        %v692 = vld [vmem:[#allocation5 + $0x548] sm:$0xff]
        %v693 = vld [vmem:[#allocation5 + $0x550] sm:$0xff]
        %v694 = vld [vmem:[#allocation5 + $0x558] sm:$0xff]
        %v695 = vld [vmem:[#allocation5 + $0x560] sm:$0xff]
        %v696 = vld [vmem:[#allocation5 + $0x568] sm:$0xff]
        %v697 = vld [vmem:[#allocation5 + $0x570] sm:$0xff]
        %v698 = vld [vmem:[#allocation5 + $0x578] sm:$0xff]
        %v699 = vld [vmem:[#allocation5 + $0x580] sm:$0xff]
        %v700 = vld [vmem:[#allocation5 + $0x588] sm:$0xff]
        %v701 = vld [vmem:[#allocation5 + $0x590] sm:$0xff]
        %v702 = vld [vmem:[#allocation5 + $0x598] sm:$0xff]
        %v703 = vld [vmem:[#allocation5 + $0x5a0] sm:$0xff]
        %v704 = vld [vmem:[#allocation5 + $0x5a8] sm:$0xff]
        %v705 = vld [vmem:[#allocation5 + $0x5b0] sm:$0xff]
        %v706 = vld [vmem:[#allocation5 + $0x5b8] sm:$0xff]
        %v707 = vld [vmem:[#allocation5 + $0x5c0] sm:$0xff]
        %v708 = vld [vmem:[#allocation5 + $0x5c8] sm:$0xff]
        %v709 = vld [vmem:[#allocation5 + $0x5d0] sm:$0xff]
        %v710 = vld [vmem:[#allocation5 + $0x5d8] sm:$0xff]
        %v711 = vld [vmem:[#allocation5 + $0x5e0] sm:$0xff]
        %v712 = vld [vmem:[#allocation5 + $0x5e8] sm:$0xff]
        %v713 = vld [vmem:[#allocation5 + $0x5f0] sm:$0xff]
        %v714 = vld [vmem:[#allocation5 + $0x5f8] sm:$0xff]
        %v715 = vld [vmem:[#allocation7] sm:$0xff]
        %v717 = vperm.slane %v715, 0
        %v718 = vperm.slane %v715, 1
        %v719 = vperm.slane %v715, 2
        %v720 = vperm.slane %v715, 3
        %v721 = vperm.slane %v715, 4
        %v722 = vperm.slane %v715, 5
        %v723 = vperm.slane %v715, 6
        %v724 = vperm.slane %v715, 7
        %v925 = vunpack.c.l.b16 %v523
        %v926 = vunpack.c.h.b16 %v523
        %v927 = vunpack.c.l.b16 %v524
        %v928 = vunpack.c.h.b16 %v524
        %v929 = vunpack.c.l.b16 %v525
        %v930 = vunpack.c.h.b16 %v525
        %v931 = vunpack.c.l.b16 %v526
        %v932 = vunpack.c.h.b16 %v526
        %v933 = vunpack.c.l.b16 %v527
        %v934 = vunpack.c.h.b16 %v527
        %v935 = vunpack.c.l.b16 %v528
        %v936 = vunpack.c.h.b16 %v528
        %v937 = vunpack.c.l.b16 %v529
        %v938 = vunpack.c.h.b16 %v529
        %v939 = vunpack.c.l.b16 %v530
        %v940 = vunpack.c.h.b16 %v530
        %v941 = vunpack.c.l.b16 %v531
        %v942 = vunpack.c.h.b16 %v531
        %v943 = vunpack.c.l.b16 %v532
        %v944 = vunpack.c.h.b16 %v532
        %v945 = vunpack.c.l.b16 %v533
        %v946 = vunpack.c.h.b16 %v533
        %v947 = vunpack.c.l.b16 %v534
        %v948 = vunpack.c.h.b16 %v534
        %v949 = vunpack.c.l.b16 %v535
        %v950 = vunpack.c.h.b16 %v535
        %v951 = vunpack.c.l.b16 %v536
        %v952 = vunpack.c.h.b16 %v536
        %v953 = vunpack.c.l.b16 %v537
        %v954 = vunpack.c.h.b16 %v537
        %v955 = vunpack.c.l.b16 %v538
        %v956 = vunpack.c.h.b16 %v538
        %v957 = vunpack.c.l.b16 %v539
        %v958 = vunpack.c.h.b16 %v539
        %v959 = vunpack.c.l.b16 %v540
        %v960 = vunpack.c.h.b16 %v540
        %v961 = vunpack.c.l.b16 %v541
        %v962 = vunpack.c.h.b16 %v541
        %v963 = vunpack.c.l.b16 %v542
        %v964 = vunpack.c.h.b16 %v542
        %v965 = vunpack.c.l.b16 %v543
        %v966 = vunpack.c.h.b16 %v543
        %v967 = vunpack.c.l.b16 %v544
        %v968 = vunpack.c.h.b16 %v544
        %v969 = vunpack.c.l.b16 %v545
        %v970 = vunpack.c.h.b16 %v545
        %v971 = vunpack.c.l.b16 %v546
        %v972 = vunpack.c.h.b16 %v546
        %v973 = vunpack.c.l.b16 %v547
        %v974 = vunpack.c.h.b16 %v547
        %v975 = vunpack.c.l.b16 %v548
        %v976 = vunpack.c.h.b16 %v548
        %v977 = vunpack.c.l.b16 %v549
        %v978 = vunpack.c.h.b16 %v549
        %v979 = vunpack.c.l.b16 %v550
        %v980 = vunpack.c.h.b16 %v550
        %v981 = vunpack.c.l.b16 %v551
        %v982 = vunpack.c.h.b16 %v551
        %v983 = vunpack.c.l.b16 %v552
        %v984 = vunpack.c.h.b16 %v552
        %v985 = vunpack.c.l.b16 %v553
        %v986 = vunpack.c.h.b16 %v553
        %v987 = vunpack.c.l.b16 %v554
        %v988 = vunpack.c.h.b16 %v554
        %v989 = vunpack.c.l.b16 %v555
        %v990 = vunpack.c.h.b16 %v555
        %v991 = vunpack.c.l.b16 %v556
        %v992 = vunpack.c.h.b16 %v556
        %v993 = vunpack.c.l.b16 %v557
        %v994 = vunpack.c.h.b16 %v557
        %v995 = vunpack.c.l.b16 %v558
        %v996 = vunpack.c.h.b16 %v558
        %v997 = vunpack.c.l.b16 %v559
        %v998 = vunpack.c.h.b16 %v559
        %v999 = vunpack.c.l.b16 %v560
        %v1000 = vunpack.c.h.b16 %v560
        %v1001 = vunpack.c.l.b16 %v561
        %v1002 = vunpack.c.h.b16 %v561
        %v1003 = vunpack.c.l.b16 %v562
        %v1004 = vunpack.c.h.b16 %v562
        %v1005 = vunpack.c.l.b16 %v563
        %v1006 = vunpack.c.h.b16 %v563
        %v1007 = vunpack.c.l.b16 %v564
        %v1008 = vunpack.c.h.b16 %v564
        %v1009 = vunpack.c.l.b16 %v565
        %v1010 = vunpack.c.h.b16 %v565
        %v1011 = vunpack.c.l.b16 %v566
        %v1012 = vunpack.c.h.b16 %v566
        %v1013 = vunpack.c.l.b16 %v567
        %v1014 = vunpack.c.h.b16 %v567
        %v1015 = vunpack.c.l.b16 %v568
        %v1016 = vunpack.c.h.b16 %v568
        %v1017 = vunpack.c.l.b16 %v569
        %v1018 = vunpack.c.h.b16 %v569
        %v1019 = vunpack.c.l.b16 %v570
        %v1020 = vunpack.c.h.b16 %v570
        %v1021 = vunpack.c.l.b16 %v571
        %v1022 = vunpack.c.h.b16 %v571
        %v1023 = vunpack.c.l.b16 %v572
        %v1024 = vunpack.c.h.b16 %v572
        %v1025 = vunpack.c.l.b16 %v573
        %v1026 = vunpack.c.h.b16 %v573
        %v1027 = vunpack.c.l.b16 %v574
        %v1028 = vunpack.c.h.b16 %v574
        %v1029 = vunpack.c.l.b16 %v575
        %v1030 = vunpack.c.h.b16 %v575
        %v1031 = vunpack.c.l.b16 %v576
        %v1032 = vunpack.c.h.b16 %v576
        %v1033 = vunpack.c.l.b16 %v577
        %v1034 = vunpack.c.h.b16 %v577
        %v1035 = vunpack.c.l.b16 %v578
        %v1036 = vunpack.c.h.b16 %v578
        %v1037 = vunpack.c.l.b16 %v579
        %v1038 = vunpack.c.h.b16 %v579
        %v1039 = vunpack.c.l.b16 %v580
        %v1040 = vunpack.c.h.b16 %v580
        %v1041 = vunpack.c.l.b16 %v581
        %v1042 = vunpack.c.h.b16 %v581
        %v1043 = vunpack.c.l.b16 %v582
        %v1044 = vunpack.c.h.b16 %v582
        %v1045 = vunpack.c.l.b16 %v583
        %v1046 = vunpack.c.h.b16 %v583
        %v1047 = vunpack.c.l.b16 %v584
        %v1048 = vunpack.c.h.b16 %v584
        %v1049 = vunpack.c.l.b16 %v585
        %v1050 = vunpack.c.h.b16 %v585
        %v1051 = vunpack.c.l.b16 %v586
        %v1052 = vunpack.c.h.b16 %v586
        %v1053 = vunpack.c.l.b16 %v587
        %v1054 = vunpack.c.h.b16 %v587
        %v1055 = vunpack.c.l.b16 %v588
        %v1056 = vunpack.c.h.b16 %v588
        %v1057 = vunpack.c.l.b16 %v589
        %v1058 = vunpack.c.h.b16 %v589
        %v1059 = vunpack.c.l.b16 %v590
        %v1060 = vunpack.c.h.b16 %v590
        %v1061 = vunpack.c.l.b16 %v591
        %v1062 = vunpack.c.h.b16 %v591
        %v1063 = vunpack.c.l.b16 %v592
        %v1064 = vunpack.c.h.b16 %v592
        %v1065 = vunpack.c.l.b16 %v593
        %v1066 = vunpack.c.h.b16 %v593
        %v1067 = vunpack.c.l.b16 %v594
        %v1068 = vunpack.c.h.b16 %v594
        %v1069 = vunpack.c.l.b16 %v595
        %v1070 = vunpack.c.h.b16 %v595
        %v1071 = vunpack.c.l.b16 %v596
        %v1072 = vunpack.c.h.b16 %v596
        %v1073 = vunpack.c.l.b16 %v597
        %v1074 = vunpack.c.h.b16 %v597
        %v1075 = vunpack.c.l.b16 %v598
        %v1076 = vunpack.c.h.b16 %v598
        %v1077 = vunpack.c.l.b16 %v599
        %v1078 = vunpack.c.h.b16 %v599
        %v1079 = vunpack.c.l.b16 %v600
        %v1080 = vunpack.c.h.b16 %v600
        %v1081 = vunpack.c.l.b16 %v601
        %v1082 = vunpack.c.h.b16 %v601
        %v1083 = vunpack.c.l.b16 %v602
        %v1084 = vunpack.c.h.b16 %v602
        %v1085 = vunpack.c.l.b16 %v603
        %v1086 = vunpack.c.h.b16 %v603
        %v1087 = vunpack.c.l.b16 %v604
        %v1088 = vunpack.c.h.b16 %v604
        %v1089 = vunpack.c.l.b16 %v605
        %v1090 = vunpack.c.h.b16 %v605
        %v1091 = vunpack.c.l.b16 %v606
        %v1092 = vunpack.c.h.b16 %v606
        %v1093 = vunpack.c.l.b16 %v607
        %v1094 = vunpack.c.h.b16 %v607
        %v1095 = vunpack.c.l.b16 %v608
        %v1096 = vunpack.c.h.b16 %v608
        %v1097 = vunpack.c.l.b16 %v609
        %v1098 = vunpack.c.h.b16 %v609
        %v1099 = vunpack.c.l.b16 %v610
        %v1100 = vunpack.c.h.b16 %v610
        %v1101 = vunpack.c.l.b16 %v611
        %v1102 = vunpack.c.h.b16 %v611
        %v1103 = vunpack.c.l.b16 %v612
        %v1104 = vunpack.c.h.b16 %v612
        %v1105 = vunpack.c.l.b16 %v613
        %v1106 = vunpack.c.h.b16 %v613
        %v1107 = vunpack.c.l.b16 %v614
        %v1108 = vunpack.c.h.b16 %v614
        %v1109 = vunpack.c.l.b16 %v615
        %v1110 = vunpack.c.h.b16 %v615
        %v1111 = vunpack.c.l.b16 %v616
        %v1112 = vunpack.c.h.b16 %v616
        %v1113 = vunpack.c.l.b16 %v617
        %v1114 = vunpack.c.h.b16 %v617
        %v1115 = vunpack.c.l.b16 %v618
        %v1116 = vunpack.c.h.b16 %v618
        %v1117 = vunpack.c.l.b16 %v619
        %v1118 = vunpack.c.h.b16 %v619
        %v1119 = vunpack.c.l.b16 %v620
        %v1120 = vunpack.c.h.b16 %v620
        %v1121 = vunpack.c.l.b16 %v621
        %v1122 = vunpack.c.h.b16 %v621
        %v1123 = vunpack.c.l.b16 %v622
        %v1124 = vunpack.c.h.b16 %v622
        %v1125 = vunpack.c.l.b16 %v623
        %v1126 = vunpack.c.h.b16 %v623
        %v1127 = vunpack.c.l.b16 %v624
        %v1128 = vunpack.c.h.b16 %v624
        %v1129 = vunpack.c.l.b16 %v625
        %v1130 = vunpack.c.h.b16 %v625
        %v1131 = vunpack.c.l.b16 %v626
        %v1132 = vunpack.c.h.b16 %v626
        %v1133 = vunpack.c.l.b16 %v627
        %v1134 = vunpack.c.h.b16 %v627
        %v1135 = vunpack.c.l.b16 %v628
        %v1136 = vunpack.c.h.b16 %v628
        %v1137 = vunpack.c.l.b16 %v629
        %v1138 = vunpack.c.h.b16 %v629
        %v1139 = vunpack.c.l.b16 %v630
        %v1140 = vunpack.c.h.b16 %v630
        %v1141 = vunpack.c.l.b16 %v631
        %v1142 = vunpack.c.h.b16 %v631
        %v1143 = vunpack.c.l.b16 %v632
        %v1144 = vunpack.c.h.b16 %v632
        %v1145 = vunpack.c.l.b16 %v633
        %v1146 = vunpack.c.h.b16 %v633
        %v1147 = vunpack.c.l.b16 %v634
        %v1148 = vunpack.c.h.b16 %v634
        %v1149 = vunpack.c.l.b16 %v635
        %v1150 = vunpack.c.h.b16 %v635
        %v1151 = vunpack.c.l.b16 %v636
        %v1152 = vunpack.c.h.b16 %v636
        %v1153 = vunpack.c.l.b16 %v637
        %v1154 = vunpack.c.h.b16 %v637
        %v1155 = vunpack.c.l.b16 %v638
        %v1156 = vunpack.c.h.b16 %v638
        %v1157 = vunpack.c.l.b16 %v639
        %v1158 = vunpack.c.h.b16 %v639
        %v1159 = vunpack.c.l.b16 %v640
        %v1160 = vunpack.c.h.b16 %v640
        %v1161 = vunpack.c.l.b16 %v641
        %v1162 = vunpack.c.h.b16 %v641
        %v1163 = vunpack.c.l.b16 %v642
        %v1164 = vunpack.c.h.b16 %v642
        %v1165 = vunpack.c.l.b16 %v643
        %v1166 = vunpack.c.h.b16 %v643
        %v1167 = vunpack.c.l.b16 %v644
        %v1168 = vunpack.c.h.b16 %v644
        %v1169 = vunpack.c.l.b16 %v645
        %v1170 = vunpack.c.h.b16 %v645
        %v1171 = vunpack.c.l.b16 %v646
        %v1172 = vunpack.c.h.b16 %v646
        %v1173 = vunpack.c.l.b16 %v647
        %v1174 = vunpack.c.h.b16 %v647
        %v1175 = vunpack.c.l.b16 %v648
        %v1176 = vunpack.c.h.b16 %v648
        %v1177 = vunpack.c.l.b16 %v649
        %v1178 = vunpack.c.h.b16 %v649
        %v1179 = vunpack.c.l.b16 %v650
        %v1180 = vunpack.c.h.b16 %v650
        %v1181 = vunpack.c.l.b16 %v651
        %v1182 = vunpack.c.h.b16 %v651
        %v1183 = vunpack.c.l.b16 %v652
        %v1184 = vunpack.c.h.b16 %v652
        %v1185 = vunpack.c.l.b16 %v653
        %v1186 = vunpack.c.h.b16 %v653
        %v1187 = vunpack.c.l.b16 %v654
        %v1188 = vunpack.c.h.b16 %v654
        %v1189 = vunpack.c.l.b16 %v655
        %v1190 = vunpack.c.h.b16 %v655
        %v1191 = vunpack.c.l.b16 %v656
        %v1192 = vunpack.c.h.b16 %v656
        %v1193 = vunpack.c.l.b16 %v657
        %v1194 = vunpack.c.h.b16 %v657
        %v1195 = vunpack.c.l.b16 %v658
        %v1196 = vunpack.c.h.b16 %v658
        %v1197 = vunpack.c.l.b16 %v659
        %v1198 = vunpack.c.h.b16 %v659
        %v1199 = vunpack.c.l.b16 %v660
        %v1200 = vunpack.c.h.b16 %v660
        %v1201 = vunpack.c.l.b16 %v661
        %v1202 = vunpack.c.h.b16 %v661
        %v1203 = vunpack.c.l.b16 %v662
        %v1204 = vunpack.c.h.b16 %v662
        %v1205 = vunpack.c.l.b16 %v663
        %v1206 = vunpack.c.h.b16 %v663
        %v1207 = vunpack.c.l.b16 %v664
        %v1208 = vunpack.c.h.b16 %v664
        %v1209 = vunpack.c.l.b16 %v665
        %v1210 = vunpack.c.h.b16 %v665
        %v1211 = vunpack.c.l.b16 %v666
        %v1212 = vunpack.c.h.b16 %v666
        %v1213 = vunpack.c.l.b16 %v667
        %v1214 = vunpack.c.h.b16 %v667
        %v1215 = vunpack.c.l.b16 %v668
        %v1216 = vunpack.c.h.b16 %v668
        %v1217 = vunpack.c.l.b16 %v669
        %v1218 = vunpack.c.h.b16 %v669
        %v1219 = vunpack.c.l.b16 %v670
        %v1220 = vunpack.c.h.b16 %v670
        %v1221 = vunpack.c.l.b16 %v671
        %v1222 = vunpack.c.h.b16 %v671
        %v1223 = vunpack.c.l.b16 %v672
        %v1224 = vunpack.c.h.b16 %v672
        %v1225 = vunpack.c.l.b16 %v673
        %v1226 = vunpack.c.h.b16 %v673
        %v1227 = vunpack.c.l.b16 %v674
        %v1228 = vunpack.c.h.b16 %v674
        %v1229 = vunpack.c.l.b16 %v675
        %v1230 = vunpack.c.h.b16 %v675
        %v1231 = vunpack.c.l.b16 %v676
        %v1232 = vunpack.c.h.b16 %v676
        %v1233 = vunpack.c.l.b16 %v677
        %v1234 = vunpack.c.h.b16 %v677
        %v1235 = vunpack.c.l.b16 %v678
        %v1236 = vunpack.c.h.b16 %v678
        %v1237 = vunpack.c.l.b16 %v679
        %v1238 = vunpack.c.h.b16 %v679
        %v1239 = vunpack.c.l.b16 %v680
        %v1240 = vunpack.c.h.b16 %v680
        %v1241 = vunpack.c.l.b16 %v681
        %v1242 = vunpack.c.h.b16 %v681
        %v1243 = vunpack.c.l.b16 %v682
        %v1244 = vunpack.c.h.b16 %v682
        %v1245 = vunpack.c.l.b16 %v683
        %v1246 = vunpack.c.h.b16 %v683
        %v1247 = vunpack.c.l.b16 %v684
        %v1248 = vunpack.c.h.b16 %v684
        %v1249 = vunpack.c.l.b16 %v685
        %v1250 = vunpack.c.h.b16 %v685
        %v1251 = vunpack.c.l.b16 %v686
        %v1252 = vunpack.c.h.b16 %v686
        %v1253 = vunpack.c.l.b16 %v687
        %v1254 = vunpack.c.h.b16 %v687
        %v1255 = vunpack.c.l.b16 %v688
        %v1256 = vunpack.c.h.b16 %v688
        %v1257 = vunpack.c.l.b16 %v689
        %v1258 = vunpack.c.h.b16 %v689
        %v1259 = vunpack.c.l.b16 %v690
        %v1260 = vunpack.c.h.b16 %v690
        %v1261 = vunpack.c.l.b16 %v691
        %v1262 = vunpack.c.h.b16 %v691
        %v1263 = vunpack.c.l.b16 %v692
        %v1264 = vunpack.c.h.b16 %v692
        %v1265 = vunpack.c.l.b16 %v693
        %v1266 = vunpack.c.h.b16 %v693
        %v1267 = vunpack.c.l.b16 %v694
        %v1268 = vunpack.c.h.b16 %v694
        %v1269 = vunpack.c.l.b16 %v695
        %v1270 = vunpack.c.h.b16 %v695
        %v1271 = vunpack.c.l.b16 %v696
        %v1272 = vunpack.c.h.b16 %v696
        %v1273 = vunpack.c.l.b16 %v697
        %v1274 = vunpack.c.h.b16 %v697
        %v1275 = vunpack.c.l.b16 %v698
        %v1276 = vunpack.c.h.b16 %v698
        %v1277 = vunpack.c.l.b16 %v699
        %v1278 = vunpack.c.h.b16 %v699
        %v1279 = vunpack.c.l.b16 %v700
        %v1280 = vunpack.c.h.b16 %v700
        %v1281 = vunpack.c.l.b16 %v701
        %v1282 = vunpack.c.h.b16 %v701
        %v1283 = vunpack.c.l.b16 %v702
        %v1284 = vunpack.c.h.b16 %v702
        %v1285 = vunpack.c.l.b16 %v703
        %v1286 = vunpack.c.h.b16 %v703
        %v1287 = vunpack.c.l.b16 %v704
        %v1288 = vunpack.c.h.b16 %v704
        %v1289 = vunpack.c.l.b16 %v705
        %v1290 = vunpack.c.h.b16 %v705
        %v1291 = vunpack.c.l.b16 %v706
        %v1292 = vunpack.c.h.b16 %v706
        %v1293 = vunpack.c.l.b16 %v707
        %v1294 = vunpack.c.h.b16 %v707
        %v1295 = vunpack.c.l.b16 %v708
        %v1296 = vunpack.c.h.b16 %v708
        %v1297 = vunpack.c.l.b16 %v709
        %v1298 = vunpack.c.h.b16 %v709
        %v1299 = vunpack.c.l.b16 %v710
        %v1300 = vunpack.c.h.b16 %v710
        %v1301 = vunpack.c.l.b16 %v711
        %v1302 = vunpack.c.h.b16 %v711
        %v1303 = vunpack.c.l.b16 %v712
        %v1304 = vunpack.c.h.b16 %v712
        %v1305 = vunpack.c.l.b16 %v713
        %v1306 = vunpack.c.h.b16 %v713
        %v1307 = vunpack.c.l.b16 %v714
        %v1308 = vunpack.c.h.b16 %v714
        %v1309 = vpack.c.b16 %v933, %v925
        %v1310 = vpack.c.b16 %v934, %v926
        %v1311 = vpack.c.b16 %v935, %v927
        %v1312 = vpack.c.b16 %v936, %v928
        %v1313 = vpack.c.b16 %v937, %v929
        %v1314 = vpack.c.b16 %v938, %v930
        %v1315 = vpack.c.b16 %v939, %v931
        %v1316 = vpack.c.b16 %v940, %v932
        %v1317 = vpack.c.b16 %v949, %v941
        %v1318 = vpack.c.b16 %v950, %v942
        %v1319 = vpack.c.b16 %v951, %v943
        %v1320 = vpack.c.b16 %v952, %v944
        %v1321 = vpack.c.b16 %v953, %v945
        %v1322 = vpack.c.b16 %v954, %v946
        %v1323 = vpack.c.b16 %v955, %v947
        %v1324 = vpack.c.b16 %v956, %v948
        %v1325 = vpack.c.b16 %v965, %v957
        %v1326 = vpack.c.b16 %v966, %v958
        %v1327 = vpack.c.b16 %v967, %v959
        %v1328 = vpack.c.b16 %v968, %v960
        %v1329 = vpack.c.b16 %v969, %v961
        %v1330 = vpack.c.b16 %v970, %v962
        %v1331 = vpack.c.b16 %v971, %v963
        %v1332 = vpack.c.b16 %v972, %v964
        %v1333 = vpack.c.b16 %v981, %v973
        %v1334 = vpack.c.b16 %v982, %v974
        %v1335 = vpack.c.b16 %v983, %v975
        %v1336 = vpack.c.b16 %v984, %v976
        %v1337 = vpack.c.b16 %v985, %v977
        %v1338 = vpack.c.b16 %v986, %v978
        %v1339 = vpack.c.b16 %v987, %v979
        %v1340 = vpack.c.b16 %v988, %v980
        %v1341 = vpack.c.b16 %v997, %v989
        %v1342 = vpack.c.b16 %v998, %v990
        %v1343 = vpack.c.b16 %v999, %v991
        %v1344 = vpack.c.b16 %v1000, %v992
        %v1345 = vpack.c.b16 %v1001, %v993
        %v1346 = vpack.c.b16 %v1002, %v994
        %v1347 = vpack.c.b16 %v1003, %v995
        %v1348 = vpack.c.b16 %v1004, %v996
        %v1349 = vpack.c.b16 %v1013, %v1005
        %v1350 = vpack.c.b16 %v1014, %v1006
        %v1351 = vpack.c.b16 %v1015, %v1007
        %v1352 = vpack.c.b16 %v1016, %v1008
        %v1353 = vpack.c.b16 %v1017, %v1009
        %v1354 = vpack.c.b16 %v1018, %v1010
        %v1355 = vpack.c.b16 %v1019, %v1011
        %v1356 = vpack.c.b16 %v1020, %v1012
        %v1357 = vpack.c.b16 %v1029, %v1021
        %v1358 = vpack.c.b16 %v1030, %v1022
        %v1359 = vpack.c.b16 %v1031, %v1023
        %v1360 = vpack.c.b16 %v1032, %v1024
        %v1361 = vpack.c.b16 %v1033, %v1025
        %v1362 = vpack.c.b16 %v1034, %v1026
        %v1363 = vpack.c.b16 %v1035, %v1027
        %v1364 = vpack.c.b16 %v1036, %v1028
        %v1365 = vpack.c.b16 %v1045, %v1037
        %v1366 = vpack.c.b16 %v1046, %v1038
        %v1367 = vpack.c.b16 %v1047, %v1039
        %v1368 = vpack.c.b16 %v1048, %v1040
        %v1369 = vpack.c.b16 %v1049, %v1041
        %v1370 = vpack.c.b16 %v1050, %v1042
        %v1371 = vpack.c.b16 %v1051, %v1043
        %v1372 = vpack.c.b16 %v1052, %v1044
        %v1373 = vpack.c.b16 %v1061, %v1053
        %v1374 = vpack.c.b16 %v1062, %v1054
        %v1375 = vpack.c.b16 %v1063, %v1055
        %v1376 = vpack.c.b16 %v1064, %v1056
        %v1377 = vpack.c.b16 %v1065, %v1057
        %v1378 = vpack.c.b16 %v1066, %v1058
        %v1379 = vpack.c.b16 %v1067, %v1059
        %v1380 = vpack.c.b16 %v1068, %v1060
        %v1381 = vpack.c.b16 %v1077, %v1069
        %v1382 = vpack.c.b16 %v1078, %v1070
        %v1383 = vpack.c.b16 %v1079, %v1071
        %v1384 = vpack.c.b16 %v1080, %v1072
        %v1385 = vpack.c.b16 %v1081, %v1073
        %v1386 = vpack.c.b16 %v1082, %v1074
        %v1387 = vpack.c.b16 %v1083, %v1075
        %v1388 = vpack.c.b16 %v1084, %v1076
        %v1389 = vpack.c.b16 %v1093, %v1085
        %v1390 = vpack.c.b16 %v1094, %v1086
        %v1391 = vpack.c.b16 %v1095, %v1087
        %v1392 = vpack.c.b16 %v1096, %v1088
        %v1393 = vpack.c.b16 %v1097, %v1089
        %v1394 = vpack.c.b16 %v1098, %v1090
        %v1395 = vpack.c.b16 %v1099, %v1091
        %v1396 = vpack.c.b16 %v1100, %v1092
        %v1397 = vpack.c.b16 %v1109, %v1101
        %v1398 = vpack.c.b16 %v1110, %v1102
        %v1399 = vpack.c.b16 %v1111, %v1103
        %v1400 = vpack.c.b16 %v1112, %v1104
        %v1401 = vpack.c.b16 %v1113, %v1105
        %v1402 = vpack.c.b16 %v1114, %v1106
        %v1403 = vpack.c.b16 %v1115, %v1107
        %v1404 = vpack.c.b16 %v1116, %v1108
        %v1405 = vpack.c.b16 %v1125, %v1117
        %v1406 = vpack.c.b16 %v1126, %v1118
        %v1407 = vpack.c.b16 %v1127, %v1119
        %v1408 = vpack.c.b16 %v1128, %v1120
        %v1409 = vpack.c.b16 %v1129, %v1121
        %v1410 = vpack.c.b16 %v1130, %v1122
        %v1411 = vpack.c.b16 %v1131, %v1123
        %v1412 = vpack.c.b16 %v1132, %v1124
        %v1413 = vpack.c.b16 %v1141, %v1133
        %v1414 = vpack.c.b16 %v1142, %v1134
        %v1415 = vpack.c.b16 %v1143, %v1135
        %v1416 = vpack.c.b16 %v1144, %v1136
        %v1417 = vpack.c.b16 %v1145, %v1137
        %v1418 = vpack.c.b16 %v1146, %v1138
        %v1419 = vpack.c.b16 %v1147, %v1139
        %v1420 = vpack.c.b16 %v1148, %v1140
        %v1421 = vpack.c.b16 %v1157, %v1149
        %v1422 = vpack.c.b16 %v1158, %v1150
        %v1423 = vpack.c.b16 %v1159, %v1151
        %v1424 = vpack.c.b16 %v1160, %v1152
        %v1425 = vpack.c.b16 %v1161, %v1153
        %v1426 = vpack.c.b16 %v1162, %v1154
        %v1427 = vpack.c.b16 %v1163, %v1155
        %v1428 = vpack.c.b16 %v1164, %v1156
        %v1429 = vpack.c.b16 %v1173, %v1165
        %v1430 = vpack.c.b16 %v1174, %v1166
        %v1431 = vpack.c.b16 %v1175, %v1167
        %v1432 = vpack.c.b16 %v1176, %v1168
        %v1433 = vpack.c.b16 %v1177, %v1169
        %v1434 = vpack.c.b16 %v1178, %v1170
        %v1435 = vpack.c.b16 %v1179, %v1171
        %v1436 = vpack.c.b16 %v1180, %v1172
        %v1437 = vpack.c.b16 %v1189, %v1181
        %v1438 = vpack.c.b16 %v1190, %v1182
        %v1439 = vpack.c.b16 %v1191, %v1183
        %v1440 = vpack.c.b16 %v1192, %v1184
        %v1441 = vpack.c.b16 %v1193, %v1185
        %v1442 = vpack.c.b16 %v1194, %v1186
        %v1443 = vpack.c.b16 %v1195, %v1187
        %v1444 = vpack.c.b16 %v1196, %v1188
        %v1445 = vpack.c.b16 %v1205, %v1197
        %v1446 = vpack.c.b16 %v1206, %v1198
        %v1447 = vpack.c.b16 %v1207, %v1199
        %v1448 = vpack.c.b16 %v1208, %v1200
        %v1449 = vpack.c.b16 %v1209, %v1201
        %v1450 = vpack.c.b16 %v1210, %v1202
        %v1451 = vpack.c.b16 %v1211, %v1203
        %v1452 = vpack.c.b16 %v1212, %v1204
        %v1453 = vpack.c.b16 %v1221, %v1213
        %v1454 = vpack.c.b16 %v1222, %v1214
        %v1455 = vpack.c.b16 %v1223, %v1215
        %v1456 = vpack.c.b16 %v1224, %v1216
        %v1457 = vpack.c.b16 %v1225, %v1217
        %v1458 = vpack.c.b16 %v1226, %v1218
        %v1459 = vpack.c.b16 %v1227, %v1219
        %v1460 = vpack.c.b16 %v1228, %v1220
        %v1461 = vpack.c.b16 %v1237, %v1229
        %v1462 = vpack.c.b16 %v1238, %v1230
        %v1463 = vpack.c.b16 %v1239, %v1231
        %v1464 = vpack.c.b16 %v1240, %v1232
        %v1465 = vpack.c.b16 %v1241, %v1233
        %v1466 = vpack.c.b16 %v1242, %v1234
        %v1467 = vpack.c.b16 %v1243, %v1235
        %v1468 = vpack.c.b16 %v1244, %v1236
        %v1469 = vpack.c.b16 %v1253, %v1245
        %v1470 = vpack.c.b16 %v1254, %v1246
        %v1471 = vpack.c.b16 %v1255, %v1247
        %v1472 = vpack.c.b16 %v1256, %v1248
        %v1473 = vpack.c.b16 %v1257, %v1249
        %v1474 = vpack.c.b16 %v1258, %v1250
        %v1475 = vpack.c.b16 %v1259, %v1251
        %v1476 = vpack.c.b16 %v1260, %v1252
        %v1477 = vpack.c.b16 %v1269, %v1261
        %v1478 = vpack.c.b16 %v1270, %v1262
        %v1479 = vpack.c.b16 %v1271, %v1263
        %v1480 = vpack.c.b16 %v1272, %v1264
        %v1481 = vpack.c.b16 %v1273, %v1265
        %v1482 = vpack.c.b16 %v1274, %v1266
        %v1483 = vpack.c.b16 %v1275, %v1267
        %v1484 = vpack.c.b16 %v1276, %v1268
        %v1485 = vpack.c.b16 %v1285, %v1277
        %v1486 = vpack.c.b16 %v1286, %v1278
        %v1487 = vpack.c.b16 %v1287, %v1279
        %v1488 = vpack.c.b16 %v1288, %v1280
        %v1489 = vpack.c.b16 %v1289, %v1281
        %v1490 = vpack.c.b16 %v1290, %v1282
        %v1491 = vpack.c.b16 %v1291, %v1283
        %v1492 = vpack.c.b16 %v1292, %v1284
        %v1493 = vpack.c.b16 %v1301, %v1293
        %v1494 = vpack.c.b16 %v1302, %v1294
        %v1495 = vpack.c.b16 %v1303, %v1295
        %v1496 = vpack.c.b16 %v1304, %v1296
        %v1497 = vpack.c.b16 %v1305, %v1297
        %v1498 = vpack.c.b16 %v1306, %v1298
        %v1499 = vpack.c.b16 %v1307, %v1299
        %v1500 = vpack.c.b16 %v1308, %v1300
        %1693 = vmatpush.bf16.msra.mxu0 %v1365
        %1694 = vmatpush.bf16.msra.mxu0 %v1357
        %1695 = vmatpush.bf16.msra.mxu0 %v1349
        %1696 = vmatpush.bf16.msra.mxu0 %v1341
        %1697 = vmatpush.bf16.msra.mxu0 %v1333
        %1698 = vmatpush.bf16.msra.mxu0 %v1325
        %1699 = vmatpush.bf16.msra.mxu0 %v1317
        %1700 = vmatpush.bf16.msra.mxu0 %v1309
        %1701 = vmatmul.bf16.gmra.mxu0 %v499
        %v1702 = vpop.f32.mrf.mxu0
        %v1703 = vadd.f32 %v717, %v1702
        %v1704 = vpop.f32.mrf.mxu0
        %v1705 = vadd.f32 %v717, %v1704
        %1706 = vmatmul.bf16.gmra.mxu0 %v502
        %v1707 = vpop.f32.mrf.mxu0
        %v1708 = vadd.f32 %v717, %v1707
        %v1709 = vpop.f32.mrf.mxu0
        %v1710 = vadd.f32 %v717, %v1709
        %1711 = vmatmul.bf16.gmra.mxu0 %v505
        %v1712 = vpop.f32.mrf.mxu0
        %v1713 = vadd.f32 %v717, %v1712
        %v1714 = vpop.f32.mrf.mxu0
        %v1715 = vadd.f32 %v717, %v1714
        %1716 = vmatmul.bf16.gmra.mxu0 %v508
        %v1717 = vpop.f32.mrf.mxu0
        %v1718 = vadd.f32 %v717, %v1717
        %v1719 = vpop.f32.mrf.mxu0
        %v1720 = vadd.f32 %v717, %v1719
        %1721 = vmatmul.bf16.gmra.mxu0 %v511
        %v1722 = vpop.f32.mrf.mxu0
        %v1723 = vadd.f32 %v717, %v1722
        %v1724 = vpop.f32.mrf.mxu0
        %v1725 = vadd.f32 %v717, %v1724
        %1726 = vmatmul.bf16.gmra.mxu0 %v514
        %v1727 = vpop.f32.mrf.mxu0
        %v1728 = vadd.f32 %v717, %v1727
        %v1729 = vpop.f32.mrf.mxu0
        %v1730 = vadd.f32 %v717, %v1729
        %1731 = vmatmul.bf16.gmra.mxu0 %v517
        %v1732 = vpop.f32.mrf.mxu0
        %v1733 = vadd.f32 %v717, %v1732
        %v1734 = vpop.f32.mrf.mxu0
        %v1735 = vadd.f32 %v717, %v1734
        %1736 = vmatmul.bf16.gmra.mxu0 %v520
        %v1737 = vpop.f32.mrf.mxu0
        %v1738 = vadd.f32 %v717, %v1737
        %v1739 = vpop.f32.mrf.mxu0
        %v1740 = vadd.f32 %v717, %v1739
        %1741 = vdwg.mxu0
        %1742 = vmatpush.bf16.msra.mxu0 %v1429
        %1743 = vmatpush.bf16.msra.mxu0 %v1421
        %1744 = vmatpush.bf16.msra.mxu0 %v1413
        %1745 = vmatpush.bf16.msra.mxu0 %v1405
        %1746 = vmatpush.bf16.msra.mxu0 %v1397
        %1747 = vmatpush.bf16.msra.mxu0 %v1389
        %1748 = vmatpush.bf16.msra.mxu0 %v1381
        %1749 = vmatpush.bf16.msra.mxu0 %v1373
        %1750 = vmatmul.bf16.gmra.mxu0 %v500
        %v1751 = vpop.f32.mrf.mxu0
        %v1752 = vadd.f32 %v1703, %v1751
        %v1753 = vpop.f32.mrf.mxu0
        %v1754 = vadd.f32 %v1705, %v1753
        %1755 = vmatmul.bf16.gmra.mxu0 %v503
        %v1756 = vpop.f32.mrf.mxu0
        %v1757 = vadd.f32 %v1708, %v1756
        %v1758 = vpop.f32.mrf.mxu0
        %v1759 = vadd.f32 %v1710, %v1758
        %1760 = vmatmul.bf16.gmra.mxu0 %v506
        %v1761 = vpop.f32.mrf.mxu0
        %v1762 = vadd.f32 %v1713, %v1761
        %v1763 = vpop.f32.mrf.mxu0
        %v1764 = vadd.f32 %v1715, %v1763
        %1765 = vmatmul.bf16.gmra.mxu0 %v509
        %v1766 = vpop.f32.mrf.mxu0
        %v1767 = vadd.f32 %v1718, %v1766
        %v1768 = vpop.f32.mrf.mxu0
        %v1769 = vadd.f32 %v1720, %v1768
        %1770 = vmatmul.bf16.gmra.mxu0 %v512
        %v1771 = vpop.f32.mrf.mxu0
        %v1772 = vadd.f32 %v1723, %v1771
        %v1773 = vpop.f32.mrf.mxu0
        %v1774 = vadd.f32 %v1725, %v1773
        %1775 = vmatmul.bf16.gmra.mxu0 %v515
        %v1776 = vpop.f32.mrf.mxu0
        %v1777 = vadd.f32 %v1728, %v1776
        %v1778 = vpop.f32.mrf.mxu0
        %v1779 = vadd.f32 %v1730, %v1778
        %1780 = vmatmul.bf16.gmra.mxu0 %v518
        %v1781 = vpop.f32.mrf.mxu0
        %v1782 = vadd.f32 %v1733, %v1781
        %v1783 = vpop.f32.mrf.mxu0
        %v1784 = vadd.f32 %v1735, %v1783
        %1785 = vmatmul.bf16.gmra.mxu0 %v521
        %v1786 = vpop.f32.mrf.mxu0
        %v1787 = vadd.f32 %v1738, %v1786
        %v1788 = vpop.f32.mrf.mxu0
        %v1789 = vadd.f32 %v1740, %v1788
        %1790 = vdwg.mxu0
        %1791 = vmatpush.bf16.msra.mxu0 %v1493
        %1792 = vmatpush.bf16.msra.mxu0 %v1485
        %1793 = vmatpush.bf16.msra.mxu0 %v1477
        %1794 = vmatpush.bf16.msra.mxu0 %v1469
        %1795 = vmatpush.bf16.msra.mxu0 %v1461
        %1796 = vmatpush.bf16.msra.mxu0 %v1453
        %1797 = vmatpush.bf16.msra.mxu0 %v1445
        %1798 = vmatpush.bf16.msra.mxu0 %v1437
        %1799 = vmatmul.bf16.gmra.mxu0 %v501
        %v1800 = vpop.f32.mrf.mxu0
        %v1801 = vadd.f32 %v1752, %v1800
        %v1802 = vpop.f32.mrf.mxu0
        %v1803 = vadd.f32 %v1754, %v1802
        %1804 = vmatmul.bf16.gmra.mxu0 %v504
        %v1805 = vpop.f32.mrf.mxu0
        %v1806 = vadd.f32 %v1757, %v1805
        %v1807 = vpop.f32.mrf.mxu0
        %v1808 = vadd.f32 %v1759, %v1807
        %1809 = vmatmul.bf16.gmra.mxu0 %v507
        %v1810 = vpop.f32.mrf.mxu0
        %v1811 = vadd.f32 %v1762, %v1810
        %v1812 = vpop.f32.mrf.mxu0
        %v1813 = vadd.f32 %v1764, %v1812
        %1814 = vmatmul.bf16.gmra.mxu0 %v510
        %v1815 = vpop.f32.mrf.mxu0
        %v1816 = vadd.f32 %v1767, %v1815
        %v1817 = vpop.f32.mrf.mxu0
        %v1818 = vadd.f32 %v1769, %v1817
        %1819 = vmatmul.bf16.gmra.mxu0 %v513
        %v1820 = vpop.f32.mrf.mxu0
        %v1821 = vadd.f32 %v1772, %v1820
        %v1822 = vpop.f32.mrf.mxu0
        %v1823 = vadd.f32 %v1774, %v1822
        %1824 = vmatmul.bf16.gmra.mxu0 %v516
        %v1825 = vpop.f32.mrf.mxu0
        %v1826 = vadd.f32 %v1777, %v1825
        %v1827 = vpop.f32.mrf.mxu0
        %v1828 = vadd.f32 %v1779, %v1827
        %1829 = vmatmul.bf16.gmra.mxu0 %v519
        %v1830 = vpop.f32.mrf.mxu0
        %v1831 = vadd.f32 %v1782, %v1830
        %v1832 = vpop.f32.mrf.mxu0
        %v1833 = vadd.f32 %v1784, %v1832
        %1834 = vmatmul.bf16.gmra.mxu0 %v522
        %v1835 = vpop.f32.mrf.mxu0
        %v1836 = vadd.f32 %v1787, %v1835
        %v1837 = vpop.f32.mrf.mxu0
        %v1838 = vadd.f32 %v1789, %v1837
        %1839 = vdwg.mxu0
        %1840 = vmatpush.bf16.msra.mxu0 %v1366
        %1841 = vmatpush.bf16.msra.mxu0 %v1358
        %1842 = vmatpush.bf16.msra.mxu0 %v1350
        %1843 = vmatpush.bf16.msra.mxu0 %v1342
        %1844 = vmatpush.bf16.msra.mxu0 %v1334
        %1845 = vmatpush.bf16.msra.mxu0 %v1326
        %1846 = vmatpush.bf16.msra.mxu0 %v1318
        %1847 = vmatpush.bf16.msra.mxu0 %v1310
        %1848 = vmatmul.bf16.gmra.mxu0 %v499
        %v1849 = vpop.f32.mrf.mxu0
        %v1850 = vadd.f32 %v718, %v1849
        %v1851 = vpop.f32.mrf.mxu0
        %v1852 = vadd.f32 %v718, %v1851
        %1853 = vmatmul.bf16.gmra.mxu0 %v502
        %v1854 = vpop.f32.mrf.mxu0
        %v1855 = vadd.f32 %v718, %v1854
        %v1856 = vpop.f32.mrf.mxu0
        %v1857 = vadd.f32 %v718, %v1856
        %1858 = vmatmul.bf16.gmra.mxu0 %v505
        %v1859 = vpop.f32.mrf.mxu0
        %v1860 = vadd.f32 %v718, %v1859
        %v1861 = vpop.f32.mrf.mxu0
        %v1862 = vadd.f32 %v718, %v1861
        %1863 = vmatmul.bf16.gmra.mxu0 %v508
        %v1864 = vpop.f32.mrf.mxu0
        %v1865 = vadd.f32 %v718, %v1864
        %v1866 = vpop.f32.mrf.mxu0
        %v1867 = vadd.f32 %v718, %v1866
        %1868 = vmatmul.bf16.gmra.mxu0 %v511
        %v1869 = vpop.f32.mrf.mxu0
        %v1870 = vadd.f32 %v718, %v1869
        %v1871 = vpop.f32.mrf.mxu0
        %v1872 = vadd.f32 %v718, %v1871
        %1873 = vmatmul.bf16.gmra.mxu0 %v514
        %v1874 = vpop.f32.mrf.mxu0
        %v1875 = vadd.f32 %v718, %v1874
        %v1876 = vpop.f32.mrf.mxu0
        %v1877 = vadd.f32 %v718, %v1876
        %1878 = vmatmul.bf16.gmra.mxu0 %v517
        %v1879 = vpop.f32.mrf.mxu0
        %v1880 = vadd.f32 %v718, %v1879
        %v1881 = vpop.f32.mrf.mxu0
        %v1882 = vadd.f32 %v718, %v1881
        %1883 = vmatmul.bf16.gmra.mxu0 %v520
        %v1884 = vpop.f32.mrf.mxu0
        %v1885 = vadd.f32 %v718, %v1884
        %v1886 = vpop.f32.mrf.mxu0
        %v1887 = vadd.f32 %v718, %v1886
        %1888 = vdwg.mxu0
        %1889 = vmatpush.bf16.msra.mxu0 %v1430
        %1890 = vmatpush.bf16.msra.mxu0 %v1422
        %1891 = vmatpush.bf16.msra.mxu0 %v1414
        %1892 = vmatpush.bf16.msra.mxu0 %v1406
        %1893 = vmatpush.bf16.msra.mxu0 %v1398
        %1894 = vmatpush.bf16.msra.mxu0 %v1390
        %1895 = vmatpush.bf16.msra.mxu0 %v1382
        %1896 = vmatpush.bf16.msra.mxu0 %v1374
        %1897 = vmatmul.bf16.gmra.mxu0 %v500
        %v1898 = vpop.f32.mrf.mxu0
        %v1899 = vadd.f32 %v1850, %v1898
        %v1900 = vpop.f32.mrf.mxu0
        %v1901 = vadd.f32 %v1852, %v1900
        %1902 = vmatmul.bf16.gmra.mxu0 %v503
        %v1903 = vpop.f32.mrf.mxu0
        %v1904 = vadd.f32 %v1855, %v1903
        %v1905 = vpop.f32.mrf.mxu0
        %v1906 = vadd.f32 %v1857, %v1905
        %1907 = vmatmul.bf16.gmra.mxu0 %v506
        %v1908 = vpop.f32.mrf.mxu0
        %v1909 = vadd.f32 %v1860, %v1908
        %v1910 = vpop.f32.mrf.mxu0
        %v1911 = vadd.f32 %v1862, %v1910
        %1912 = vmatmul.bf16.gmra.mxu0 %v509
        %v1913 = vpop.f32.mrf.mxu0
        %v1914 = vadd.f32 %v1865, %v1913
        %v1915 = vpop.f32.mrf.mxu0
        %v1916 = vadd.f32 %v1867, %v1915
        %1917 = vmatmul.bf16.gmra.mxu0 %v512
        %v1918 = vpop.f32.mrf.mxu0
        %v1919 = vadd.f32 %v1870, %v1918
        %v1920 = vpop.f32.mrf.mxu0
        %v1921 = vadd.f32 %v1872, %v1920
        %1922 = vmatmul.bf16.gmra.mxu0 %v515
        %v1923 = vpop.f32.mrf.mxu0
        %v1924 = vadd.f32 %v1875, %v1923
        %v1925 = vpop.f32.mrf.mxu0
        %v1926 = vadd.f32 %v1877, %v1925
        %1927 = vmatmul.bf16.gmra.mxu0 %v518
        %v1928 = vpop.f32.mrf.mxu0
        %v1929 = vadd.f32 %v1880, %v1928
        %v1930 = vpop.f32.mrf.mxu0
        %v1931 = vadd.f32 %v1882, %v1930
        %1932 = vmatmul.bf16.gmra.mxu0 %v521
        %v1933 = vpop.f32.mrf.mxu0
        %v1934 = vadd.f32 %v1885, %v1933
        %v1935 = vpop.f32.mrf.mxu0
        %v1936 = vadd.f32 %v1887, %v1935
        %1937 = vdwg.mxu0
        %1938 = vmatpush.bf16.msra.mxu0 %v1494
        %1939 = vmatpush.bf16.msra.mxu0 %v1486
        %1940 = vmatpush.bf16.msra.mxu0 %v1478
        %1941 = vmatpush.bf16.msra.mxu0 %v1470
        %1942 = vmatpush.bf16.msra.mxu0 %v1462
        %1943 = vmatpush.bf16.msra.mxu0 %v1454
        %1944 = vmatpush.bf16.msra.mxu0 %v1446
        %1945 = vmatpush.bf16.msra.mxu0 %v1438
        %1946 = vmatmul.bf16.gmra.mxu0 %v501
        %v1947 = vpop.f32.mrf.mxu0
        %v1948 = vadd.f32 %v1899, %v1947
        %v1949 = vpop.f32.mrf.mxu0
        %v1950 = vadd.f32 %v1901, %v1949
        %1951 = vmatmul.bf16.gmra.mxu0 %v504
        %v1952 = vpop.f32.mrf.mxu0
        %v1953 = vadd.f32 %v1904, %v1952
        %v1954 = vpop.f32.mrf.mxu0
        %v1955 = vadd.f32 %v1906, %v1954
        %1956 = vmatmul.bf16.gmra.mxu0 %v507
        %v1957 = vpop.f32.mrf.mxu0
        %v1958 = vadd.f32 %v1909, %v1957
        %v1959 = vpop.f32.mrf.mxu0
        %v1960 = vadd.f32 %v1911, %v1959
        %1961 = vmatmul.bf16.gmra.mxu0 %v510
        %v1962 = vpop.f32.mrf.mxu0
        %v1963 = vadd.f32 %v1914, %v1962
        %v1964 = vpop.f32.mrf.mxu0
        %v1965 = vadd.f32 %v1916, %v1964
        %1966 = vmatmul.bf16.gmra.mxu0 %v513
        %v1967 = vpop.f32.mrf.mxu0
        %v1968 = vadd.f32 %v1919, %v1967
        %v1969 = vpop.f32.mrf.mxu0
        %v1970 = vadd.f32 %v1921, %v1969
        %1971 = vmatmul.bf16.gmra.mxu0 %v516
        %v1972 = vpop.f32.mrf.mxu0
        %v1973 = vadd.f32 %v1924, %v1972
        %v1974 = vpop.f32.mrf.mxu0
        %v1975 = vadd.f32 %v1926, %v1974
        %1976 = vmatmul.bf16.gmra.mxu0 %v519
        %v1977 = vpop.f32.mrf.mxu0
        %v1978 = vadd.f32 %v1929, %v1977
        %v1979 = vpop.f32.mrf.mxu0
        %v1980 = vadd.f32 %v1931, %v1979
        %1981 = vmatmul.bf16.gmra.mxu0 %v522
        %v1982 = vpop.f32.mrf.mxu0
        %v1983 = vadd.f32 %v1934, %v1982
        %v1984 = vpop.f32.mrf.mxu0
        %v1985 = vadd.f32 %v1936, %v1984
        %1986 = vdwg.mxu0
        %1987 = vmatpush.bf16.msra.mxu0 %v1367
        %1988 = vmatpush.bf16.msra.mxu0 %v1359
        %1989 = vmatpush.bf16.msra.mxu0 %v1351
        %1990 = vmatpush.bf16.msra.mxu0 %v1343
        %1991 = vmatpush.bf16.msra.mxu0 %v1335
        %1992 = vmatpush.bf16.msra.mxu0 %v1327
        %1993 = vmatpush.bf16.msra.mxu0 %v1319
        %1994 = vmatpush.bf16.msra.mxu0 %v1311
        %1995 = vmatmul.bf16.gmra.mxu0 %v499
        %v1996 = vpop.f32.mrf.mxu0
        %v1997 = vadd.f32 %v719, %v1996
        %v1998 = vpop.f32.mrf.mxu0
        %v1999 = vadd.f32 %v719, %v1998
        %2000 = vmatmul.bf16.gmra.mxu0 %v502
        %v2001 = vpop.f32.mrf.mxu0
        %v2002 = vadd.f32 %v719, %v2001
        %v2003 = vpop.f32.mrf.mxu0
        %v2004 = vadd.f32 %v719, %v2003
        %2005 = vmatmul.bf16.gmra.mxu0 %v505
        %v2006 = vpop.f32.mrf.mxu0
        %v2007 = vadd.f32 %v719, %v2006
        %v2008 = vpop.f32.mrf.mxu0
        %v2009 = vadd.f32 %v719, %v2008
        %2010 = vmatmul.bf16.gmra.mxu0 %v508
        %v2011 = vpop.f32.mrf.mxu0
        %v2012 = vadd.f32 %v719, %v2011
        %v2013 = vpop.f32.mrf.mxu0
        %v2014 = vadd.f32 %v719, %v2013
        %2015 = vmatmul.bf16.gmra.mxu0 %v511
        %v2016 = vpop.f32.mrf.mxu0
        %v2017 = vadd.f32 %v719, %v2016
        %v2018 = vpop.f32.mrf.mxu0
        %v2019 = vadd.f32 %v719, %v2018
        %2020 = vmatmul.bf16.gmra.mxu0 %v514
        %v2021 = vpop.f32.mrf.mxu0
        %v2022 = vadd.f32 %v719, %v2021
        %v2023 = vpop.f32.mrf.mxu0
        %v2024 = vadd.f32 %v719, %v2023
        %2025 = vmatmul.bf16.gmra.mxu0 %v517
        %v2026 = vpop.f32.mrf.mxu0
        %v2027 = vadd.f32 %v719, %v2026
        %v2028 = vpop.f32.mrf.mxu0
        %v2029 = vadd.f32 %v719, %v2028
        %2030 = vmatmul.bf16.gmra.mxu0 %v520
        %v2031 = vpop.f32.mrf.mxu0
        %v2032 = vadd.f32 %v719, %v2031
        %v2033 = vpop.f32.mrf.mxu0
        %v2034 = vadd.f32 %v719, %v2033
        %2035 = vdwg.mxu0
        %2036 = vmatpush.bf16.msra.mxu0 %v1431
        %2037 = vmatpush.bf16.msra.mxu0 %v1423
        %2038 = vmatpush.bf16.msra.mxu0 %v1415
        %2039 = vmatpush.bf16.msra.mxu0 %v1407
        %2040 = vmatpush.bf16.msra.mxu0 %v1399
        %2041 = vmatpush.bf16.msra.mxu0 %v1391
        %2042 = vmatpush.bf16.msra.mxu0 %v1383
        %2043 = vmatpush.bf16.msra.mxu0 %v1375
        %2044 = vmatmul.bf16.gmra.mxu0 %v500
        %v2045 = vpop.f32.mrf.mxu0
        %v2046 = vadd.f32 %v1997, %v2045
        %v2047 = vpop.f32.mrf.mxu0
        %v2048 = vadd.f32 %v1999, %v2047
        %2049 = vmatmul.bf16.gmra.mxu0 %v503
        %v2050 = vpop.f32.mrf.mxu0
        %v2051 = vadd.f32 %v2002, %v2050
        %v2052 = vpop.f32.mrf.mxu0
        %v2053 = vadd.f32 %v2004, %v2052
        %2054 = vmatmul.bf16.gmra.mxu0 %v506
        %v2055 = vpop.f32.mrf.mxu0
        %v2056 = vadd.f32 %v2007, %v2055
        %v2057 = vpop.f32.mrf.mxu0
        %v2058 = vadd.f32 %v2009, %v2057
        %2059 = vmatmul.bf16.gmra.mxu0 %v509
        %v2060 = vpop.f32.mrf.mxu0
        %v2061 = vadd.f32 %v2012, %v2060
        %v2062 = vpop.f32.mrf.mxu0
        %v2063 = vadd.f32 %v2014, %v2062
        %2064 = vmatmul.bf16.gmra.mxu0 %v512
        %v2065 = vpop.f32.mrf.mxu0
        %v2066 = vadd.f32 %v2017, %v2065
        %v2067 = vpop.f32.mrf.mxu0
        %v2068 = vadd.f32 %v2019, %v2067
        %2069 = vmatmul.bf16.gmra.mxu0 %v515
        %v2070 = vpop.f32.mrf.mxu0
        %v2071 = vadd.f32 %v2022, %v2070
        %v2072 = vpop.f32.mrf.mxu0
        %v2073 = vadd.f32 %v2024, %v2072
        %2074 = vmatmul.bf16.gmra.mxu0 %v518
        %v2075 = vpop.f32.mrf.mxu0
        %v2076 = vadd.f32 %v2027, %v2075
        %v2077 = vpop.f32.mrf.mxu0
        %v2078 = vadd.f32 %v2029, %v2077
        %2079 = vmatmul.bf16.gmra.mxu0 %v521
        %v2080 = vpop.f32.mrf.mxu0
        %v2081 = vadd.f32 %v2032, %v2080
        %v2082 = vpop.f32.mrf.mxu0
        %v2083 = vadd.f32 %v2034, %v2082
        %2084 = vdwg.mxu0
        %2085 = vmatpush.bf16.msra.mxu0 %v1495
        %2086 = vmatpush.bf16.msra.mxu0 %v1487
        %2087 = vmatpush.bf16.msra.mxu0 %v1479
        %2088 = vmatpush.bf16.msra.mxu0 %v1471
        %2089 = vmatpush.bf16.msra.mxu0 %v1463
        %2090 = vmatpush.bf16.msra.mxu0 %v1455
        %2091 = vmatpush.bf16.msra.mxu0 %v1447
        %2092 = vmatpush.bf16.msra.mxu0 %v1439
        %2093 = vmatmul.bf16.gmra.mxu0 %v501
        %v2094 = vpop.f32.mrf.mxu0
        %v2095 = vadd.f32 %v2046, %v2094
        %v2096 = vpop.f32.mrf.mxu0
        %v2097 = vadd.f32 %v2048, %v2096
        %2098 = vmatmul.bf16.gmra.mxu0 %v504
        %v2099 = vpop.f32.mrf.mxu0
        %v2100 = vadd.f32 %v2051, %v2099
        %v2101 = vpop.f32.mrf.mxu0
        %v2102 = vadd.f32 %v2053, %v2101
        %2103 = vmatmul.bf16.gmra.mxu0 %v507
        %v2104 = vpop.f32.mrf.mxu0
        %v2105 = vadd.f32 %v2056, %v2104
        %v2106 = vpop.f32.mrf.mxu0
        %v2107 = vadd.f32 %v2058, %v2106
        %2108 = vmatmul.bf16.gmra.mxu0 %v510
        %v2109 = vpop.f32.mrf.mxu0
        %v2110 = vadd.f32 %v2061, %v2109
        %v2111 = vpop.f32.mrf.mxu0
        %v2112 = vadd.f32 %v2063, %v2111
        %2113 = vmatmul.bf16.gmra.mxu0 %v513
        %v2114 = vpop.f32.mrf.mxu0
        %v2115 = vadd.f32 %v2066, %v2114
        %v2116 = vpop.f32.mrf.mxu0
        %v2117 = vadd.f32 %v2068, %v2116
        %2118 = vmatmul.bf16.gmra.mxu0 %v516
        %v2119 = vpop.f32.mrf.mxu0
        %v2120 = vadd.f32 %v2071, %v2119
        %v2121 = vpop.f32.mrf.mxu0
        %v2122 = vadd.f32 %v2073, %v2121
        %2123 = vmatmul.bf16.gmra.mxu0 %v519
        %v2124 = vpop.f32.mrf.mxu0
        %v2125 = vadd.f32 %v2076, %v2124
        %v2126 = vpop.f32.mrf.mxu0
        %v2127 = vadd.f32 %v2078, %v2126
        %2128 = vmatmul.bf16.gmra.mxu0 %v522
        %v2129 = vpop.f32.mrf.mxu0
        %v2130 = vadd.f32 %v2081, %v2129
        %v2131 = vpop.f32.mrf.mxu0
        %v2132 = vadd.f32 %v2083, %v2131
        %2133 = vdwg.mxu0
        %2134 = vmatpush.bf16.msra.mxu0 %v1368
        %2135 = vmatpush.bf16.msra.mxu0 %v1360
        %2136 = vmatpush.bf16.msra.mxu0 %v1352
        %2137 = vmatpush.bf16.msra.mxu0 %v1344
        %2138 = vmatpush.bf16.msra.mxu0 %v1336
        %2139 = vmatpush.bf16.msra.mxu0 %v1328
        %2140 = vmatpush.bf16.msra.mxu0 %v1320
        %2141 = vmatpush.bf16.msra.mxu0 %v1312
        %2142 = vmatmul.bf16.gmra.mxu0 %v499
        %v2143 = vpop.f32.mrf.mxu0
        %v2144 = vadd.f32 %v720, %v2143
        %v2145 = vpop.f32.mrf.mxu0
        %v2146 = vadd.f32 %v720, %v2145
        %2147 = vmatmul.bf16.gmra.mxu0 %v502
        %v2148 = vpop.f32.mrf.mxu0
        %v2149 = vadd.f32 %v720, %v2148
        %v2150 = vpop.f32.mrf.mxu0
        %v2151 = vadd.f32 %v720, %v2150
        %2152 = vmatmul.bf16.gmra.mxu0 %v505
        %v2153 = vpop.f32.mrf.mxu0
        %v2154 = vadd.f32 %v720, %v2153
        %v2155 = vpop.f32.mrf.mxu0
        %v2156 = vadd.f32 %v720, %v2155
        %2157 = vmatmul.bf16.gmra.mxu0 %v508
        %v2158 = vpop.f32.mrf.mxu0
        %v2159 = vadd.f32 %v720, %v2158
        %v2160 = vpop.f32.mrf.mxu0
        %v2161 = vadd.f32 %v720, %v2160
        %2162 = vmatmul.bf16.gmra.mxu0 %v511
        %v2163 = vpop.f32.mrf.mxu0
        %v2164 = vadd.f32 %v720, %v2163
        %v2165 = vpop.f32.mrf.mxu0
        %v2166 = vadd.f32 %v720, %v2165
        %2167 = vmatmul.bf16.gmra.mxu0 %v514
        %v2168 = vpop.f32.mrf.mxu0
        %v2169 = vadd.f32 %v720, %v2168
        %v2170 = vpop.f32.mrf.mxu0
        %v2171 = vadd.f32 %v720, %v2170
        %2172 = vmatmul.bf16.gmra.mxu0 %v517
        %v2173 = vpop.f32.mrf.mxu0
        %v2174 = vadd.f32 %v720, %v2173
        %v2175 = vpop.f32.mrf.mxu0
        %v2176 = vadd.f32 %v720, %v2175
        %2177 = vmatmul.bf16.gmra.mxu0 %v520
        %v2178 = vpop.f32.mrf.mxu0
        %v2179 = vadd.f32 %v720, %v2178
        %v2180 = vpop.f32.mrf.mxu0
        %v2181 = vadd.f32 %v720, %v2180
        %2182 = vdwg.mxu0
        %2183 = vmatpush.bf16.msra.mxu0 %v1432
        %2184 = vmatpush.bf16.msra.mxu0 %v1424
        %2185 = vmatpush.bf16.msra.mxu0 %v1416
        %2186 = vmatpush.bf16.msra.mxu0 %v1408
        %2187 = vmatpush.bf16.msra.mxu0 %v1400
        %2188 = vmatpush.bf16.msra.mxu0 %v1392
        %2189 = vmatpush.bf16.msra.mxu0 %v1384
        %2190 = vmatpush.bf16.msra.mxu0 %v1376
        %2191 = vmatmul.bf16.gmra.mxu0 %v500
        %v2192 = vpop.f32.mrf.mxu0
        %v2193 = vadd.f32 %v2144, %v2192
        %v2194 = vpop.f32.mrf.mxu0
        %v2195 = vadd.f32 %v2146, %v2194
        %2196 = vmatmul.bf16.gmra.mxu0 %v503
        %v2197 = vpop.f32.mrf.mxu0
        %v2198 = vadd.f32 %v2149, %v2197
        %v2199 = vpop.f32.mrf.mxu0
        %v2200 = vadd.f32 %v2151, %v2199
        %2201 = vmatmul.bf16.gmra.mxu0 %v506
        %v2202 = vpop.f32.mrf.mxu0
        %v2203 = vadd.f32 %v2154, %v2202
        %v2204 = vpop.f32.mrf.mxu0
        %v2205 = vadd.f32 %v2156, %v2204
        %2206 = vmatmul.bf16.gmra.mxu0 %v509
        %v2207 = vpop.f32.mrf.mxu0
        %v2208 = vadd.f32 %v2159, %v2207
        %v2209 = vpop.f32.mrf.mxu0
        %v2210 = vadd.f32 %v2161, %v2209
        %2211 = vmatmul.bf16.gmra.mxu0 %v512
        %v2212 = vpop.f32.mrf.mxu0
        %v2213 = vadd.f32 %v2164, %v2212
        %v2214 = vpop.f32.mrf.mxu0
        %v2215 = vadd.f32 %v2166, %v2214
        %2216 = vmatmul.bf16.gmra.mxu0 %v515
        %v2217 = vpop.f32.mrf.mxu0
        %v2218 = vadd.f32 %v2169, %v2217
        %v2219 = vpop.f32.mrf.mxu0
        %v2220 = vadd.f32 %v2171, %v2219
        %2221 = vmatmul.bf16.gmra.mxu0 %v518
        %v2222 = vpop.f32.mrf.mxu0
        %v2223 = vadd.f32 %v2174, %v2222
        %v2224 = vpop.f32.mrf.mxu0
        %v2225 = vadd.f32 %v2176, %v2224
        %2226 = vmatmul.bf16.gmra.mxu0 %v521
        %v2227 = vpop.f32.mrf.mxu0
        %v2228 = vadd.f32 %v2179, %v2227
        %v2229 = vpop.f32.mrf.mxu0
        %v2230 = vadd.f32 %v2181, %v2229
        %2231 = vdwg.mxu0
        %2232 = vmatpush.bf16.msra.mxu0 %v1496
        %2233 = vmatpush.bf16.msra.mxu0 %v1488
        %2234 = vmatpush.bf16.msra.mxu0 %v1480
        %2235 = vmatpush.bf16.msra.mxu0 %v1472
        %2236 = vmatpush.bf16.msra.mxu0 %v1464
        %2237 = vmatpush.bf16.msra.mxu0 %v1456
        %2238 = vmatpush.bf16.msra.mxu0 %v1448
        %2239 = vmatpush.bf16.msra.mxu0 %v1440
        %2240 = vmatmul.bf16.gmra.mxu0 %v501
        %v2241 = vpop.f32.mrf.mxu0
        %v2242 = vadd.f32 %v2193, %v2241
        %v2243 = vpop.f32.mrf.mxu0
        %v2244 = vadd.f32 %v2195, %v2243
        %2245 = vmatmul.bf16.gmra.mxu0 %v504
        %v2246 = vpop.f32.mrf.mxu0
        %v2247 = vadd.f32 %v2198, %v2246
        %v2248 = vpop.f32.mrf.mxu0
        %v2249 = vadd.f32 %v2200, %v2248
        %2250 = vmatmul.bf16.gmra.mxu0 %v507
        %v2251 = vpop.f32.mrf.mxu0
        %v2252 = vadd.f32 %v2203, %v2251
        %v2253 = vpop.f32.mrf.mxu0
        %v2254 = vadd.f32 %v2205, %v2253
        %2255 = vmatmul.bf16.gmra.mxu0 %v510
        %v2256 = vpop.f32.mrf.mxu0
        %v2257 = vadd.f32 %v2208, %v2256
        %v2258 = vpop.f32.mrf.mxu0
        %v2259 = vadd.f32 %v2210, %v2258
        %2260 = vmatmul.bf16.gmra.mxu0 %v513
        %v2261 = vpop.f32.mrf.mxu0
        %v2262 = vadd.f32 %v2213, %v2261
        %v2263 = vpop.f32.mrf.mxu0
        %v2264 = vadd.f32 %v2215, %v2263
        %2265 = vmatmul.bf16.gmra.mxu0 %v516
        %v2266 = vpop.f32.mrf.mxu0
        %v2267 = vadd.f32 %v2218, %v2266
        %v2268 = vpop.f32.mrf.mxu0
        %v2269 = vadd.f32 %v2220, %v2268
        %2270 = vmatmul.bf16.gmra.mxu0 %v519
        %v2271 = vpop.f32.mrf.mxu0
        %v2272 = vadd.f32 %v2223, %v2271
        %v2273 = vpop.f32.mrf.mxu0
        %v2274 = vadd.f32 %v2225, %v2273
        %2275 = vmatmul.bf16.gmra.mxu0 %v522
        %v2276 = vpop.f32.mrf.mxu0
        %v2277 = vadd.f32 %v2228, %v2276
        %v2278 = vpop.f32.mrf.mxu0
        %v2279 = vadd.f32 %v2230, %v2278
        %2280 = vdwg.mxu0
        %2281 = vmatpush.bf16.msra.mxu0 %v1369
        %2282 = vmatpush.bf16.msra.mxu0 %v1361
        %2283 = vmatpush.bf16.msra.mxu0 %v1353
        %2284 = vmatpush.bf16.msra.mxu0 %v1345
        %2285 = vmatpush.bf16.msra.mxu0 %v1337
        %2286 = vmatpush.bf16.msra.mxu0 %v1329
        %2287 = vmatpush.bf16.msra.mxu0 %v1321
        %2288 = vmatpush.bf16.msra.mxu0 %v1313
        %2289 = vmatmul.bf16.gmra.mxu0 %v499
        %v2290 = vpop.f32.mrf.mxu0
        %v2291 = vadd.f32 %v721, %v2290
        %v2292 = vpop.f32.mrf.mxu0
        %v2293 = vadd.f32 %v721, %v2292
        %2294 = vmatmul.bf16.gmra.mxu0 %v502
        %v2295 = vpop.f32.mrf.mxu0
        %v2296 = vadd.f32 %v721, %v2295
        %v2297 = vpop.f32.mrf.mxu0
        %v2298 = vadd.f32 %v721, %v2297
        %2299 = vmatmul.bf16.gmra.mxu0 %v505
        %v2300 = vpop.f32.mrf.mxu0
        %v2301 = vadd.f32 %v721, %v2300
        %v2302 = vpop.f32.mrf.mxu0
        %v2303 = vadd.f32 %v721, %v2302
        %2304 = vmatmul.bf16.gmra.mxu0 %v508
        %v2305 = vpop.f32.mrf.mxu0
        %v2306 = vadd.f32 %v721, %v2305
        %v2307 = vpop.f32.mrf.mxu0
        %v2308 = vadd.f32 %v721, %v2307
        %2309 = vmatmul.bf16.gmra.mxu0 %v511
        %v2310 = vpop.f32.mrf.mxu0
        %v2311 = vadd.f32 %v721, %v2310
        %v2312 = vpop.f32.mrf.mxu0
        %v2313 = vadd.f32 %v721, %v2312
        %2314 = vmatmul.bf16.gmra.mxu0 %v514
        %v2315 = vpop.f32.mrf.mxu0
        %v2316 = vadd.f32 %v721, %v2315
        %v2317 = vpop.f32.mrf.mxu0
        %v2318 = vadd.f32 %v721, %v2317
        %2319 = vmatmul.bf16.gmra.mxu0 %v517
        %v2320 = vpop.f32.mrf.mxu0
        %v2321 = vadd.f32 %v721, %v2320
        %v2322 = vpop.f32.mrf.mxu0
        %v2323 = vadd.f32 %v721, %v2322
        %2324 = vmatmul.bf16.gmra.mxu0 %v520
        %v2325 = vpop.f32.mrf.mxu0
        %v2326 = vadd.f32 %v721, %v2325
        %v2327 = vpop.f32.mrf.mxu0
        %v2328 = vadd.f32 %v721, %v2327
        %2329 = vdwg.mxu0
        %2330 = vmatpush.bf16.msra.mxu0 %v1433
        %2331 = vmatpush.bf16.msra.mxu0 %v1425
        %2332 = vmatpush.bf16.msra.mxu0 %v1417
        %2333 = vmatpush.bf16.msra.mxu0 %v1409
        %2334 = vmatpush.bf16.msra.mxu0 %v1401
        %2335 = vmatpush.bf16.msra.mxu0 %v1393
        %2336 = vmatpush.bf16.msra.mxu0 %v1385
        %2337 = vmatpush.bf16.msra.mxu0 %v1377
        %2338 = vmatmul.bf16.gmra.mxu0 %v500
        %v2339 = vpop.f32.mrf.mxu0
        %v2340 = vadd.f32 %v2291, %v2339
        %v2341 = vpop.f32.mrf.mxu0
        %v2342 = vadd.f32 %v2293, %v2341
        %2343 = vmatmul.bf16.gmra.mxu0 %v503
        %v2344 = vpop.f32.mrf.mxu0
        %v2345 = vadd.f32 %v2296, %v2344
        %v2346 = vpop.f32.mrf.mxu0
        %v2347 = vadd.f32 %v2298, %v2346
        %2348 = vmatmul.bf16.gmra.mxu0 %v506
        %v2349 = vpop.f32.mrf.mxu0
        %v2350 = vadd.f32 %v2301, %v2349
        %v2351 = vpop.f32.mrf.mxu0
        %v2352 = vadd.f32 %v2303, %v2351
        %2353 = vmatmul.bf16.gmra.mxu0 %v509
        %v2354 = vpop.f32.mrf.mxu0
        %v2355 = vadd.f32 %v2306, %v2354
        %v2356 = vpop.f32.mrf.mxu0
        %v2357 = vadd.f32 %v2308, %v2356
        %2358 = vmatmul.bf16.gmra.mxu0 %v512
        %v2359 = vpop.f32.mrf.mxu0
        %v2360 = vadd.f32 %v2311, %v2359
        %v2361 = vpop.f32.mrf.mxu0
        %v2362 = vadd.f32 %v2313, %v2361
        %2363 = vmatmul.bf16.gmra.mxu0 %v515
        %v2364 = vpop.f32.mrf.mxu0
        %v2365 = vadd.f32 %v2316, %v2364
        %v2366 = vpop.f32.mrf.mxu0
        %v2367 = vadd.f32 %v2318, %v2366
        %2368 = vmatmul.bf16.gmra.mxu0 %v518
        %v2369 = vpop.f32.mrf.mxu0
        %v2370 = vadd.f32 %v2321, %v2369
        %v2371 = vpop.f32.mrf.mxu0
        %v2372 = vadd.f32 %v2323, %v2371
        %2373 = vmatmul.bf16.gmra.mxu0 %v521
        %v2374 = vpop.f32.mrf.mxu0
        %v2375 = vadd.f32 %v2326, %v2374
        %v2376 = vpop.f32.mrf.mxu0
        %v2377 = vadd.f32 %v2328, %v2376
        %2378 = vdwg.mxu0
        %2379 = vmatpush.bf16.msra.mxu0 %v1497
        %2380 = vmatpush.bf16.msra.mxu0 %v1489
        %2381 = vmatpush.bf16.msra.mxu0 %v1481
        %2382 = vmatpush.bf16.msra.mxu0 %v1473
        %2383 = vmatpush.bf16.msra.mxu0 %v1465
        %2384 = vmatpush.bf16.msra.mxu0 %v1457
        %2385 = vmatpush.bf16.msra.mxu0 %v1449
        %2386 = vmatpush.bf16.msra.mxu0 %v1441
        %2387 = vmatmul.bf16.gmra.mxu0 %v501
        %v2388 = vpop.f32.mrf.mxu0
        %v2389 = vadd.f32 %v2340, %v2388
        %v2390 = vpop.f32.mrf.mxu0
        %v2391 = vadd.f32 %v2342, %v2390
        %2392 = vmatmul.bf16.gmra.mxu0 %v504
        %v2393 = vpop.f32.mrf.mxu0
        %v2394 = vadd.f32 %v2345, %v2393
        %v2395 = vpop.f32.mrf.mxu0
        %v2396 = vadd.f32 %v2347, %v2395
        %2397 = vmatmul.bf16.gmra.mxu0 %v507
        %v2398 = vpop.f32.mrf.mxu0
        %v2399 = vadd.f32 %v2350, %v2398
        %v2400 = vpop.f32.mrf.mxu0
        %v2401 = vadd.f32 %v2352, %v2400
        %2402 = vmatmul.bf16.gmra.mxu0 %v510
        %v2403 = vpop.f32.mrf.mxu0
        %v2404 = vadd.f32 %v2355, %v2403
        %v2405 = vpop.f32.mrf.mxu0
        %v2406 = vadd.f32 %v2357, %v2405
        %2407 = vmatmul.bf16.gmra.mxu0 %v513
        %v2408 = vpop.f32.mrf.mxu0
        %v2409 = vadd.f32 %v2360, %v2408
        %v2410 = vpop.f32.mrf.mxu0
        %v2411 = vadd.f32 %v2362, %v2410
        %2412 = vmatmul.bf16.gmra.mxu0 %v516
        %v2413 = vpop.f32.mrf.mxu0
        %v2414 = vadd.f32 %v2365, %v2413
        %v2415 = vpop.f32.mrf.mxu0
        %v2416 = vadd.f32 %v2367, %v2415
        %2417 = vmatmul.bf16.gmra.mxu0 %v519
        %v2418 = vpop.f32.mrf.mxu0
        %v2419 = vadd.f32 %v2370, %v2418
        %v2420 = vpop.f32.mrf.mxu0
        %v2421 = vadd.f32 %v2372, %v2420
        %2422 = vmatmul.bf16.gmra.mxu0 %v522
        %v2423 = vpop.f32.mrf.mxu0
        %v2424 = vadd.f32 %v2375, %v2423
        %v2425 = vpop.f32.mrf.mxu0
        %v2426 = vadd.f32 %v2377, %v2425
        %2427 = vdwg.mxu0
        %2428 = vmatpush.bf16.msra.mxu0 %v1370
        %2429 = vmatpush.bf16.msra.mxu0 %v1362
        %2430 = vmatpush.bf16.msra.mxu0 %v1354
        %2431 = vmatpush.bf16.msra.mxu0 %v1346
        %2432 = vmatpush.bf16.msra.mxu0 %v1338
        %2433 = vmatpush.bf16.msra.mxu0 %v1330
        %2434 = vmatpush.bf16.msra.mxu0 %v1322
        %2435 = vmatpush.bf16.msra.mxu0 %v1314
        %2436 = vmatmul.bf16.gmra.mxu0 %v499
        %v2437 = vpop.f32.mrf.mxu0
        %v2438 = vadd.f32 %v722, %v2437
        %v2439 = vpop.f32.mrf.mxu0
        %v2440 = vadd.f32 %v722, %v2439
        %2441 = vmatmul.bf16.gmra.mxu0 %v502
        %v2442 = vpop.f32.mrf.mxu0
        %v2443 = vadd.f32 %v722, %v2442
        %v2444 = vpop.f32.mrf.mxu0
        %v2445 = vadd.f32 %v722, %v2444
        %2446 = vmatmul.bf16.gmra.mxu0 %v505
        %v2447 = vpop.f32.mrf.mxu0
        %v2448 = vadd.f32 %v722, %v2447
        %v2449 = vpop.f32.mrf.mxu0
        %v2450 = vadd.f32 %v722, %v2449
        %2451 = vmatmul.bf16.gmra.mxu0 %v508
        %v2452 = vpop.f32.mrf.mxu0
        %v2453 = vadd.f32 %v722, %v2452
        %v2454 = vpop.f32.mrf.mxu0
        %v2455 = vadd.f32 %v722, %v2454
        %2456 = vmatmul.bf16.gmra.mxu0 %v511
        %v2457 = vpop.f32.mrf.mxu0
        %v2458 = vadd.f32 %v722, %v2457
        %v2459 = vpop.f32.mrf.mxu0
        %v2460 = vadd.f32 %v722, %v2459
        %2461 = vmatmul.bf16.gmra.mxu0 %v514
        %v2462 = vpop.f32.mrf.mxu0
        %v2463 = vadd.f32 %v722, %v2462
        %v2464 = vpop.f32.mrf.mxu0
        %v2465 = vadd.f32 %v722, %v2464
        %2466 = vmatmul.bf16.gmra.mxu0 %v517
        %v2467 = vpop.f32.mrf.mxu0
        %v2468 = vadd.f32 %v722, %v2467
        %v2469 = vpop.f32.mrf.mxu0
        %v2470 = vadd.f32 %v722, %v2469
        %2471 = vmatmul.bf16.gmra.mxu0 %v520
        %v2472 = vpop.f32.mrf.mxu0
        %v2473 = vadd.f32 %v722, %v2472
        %v2474 = vpop.f32.mrf.mxu0
        %v2475 = vadd.f32 %v722, %v2474
        %2476 = vdwg.mxu0
        %2477 = vmatpush.bf16.msra.mxu0 %v1434
        %2478 = vmatpush.bf16.msra.mxu0 %v1426
        %2479 = vmatpush.bf16.msra.mxu0 %v1418
        %2480 = vmatpush.bf16.msra.mxu0 %v1410
        %2481 = vmatpush.bf16.msra.mxu0 %v1402
        %2482 = vmatpush.bf16.msra.mxu0 %v1394
        %2483 = vmatpush.bf16.msra.mxu0 %v1386
        %2484 = vmatpush.bf16.msra.mxu0 %v1378
        %2485 = vmatmul.bf16.gmra.mxu0 %v500
        %v2486 = vpop.f32.mrf.mxu0
        %v2487 = vadd.f32 %v2438, %v2486
        %v2488 = vpop.f32.mrf.mxu0
        %v2489 = vadd.f32 %v2440, %v2488
        %2490 = vmatmul.bf16.gmra.mxu0 %v503
        %v2491 = vpop.f32.mrf.mxu0
        %v2492 = vadd.f32 %v2443, %v2491
        %v2493 = vpop.f32.mrf.mxu0
        %v2494 = vadd.f32 %v2445, %v2493
        %2495 = vmatmul.bf16.gmra.mxu0 %v506
        %v2496 = vpop.f32.mrf.mxu0
        %v2497 = vadd.f32 %v2448, %v2496
        %v2498 = vpop.f32.mrf.mxu0
        %v2499 = vadd.f32 %v2450, %v2498
        %2500 = vmatmul.bf16.gmra.mxu0 %v509
        %v2501 = vpop.f32.mrf.mxu0
        %v2502 = vadd.f32 %v2453, %v2501
        %v2503 = vpop.f32.mrf.mxu0
        %v2504 = vadd.f32 %v2455, %v2503
        %2505 = vmatmul.bf16.gmra.mxu0 %v512
        %v2506 = vpop.f32.mrf.mxu0
        %v2507 = vadd.f32 %v2458, %v2506
        %v2508 = vpop.f32.mrf.mxu0
        %v2509 = vadd.f32 %v2460, %v2508
        %2510 = vmatmul.bf16.gmra.mxu0 %v515
        %v2511 = vpop.f32.mrf.mxu0
        %v2512 = vadd.f32 %v2463, %v2511
        %v2513 = vpop.f32.mrf.mxu0
        %v2514 = vadd.f32 %v2465, %v2513
        %2515 = vmatmul.bf16.gmra.mxu0 %v518
        %v2516 = vpop.f32.mrf.mxu0
        %v2517 = vadd.f32 %v2468, %v2516
        %v2518 = vpop.f32.mrf.mxu0
        %v2519 = vadd.f32 %v2470, %v2518
        %2520 = vmatmul.bf16.gmra.mxu0 %v521
        %v2521 = vpop.f32.mrf.mxu0
        %v2522 = vadd.f32 %v2473, %v2521
        %v2523 = vpop.f32.mrf.mxu0
        %v2524 = vadd.f32 %v2475, %v2523
        %2525 = vdwg.mxu0
        %2526 = vmatpush.bf16.msra.mxu0 %v1498
        %2527 = vmatpush.bf16.msra.mxu0 %v1490
        %2528 = vmatpush.bf16.msra.mxu0 %v1482
        %2529 = vmatpush.bf16.msra.mxu0 %v1474
        %2530 = vmatpush.bf16.msra.mxu0 %v1466
        %2531 = vmatpush.bf16.msra.mxu0 %v1458
        %2532 = vmatpush.bf16.msra.mxu0 %v1450
        %2533 = vmatpush.bf16.msra.mxu0 %v1442
        %2534 = vmatmul.bf16.gmra.mxu0 %v501
        %v2535 = vpop.f32.mrf.mxu0
        %v2536 = vadd.f32 %v2487, %v2535
        %v2537 = vpop.f32.mrf.mxu0
        %v2538 = vadd.f32 %v2489, %v2537
        %2539 = vmatmul.bf16.gmra.mxu0 %v504
        %v2540 = vpop.f32.mrf.mxu0
        %v2541 = vadd.f32 %v2492, %v2540
        %v2542 = vpop.f32.mrf.mxu0
        %v2543 = vadd.f32 %v2494, %v2542
        %2544 = vmatmul.bf16.gmra.mxu0 %v507
        %v2545 = vpop.f32.mrf.mxu0
        %v2546 = vadd.f32 %v2497, %v2545
        %v2547 = vpop.f32.mrf.mxu0
        %v2548 = vadd.f32 %v2499, %v2547
        %2549 = vmatmul.bf16.gmra.mxu0 %v510
        %v2550 = vpop.f32.mrf.mxu0
        %v2551 = vadd.f32 %v2502, %v2550
        %v2552 = vpop.f32.mrf.mxu0
        %v2553 = vadd.f32 %v2504, %v2552
        %2554 = vmatmul.bf16.gmra.mxu0 %v513
        %v2555 = vpop.f32.mrf.mxu0
        %v2556 = vadd.f32 %v2507, %v2555
        %v2557 = vpop.f32.mrf.mxu0
        %v2558 = vadd.f32 %v2509, %v2557
        %2559 = vmatmul.bf16.gmra.mxu0 %v516
        %v2560 = vpop.f32.mrf.mxu0
        %v2561 = vadd.f32 %v2512, %v2560
        %v2562 = vpop.f32.mrf.mxu0
        %v2563 = vadd.f32 %v2514, %v2562
        %2564 = vmatmul.bf16.gmra.mxu0 %v519
        %v2565 = vpop.f32.mrf.mxu0
        %v2566 = vadd.f32 %v2517, %v2565
        %v2567 = vpop.f32.mrf.mxu0
        %v2568 = vadd.f32 %v2519, %v2567
        %2569 = vmatmul.bf16.gmra.mxu0 %v522
        %v2570 = vpop.f32.mrf.mxu0
        %v2571 = vadd.f32 %v2522, %v2570
        %v2572 = vpop.f32.mrf.mxu0
        %v2573 = vadd.f32 %v2524, %v2572
        %2574 = vdwg.mxu0
        %2575 = vmatpush.bf16.msra.mxu0 %v1371
        %2576 = vmatpush.bf16.msra.mxu0 %v1363
        %2577 = vmatpush.bf16.msra.mxu0 %v1355
        %2578 = vmatpush.bf16.msra.mxu0 %v1347
        %2579 = vmatpush.bf16.msra.mxu0 %v1339
        %2580 = vmatpush.bf16.msra.mxu0 %v1331
        %2581 = vmatpush.bf16.msra.mxu0 %v1323
        %2582 = vmatpush.bf16.msra.mxu0 %v1315
        %2583 = vmatmul.bf16.gmra.mxu0 %v499
        %v2584 = vpop.f32.mrf.mxu0
        %v2585 = vadd.f32 %v723, %v2584
        %v2586 = vpop.f32.mrf.mxu0
        %v2587 = vadd.f32 %v723, %v2586
        %2588 = vmatmul.bf16.gmra.mxu0 %v502
        %v2589 = vpop.f32.mrf.mxu0
        %v2590 = vadd.f32 %v723, %v2589
        %v2591 = vpop.f32.mrf.mxu0
        %v2592 = vadd.f32 %v723, %v2591
        %2593 = vmatmul.bf16.gmra.mxu0 %v505
        %v2594 = vpop.f32.mrf.mxu0
        %v2595 = vadd.f32 %v723, %v2594
        %v2596 = vpop.f32.mrf.mxu0
        %v2597 = vadd.f32 %v723, %v2596
        %2598 = vmatmul.bf16.gmra.mxu0 %v508
        %v2599 = vpop.f32.mrf.mxu0
        %v2600 = vadd.f32 %v723, %v2599
        %v2601 = vpop.f32.mrf.mxu0
        %v2602 = vadd.f32 %v723, %v2601
        %2603 = vmatmul.bf16.gmra.mxu0 %v511
        %v2604 = vpop.f32.mrf.mxu0
        %v2605 = vadd.f32 %v723, %v2604
        %v2606 = vpop.f32.mrf.mxu0
        %v2607 = vadd.f32 %v723, %v2606
        %2608 = vmatmul.bf16.gmra.mxu0 %v514
        %v2609 = vpop.f32.mrf.mxu0
        %v2610 = vadd.f32 %v723, %v2609
        %v2611 = vpop.f32.mrf.mxu0
        %v2612 = vadd.f32 %v723, %v2611
        %2613 = vmatmul.bf16.gmra.mxu0 %v517
        %v2614 = vpop.f32.mrf.mxu0
        %v2615 = vadd.f32 %v723, %v2614
        %v2616 = vpop.f32.mrf.mxu0
        %v2617 = vadd.f32 %v723, %v2616
        %2618 = vmatmul.bf16.gmra.mxu0 %v520
        %v2619 = vpop.f32.mrf.mxu0
        %v2620 = vadd.f32 %v723, %v2619
        %v2621 = vpop.f32.mrf.mxu0
        %v2622 = vadd.f32 %v723, %v2621
        %2623 = vdwg.mxu0
        %2624 = vmatpush.bf16.msra.mxu0 %v1435
        %2625 = vmatpush.bf16.msra.mxu0 %v1427
        %2626 = vmatpush.bf16.msra.mxu0 %v1419
        %2627 = vmatpush.bf16.msra.mxu0 %v1411
        %2628 = vmatpush.bf16.msra.mxu0 %v1403
        %2629 = vmatpush.bf16.msra.mxu0 %v1395
        %2630 = vmatpush.bf16.msra.mxu0 %v1387
        %2631 = vmatpush.bf16.msra.mxu0 %v1379
        %2632 = vmatmul.bf16.gmra.mxu0 %v500
        %v2633 = vpop.f32.mrf.mxu0
        %v2634 = vadd.f32 %v2585, %v2633
        %v2635 = vpop.f32.mrf.mxu0
        %v2636 = vadd.f32 %v2587, %v2635
        %2637 = vmatmul.bf16.gmra.mxu0 %v503
        %v2638 = vpop.f32.mrf.mxu0
        %v2639 = vadd.f32 %v2590, %v2638
        %v2640 = vpop.f32.mrf.mxu0
        %v2641 = vadd.f32 %v2592, %v2640
        %2642 = vmatmul.bf16.gmra.mxu0 %v506
        %v2643 = vpop.f32.mrf.mxu0
        %v2644 = vadd.f32 %v2595, %v2643
        %v2645 = vpop.f32.mrf.mxu0
        %v2646 = vadd.f32 %v2597, %v2645
        %2647 = vmatmul.bf16.gmra.mxu0 %v509
        %v2648 = vpop.f32.mrf.mxu0
        %v2649 = vadd.f32 %v2600, %v2648
        %v2650 = vpop.f32.mrf.mxu0
        %v2651 = vadd.f32 %v2602, %v2650
        %2652 = vmatmul.bf16.gmra.mxu0 %v512
        %v2653 = vpop.f32.mrf.mxu0
        %v2654 = vadd.f32 %v2605, %v2653
        %v2655 = vpop.f32.mrf.mxu0
        %v2656 = vadd.f32 %v2607, %v2655
        %2657 = vmatmul.bf16.gmra.mxu0 %v515
        %v2658 = vpop.f32.mrf.mxu0
        %v2659 = vadd.f32 %v2610, %v2658
        %v2660 = vpop.f32.mrf.mxu0
        %v2661 = vadd.f32 %v2612, %v2660
        %2662 = vmatmul.bf16.gmra.mxu0 %v518
        %v2663 = vpop.f32.mrf.mxu0
        %v2664 = vadd.f32 %v2615, %v2663
        %v2665 = vpop.f32.mrf.mxu0
        %v2666 = vadd.f32 %v2617, %v2665
        %2667 = vmatmul.bf16.gmra.mxu0 %v521
        %v2668 = vpop.f32.mrf.mxu0
        %v2669 = vadd.f32 %v2620, %v2668
        %v2670 = vpop.f32.mrf.mxu0
        %v2671 = vadd.f32 %v2622, %v2670
        %2672 = vdwg.mxu0
        %2673 = vmatpush.bf16.msra.mxu0 %v1499
        %2674 = vmatpush.bf16.msra.mxu0 %v1491
        %2675 = vmatpush.bf16.msra.mxu0 %v1483
        %2676 = vmatpush.bf16.msra.mxu0 %v1475
        %2677 = vmatpush.bf16.msra.mxu0 %v1467
        %2678 = vmatpush.bf16.msra.mxu0 %v1459
        %2679 = vmatpush.bf16.msra.mxu0 %v1451
        %2680 = vmatpush.bf16.msra.mxu0 %v1443
        %2681 = vmatmul.bf16.gmra.mxu0 %v501
        %v2682 = vpop.f32.mrf.mxu0
        %v2683 = vadd.f32 %v2634, %v2682
        %v2684 = vpop.f32.mrf.mxu0
        %v2685 = vadd.f32 %v2636, %v2684
        %2686 = vmatmul.bf16.gmra.mxu0 %v504
        %v2687 = vpop.f32.mrf.mxu0
        %v2688 = vadd.f32 %v2639, %v2687
        %v2689 = vpop.f32.mrf.mxu0
        %v2690 = vadd.f32 %v2641, %v2689
        %2691 = vmatmul.bf16.gmra.mxu0 %v507
        %v2692 = vpop.f32.mrf.mxu0
        %v2693 = vadd.f32 %v2644, %v2692
        %v2694 = vpop.f32.mrf.mxu0
        %v2695 = vadd.f32 %v2646, %v2694
        %2696 = vmatmul.bf16.gmra.mxu0 %v510
        %v2697 = vpop.f32.mrf.mxu0
        %v2698 = vadd.f32 %v2649, %v2697
        %v2699 = vpop.f32.mrf.mxu0
        %v2700 = vadd.f32 %v2651, %v2699
        %2701 = vmatmul.bf16.gmra.mxu0 %v513
        %v2702 = vpop.f32.mrf.mxu0
        %v2703 = vadd.f32 %v2654, %v2702
        %v2704 = vpop.f32.mrf.mxu0
        %v2705 = vadd.f32 %v2656, %v2704
        %2706 = vmatmul.bf16.gmra.mxu0 %v516
        %v2707 = vpop.f32.mrf.mxu0
        %v2708 = vadd.f32 %v2659, %v2707
        %v2709 = vpop.f32.mrf.mxu0
        %v2710 = vadd.f32 %v2661, %v2709
        %2711 = vmatmul.bf16.gmra.mxu0 %v519
        %v2712 = vpop.f32.mrf.mxu0
        %v2713 = vadd.f32 %v2664, %v2712
        %v2714 = vpop.f32.mrf.mxu0
        %v2715 = vadd.f32 %v2666, %v2714
        %2716 = vmatmul.bf16.gmra.mxu0 %v522
        %v2717 = vpop.f32.mrf.mxu0
        %v2718 = vadd.f32 %v2669, %v2717
        %v2719 = vpop.f32.mrf.mxu0
        %v2720 = vadd.f32 %v2671, %v2719
        %2721 = vdwg.mxu0
        %2722 = vmatpush.bf16.msra.mxu0 %v1372
        %2723 = vmatpush.bf16.msra.mxu0 %v1364
        %2724 = vmatpush.bf16.msra.mxu0 %v1356
        %2725 = vmatpush.bf16.msra.mxu0 %v1348
        %2726 = vmatpush.bf16.msra.mxu0 %v1340
        %2727 = vmatpush.bf16.msra.mxu0 %v1332
        %2728 = vmatpush.bf16.msra.mxu0 %v1324
        %2729 = vmatpush.bf16.msra.mxu0 %v1316
        %2730 = vmatmul.bf16.gmra.mxu0 %v499
        %v2731 = vpop.f32.mrf.mxu0
        %v2732 = vadd.f32 %v724, %v2731
        %v2733 = vpop.f32.mrf.mxu0
        %v2734 = vadd.f32 %v724, %v2733
        %2735 = vmatmul.bf16.gmra.mxu0 %v502
        %v2736 = vpop.f32.mrf.mxu0
        %v2737 = vadd.f32 %v724, %v2736
        %v2738 = vpop.f32.mrf.mxu0
        %v2739 = vadd.f32 %v724, %v2738
        %2740 = vmatmul.bf16.gmra.mxu0 %v505
        %v2741 = vpop.f32.mrf.mxu0
        %v2742 = vadd.f32 %v724, %v2741
        %v2743 = vpop.f32.mrf.mxu0
        %v2744 = vadd.f32 %v724, %v2743
        %2745 = vmatmul.bf16.gmra.mxu0 %v508
        %v2746 = vpop.f32.mrf.mxu0
        %v2747 = vadd.f32 %v724, %v2746
        %v2748 = vpop.f32.mrf.mxu0
        %v2749 = vadd.f32 %v724, %v2748
        %2750 = vmatmul.bf16.gmra.mxu0 %v511
        %v2751 = vpop.f32.mrf.mxu0
        %v2752 = vadd.f32 %v724, %v2751
        %v2753 = vpop.f32.mrf.mxu0
        %v2754 = vadd.f32 %v724, %v2753
        %2755 = vmatmul.bf16.gmra.mxu0 %v514
        %v2756 = vpop.f32.mrf.mxu0
        %v2757 = vadd.f32 %v724, %v2756
        %v2758 = vpop.f32.mrf.mxu0
        %v2759 = vadd.f32 %v724, %v2758
        %2760 = vmatmul.bf16.gmra.mxu0 %v517
        %v2761 = vpop.f32.mrf.mxu0
        %v2762 = vadd.f32 %v724, %v2761
        %v2763 = vpop.f32.mrf.mxu0
        %v2764 = vadd.f32 %v724, %v2763
        %2765 = vmatmul.bf16.gmra.mxu0 %v520
        %v2766 = vpop.f32.mrf.mxu0
        %v2767 = vadd.f32 %v724, %v2766
        %v2768 = vpop.f32.mrf.mxu0
        %v2769 = vadd.f32 %v724, %v2768
        %2770 = vdwg.mxu0
        %2771 = vmatpush.bf16.msra.mxu0 %v1436
        %2772 = vmatpush.bf16.msra.mxu0 %v1428
        %2773 = vmatpush.bf16.msra.mxu0 %v1420
        %2774 = vmatpush.bf16.msra.mxu0 %v1412
        %2775 = vmatpush.bf16.msra.mxu0 %v1404
        %2776 = vmatpush.bf16.msra.mxu0 %v1396
        %2777 = vmatpush.bf16.msra.mxu0 %v1388
        %2778 = vmatpush.bf16.msra.mxu0 %v1380
        %2779 = vmatmul.bf16.gmra.mxu0 %v500
        %v2780 = vpop.f32.mrf.mxu0
        %v2781 = vadd.f32 %v2732, %v2780
        %v2782 = vpop.f32.mrf.mxu0
        %v2783 = vadd.f32 %v2734, %v2782
        %2784 = vmatmul.bf16.gmra.mxu0 %v503
        %v2785 = vpop.f32.mrf.mxu0
        %v2786 = vadd.f32 %v2737, %v2785
        %v2787 = vpop.f32.mrf.mxu0
        %v2788 = vadd.f32 %v2739, %v2787
        %2789 = vmatmul.bf16.gmra.mxu0 %v506
        %v2790 = vpop.f32.mrf.mxu0
        %v2791 = vadd.f32 %v2742, %v2790
        %v2792 = vpop.f32.mrf.mxu0
        %v2793 = vadd.f32 %v2744, %v2792
        %2794 = vmatmul.bf16.gmra.mxu0 %v509
        %v2795 = vpop.f32.mrf.mxu0
        %v2796 = vadd.f32 %v2747, %v2795
        %v2797 = vpop.f32.mrf.mxu0
        %v2798 = vadd.f32 %v2749, %v2797
        %2799 = vmatmul.bf16.gmra.mxu0 %v512
        %v2800 = vpop.f32.mrf.mxu0
        %v2801 = vadd.f32 %v2752, %v2800
        %v2802 = vpop.f32.mrf.mxu0
        %v2803 = vadd.f32 %v2754, %v2802
        %2804 = vmatmul.bf16.gmra.mxu0 %v515
        %v2805 = vpop.f32.mrf.mxu0
        %v2806 = vadd.f32 %v2757, %v2805
        %v2807 = vpop.f32.mrf.mxu0
        %v2808 = vadd.f32 %v2759, %v2807
        %2809 = vmatmul.bf16.gmra.mxu0 %v518
        %v2810 = vpop.f32.mrf.mxu0
        %v2811 = vadd.f32 %v2762, %v2810
        %v2812 = vpop.f32.mrf.mxu0
        %v2813 = vadd.f32 %v2764, %v2812
        %2814 = vmatmul.bf16.gmra.mxu0 %v521
        %v2815 = vpop.f32.mrf.mxu0
        %v2816 = vadd.f32 %v2767, %v2815
        %v2817 = vpop.f32.mrf.mxu0
        %v2818 = vadd.f32 %v2769, %v2817
        %2819 = vdwg.mxu0
        %2820 = vmatpush.bf16.msra.mxu0 %v1500
        %2821 = vmatpush.bf16.msra.mxu0 %v1492
        %2822 = vmatpush.bf16.msra.mxu0 %v1484
        %2823 = vmatpush.bf16.msra.mxu0 %v1476
        %2824 = vmatpush.bf16.msra.mxu0 %v1468
        %2825 = vmatpush.bf16.msra.mxu0 %v1460
        %2826 = vmatpush.bf16.msra.mxu0 %v1452
        %2827 = vmatpush.bf16.msra.mxu0 %v1444
        %2828 = vmatmul.bf16.gmra.mxu0 %v501
        %v2829 = vpop.f32.mrf.mxu0
        %v2830 = vadd.f32 %v2781, %v2829
        %v2831 = vpop.f32.mrf.mxu0
        %v2832 = vadd.f32 %v2783, %v2831
        %2833 = vmatmul.bf16.gmra.mxu0 %v504
        %v2834 = vpop.f32.mrf.mxu0
        %v2835 = vadd.f32 %v2786, %v2834
        %v2836 = vpop.f32.mrf.mxu0
        %v2837 = vadd.f32 %v2788, %v2836
        %2838 = vmatmul.bf16.gmra.mxu0 %v507
        %v2839 = vpop.f32.mrf.mxu0
        %v2840 = vadd.f32 %v2791, %v2839
        %v2841 = vpop.f32.mrf.mxu0
        %v2842 = vadd.f32 %v2793, %v2841
        %2843 = vmatmul.bf16.gmra.mxu0 %v510
        %v2844 = vpop.f32.mrf.mxu0
        %v2845 = vadd.f32 %v2796, %v2844
        %v2846 = vpop.f32.mrf.mxu0
        %v2847 = vadd.f32 %v2798, %v2846
        %2848 = vmatmul.bf16.gmra.mxu0 %v513
        %v2849 = vpop.f32.mrf.mxu0
        %v2850 = vadd.f32 %v2801, %v2849
        %v2851 = vpop.f32.mrf.mxu0
        %v2852 = vadd.f32 %v2803, %v2851
        %2853 = vmatmul.bf16.gmra.mxu0 %v516
        %v2854 = vpop.f32.mrf.mxu0
        %v2855 = vadd.f32 %v2806, %v2854
        %v2856 = vpop.f32.mrf.mxu0
        %v2857 = vadd.f32 %v2808, %v2856
        %2858 = vmatmul.bf16.gmra.mxu0 %v519
        %v2859 = vpop.f32.mrf.mxu0
        %v2860 = vadd.f32 %v2811, %v2859
        %v2861 = vpop.f32.mrf.mxu0
        %v2862 = vadd.f32 %v2813, %v2861
        %2863 = vmatmul.bf16.gmra.mxu0 %v522
        %v2864 = vpop.f32.mrf.mxu0
        %v2865 = vadd.f32 %v2816, %v2864
        %v2866 = vpop.f32.mrf.mxu0
        %v2867 = vadd.f32 %v2818, %v2866
        %2868 = vdwg.mxu0
        %v2869 = vmax.f32 %v1801, 0.0
        %v2870 = vmax.f32 %v1948, 0.0
        %v2871 = vmax.f32 %v2095, 0.0
        %v2872 = vmax.f32 %v2242, 0.0
        %v2873 = vmax.f32 %v2389, 0.0
        %v2874 = vmax.f32 %v2536, 0.0
        %v2875 = vmax.f32 %v2683, 0.0
        %v2876 = vmax.f32 %v2830, 0.0
        %v2877 = vmax.f32 %v1803, 0.0
        %v2878 = vmax.f32 %v1950, 0.0
        %v2879 = vmax.f32 %v2097, 0.0
        %v2880 = vmax.f32 %v2244, 0.0
        %v2881 = vmax.f32 %v2391, 0.0
        %v2882 = vmax.f32 %v2538, 0.0
        %v2883 = vmax.f32 %v2685, 0.0
        %v2884 = vmax.f32 %v2832, 0.0
        %v2885 = vmax.f32 %v1806, 0.0
        %v2886 = vmax.f32 %v1953, 0.0
        %v2887 = vmax.f32 %v2100, 0.0
        %v2888 = vmax.f32 %v2247, 0.0
        %v2889 = vmax.f32 %v2394, 0.0
        %v2890 = vmax.f32 %v2541, 0.0
        %v2891 = vmax.f32 %v2688, 0.0
        %v2892 = vmax.f32 %v2835, 0.0
        %v2893 = vmax.f32 %v1808, 0.0
        %v2894 = vmax.f32 %v1955, 0.0
        %v2895 = vmax.f32 %v2102, 0.0
        %v2896 = vmax.f32 %v2249, 0.0
        %v2897 = vmax.f32 %v2396, 0.0
        %v2898 = vmax.f32 %v2543, 0.0
        %v2899 = vmax.f32 %v2690, 0.0
        %v2900 = vmax.f32 %v2837, 0.0
        %v2901 = vmax.f32 %v1811, 0.0
        %v2902 = vmax.f32 %v1958, 0.0
        %v2903 = vmax.f32 %v2105, 0.0
        %v2904 = vmax.f32 %v2252, 0.0
        %v2905 = vmax.f32 %v2399, 0.0
        %v2906 = vmax.f32 %v2546, 0.0
        %v2907 = vmax.f32 %v2693, 0.0
        %v2908 = vmax.f32 %v2840, 0.0
        %v2909 = vmax.f32 %v1813, 0.0
        %v2910 = vmax.f32 %v1960, 0.0
        %v2911 = vmax.f32 %v2107, 0.0
        %v2912 = vmax.f32 %v2254, 0.0
        %v2913 = vmax.f32 %v2401, 0.0
        %v2914 = vmax.f32 %v2548, 0.0
        %v2915 = vmax.f32 %v2695, 0.0
        %v2916 = vmax.f32 %v2842, 0.0
        %v2917 = vmax.f32 %v1816, 0.0
        %v2918 = vmax.f32 %v1963, 0.0
        %v2919 = vmax.f32 %v2110, 0.0
        %v2920 = vmax.f32 %v2257, 0.0
        %v2921 = vmax.f32 %v2404, 0.0
        %v2922 = vmax.f32 %v2551, 0.0
        %v2923 = vmax.f32 %v2698, 0.0
        %v2924 = vmax.f32 %v2845, 0.0
        %v2925 = vmax.f32 %v1818, 0.0
        %v2926 = vmax.f32 %v1965, 0.0
        %v2927 = vmax.f32 %v2112, 0.0
        %v2928 = vmax.f32 %v2259, 0.0
        %v2929 = vmax.f32 %v2406, 0.0
        %v2930 = vmax.f32 %v2553, 0.0
        %v2931 = vmax.f32 %v2700, 0.0
        %v2932 = vmax.f32 %v2847, 0.0
        %v2933 = vmax.f32 %v1821, 0.0
        %v2934 = vmax.f32 %v1968, 0.0
        %v2935 = vmax.f32 %v2115, 0.0
        %v2936 = vmax.f32 %v2262, 0.0
        %v2937 = vmax.f32 %v2409, 0.0
        %v2938 = vmax.f32 %v2556, 0.0
        %v2939 = vmax.f32 %v2703, 0.0
        %v2940 = vmax.f32 %v2850, 0.0
        %v2941 = vmax.f32 %v1823, 0.0
        %v2942 = vmax.f32 %v1970, 0.0
        %v2943 = vmax.f32 %v2117, 0.0
        %v2944 = vmax.f32 %v2264, 0.0
        %v2945 = vmax.f32 %v2411, 0.0
        %v2946 = vmax.f32 %v2558, 0.0
        %v2947 = vmax.f32 %v2705, 0.0
        %v2948 = vmax.f32 %v2852, 0.0
        %v2949 = vmax.f32 %v1826, 0.0
        %v2950 = vmax.f32 %v1973, 0.0
        %v2951 = vmax.f32 %v2120, 0.0
        %v2952 = vmax.f32 %v2267, 0.0
        %v2953 = vmax.f32 %v2414, 0.0
        %v2954 = vmax.f32 %v2561, 0.0
        %v2955 = vmax.f32 %v2708, 0.0
        %v2956 = vmax.f32 %v2855, 0.0
        %v2957 = vmax.f32 %v1828, 0.0
        %v2958 = vmax.f32 %v1975, 0.0
        %v2959 = vmax.f32 %v2122, 0.0
        %v2960 = vmax.f32 %v2269, 0.0
        %v2961 = vmax.f32 %v2416, 0.0
        %v2962 = vmax.f32 %v2563, 0.0
        %v2963 = vmax.f32 %v2710, 0.0
        %v2964 = vmax.f32 %v2857, 0.0
        %v2965 = vmax.f32 %v1831, 0.0
        %v2966 = vmax.f32 %v1978, 0.0
        %v2967 = vmax.f32 %v2125, 0.0
        %v2968 = vmax.f32 %v2272, 0.0
        %v2969 = vmax.f32 %v2419, 0.0
        %v2970 = vmax.f32 %v2566, 0.0
        %v2971 = vmax.f32 %v2713, 0.0
        %v2972 = vmax.f32 %v2860, 0.0
        %v2973 = vmax.f32 %v1833, 0.0
        %v2974 = vmax.f32 %v1980, 0.0
        %v2975 = vmax.f32 %v2127, 0.0
        %v2976 = vmax.f32 %v2274, 0.0
        %v2977 = vmax.f32 %v2421, 0.0
        %v2978 = vmax.f32 %v2568, 0.0
        %v2979 = vmax.f32 %v2715, 0.0
        %v2980 = vmax.f32 %v2862, 0.0
        %v2981 = vmax.f32 %v1836, 0.0
        %v2982 = vmax.f32 %v1983, 0.0
        %v2983 = vmax.f32 %v2130, 0.0
        %v2984 = vmax.f32 %v2277, 0.0
        %v2985 = vmax.f32 %v2424, 0.0
        %v2986 = vmax.f32 %v2571, 0.0
        %v2987 = vmax.f32 %v2718, 0.0
        %v2988 = vmax.f32 %v2865, 0.0
        %v2989 = vmax.f32 %v1838, 0.0
        %v2990 = vmax.f32 %v1985, 0.0
        %v2991 = vmax.f32 %v2132, 0.0
        %v2992 = vmax.f32 %v2279, 0.0
        %v2993 = vmax.f32 %v2426, 0.0
        %v2994 = vmax.f32 %v2573, 0.0
        %v2995 = vmax.f32 %v2720, 0.0
        %v2996 = vmax.f32 %v2867, 0.0
        %v2997 = vpack.c.bf16 %v2877, %v2869
        %v2998 = vpack.c.bf16 %v2878, %v2870
        %v2999 = vpack.c.bf16 %v2879, %v2871
        %v3000 = vpack.c.bf16 %v2880, %v2872
        %v3001 = vpack.c.bf16 %v2881, %v2873
        %v3002 = vpack.c.bf16 %v2882, %v2874
        %v3003 = vpack.c.bf16 %v2883, %v2875
        %v3004 = vpack.c.bf16 %v2884, %v2876
        %v3005 = vpack.c.bf16 %v2893, %v2885
        %v3006 = vpack.c.bf16 %v2894, %v2886
        %v3007 = vpack.c.bf16 %v2895, %v2887
        %v3008 = vpack.c.bf16 %v2896, %v2888
        %v3009 = vpack.c.bf16 %v2897, %v2889
        %v3010 = vpack.c.bf16 %v2898, %v2890
        %v3011 = vpack.c.bf16 %v2899, %v2891
        %v3012 = vpack.c.bf16 %v2900, %v2892
        %v3013 = vpack.c.bf16 %v2909, %v2901
        %v3014 = vpack.c.bf16 %v2910, %v2902
        %v3015 = vpack.c.bf16 %v2911, %v2903
        %v3016 = vpack.c.bf16 %v2912, %v2904
        %v3017 = vpack.c.bf16 %v2913, %v2905
        %v3018 = vpack.c.bf16 %v2914, %v2906
        %v3019 = vpack.c.bf16 %v2915, %v2907
        %v3020 = vpack.c.bf16 %v2916, %v2908
        %v3021 = vpack.c.bf16 %v2925, %v2917
        %v3022 = vpack.c.bf16 %v2926, %v2918
        %v3023 = vpack.c.bf16 %v2927, %v2919
        %v3024 = vpack.c.bf16 %v2928, %v2920
        %v3025 = vpack.c.bf16 %v2929, %v2921
        %v3026 = vpack.c.bf16 %v2930, %v2922
        %v3027 = vpack.c.bf16 %v2931, %v2923
        %v3028 = vpack.c.bf16 %v2932, %v2924
        %v3029 = vpack.c.bf16 %v2941, %v2933
        %v3030 = vpack.c.bf16 %v2942, %v2934
        %v3031 = vpack.c.bf16 %v2943, %v2935
        %v3032 = vpack.c.bf16 %v2944, %v2936
        %v3033 = vpack.c.bf16 %v2945, %v2937
        %v3034 = vpack.c.bf16 %v2946, %v2938
        %v3035 = vpack.c.bf16 %v2947, %v2939
        %v3036 = vpack.c.bf16 %v2948, %v2940
        %v3037 = vpack.c.bf16 %v2957, %v2949
        %v3038 = vpack.c.bf16 %v2958, %v2950
        %v3039 = vpack.c.bf16 %v2959, %v2951
        %v3040 = vpack.c.bf16 %v2960, %v2952
        %v3041 = vpack.c.bf16 %v2961, %v2953
        %v3042 = vpack.c.bf16 %v2962, %v2954
        %v3043 = vpack.c.bf16 %v2963, %v2955
        %v3044 = vpack.c.bf16 %v2964, %v2956
        %v3045 = vpack.c.bf16 %v2973, %v2965
        %v3046 = vpack.c.bf16 %v2974, %v2966
        %v3047 = vpack.c.bf16 %v2975, %v2967
        %v3048 = vpack.c.bf16 %v2976, %v2968
        %v3049 = vpack.c.bf16 %v2977, %v2969
        %v3050 = vpack.c.bf16 %v2978, %v2970
        %v3051 = vpack.c.bf16 %v2979, %v2971
        %v3052 = vpack.c.bf16 %v2980, %v2972
        %v3053 = vpack.c.bf16 %v2989, %v2981
        %v3054 = vpack.c.bf16 %v2990, %v2982
        %v3055 = vpack.c.bf16 %v2991, %v2983
        %v3056 = vpack.c.bf16 %v2992, %v2984
        %v3057 = vpack.c.bf16 %v2993, %v2985
        %v3058 = vpack.c.bf16 %v2994, %v2986
        %v3059 = vpack.c.bf16 %v2995, %v2987
        %v3060 = vpack.c.bf16 %v2996, %v2988
        %v3061 = vld [vmem:[#allocation8] sm:$0xff]
        %v3062 = vld [vmem:[#allocation8 + $0x8] sm:$0xff]
        %v3063 = vld [vmem:[#allocation8 + $0x10] sm:$0xff]
        %v3064 = vld [vmem:[#allocation8 + $0x18] sm:$0xff]
        %v3065 = vld [vmem:[#allocation8 + $0x20] sm:$0xff]
        %v3066 = vld [vmem:[#allocation8 + $0x28] sm:$0xff]
        %v3067 = vld [vmem:[#allocation8 + $0x30] sm:$0xff]
        %v3068 = vld [vmem:[#allocation8 + $0x38] sm:$0xff]
        %v3069 = vld [vmem:[#allocation8 + $0x40] sm:$0xff]
        %v3070 = vld [vmem:[#allocation8 + $0x48] sm:$0xff]
        %v3071 = vld [vmem:[#allocation8 + $0x50] sm:$0xff]
        %v3072 = vld [vmem:[#allocation8 + $0x58] sm:$0xff]
        %v3073 = vld [vmem:[#allocation8 + $0x60] sm:$0xff]
        %v3074 = vld [vmem:[#allocation8 + $0x68] sm:$0xff]
        %v3075 = vld [vmem:[#allocation8 + $0x70] sm:$0xff]
        %v3076 = vld [vmem:[#allocation8 + $0x78] sm:$0xff]
        %v3077 = vld [vmem:[#allocation8 + $0x80] sm:$0xff]
        %v3078 = vld [vmem:[#allocation8 + $0x88] sm:$0xff]
        %v3079 = vld [vmem:[#allocation8 + $0x90] sm:$0xff]
        %v3080 = vld [vmem:[#allocation8 + $0x98] sm:$0xff]
        %v3081 = vld [vmem:[#allocation8 + $0xa0] sm:$0xff]
        %v3082 = vld [vmem:[#allocation8 + $0xa8] sm:$0xff]
        %v3083 = vld [vmem:[#allocation8 + $0xb0] sm:$0xff]
        %v3084 = vld [vmem:[#allocation8 + $0xb8] sm:$0xff]
        %v3085 = vld [vmem:[#allocation8 + $0xc0] sm:$0xff]
        %v3086 = vld [vmem:[#allocation8 + $0xc8] sm:$0xff]
        %v3087 = vld [vmem:[#allocation8 + $0xd0] sm:$0xff]
        %v3088 = vld [vmem:[#allocation8 + $0xd8] sm:$0xff]
        %v3089 = vld [vmem:[#allocation8 + $0xe0] sm:$0xff]
        %v3090 = vld [vmem:[#allocation8 + $0xe8] sm:$0xff]
        %v3091 = vld [vmem:[#allocation8 + $0xf0] sm:$0xff]
        %v3092 = vld [vmem:[#allocation8 + $0xf8] sm:$0xff]
        %v3093 = vld [vmem:[#allocation8 + $0x100] sm:$0xff]
        %v3094 = vld [vmem:[#allocation8 + $0x108] sm:$0xff]
        %v3095 = vld [vmem:[#allocation8 + $0x110] sm:$0xff]
        %v3096 = vld [vmem:[#allocation8 + $0x118] sm:$0xff]
        %v3097 = vld [vmem:[#allocation8 + $0x120] sm:$0xff]
        %v3098 = vld [vmem:[#allocation8 + $0x128] sm:$0xff]
        %v3099 = vld [vmem:[#allocation8 + $0x130] sm:$0xff]
        %v3100 = vld [vmem:[#allocation8 + $0x138] sm:$0xff]
        %v3101 = vld [vmem:[#allocation8 + $0x140] sm:$0xff]
        %v3102 = vld [vmem:[#allocation8 + $0x148] sm:$0xff]
        %v3103 = vld [vmem:[#allocation8 + $0x150] sm:$0xff]
        %v3104 = vld [vmem:[#allocation8 + $0x158] sm:$0xff]
        %v3105 = vld [vmem:[#allocation8 + $0x160] sm:$0xff]
        %v3106 = vld [vmem:[#allocation8 + $0x168] sm:$0xff]
        %v3107 = vld [vmem:[#allocation8 + $0x170] sm:$0xff]
        %v3108 = vld [vmem:[#allocation8 + $0x178] sm:$0xff]
        %v3109 = vld [vmem:[#allocation8 + $0x180] sm:$0xff]
        %v3110 = vld [vmem:[#allocation8 + $0x188] sm:$0xff]
        %v3111 = vld [vmem:[#allocation8 + $0x190] sm:$0xff]
        %v3112 = vld [vmem:[#allocation8 + $0x198] sm:$0xff]
        %v3113 = vld [vmem:[#allocation8 + $0x1a0] sm:$0xff]
        %v3114 = vld [vmem:[#allocation8 + $0x1a8] sm:$0xff]
        %v3115 = vld [vmem:[#allocation8 + $0x1b0] sm:$0xff]
        %v3116 = vld [vmem:[#allocation8 + $0x1b8] sm:$0xff]
        %v3117 = vld [vmem:[#allocation8 + $0x1c0] sm:$0xff]
        %v3118 = vld [vmem:[#allocation8 + $0x1c8] sm:$0xff]
        %v3119 = vld [vmem:[#allocation8 + $0x1d0] sm:$0xff]
        %v3120 = vld [vmem:[#allocation8 + $0x1d8] sm:$0xff]
        %v3121 = vld [vmem:[#allocation8 + $0x1e0] sm:$0xff]
        %v3122 = vld [vmem:[#allocation8 + $0x1e8] sm:$0xff]
        %v3123 = vld [vmem:[#allocation8 + $0x1f0] sm:$0xff]
        %v3124 = vld [vmem:[#allocation8 + $0x1f8] sm:$0xff]
        %v3125 = vld [vmem:[#allocation8 + $0x200] sm:$0xff]
        %v3126 = vld [vmem:[#allocation8 + $0x208] sm:$0xff]
        %v3127 = vld [vmem:[#allocation8 + $0x210] sm:$0xff]
        %v3128 = vld [vmem:[#allocation8 + $0x218] sm:$0xff]
        %v3129 = vld [vmem:[#allocation8 + $0x220] sm:$0xff]
        %v3130 = vld [vmem:[#allocation8 + $0x228] sm:$0xff]
        %v3131 = vld [vmem:[#allocation8 + $0x230] sm:$0xff]
        %v3132 = vld [vmem:[#allocation8 + $0x238] sm:$0xff]
        %v3133 = vld [vmem:[#allocation8 + $0x240] sm:$0xff]
        %v3134 = vld [vmem:[#allocation8 + $0x248] sm:$0xff]
        %v3135 = vld [vmem:[#allocation8 + $0x250] sm:$0xff]
        %v3136 = vld [vmem:[#allocation8 + $0x258] sm:$0xff]
        %v3137 = vld [vmem:[#allocation8 + $0x260] sm:$0xff]
        %v3138 = vld [vmem:[#allocation8 + $0x268] sm:$0xff]
        %v3139 = vld [vmem:[#allocation8 + $0x270] sm:$0xff]
        %v3140 = vld [vmem:[#allocation8 + $0x278] sm:$0xff]
        %v3141 = vld [vmem:[#allocation8 + $0x280] sm:$0xff]
        %v3142 = vld [vmem:[#allocation8 + $0x288] sm:$0xff]
        %v3143 = vld [vmem:[#allocation8 + $0x290] sm:$0xff]
        %v3144 = vld [vmem:[#allocation8 + $0x298] sm:$0xff]
        %v3145 = vld [vmem:[#allocation8 + $0x2a0] sm:$0xff]
        %v3146 = vld [vmem:[#allocation8 + $0x2a8] sm:$0xff]
        %v3147 = vld [vmem:[#allocation8 + $0x2b0] sm:$0xff]
        %v3148 = vld [vmem:[#allocation8 + $0x2b8] sm:$0xff]
        %v3149 = vld [vmem:[#allocation8 + $0x2c0] sm:$0xff]
        %v3150 = vld [vmem:[#allocation8 + $0x2c8] sm:$0xff]
        %v3151 = vld [vmem:[#allocation8 + $0x2d0] sm:$0xff]
        %v3152 = vld [vmem:[#allocation8 + $0x2d8] sm:$0xff]
        %v3153 = vld [vmem:[#allocation8 + $0x2e0] sm:$0xff]
        %v3154 = vld [vmem:[#allocation8 + $0x2e8] sm:$0xff]
        %v3155 = vld [vmem:[#allocation8 + $0x2f0] sm:$0xff]
        %v3156 = vld [vmem:[#allocation8 + $0x2f8] sm:$0xff]
        %v3157 = vld [vmem:[#allocation8 + $0x300] sm:$0xff]
        %v3158 = vld [vmem:[#allocation8 + $0x308] sm:$0xff]
        %v3159 = vld [vmem:[#allocation8 + $0x310] sm:$0xff]
        %v3160 = vld [vmem:[#allocation8 + $0x318] sm:$0xff]
        %v3161 = vld [vmem:[#allocation8 + $0x320] sm:$0xff]
        %v3162 = vld [vmem:[#allocation8 + $0x328] sm:$0xff]
        %v3163 = vld [vmem:[#allocation8 + $0x330] sm:$0xff]
        %v3164 = vld [vmem:[#allocation8 + $0x338] sm:$0xff]
        %v3165 = vld [vmem:[#allocation8 + $0x340] sm:$0xff]
        %v3166 = vld [vmem:[#allocation8 + $0x348] sm:$0xff]
        %v3167 = vld [vmem:[#allocation8 + $0x350] sm:$0xff]
        %v3168 = vld [vmem:[#allocation8 + $0x358] sm:$0xff]
        %v3169 = vld [vmem:[#allocation8 + $0x360] sm:$0xff]
        %v3170 = vld [vmem:[#allocation8 + $0x368] sm:$0xff]
        %v3171 = vld [vmem:[#allocation8 + $0x370] sm:$0xff]
        %v3172 = vld [vmem:[#allocation8 + $0x378] sm:$0xff]
        %v3173 = vld [vmem:[#allocation8 + $0x380] sm:$0xff]
        %v3174 = vld [vmem:[#allocation8 + $0x388] sm:$0xff]
        %v3175 = vld [vmem:[#allocation8 + $0x390] sm:$0xff]
        %v3176 = vld [vmem:[#allocation8 + $0x398] sm:$0xff]
        %v3177 = vld [vmem:[#allocation8 + $0x3a0] sm:$0xff]
        %v3178 = vld [vmem:[#allocation8 + $0x3a8] sm:$0xff]
        %v3179 = vld [vmem:[#allocation8 + $0x3b0] sm:$0xff]
        %v3180 = vld [vmem:[#allocation8 + $0x3b8] sm:$0xff]
        %v3181 = vld [vmem:[#allocation8 + $0x3c0] sm:$0xff]
        %v3182 = vld [vmem:[#allocation8 + $0x3c8] sm:$0xff]
        %v3183 = vld [vmem:[#allocation8 + $0x3d0] sm:$0xff]
        %v3184 = vld [vmem:[#allocation8 + $0x3d8] sm:$0xff]
        %v3185 = vld [vmem:[#allocation8 + $0x3e0] sm:$0xff]
        %v3186 = vld [vmem:[#allocation8 + $0x3e8] sm:$0xff]
        %v3187 = vld [vmem:[#allocation8 + $0x3f0] sm:$0xff]
        %v3188 = vld [vmem:[#allocation8 + $0x3f8] sm:$0xff]
        %v3189 = vld [vmem:[#allocation8 + $0x400] sm:$0xff]
        %v3190 = vld [vmem:[#allocation8 + $0x408] sm:$0xff]
        %v3191 = vld [vmem:[#allocation8 + $0x410] sm:$0xff]
        %v3192 = vld [vmem:[#allocation8 + $0x418] sm:$0xff]
        %v3193 = vld [vmem:[#allocation8 + $0x420] sm:$0xff]
        %v3194 = vld [vmem:[#allocation8 + $0x428] sm:$0xff]
        %v3195 = vld [vmem:[#allocation8 + $0x430] sm:$0xff]
        %v3196 = vld [vmem:[#allocation8 + $0x438] sm:$0xff]
        %v3197 = vld [vmem:[#allocation8 + $0x440] sm:$0xff]
        %v3198 = vld [vmem:[#allocation8 + $0x448] sm:$0xff]
        %v3199 = vld [vmem:[#allocation8 + $0x450] sm:$0xff]
        %v3200 = vld [vmem:[#allocation8 + $0x458] sm:$0xff]
        %v3201 = vld [vmem:[#allocation8 + $0x460] sm:$0xff]
        %v3202 = vld [vmem:[#allocation8 + $0x468] sm:$0xff]
        %v3203 = vld [vmem:[#allocation8 + $0x470] sm:$0xff]
        %v3204 = vld [vmem:[#allocation8 + $0x478] sm:$0xff]
        %v3205 = vld [vmem:[#allocation8 + $0x480] sm:$0xff]
        %v3206 = vld [vmem:[#allocation8 + $0x488] sm:$0xff]
        %v3207 = vld [vmem:[#allocation8 + $0x490] sm:$0xff]
        %v3208 = vld [vmem:[#allocation8 + $0x498] sm:$0xff]
        %v3209 = vld [vmem:[#allocation8 + $0x4a0] sm:$0xff]
        %v3210 = vld [vmem:[#allocation8 + $0x4a8] sm:$0xff]
        %v3211 = vld [vmem:[#allocation8 + $0x4b0] sm:$0xff]
        %v3212 = vld [vmem:[#allocation8 + $0x4b8] sm:$0xff]
        %v3213 = vld [vmem:[#allocation8 + $0x4c0] sm:$0xff]
        %v3214 = vld [vmem:[#allocation8 + $0x4c8] sm:$0xff]
        %v3215 = vld [vmem:[#allocation8 + $0x4d0] sm:$0xff]
        %v3216 = vld [vmem:[#allocation8 + $0x4d8] sm:$0xff]
        %v3217 = vld [vmem:[#allocation8 + $0x4e0] sm:$0xff]
        %v3218 = vld [vmem:[#allocation8 + $0x4e8] sm:$0xff]
        %v3219 = vld [vmem:[#allocation8 + $0x4f0] sm:$0xff]
        %v3220 = vld [vmem:[#allocation8 + $0x4f8] sm:$0xff]
        %v3221 = vld [vmem:[#allocation8 + $0x500] sm:$0xff]
        %v3222 = vld [vmem:[#allocation8 + $0x508] sm:$0xff]
        %v3223 = vld [vmem:[#allocation8 + $0x510] sm:$0xff]
        %v3224 = vld [vmem:[#allocation8 + $0x518] sm:$0xff]
        %v3225 = vld [vmem:[#allocation8 + $0x520] sm:$0xff]
        %v3226 = vld [vmem:[#allocation8 + $0x528] sm:$0xff]
        %v3227 = vld [vmem:[#allocation8 + $0x530] sm:$0xff]
        %v3228 = vld [vmem:[#allocation8 + $0x538] sm:$0xff]
        %v3229 = vld [vmem:[#allocation8 + $0x540] sm:$0xff]
        %v3230 = vld [vmem:[#allocation8 + $0x548] sm:$0xff]
        %v3231 = vld [vmem:[#allocation8 + $0x550] sm:$0xff]
        %v3232 = vld [vmem:[#allocation8 + $0x558] sm:$0xff]
        %v3233 = vld [vmem:[#allocation8 + $0x560] sm:$0xff]
        %v3234 = vld [vmem:[#allocation8 + $0x568] sm:$0xff]
        %v3235 = vld [vmem:[#allocation8 + $0x570] sm:$0xff]
        %v3236 = vld [vmem:[#allocation8 + $0x578] sm:$0xff]
        %v3237 = vld [vmem:[#allocation8 + $0x580] sm:$0xff]
        %v3238 = vld [vmem:[#allocation8 + $0x588] sm:$0xff]
        %v3239 = vld [vmem:[#allocation8 + $0x590] sm:$0xff]
        %v3240 = vld [vmem:[#allocation8 + $0x598] sm:$0xff]
        %v3241 = vld [vmem:[#allocation8 + $0x5a0] sm:$0xff]
        %v3242 = vld [vmem:[#allocation8 + $0x5a8] sm:$0xff]
        %v3243 = vld [vmem:[#allocation8 + $0x5b0] sm:$0xff]
        %v3244 = vld [vmem:[#allocation8 + $0x5b8] sm:$0xff]
        %v3245 = vld [vmem:[#allocation8 + $0x5c0] sm:$0xff]
        %v3246 = vld [vmem:[#allocation8 + $0x5c8] sm:$0xff]
        %v3247 = vld [vmem:[#allocation8 + $0x5d0] sm:$0xff]
        %v3248 = vld [vmem:[#allocation8 + $0x5d8] sm:$0xff]
        %v3249 = vld [vmem:[#allocation8 + $0x5e0] sm:$0xff]
        %v3250 = vld [vmem:[#allocation8 + $0x5e8] sm:$0xff]
        %v3251 = vld [vmem:[#allocation8 + $0x5f0] sm:$0xff]
        %v3252 = vld [vmem:[#allocation8 + $0x5f8] sm:$0xff]
        %v3253 = vld [vmem:[#allocation8 + $0x600] sm:$0xff]
        %v3254 = vld [vmem:[#allocation8 + $0x608] sm:$0xff]
        %v3255 = vld [vmem:[#allocation8 + $0x610] sm:$0xff]
        %v3256 = vld [vmem:[#allocation8 + $0x618] sm:$0xff]
        %v3257 = vld [vmem:[#allocation8 + $0x620] sm:$0xff]
        %v3258 = vld [vmem:[#allocation8 + $0x628] sm:$0xff]
        %v3259 = vld [vmem:[#allocation8 + $0x630] sm:$0xff]
        %v3260 = vld [vmem:[#allocation8 + $0x638] sm:$0xff]
        %v3261 = vld [vmem:[#allocation8 + $0x640] sm:$0xff]
        %v3262 = vld [vmem:[#allocation8 + $0x648] sm:$0xff]
        %v3263 = vld [vmem:[#allocation8 + $0x650] sm:$0xff]
        %v3264 = vld [vmem:[#allocation8 + $0x658] sm:$0xff]
        %v3265 = vld [vmem:[#allocation8 + $0x660] sm:$0xff]
        %v3266 = vld [vmem:[#allocation8 + $0x668] sm:$0xff]
        %v3267 = vld [vmem:[#allocation8 + $0x670] sm:$0xff]
        %v3268 = vld [vmem:[#allocation8 + $0x678] sm:$0xff]
        %v3269 = vld [vmem:[#allocation8 + $0x680] sm:$0xff]
        %v3270 = vld [vmem:[#allocation8 + $0x688] sm:$0xff]
        %v3271 = vld [vmem:[#allocation8 + $0x690] sm:$0xff]
        %v3272 = vld [vmem:[#allocation8 + $0x698] sm:$0xff]
        %v3273 = vld [vmem:[#allocation8 + $0x6a0] sm:$0xff]
        %v3274 = vld [vmem:[#allocation8 + $0x6a8] sm:$0xff]
        %v3275 = vld [vmem:[#allocation8 + $0x6b0] sm:$0xff]
        %v3276 = vld [vmem:[#allocation8 + $0x6b8] sm:$0xff]
        %v3277 = vld [vmem:[#allocation8 + $0x6c0] sm:$0xff]
        %v3278 = vld [vmem:[#allocation8 + $0x6c8] sm:$0xff]
        %v3279 = vld [vmem:[#allocation8 + $0x6d0] sm:$0xff]
        %v3280 = vld [vmem:[#allocation8 + $0x6d8] sm:$0xff]
        %v3281 = vld [vmem:[#allocation8 + $0x6e0] sm:$0xff]
        %v3282 = vld [vmem:[#allocation8 + $0x6e8] sm:$0xff]
        %v3283 = vld [vmem:[#allocation8 + $0x6f0] sm:$0xff]
        %v3284 = vld [vmem:[#allocation8 + $0x6f8] sm:$0xff]
        %v3285 = vld [vmem:[#allocation8 + $0x700] sm:$0xff]
        %v3286 = vld [vmem:[#allocation8 + $0x708] sm:$0xff]
        %v3287 = vld [vmem:[#allocation8 + $0x710] sm:$0xff]
        %v3288 = vld [vmem:[#allocation8 + $0x718] sm:$0xff]
        %v3289 = vld [vmem:[#allocation8 + $0x720] sm:$0xff]
        %v3290 = vld [vmem:[#allocation8 + $0x728] sm:$0xff]
        %v3291 = vld [vmem:[#allocation8 + $0x730] sm:$0xff]
        %v3292 = vld [vmem:[#allocation8 + $0x738] sm:$0xff]
        %v3293 = vld [vmem:[#allocation8 + $0x740] sm:$0xff]
        %v3294 = vld [vmem:[#allocation8 + $0x748] sm:$0xff]
        %v3295 = vld [vmem:[#allocation8 + $0x750] sm:$0xff]
        %v3296 = vld [vmem:[#allocation8 + $0x758] sm:$0xff]
        %v3297 = vld [vmem:[#allocation8 + $0x760] sm:$0xff]
        %v3298 = vld [vmem:[#allocation8 + $0x768] sm:$0xff]
        %v3299 = vld [vmem:[#allocation8 + $0x770] sm:$0xff]
        %v3300 = vld [vmem:[#allocation8 + $0x778] sm:$0xff]
        %v3301 = vld [vmem:[#allocation8 + $0x780] sm:$0xff]
        %v3302 = vld [vmem:[#allocation8 + $0x788] sm:$0xff]
        %v3303 = vld [vmem:[#allocation8 + $0x790] sm:$0xff]
        %v3304 = vld [vmem:[#allocation8 + $0x798] sm:$0xff]
        %v3305 = vld [vmem:[#allocation8 + $0x7a0] sm:$0xff]
        %v3306 = vld [vmem:[#allocation8 + $0x7a8] sm:$0xff]
        %v3307 = vld [vmem:[#allocation8 + $0x7b0] sm:$0xff]
        %v3308 = vld [vmem:[#allocation8 + $0x7b8] sm:$0xff]
        %v3309 = vld [vmem:[#allocation8 + $0x7c0] sm:$0xff]
        %v3310 = vld [vmem:[#allocation8 + $0x7c8] sm:$0xff]
        %v3311 = vld [vmem:[#allocation8 + $0x7d0] sm:$0xff]
        %v3312 = vld [vmem:[#allocation8 + $0x7d8] sm:$0xff]
        %v3313 = vld [vmem:[#allocation8 + $0x7e0] sm:$0xff]
        %v3314 = vld [vmem:[#allocation8 + $0x7e8] sm:$0xff]
        %v3315 = vld [vmem:[#allocation8 + $0x7f0] sm:$0xff]
        %v3316 = vld [vmem:[#allocation8 + $0x7f8] sm:$0xff]
        %v3317 = vld [vmem:[#allocation10] sm:$0xf]
        %v3319 = vperm.slane %v3317, 0
        %v3320 = vperm.slane %v3317, 1
        %v3321 = vperm.slane %v3317, 2
        %v3322 = vperm.slane %v3317, 3
        %v3583 = vunpack.c.l.b16 %v3061
        %v3584 = vunpack.c.h.b16 %v3061
        %v3585 = vunpack.c.l.b16 %v3062
        %v3586 = vunpack.c.h.b16 %v3062
        %v3587 = vunpack.c.l.b16 %v3063
        %v3588 = vunpack.c.h.b16 %v3063
        %v3589 = vunpack.c.l.b16 %v3064
        %v3590 = vunpack.c.h.b16 %v3064
        %v3591 = vunpack.c.l.b16 %v3065
        %v3592 = vunpack.c.h.b16 %v3065
        %v3593 = vunpack.c.l.b16 %v3066
        %v3594 = vunpack.c.h.b16 %v3066
        %v3595 = vunpack.c.l.b16 %v3067
        %v3596 = vunpack.c.h.b16 %v3067
        %v3597 = vunpack.c.l.b16 %v3068
        %v3598 = vunpack.c.h.b16 %v3068
        %v3599 = vunpack.c.l.b16 %v3069
        %v3600 = vunpack.c.h.b16 %v3069
        %v3601 = vunpack.c.l.b16 %v3070
        %v3602 = vunpack.c.h.b16 %v3070
        %v3603 = vunpack.c.l.b16 %v3071
        %v3604 = vunpack.c.h.b16 %v3071
        %v3605 = vunpack.c.l.b16 %v3072
        %v3606 = vunpack.c.h.b16 %v3072
        %v3607 = vunpack.c.l.b16 %v3073
        %v3608 = vunpack.c.h.b16 %v3073
        %v3609 = vunpack.c.l.b16 %v3074
        %v3610 = vunpack.c.h.b16 %v3074
        %v3611 = vunpack.c.l.b16 %v3075
        %v3612 = vunpack.c.h.b16 %v3075
        %v3613 = vunpack.c.l.b16 %v3076
        %v3614 = vunpack.c.h.b16 %v3076
        %v3615 = vunpack.c.l.b16 %v3077
        %v3616 = vunpack.c.h.b16 %v3077
        %v3617 = vunpack.c.l.b16 %v3078
        %v3618 = vunpack.c.h.b16 %v3078
        %v3619 = vunpack.c.l.b16 %v3079
        %v3620 = vunpack.c.h.b16 %v3079
        %v3621 = vunpack.c.l.b16 %v3080
        %v3622 = vunpack.c.h.b16 %v3080
        %v3623 = vunpack.c.l.b16 %v3081
        %v3624 = vunpack.c.h.b16 %v3081
        %v3625 = vunpack.c.l.b16 %v3082
        %v3626 = vunpack.c.h.b16 %v3082
        %v3627 = vunpack.c.l.b16 %v3083
        %v3628 = vunpack.c.h.b16 %v3083
        %v3629 = vunpack.c.l.b16 %v3084
        %v3630 = vunpack.c.h.b16 %v3084
        %v3631 = vunpack.c.l.b16 %v3085
        %v3632 = vunpack.c.h.b16 %v3085
        %v3633 = vunpack.c.l.b16 %v3086
        %v3634 = vunpack.c.h.b16 %v3086
        %v3635 = vunpack.c.l.b16 %v3087
        %v3636 = vunpack.c.h.b16 %v3087
        %v3637 = vunpack.c.l.b16 %v3088
        %v3638 = vunpack.c.h.b16 %v3088
        %v3639 = vunpack.c.l.b16 %v3089
        %v3640 = vunpack.c.h.b16 %v3089
        %v3641 = vunpack.c.l.b16 %v3090
        %v3642 = vunpack.c.h.b16 %v3090
        %v3643 = vunpack.c.l.b16 %v3091
        %v3644 = vunpack.c.h.b16 %v3091
        %v3645 = vunpack.c.l.b16 %v3092
        %v3646 = vunpack.c.h.b16 %v3092
        %v3647 = vunpack.c.l.b16 %v3093
        %v3648 = vunpack.c.h.b16 %v3093
        %v3649 = vunpack.c.l.b16 %v3094
        %v3650 = vunpack.c.h.b16 %v3094
        %v3651 = vunpack.c.l.b16 %v3095
        %v3652 = vunpack.c.h.b16 %v3095
        %v3653 = vunpack.c.l.b16 %v3096
        %v3654 = vunpack.c.h.b16 %v3096
        %v3655 = vunpack.c.l.b16 %v3097
        %v3656 = vunpack.c.h.b16 %v3097
        %v3657 = vunpack.c.l.b16 %v3098
        %v3658 = vunpack.c.h.b16 %v3098
        %v3659 = vunpack.c.l.b16 %v3099
        %v3660 = vunpack.c.h.b16 %v3099
        %v3661 = vunpack.c.l.b16 %v3100
        %v3662 = vunpack.c.h.b16 %v3100
        %v3663 = vunpack.c.l.b16 %v3101
        %v3664 = vunpack.c.h.b16 %v3101
        %v3665 = vunpack.c.l.b16 %v3102
        %v3666 = vunpack.c.h.b16 %v3102
        %v3667 = vunpack.c.l.b16 %v3103
        %v3668 = vunpack.c.h.b16 %v3103
        %v3669 = vunpack.c.l.b16 %v3104
        %v3670 = vunpack.c.h.b16 %v3104
        %v3671 = vunpack.c.l.b16 %v3105
        %v3672 = vunpack.c.h.b16 %v3105
        %v3673 = vunpack.c.l.b16 %v3106
        %v3674 = vunpack.c.h.b16 %v3106
        %v3675 = vunpack.c.l.b16 %v3107
        %v3676 = vunpack.c.h.b16 %v3107
        %v3677 = vunpack.c.l.b16 %v3108
        %v3678 = vunpack.c.h.b16 %v3108
        %v3679 = vunpack.c.l.b16 %v3109
        %v3680 = vunpack.c.h.b16 %v3109
        %v3681 = vunpack.c.l.b16 %v3110
        %v3682 = vunpack.c.h.b16 %v3110
        %v3683 = vunpack.c.l.b16 %v3111
        %v3684 = vunpack.c.h.b16 %v3111
        %v3685 = vunpack.c.l.b16 %v3112
        %v3686 = vunpack.c.h.b16 %v3112
        %v3687 = vunpack.c.l.b16 %v3113
        %v3688 = vunpack.c.h.b16 %v3113
        %v3689 = vunpack.c.l.b16 %v3114
        %v3690 = vunpack.c.h.b16 %v3114
        %v3691 = vunpack.c.l.b16 %v3115
        %v3692 = vunpack.c.h.b16 %v3115
        %v3693 = vunpack.c.l.b16 %v3116
        %v3694 = vunpack.c.h.b16 %v3116
        %v3695 = vunpack.c.l.b16 %v3117
        %v3696 = vunpack.c.h.b16 %v3117
        %v3697 = vunpack.c.l.b16 %v3118
        %v3698 = vunpack.c.h.b16 %v3118
        %v3699 = vunpack.c.l.b16 %v3119
        %v3700 = vunpack.c.h.b16 %v3119
        %v3701 = vunpack.c.l.b16 %v3120
        %v3702 = vunpack.c.h.b16 %v3120
        %v3703 = vunpack.c.l.b16 %v3121
        %v3704 = vunpack.c.h.b16 %v3121
        %v3705 = vunpack.c.l.b16 %v3122
        %v3706 = vunpack.c.h.b16 %v3122
        %v3707 = vunpack.c.l.b16 %v3123
        %v3708 = vunpack.c.h.b16 %v3123
        %v3709 = vunpack.c.l.b16 %v3124
        %v3710 = vunpack.c.h.b16 %v3124
        %v3711 = vunpack.c.l.b16 %v3125
        %v3712 = vunpack.c.h.b16 %v3125
        %v3713 = vunpack.c.l.b16 %v3126
        %v3714 = vunpack.c.h.b16 %v3126
        %v3715 = vunpack.c.l.b16 %v3127
        %v3716 = vunpack.c.h.b16 %v3127
        %v3717 = vunpack.c.l.b16 %v3128
        %v3718 = vunpack.c.h.b16 %v3128
        %v3719 = vunpack.c.l.b16 %v3129
        %v3720 = vunpack.c.h.b16 %v3129
        %v3721 = vunpack.c.l.b16 %v3130
        %v3722 = vunpack.c.h.b16 %v3130
        %v3723 = vunpack.c.l.b16 %v3131
        %v3724 = vunpack.c.h.b16 %v3131
        %v3725 = vunpack.c.l.b16 %v3132
        %v3726 = vunpack.c.h.b16 %v3132
        %v3727 = vunpack.c.l.b16 %v3133
        %v3728 = vunpack.c.h.b16 %v3133
        %v3729 = vunpack.c.l.b16 %v3134
        %v3730 = vunpack.c.h.b16 %v3134
        %v3731 = vunpack.c.l.b16 %v3135
        %v3732 = vunpack.c.h.b16 %v3135
        %v3733 = vunpack.c.l.b16 %v3136
        %v3734 = vunpack.c.h.b16 %v3136
        %v3735 = vunpack.c.l.b16 %v3137
        %v3736 = vunpack.c.h.b16 %v3137
        %v3737 = vunpack.c.l.b16 %v3138
        %v3738 = vunpack.c.h.b16 %v3138
        %v3739 = vunpack.c.l.b16 %v3139
        %v3740 = vunpack.c.h.b16 %v3139
        %v3741 = vunpack.c.l.b16 %v3140
        %v3742 = vunpack.c.h.b16 %v3140
        %v3743 = vunpack.c.l.b16 %v3141
        %v3744 = vunpack.c.h.b16 %v3141
        %v3745 = vunpack.c.l.b16 %v3142
        %v3746 = vunpack.c.h.b16 %v3142
        %v3747 = vunpack.c.l.b16 %v3143
        %v3748 = vunpack.c.h.b16 %v3143
        %v3749 = vunpack.c.l.b16 %v3144
        %v3750 = vunpack.c.h.b16 %v3144
        %v3751 = vunpack.c.l.b16 %v3145
        %v3752 = vunpack.c.h.b16 %v3145
        %v3753 = vunpack.c.l.b16 %v3146
        %v3754 = vunpack.c.h.b16 %v3146
        %v3755 = vunpack.c.l.b16 %v3147
        %v3756 = vunpack.c.h.b16 %v3147
        %v3757 = vunpack.c.l.b16 %v3148
        %v3758 = vunpack.c.h.b16 %v3148
        %v3759 = vunpack.c.l.b16 %v3149
        %v3760 = vunpack.c.h.b16 %v3149
        %v3761 = vunpack.c.l.b16 %v3150
        %v3762 = vunpack.c.h.b16 %v3150
        %v3763 = vunpack.c.l.b16 %v3151
        %v3764 = vunpack.c.h.b16 %v3151
        %v3765 = vunpack.c.l.b16 %v3152
        %v3766 = vunpack.c.h.b16 %v3152
        %v3767 = vunpack.c.l.b16 %v3153
        %v3768 = vunpack.c.h.b16 %v3153
        %v3769 = vunpack.c.l.b16 %v3154
        %v3770 = vunpack.c.h.b16 %v3154
        %v3771 = vunpack.c.l.b16 %v3155
        %v3772 = vunpack.c.h.b16 %v3155
        %v3773 = vunpack.c.l.b16 %v3156
        %v3774 = vunpack.c.h.b16 %v3156
        %v3775 = vunpack.c.l.b16 %v3157
        %v3776 = vunpack.c.h.b16 %v3157
        %v3777 = vunpack.c.l.b16 %v3158
        %v3778 = vunpack.c.h.b16 %v3158
        %v3779 = vunpack.c.l.b16 %v3159
        %v3780 = vunpack.c.h.b16 %v3159
        %v3781 = vunpack.c.l.b16 %v3160
        %v3782 = vunpack.c.h.b16 %v3160
        %v3783 = vunpack.c.l.b16 %v3161
        %v3784 = vunpack.c.h.b16 %v3161
        %v3785 = vunpack.c.l.b16 %v3162
        %v3786 = vunpack.c.h.b16 %v3162
        %v3787 = vunpack.c.l.b16 %v3163
        %v3788 = vunpack.c.h.b16 %v3163
        %v3789 = vunpack.c.l.b16 %v3164
        %v3790 = vunpack.c.h.b16 %v3164
        %v3791 = vunpack.c.l.b16 %v3165
        %v3792 = vunpack.c.h.b16 %v3165
        %v3793 = vunpack.c.l.b16 %v3166
        %v3794 = vunpack.c.h.b16 %v3166
        %v3795 = vunpack.c.l.b16 %v3167
        %v3796 = vunpack.c.h.b16 %v3167
        %v3797 = vunpack.c.l.b16 %v3168
        %v3798 = vunpack.c.h.b16 %v3168
        %v3799 = vunpack.c.l.b16 %v3169
        %v3800 = vunpack.c.h.b16 %v3169
        %v3801 = vunpack.c.l.b16 %v3170
        %v3802 = vunpack.c.h.b16 %v3170
        %v3803 = vunpack.c.l.b16 %v3171
        %v3804 = vunpack.c.h.b16 %v3171
        %v3805 = vunpack.c.l.b16 %v3172
        %v3806 = vunpack.c.h.b16 %v3172
        %v3807 = vunpack.c.l.b16 %v3173
        %v3808 = vunpack.c.h.b16 %v3173
        %v3809 = vunpack.c.l.b16 %v3174
        %v3810 = vunpack.c.h.b16 %v3174
        %v3811 = vunpack.c.l.b16 %v3175
        %v3812 = vunpack.c.h.b16 %v3175
        %v3813 = vunpack.c.l.b16 %v3176
        %v3814 = vunpack.c.h.b16 %v3176
        %v3815 = vunpack.c.l.b16 %v3177
        %v3816 = vunpack.c.h.b16 %v3177
        %v3817 = vunpack.c.l.b16 %v3178
        %v3818 = vunpack.c.h.b16 %v3178
        %v3819 = vunpack.c.l.b16 %v3179
        %v3820 = vunpack.c.h.b16 %v3179
        %v3821 = vunpack.c.l.b16 %v3180
        %v3822 = vunpack.c.h.b16 %v3180
        %v3823 = vunpack.c.l.b16 %v3181
        %v3824 = vunpack.c.h.b16 %v3181
        %v3825 = vunpack.c.l.b16 %v3182
        %v3826 = vunpack.c.h.b16 %v3182
        %v3827 = vunpack.c.l.b16 %v3183
        %v3828 = vunpack.c.h.b16 %v3183
        %v3829 = vunpack.c.l.b16 %v3184
        %v3830 = vunpack.c.h.b16 %v3184
        %v3831 = vunpack.c.l.b16 %v3185
        %v3832 = vunpack.c.h.b16 %v3185
        %v3833 = vunpack.c.l.b16 %v3186
        %v3834 = vunpack.c.h.b16 %v3186
        %v3835 = vunpack.c.l.b16 %v3187
        %v3836 = vunpack.c.h.b16 %v3187
        %v3837 = vunpack.c.l.b16 %v3188
        %v3838 = vunpack.c.h.b16 %v3188
        %v3839 = vunpack.c.l.b16 %v3189
        %v3840 = vunpack.c.h.b16 %v3189
        %v3841 = vunpack.c.l.b16 %v3190
        %v3842 = vunpack.c.h.b16 %v3190
        %v3843 = vunpack.c.l.b16 %v3191
        %v3844 = vunpack.c.h.b16 %v3191
        %v3845 = vunpack.c.l.b16 %v3192
        %v3846 = vunpack.c.h.b16 %v3192
        %v3847 = vunpack.c.l.b16 %v3193
        %v3848 = vunpack.c.h.b16 %v3193
        %v3849 = vunpack.c.l.b16 %v3194
        %v3850 = vunpack.c.h.b16 %v3194
        %v3851 = vunpack.c.l.b16 %v3195
        %v3852 = vunpack.c.h.b16 %v3195
        %v3853 = vunpack.c.l.b16 %v3196
        %v3854 = vunpack.c.h.b16 %v3196
        %v3855 = vunpack.c.l.b16 %v3197
        %v3856 = vunpack.c.h.b16 %v3197
        %v3857 = vunpack.c.l.b16 %v3198
        %v3858 = vunpack.c.h.b16 %v3198
        %v3859 = vunpack.c.l.b16 %v3199
        %v3860 = vunpack.c.h.b16 %v3199
        %v3861 = vunpack.c.l.b16 %v3200
        %v3862 = vunpack.c.h.b16 %v3200
        %v3863 = vunpack.c.l.b16 %v3201
        %v3864 = vunpack.c.h.b16 %v3201
        %v3865 = vunpack.c.l.b16 %v3202
        %v3866 = vunpack.c.h.b16 %v3202
        %v3867 = vunpack.c.l.b16 %v3203
        %v3868 = vunpack.c.h.b16 %v3203
        %v3869 = vunpack.c.l.b16 %v3204
        %v3870 = vunpack.c.h.b16 %v3204
        %v3871 = vunpack.c.l.b16 %v3205
        %v3872 = vunpack.c.h.b16 %v3205
        %v3873 = vunpack.c.l.b16 %v3206
        %v3874 = vunpack.c.h.b16 %v3206
        %v3875 = vunpack.c.l.b16 %v3207
        %v3876 = vunpack.c.h.b16 %v3207
        %v3877 = vunpack.c.l.b16 %v3208
        %v3878 = vunpack.c.h.b16 %v3208
        %v3879 = vunpack.c.l.b16 %v3209
        %v3880 = vunpack.c.h.b16 %v3209
        %v3881 = vunpack.c.l.b16 %v3210
        %v3882 = vunpack.c.h.b16 %v3210
        %v3883 = vunpack.c.l.b16 %v3211
        %v3884 = vunpack.c.h.b16 %v3211
        %v3885 = vunpack.c.l.b16 %v3212
        %v3886 = vunpack.c.h.b16 %v3212
        %v3887 = vunpack.c.l.b16 %v3213
        %v3888 = vunpack.c.h.b16 %v3213
        %v3889 = vunpack.c.l.b16 %v3214
        %v3890 = vunpack.c.h.b16 %v3214
        %v3891 = vunpack.c.l.b16 %v3215
        %v3892 = vunpack.c.h.b16 %v3215
        %v3893 = vunpack.c.l.b16 %v3216
        %v3894 = vunpack.c.h.b16 %v3216
        %v3895 = vunpack.c.l.b16 %v3217
        %v3896 = vunpack.c.h.b16 %v3217
        %v3897 = vunpack.c.l.b16 %v3218
        %v3898 = vunpack.c.h.b16 %v3218
        %v3899 = vunpack.c.l.b16 %v3219
        %v3900 = vunpack.c.h.b16 %v3219
        %v3901 = vunpack.c.l.b16 %v3220
        %v3902 = vunpack.c.h.b16 %v3220
        %v3903 = vunpack.c.l.b16 %v3221
        %v3904 = vunpack.c.h.b16 %v3221
        %v3905 = vunpack.c.l.b16 %v3222
        %v3906 = vunpack.c.h.b16 %v3222
        %v3907 = vunpack.c.l.b16 %v3223
        %v3908 = vunpack.c.h.b16 %v3223
        %v3909 = vunpack.c.l.b16 %v3224
        %v3910 = vunpack.c.h.b16 %v3224
        %v3911 = vunpack.c.l.b16 %v3225
        %v3912 = vunpack.c.h.b16 %v3225
        %v3913 = vunpack.c.l.b16 %v3226
        %v3914 = vunpack.c.h.b16 %v3226
        %v3915 = vunpack.c.l.b16 %v3227
        %v3916 = vunpack.c.h.b16 %v3227
        %v3917 = vunpack.c.l.b16 %v3228
        %v3918 = vunpack.c.h.b16 %v3228
        %v3919 = vunpack.c.l.b16 %v3229
        %v3920 = vunpack.c.h.b16 %v3229
        %v3921 = vunpack.c.l.b16 %v3230
        %v3922 = vunpack.c.h.b16 %v3230
        %v3923 = vunpack.c.l.b16 %v3231
        %v3924 = vunpack.c.h.b16 %v3231
        %v3925 = vunpack.c.l.b16 %v3232
        %v3926 = vunpack.c.h.b16 %v3232
        %v3927 = vunpack.c.l.b16 %v3233
        %v3928 = vunpack.c.h.b16 %v3233
        %v3929 = vunpack.c.l.b16 %v3234
        %v3930 = vunpack.c.h.b16 %v3234
        %v3931 = vunpack.c.l.b16 %v3235
        %v3932 = vunpack.c.h.b16 %v3235
        %v3933 = vunpack.c.l.b16 %v3236
        %v3934 = vunpack.c.h.b16 %v3236
        %v3935 = vunpack.c.l.b16 %v3237
        %v3936 = vunpack.c.h.b16 %v3237
        %v3937 = vunpack.c.l.b16 %v3238
        %v3938 = vunpack.c.h.b16 %v3238
        %v3939 = vunpack.c.l.b16 %v3239
        %v3940 = vunpack.c.h.b16 %v3239
        %v3941 = vunpack.c.l.b16 %v3240
        %v3942 = vunpack.c.h.b16 %v3240
        %v3943 = vunpack.c.l.b16 %v3241
        %v3944 = vunpack.c.h.b16 %v3241
        %v3945 = vunpack.c.l.b16 %v3242
        %v3946 = vunpack.c.h.b16 %v3242
        %v3947 = vunpack.c.l.b16 %v3243
        %v3948 = vunpack.c.h.b16 %v3243
        %v3949 = vunpack.c.l.b16 %v3244
        %v3950 = vunpack.c.h.b16 %v3244
        %v3951 = vunpack.c.l.b16 %v3245
        %v3952 = vunpack.c.h.b16 %v3245
        %v3953 = vunpack.c.l.b16 %v3246
        %v3954 = vunpack.c.h.b16 %v3246
        %v3955 = vunpack.c.l.b16 %v3247
        %v3956 = vunpack.c.h.b16 %v3247
        %v3957 = vunpack.c.l.b16 %v3248
        %v3958 = vunpack.c.h.b16 %v3248
        %v3959 = vunpack.c.l.b16 %v3249
        %v3960 = vunpack.c.h.b16 %v3249
        %v3961 = vunpack.c.l.b16 %v3250
        %v3962 = vunpack.c.h.b16 %v3250
        %v3963 = vunpack.c.l.b16 %v3251
        %v3964 = vunpack.c.h.b16 %v3251
        %v3965 = vunpack.c.l.b16 %v3252
        %v3966 = vunpack.c.h.b16 %v3252
        %v3967 = vunpack.c.l.b16 %v3253
        %v3968 = vunpack.c.h.b16 %v3253
        %v3969 = vunpack.c.l.b16 %v3254
        %v3970 = vunpack.c.h.b16 %v3254
        %v3971 = vunpack.c.l.b16 %v3255
        %v3972 = vunpack.c.h.b16 %v3255
        %v3973 = vunpack.c.l.b16 %v3256
        %v3974 = vunpack.c.h.b16 %v3256
        %v3975 = vunpack.c.l.b16 %v3257
        %v3976 = vunpack.c.h.b16 %v3257
        %v3977 = vunpack.c.l.b16 %v3258
        %v3978 = vunpack.c.h.b16 %v3258
        %v3979 = vunpack.c.l.b16 %v3259
        %v3980 = vunpack.c.h.b16 %v3259
        %v3981 = vunpack.c.l.b16 %v3260
        %v3982 = vunpack.c.h.b16 %v3260
        %v3983 = vunpack.c.l.b16 %v3261
        %v3984 = vunpack.c.h.b16 %v3261
        %v3985 = vunpack.c.l.b16 %v3262
        %v3986 = vunpack.c.h.b16 %v3262
        %v3987 = vunpack.c.l.b16 %v3263
        %v3988 = vunpack.c.h.b16 %v3263
        %v3989 = vunpack.c.l.b16 %v3264
        %v3990 = vunpack.c.h.b16 %v3264
        %v3991 = vunpack.c.l.b16 %v3265
        %v3992 = vunpack.c.h.b16 %v3265
        %v3993 = vunpack.c.l.b16 %v3266
        %v3994 = vunpack.c.h.b16 %v3266
        %v3995 = vunpack.c.l.b16 %v3267
        %v3996 = vunpack.c.h.b16 %v3267
        %v3997 = vunpack.c.l.b16 %v3268
        %v3998 = vunpack.c.h.b16 %v3268
        %v3999 = vunpack.c.l.b16 %v3269
        %v4000 = vunpack.c.h.b16 %v3269
        %v4001 = vunpack.c.l.b16 %v3270
        %v4002 = vunpack.c.h.b16 %v3270
        %v4003 = vunpack.c.l.b16 %v3271
        %v4004 = vunpack.c.h.b16 %v3271
        %v4005 = vunpack.c.l.b16 %v3272
        %v4006 = vunpack.c.h.b16 %v3272
        %v4007 = vunpack.c.l.b16 %v3273
        %v4008 = vunpack.c.h.b16 %v3273
        %v4009 = vunpack.c.l.b16 %v3274
        %v4010 = vunpack.c.h.b16 %v3274
        %v4011 = vunpack.c.l.b16 %v3275
        %v4012 = vunpack.c.h.b16 %v3275
        %v4013 = vunpack.c.l.b16 %v3276
        %v4014 = vunpack.c.h.b16 %v3276
        %v4015 = vunpack.c.l.b16 %v3277
        %v4016 = vunpack.c.h.b16 %v3277
        %v4017 = vunpack.c.l.b16 %v3278
        %v4018 = vunpack.c.h.b16 %v3278
        %v4019 = vunpack.c.l.b16 %v3279
        %v4020 = vunpack.c.h.b16 %v3279
        %v4021 = vunpack.c.l.b16 %v3280
        %v4022 = vunpack.c.h.b16 %v3280
        %v4023 = vunpack.c.l.b16 %v3281
        %v4024 = vunpack.c.h.b16 %v3281
        %v4025 = vunpack.c.l.b16 %v3282
        %v4026 = vunpack.c.h.b16 %v3282
        %v4027 = vunpack.c.l.b16 %v3283
        %v4028 = vunpack.c.h.b16 %v3283
        %v4029 = vunpack.c.l.b16 %v3284
        %v4030 = vunpack.c.h.b16 %v3284
        %v4031 = vunpack.c.l.b16 %v3285
        %v4032 = vunpack.c.h.b16 %v3285
        %v4033 = vunpack.c.l.b16 %v3286
        %v4034 = vunpack.c.h.b16 %v3286
        %v4035 = vunpack.c.l.b16 %v3287
        %v4036 = vunpack.c.h.b16 %v3287
        %v4037 = vunpack.c.l.b16 %v3288
        %v4038 = vunpack.c.h.b16 %v3288
        %v4039 = vunpack.c.l.b16 %v3289
        %v4040 = vunpack.c.h.b16 %v3289
        %v4041 = vunpack.c.l.b16 %v3290
        %v4042 = vunpack.c.h.b16 %v3290
        %v4043 = vunpack.c.l.b16 %v3291
        %v4044 = vunpack.c.h.b16 %v3291
        %v4045 = vunpack.c.l.b16 %v3292
        %v4046 = vunpack.c.h.b16 %v3292
        %v4047 = vunpack.c.l.b16 %v3293
        %v4048 = vunpack.c.h.b16 %v3293
        %v4049 = vunpack.c.l.b16 %v3294
        %v4050 = vunpack.c.h.b16 %v3294
        %v4051 = vunpack.c.l.b16 %v3295
        %v4052 = vunpack.c.h.b16 %v3295
        %v4053 = vunpack.c.l.b16 %v3296
        %v4054 = vunpack.c.h.b16 %v3296
        %v4055 = vunpack.c.l.b16 %v3297
        %v4056 = vunpack.c.h.b16 %v3297
        %v4057 = vunpack.c.l.b16 %v3298
        %v4058 = vunpack.c.h.b16 %v3298
        %v4059 = vunpack.c.l.b16 %v3299
        %v4060 = vunpack.c.h.b16 %v3299
        %v4061 = vunpack.c.l.b16 %v3300
        %v4062 = vunpack.c.h.b16 %v3300
        %v4063 = vunpack.c.l.b16 %v3301
        %v4064 = vunpack.c.h.b16 %v3301
        %v4065 = vunpack.c.l.b16 %v3302
        %v4066 = vunpack.c.h.b16 %v3302
        %v4067 = vunpack.c.l.b16 %v3303
        %v4068 = vunpack.c.h.b16 %v3303
        %v4069 = vunpack.c.l.b16 %v3304
        %v4070 = vunpack.c.h.b16 %v3304
        %v4071 = vunpack.c.l.b16 %v3305
        %v4072 = vunpack.c.h.b16 %v3305
        %v4073 = vunpack.c.l.b16 %v3306
        %v4074 = vunpack.c.h.b16 %v3306
        %v4075 = vunpack.c.l.b16 %v3307
        %v4076 = vunpack.c.h.b16 %v3307
        %v4077 = vunpack.c.l.b16 %v3308
        %v4078 = vunpack.c.h.b16 %v3308
        %v4079 = vunpack.c.l.b16 %v3309
        %v4080 = vunpack.c.h.b16 %v3309
        %v4081 = vunpack.c.l.b16 %v3310
        %v4082 = vunpack.c.h.b16 %v3310
        %v4083 = vunpack.c.l.b16 %v3311
        %v4084 = vunpack.c.h.b16 %v3311
        %v4085 = vunpack.c.l.b16 %v3312
        %v4086 = vunpack.c.h.b16 %v3312
        %v4087 = vunpack.c.l.b16 %v3313
        %v4088 = vunpack.c.h.b16 %v3313
        %v4089 = vunpack.c.l.b16 %v3314
        %v4090 = vunpack.c.h.b16 %v3314
        %v4091 = vunpack.c.l.b16 %v3315
        %v4092 = vunpack.c.h.b16 %v3315
        %v4093 = vunpack.c.l.b16 %v3316
        %v4094 = vunpack.c.h.b16 %v3316
        %v4095 = vpack.c.b16 %v3587, %v3583
        %v4096 = vpack.c.b16 %v3588, %v3584
        %v4097 = vpack.c.b16 %v3589, %v3585
        %v4098 = vpack.c.b16 %v3590, %v3586
        %v4099 = vpack.c.b16 %v3595, %v3591
        %v4100 = vpack.c.b16 %v3596, %v3592
        %v4101 = vpack.c.b16 %v3597, %v3593
        %v4102 = vpack.c.b16 %v3598, %v3594
        %v4103 = vpack.c.b16 %v3603, %v3599
        %v4104 = vpack.c.b16 %v3604, %v3600
        %v4105 = vpack.c.b16 %v3605, %v3601
        %v4106 = vpack.c.b16 %v3606, %v3602
        %v4107 = vpack.c.b16 %v3611, %v3607
        %v4108 = vpack.c.b16 %v3612, %v3608
        %v4109 = vpack.c.b16 %v3613, %v3609
        %v4110 = vpack.c.b16 %v3614, %v3610
        %v4111 = vpack.c.b16 %v3619, %v3615
        %v4112 = vpack.c.b16 %v3620, %v3616
        %v4113 = vpack.c.b16 %v3621, %v3617
        %v4114 = vpack.c.b16 %v3622, %v3618
        %v4115 = vpack.c.b16 %v3627, %v3623
        %v4116 = vpack.c.b16 %v3628, %v3624
        %v4117 = vpack.c.b16 %v3629, %v3625
        %v4118 = vpack.c.b16 %v3630, %v3626
        %v4119 = vpack.c.b16 %v3635, %v3631
        %v4120 = vpack.c.b16 %v3636, %v3632
        %v4121 = vpack.c.b16 %v3637, %v3633
        %v4122 = vpack.c.b16 %v3638, %v3634
        %v4123 = vpack.c.b16 %v3643, %v3639
        %v4124 = vpack.c.b16 %v3644, %v3640
        %v4125 = vpack.c.b16 %v3645, %v3641
        %v4126 = vpack.c.b16 %v3646, %v3642
        %v4127 = vpack.c.b16 %v3651, %v3647
        %v4128 = vpack.c.b16 %v3652, %v3648
        %v4129 = vpack.c.b16 %v3653, %v3649
        %v4130 = vpack.c.b16 %v3654, %v3650
        %v4131 = vpack.c.b16 %v3659, %v3655
        %v4132 = vpack.c.b16 %v3660, %v3656
        %v4133 = vpack.c.b16 %v3661, %v3657
        %v4134 = vpack.c.b16 %v3662, %v3658
        %v4135 = vpack.c.b16 %v3667, %v3663
        %v4136 = vpack.c.b16 %v3668, %v3664
        %v4137 = vpack.c.b16 %v3669, %v3665
        %v4138 = vpack.c.b16 %v3670, %v3666
        %v4139 = vpack.c.b16 %v3675, %v3671
        %v4140 = vpack.c.b16 %v3676, %v3672
        %v4141 = vpack.c.b16 %v3677, %v3673
        %v4142 = vpack.c.b16 %v3678, %v3674
        %v4143 = vpack.c.b16 %v3683, %v3679
        %v4144 = vpack.c.b16 %v3684, %v3680
        %v4145 = vpack.c.b16 %v3685, %v3681
        %v4146 = vpack.c.b16 %v3686, %v3682
        %v4147 = vpack.c.b16 %v3691, %v3687
        %v4148 = vpack.c.b16 %v3692, %v3688
        %v4149 = vpack.c.b16 %v3693, %v3689
        %v4150 = vpack.c.b16 %v3694, %v3690
        %v4151 = vpack.c.b16 %v3699, %v3695
        %v4152 = vpack.c.b16 %v3700, %v3696
        %v4153 = vpack.c.b16 %v3701, %v3697
        %v4154 = vpack.c.b16 %v3702, %v3698
        %v4155 = vpack.c.b16 %v3707, %v3703
        %v4156 = vpack.c.b16 %v3708, %v3704
        %v4157 = vpack.c.b16 %v3709, %v3705
        %v4158 = vpack.c.b16 %v3710, %v3706
        %v4159 = vpack.c.b16 %v3715, %v3711
        %v4160 = vpack.c.b16 %v3716, %v3712
        %v4161 = vpack.c.b16 %v3717, %v3713
        %v4162 = vpack.c.b16 %v3718, %v3714
        %v4163 = vpack.c.b16 %v3723, %v3719
        %v4164 = vpack.c.b16 %v3724, %v3720
        %v4165 = vpack.c.b16 %v3725, %v3721
        %v4166 = vpack.c.b16 %v3726, %v3722
        %v4167 = vpack.c.b16 %v3731, %v3727
        %v4168 = vpack.c.b16 %v3732, %v3728
        %v4169 = vpack.c.b16 %v3733, %v3729
        %v4170 = vpack.c.b16 %v3734, %v3730
        %v4171 = vpack.c.b16 %v3739, %v3735
        %v4172 = vpack.c.b16 %v3740, %v3736
        %v4173 = vpack.c.b16 %v3741, %v3737
        %v4174 = vpack.c.b16 %v3742, %v3738
        %v4175 = vpack.c.b16 %v3747, %v3743
        %v4176 = vpack.c.b16 %v3748, %v3744
        %v4177 = vpack.c.b16 %v3749, %v3745
        %v4178 = vpack.c.b16 %v3750, %v3746
        %v4179 = vpack.c.b16 %v3755, %v3751
        %v4180 = vpack.c.b16 %v3756, %v3752
        %v4181 = vpack.c.b16 %v3757, %v3753
        %v4182 = vpack.c.b16 %v3758, %v3754
        %v4183 = vpack.c.b16 %v3763, %v3759
        %v4184 = vpack.c.b16 %v3764, %v3760
        %v4185 = vpack.c.b16 %v3765, %v3761
        %v4186 = vpack.c.b16 %v3766, %v3762
        %v4187 = vpack.c.b16 %v3771, %v3767
        %v4188 = vpack.c.b16 %v3772, %v3768
        %v4189 = vpack.c.b16 %v3773, %v3769
        %v4190 = vpack.c.b16 %v3774, %v3770
        %v4191 = vpack.c.b16 %v3779, %v3775
        %v4192 = vpack.c.b16 %v3780, %v3776
        %v4193 = vpack.c.b16 %v3781, %v3777
        %v4194 = vpack.c.b16 %v3782, %v3778
        %v4195 = vpack.c.b16 %v3787, %v3783
        %v4196 = vpack.c.b16 %v3788, %v3784
        %v4197 = vpack.c.b16 %v3789, %v3785
        %v4198 = vpack.c.b16 %v3790, %v3786
        %v4199 = vpack.c.b16 %v3795, %v3791
        %v4200 = vpack.c.b16 %v3796, %v3792
        %v4201 = vpack.c.b16 %v3797, %v3793
        %v4202 = vpack.c.b16 %v3798, %v3794
        %v4203 = vpack.c.b16 %v3803, %v3799
        %v4204 = vpack.c.b16 %v3804, %v3800
        %v4205 = vpack.c.b16 %v3805, %v3801
        %v4206 = vpack.c.b16 %v3806, %v3802
        %v4207 = vpack.c.b16 %v3811, %v3807
        %v4208 = vpack.c.b16 %v3812, %v3808
        %v4209 = vpack.c.b16 %v3813, %v3809
        %v4210 = vpack.c.b16 %v3814, %v3810
        %v4211 = vpack.c.b16 %v3819, %v3815
        %v4212 = vpack.c.b16 %v3820, %v3816
        %v4213 = vpack.c.b16 %v3821, %v3817
        %v4214 = vpack.c.b16 %v3822, %v3818
        %v4215 = vpack.c.b16 %v3827, %v3823
        %v4216 = vpack.c.b16 %v3828, %v3824
        %v4217 = vpack.c.b16 %v3829, %v3825
        %v4218 = vpack.c.b16 %v3830, %v3826
        %v4219 = vpack.c.b16 %v3835, %v3831
        %v4220 = vpack.c.b16 %v3836, %v3832
        %v4221 = vpack.c.b16 %v3837, %v3833
        %v4222 = vpack.c.b16 %v3838, %v3834
        %v4223 = vpack.c.b16 %v3843, %v3839
        %v4224 = vpack.c.b16 %v3844, %v3840
        %v4225 = vpack.c.b16 %v3845, %v3841
        %v4226 = vpack.c.b16 %v3846, %v3842
        %v4227 = vpack.c.b16 %v3851, %v3847
        %v4228 = vpack.c.b16 %v3852, %v3848
        %v4229 = vpack.c.b16 %v3853, %v3849
        %v4230 = vpack.c.b16 %v3854, %v3850
        %v4231 = vpack.c.b16 %v3859, %v3855
        %v4232 = vpack.c.b16 %v3860, %v3856
        %v4233 = vpack.c.b16 %v3861, %v3857
        %v4234 = vpack.c.b16 %v3862, %v3858
        %v4235 = vpack.c.b16 %v3867, %v3863
        %v4236 = vpack.c.b16 %v3868, %v3864
        %v4237 = vpack.c.b16 %v3869, %v3865
        %v4238 = vpack.c.b16 %v3870, %v3866
        %v4239 = vpack.c.b16 %v3875, %v3871
        %v4240 = vpack.c.b16 %v3876, %v3872
        %v4241 = vpack.c.b16 %v3877, %v3873
        %v4242 = vpack.c.b16 %v3878, %v3874
        %v4243 = vpack.c.b16 %v3883, %v3879
        %v4244 = vpack.c.b16 %v3884, %v3880
        %v4245 = vpack.c.b16 %v3885, %v3881
        %v4246 = vpack.c.b16 %v3886, %v3882
        %v4247 = vpack.c.b16 %v3891, %v3887
        %v4248 = vpack.c.b16 %v3892, %v3888
        %v4249 = vpack.c.b16 %v3893, %v3889
        %v4250 = vpack.c.b16 %v3894, %v3890
        %v4251 = vpack.c.b16 %v3899, %v3895
        %v4252 = vpack.c.b16 %v3900, %v3896
        %v4253 = vpack.c.b16 %v3901, %v3897
        %v4254 = vpack.c.b16 %v3902, %v3898
        %v4255 = vpack.c.b16 %v3907, %v3903
        %v4256 = vpack.c.b16 %v3908, %v3904
        %v4257 = vpack.c.b16 %v3909, %v3905
        %v4258 = vpack.c.b16 %v3910, %v3906
        %v4259 = vpack.c.b16 %v3915, %v3911
        %v4260 = vpack.c.b16 %v3916, %v3912
        %v4261 = vpack.c.b16 %v3917, %v3913
        %v4262 = vpack.c.b16 %v3918, %v3914
        %v4263 = vpack.c.b16 %v3923, %v3919
        %v4264 = vpack.c.b16 %v3924, %v3920
        %v4265 = vpack.c.b16 %v3925, %v3921
        %v4266 = vpack.c.b16 %v3926, %v3922
        %v4267 = vpack.c.b16 %v3931, %v3927
        %v4268 = vpack.c.b16 %v3932, %v3928
        %v4269 = vpack.c.b16 %v3933, %v3929
        %v4270 = vpack.c.b16 %v3934, %v3930
        %v4271 = vpack.c.b16 %v3939, %v3935
        %v4272 = vpack.c.b16 %v3940, %v3936
        %v4273 = vpack.c.b16 %v3941, %v3937
        %v4274 = vpack.c.b16 %v3942, %v3938
        %v4275 = vpack.c.b16 %v3947, %v3943
        %v4276 = vpack.c.b16 %v3948, %v3944
        %v4277 = vpack.c.b16 %v3949, %v3945
        %v4278 = vpack.c.b16 %v3950, %v3946
        %v4279 = vpack.c.b16 %v3955, %v3951
        %v4280 = vpack.c.b16 %v3956, %v3952
        %v4281 = vpack.c.b16 %v3957, %v3953
        %v4282 = vpack.c.b16 %v3958, %v3954
        %v4283 = vpack.c.b16 %v3963, %v3959
        %v4284 = vpack.c.b16 %v3964, %v3960
        %v4285 = vpack.c.b16 %v3965, %v3961
        %v4286 = vpack.c.b16 %v3966, %v3962
        %v4287 = vpack.c.b16 %v3971, %v3967
        %v4288 = vpack.c.b16 %v3972, %v3968
        %v4289 = vpack.c.b16 %v3973, %v3969
        %v4290 = vpack.c.b16 %v3974, %v3970
        %v4291 = vpack.c.b16 %v3979, %v3975
        %v4292 = vpack.c.b16 %v3980, %v3976
        %v4293 = vpack.c.b16 %v3981, %v3977
        %v4294 = vpack.c.b16 %v3982, %v3978
        %v4295 = vpack.c.b16 %v3987, %v3983
        %v4296 = vpack.c.b16 %v3988, %v3984
        %v4297 = vpack.c.b16 %v3989, %v3985
        %v4298 = vpack.c.b16 %v3990, %v3986
        %v4299 = vpack.c.b16 %v3995, %v3991
        %v4300 = vpack.c.b16 %v3996, %v3992
        %v4301 = vpack.c.b16 %v3997, %v3993
        %v4302 = vpack.c.b16 %v3998, %v3994
        %v4303 = vpack.c.b16 %v4003, %v3999
        %v4304 = vpack.c.b16 %v4004, %v4000
        %v4305 = vpack.c.b16 %v4005, %v4001
        %v4306 = vpack.c.b16 %v4006, %v4002
        %v4307 = vpack.c.b16 %v4011, %v4007
        %v4308 = vpack.c.b16 %v4012, %v4008
        %v4309 = vpack.c.b16 %v4013, %v4009
        %v4310 = vpack.c.b16 %v4014, %v4010
        %v4311 = vpack.c.b16 %v4019, %v4015
        %v4312 = vpack.c.b16 %v4020, %v4016
        %v4313 = vpack.c.b16 %v4021, %v4017
        %v4314 = vpack.c.b16 %v4022, %v4018
        %v4315 = vpack.c.b16 %v4027, %v4023
        %v4316 = vpack.c.b16 %v4028, %v4024
        %v4317 = vpack.c.b16 %v4029, %v4025
        %v4318 = vpack.c.b16 %v4030, %v4026
        %v4319 = vpack.c.b16 %v4035, %v4031
        %v4320 = vpack.c.b16 %v4036, %v4032
        %v4321 = vpack.c.b16 %v4037, %v4033
        %v4322 = vpack.c.b16 %v4038, %v4034
        %v4323 = vpack.c.b16 %v4043, %v4039
        %v4324 = vpack.c.b16 %v4044, %v4040
        %v4325 = vpack.c.b16 %v4045, %v4041
        %v4326 = vpack.c.b16 %v4046, %v4042
        %v4327 = vpack.c.b16 %v4051, %v4047
        %v4328 = vpack.c.b16 %v4052, %v4048
        %v4329 = vpack.c.b16 %v4053, %v4049
        %v4330 = vpack.c.b16 %v4054, %v4050
        %v4331 = vpack.c.b16 %v4059, %v4055
        %v4332 = vpack.c.b16 %v4060, %v4056
        %v4333 = vpack.c.b16 %v4061, %v4057
        %v4334 = vpack.c.b16 %v4062, %v4058
        %v4335 = vpack.c.b16 %v4067, %v4063
        %v4336 = vpack.c.b16 %v4068, %v4064
        %v4337 = vpack.c.b16 %v4069, %v4065
        %v4338 = vpack.c.b16 %v4070, %v4066
        %v4339 = vpack.c.b16 %v4075, %v4071
        %v4340 = vpack.c.b16 %v4076, %v4072
        %v4341 = vpack.c.b16 %v4077, %v4073
        %v4342 = vpack.c.b16 %v4078, %v4074
        %v4343 = vpack.c.b16 %v4083, %v4079
        %v4344 = vpack.c.b16 %v4084, %v4080
        %v4345 = vpack.c.b16 %v4085, %v4081
        %v4346 = vpack.c.b16 %v4086, %v4082
        %v4347 = vpack.c.b16 %v4091, %v4087
        %v4348 = vpack.c.b16 %v4092, %v4088
        %v4349 = vpack.c.b16 %v4093, %v4089
        %v4350 = vpack.c.b16 %v4094, %v4090
        %4607 = vmatpush.bf16.msra.mxu0 %v4123
        %4608 = vmatpush.bf16.msra.mxu0 %v4119
        %4609 = vmatpush.bf16.msra.mxu0 %v4115
        %4610 = vmatpush.bf16.msra.mxu0 %v4111
        %4611 = vmatpush.bf16.msra.mxu0 %v4107
        %4612 = vmatpush.bf16.msra.mxu0 %v4103
        %4613 = vmatpush.bf16.msra.mxu0 %v4099
        %4614 = vmatpush.bf16.msra.mxu0 %v4095
        %4615 = vmatmul.bf16.gmra.mxu0 %v2997
        %v4616 = vpop.f32.mrf.mxu0
        %v4617 = vadd.f32 %v3319, %v4616
        %v4618 = vpop.f32.mrf.mxu0
        %v4619 = vadd.f32 %v3319, %v4618
        %4620 = vmatmul.bf16.gmra.mxu0 %v3005
        %v4621 = vpop.f32.mrf.mxu0
        %v4622 = vadd.f32 %v3319, %v4621
        %v4623 = vpop.f32.mrf.mxu0
        %v4624 = vadd.f32 %v3319, %v4623
        %4625 = vmatmul.bf16.gmra.mxu0 %v3013
        %v4626 = vpop.f32.mrf.mxu0
        %v4627 = vadd.f32 %v3319, %v4626
        %v4628 = vpop.f32.mrf.mxu0
        %v4629 = vadd.f32 %v3319, %v4628
        %4630 = vmatmul.bf16.gmra.mxu0 %v3021
        %v4631 = vpop.f32.mrf.mxu0
        %v4632 = vadd.f32 %v3319, %v4631
        %v4633 = vpop.f32.mrf.mxu0
        %v4634 = vadd.f32 %v3319, %v4633
        %4635 = vmatmul.bf16.gmra.mxu0 %v3029
        %v4636 = vpop.f32.mrf.mxu0
        %v4637 = vadd.f32 %v3319, %v4636
        %v4638 = vpop.f32.mrf.mxu0
        %v4639 = vadd.f32 %v3319, %v4638
        %4640 = vmatmul.bf16.gmra.mxu0 %v3037
        %v4641 = vpop.f32.mrf.mxu0
        %v4642 = vadd.f32 %v3319, %v4641
        %v4643 = vpop.f32.mrf.mxu0
        %v4644 = vadd.f32 %v3319, %v4643
        %4645 = vmatmul.bf16.gmra.mxu0 %v3045
        %v4646 = vpop.f32.mrf.mxu0
        %v4647 = vadd.f32 %v3319, %v4646
        %v4648 = vpop.f32.mrf.mxu0
        %v4649 = vadd.f32 %v3319, %v4648
        %4650 = vmatmul.bf16.gmra.mxu0 %v3053
        %v4651 = vpop.f32.mrf.mxu0
        %v4652 = vadd.f32 %v3319, %v4651
        %v4653 = vpop.f32.mrf.mxu0
        %v4654 = vadd.f32 %v3319, %v4653
        %4655 = vdwg.mxu0
        %4656 = vmatpush.bf16.msra.mxu0 %v4155
        %4657 = vmatpush.bf16.msra.mxu0 %v4151
        %4658 = vmatpush.bf16.msra.mxu0 %v4147
        %4659 = vmatpush.bf16.msra.mxu0 %v4143
        %4660 = vmatpush.bf16.msra.mxu0 %v4139
        %4661 = vmatpush.bf16.msra.mxu0 %v4135
        %4662 = vmatpush.bf16.msra.mxu0 %v4131
        %4663 = vmatpush.bf16.msra.mxu0 %v4127
        %4664 = vmatmul.bf16.gmra.mxu0 %v2998
        %v4665 = vpop.f32.mrf.mxu0
        %v4666 = vadd.f32 %v4617, %v4665
        %v4667 = vpop.f32.mrf.mxu0
        %v4668 = vadd.f32 %v4619, %v4667
        %4669 = vmatmul.bf16.gmra.mxu0 %v3006
        %v4670 = vpop.f32.mrf.mxu0
        %v4671 = vadd.f32 %v4622, %v4670
        %v4672 = vpop.f32.mrf.mxu0
        %v4673 = vadd.f32 %v4624, %v4672
        %4674 = vmatmul.bf16.gmra.mxu0 %v3014
        %v4675 = vpop.f32.mrf.mxu0
        %v4676 = vadd.f32 %v4627, %v4675
        %v4677 = vpop.f32.mrf.mxu0
        %v4678 = vadd.f32 %v4629, %v4677
        %4679 = vmatmul.bf16.gmra.mxu0 %v3022
        %v4680 = vpop.f32.mrf.mxu0
        %v4681 = vadd.f32 %v4632, %v4680
        %v4682 = vpop.f32.mrf.mxu0
        %v4683 = vadd.f32 %v4634, %v4682
        %4684 = vmatmul.bf16.gmra.mxu0 %v3030
        %v4685 = vpop.f32.mrf.mxu0
        %v4686 = vadd.f32 %v4637, %v4685
        %v4687 = vpop.f32.mrf.mxu0
        %v4688 = vadd.f32 %v4639, %v4687
        %4689 = vmatmul.bf16.gmra.mxu0 %v3038
        %v4690 = vpop.f32.mrf.mxu0
        %v4691 = vadd.f32 %v4642, %v4690
        %v4692 = vpop.f32.mrf.mxu0
        %v4693 = vadd.f32 %v4644, %v4692
        %4694 = vmatmul.bf16.gmra.mxu0 %v3046
        %v4695 = vpop.f32.mrf.mxu0
        %v4696 = vadd.f32 %v4647, %v4695
        %v4697 = vpop.f32.mrf.mxu0
        %v4698 = vadd.f32 %v4649, %v4697
        %4699 = vmatmul.bf16.gmra.mxu0 %v3054
        %v4700 = vpop.f32.mrf.mxu0
        %v4701 = vadd.f32 %v4652, %v4700
        %v4702 = vpop.f32.mrf.mxu0
        %v4703 = vadd.f32 %v4654, %v4702
        %4704 = vdwg.mxu0
        %4705 = vmatpush.bf16.msra.mxu0 %v4187
        %4706 = vmatpush.bf16.msra.mxu0 %v4183
        %4707 = vmatpush.bf16.msra.mxu0 %v4179
        %4708 = vmatpush.bf16.msra.mxu0 %v4175
        %4709 = vmatpush.bf16.msra.mxu0 %v4171
        %4710 = vmatpush.bf16.msra.mxu0 %v4167
        %4711 = vmatpush.bf16.msra.mxu0 %v4163
        %4712 = vmatpush.bf16.msra.mxu0 %v4159
        %4713 = vmatmul.bf16.gmra.mxu0 %v2999
        %v4714 = vpop.f32.mrf.mxu0
        %v4715 = vadd.f32 %v4666, %v4714
        %v4716 = vpop.f32.mrf.mxu0
        %v4717 = vadd.f32 %v4668, %v4716
        %4718 = vmatmul.bf16.gmra.mxu0 %v3007
        %v4719 = vpop.f32.mrf.mxu0
        %v4720 = vadd.f32 %v4671, %v4719
        %v4721 = vpop.f32.mrf.mxu0
        %v4722 = vadd.f32 %v4673, %v4721
        %4723 = vmatmul.bf16.gmra.mxu0 %v3015
        %v4724 = vpop.f32.mrf.mxu0
        %v4725 = vadd.f32 %v4676, %v4724
        %v4726 = vpop.f32.mrf.mxu0
        %v4727 = vadd.f32 %v4678, %v4726
        %4728 = vmatmul.bf16.gmra.mxu0 %v3023
        %v4729 = vpop.f32.mrf.mxu0
        %v4730 = vadd.f32 %v4681, %v4729
        %v4731 = vpop.f32.mrf.mxu0
        %v4732 = vadd.f32 %v4683, %v4731
        %4733 = vmatmul.bf16.gmra.mxu0 %v3031
        %v4734 = vpop.f32.mrf.mxu0
        %v4735 = vadd.f32 %v4686, %v4734
        %v4736 = vpop.f32.mrf.mxu0
        %v4737 = vadd.f32 %v4688, %v4736
        %4738 = vmatmul.bf16.gmra.mxu0 %v3039
        %v4739 = vpop.f32.mrf.mxu0
        %v4740 = vadd.f32 %v4691, %v4739
        %v4741 = vpop.f32.mrf.mxu0
        %v4742 = vadd.f32 %v4693, %v4741
        %4743 = vmatmul.bf16.gmra.mxu0 %v3047
        %v4744 = vpop.f32.mrf.mxu0
        %v4745 = vadd.f32 %v4696, %v4744
        %v4746 = vpop.f32.mrf.mxu0
        %v4747 = vadd.f32 %v4698, %v4746
        %4748 = vmatmul.bf16.gmra.mxu0 %v3055
        %v4749 = vpop.f32.mrf.mxu0
        %v4750 = vadd.f32 %v4701, %v4749
        %v4751 = vpop.f32.mrf.mxu0
        %v4752 = vadd.f32 %v4703, %v4751
        %4753 = vdwg.mxu0
        %4754 = vmatpush.bf16.msra.mxu0 %v4219
        %4755 = vmatpush.bf16.msra.mxu0 %v4215
        %4756 = vmatpush.bf16.msra.mxu0 %v4211
        %4757 = vmatpush.bf16.msra.mxu0 %v4207
        %4758 = vmatpush.bf16.msra.mxu0 %v4203
        %4759 = vmatpush.bf16.msra.mxu0 %v4199
        %4760 = vmatpush.bf16.msra.mxu0 %v4195
        %4761 = vmatpush.bf16.msra.mxu0 %v4191
        %4762 = vmatmul.bf16.gmra.mxu0 %v3000
        %v4763 = vpop.f32.mrf.mxu0
        %v4764 = vadd.f32 %v4715, %v4763
        %v4765 = vpop.f32.mrf.mxu0
        %v4766 = vadd.f32 %v4717, %v4765
        %4767 = vmatmul.bf16.gmra.mxu0 %v3008
        %v4768 = vpop.f32.mrf.mxu0
        %v4769 = vadd.f32 %v4720, %v4768
        %v4770 = vpop.f32.mrf.mxu0
        %v4771 = vadd.f32 %v4722, %v4770
        %4772 = vmatmul.bf16.gmra.mxu0 %v3016
        %v4773 = vpop.f32.mrf.mxu0
        %v4774 = vadd.f32 %v4725, %v4773
        %v4775 = vpop.f32.mrf.mxu0
        %v4776 = vadd.f32 %v4727, %v4775
        %4777 = vmatmul.bf16.gmra.mxu0 %v3024
        %v4778 = vpop.f32.mrf.mxu0
        %v4779 = vadd.f32 %v4730, %v4778
        %v4780 = vpop.f32.mrf.mxu0
        %v4781 = vadd.f32 %v4732, %v4780
        %4782 = vmatmul.bf16.gmra.mxu0 %v3032
        %v4783 = vpop.f32.mrf.mxu0
        %v4784 = vadd.f32 %v4735, %v4783
        %v4785 = vpop.f32.mrf.mxu0
        %v4786 = vadd.f32 %v4737, %v4785
        %4787 = vmatmul.bf16.gmra.mxu0 %v3040
        %v4788 = vpop.f32.mrf.mxu0
        %v4789 = vadd.f32 %v4740, %v4788
        %v4790 = vpop.f32.mrf.mxu0
        %v4791 = vadd.f32 %v4742, %v4790
        %4792 = vmatmul.bf16.gmra.mxu0 %v3048
        %v4793 = vpop.f32.mrf.mxu0
        %v4794 = vadd.f32 %v4745, %v4793
        %v4795 = vpop.f32.mrf.mxu0
        %v4796 = vadd.f32 %v4747, %v4795
        %4797 = vmatmul.bf16.gmra.mxu0 %v3056
        %v4798 = vpop.f32.mrf.mxu0
        %v4799 = vadd.f32 %v4750, %v4798
        %v4800 = vpop.f32.mrf.mxu0
        %v4801 = vadd.f32 %v4752, %v4800
        %4802 = vdwg.mxu0
        %4803 = vmatpush.bf16.msra.mxu0 %v4251
        %4804 = vmatpush.bf16.msra.mxu0 %v4247
        %4805 = vmatpush.bf16.msra.mxu0 %v4243
        %4806 = vmatpush.bf16.msra.mxu0 %v4239
        %4807 = vmatpush.bf16.msra.mxu0 %v4235
        %4808 = vmatpush.bf16.msra.mxu0 %v4231
        %4809 = vmatpush.bf16.msra.mxu0 %v4227
        %4810 = vmatpush.bf16.msra.mxu0 %v4223
        %4811 = vmatmul.bf16.gmra.mxu0 %v3001
        %v4812 = vpop.f32.mrf.mxu0
        %v4813 = vadd.f32 %v4764, %v4812
        %v4814 = vpop.f32.mrf.mxu0
        %v4815 = vadd.f32 %v4766, %v4814
        %4816 = vmatmul.bf16.gmra.mxu0 %v3009
        %v4817 = vpop.f32.mrf.mxu0
        %v4818 = vadd.f32 %v4769, %v4817
        %v4819 = vpop.f32.mrf.mxu0
        %v4820 = vadd.f32 %v4771, %v4819
        %4821 = vmatmul.bf16.gmra.mxu0 %v3017
        %v4822 = vpop.f32.mrf.mxu0
        %v4823 = vadd.f32 %v4774, %v4822
        %v4824 = vpop.f32.mrf.mxu0
        %v4825 = vadd.f32 %v4776, %v4824
        %4826 = vmatmul.bf16.gmra.mxu0 %v3025
        %v4827 = vpop.f32.mrf.mxu0
        %v4828 = vadd.f32 %v4779, %v4827
        %v4829 = vpop.f32.mrf.mxu0
        %v4830 = vadd.f32 %v4781, %v4829
        %4831 = vmatmul.bf16.gmra.mxu0 %v3033
        %v4832 = vpop.f32.mrf.mxu0
        %v4833 = vadd.f32 %v4784, %v4832
        %v4834 = vpop.f32.mrf.mxu0
        %v4835 = vadd.f32 %v4786, %v4834
        %4836 = vmatmul.bf16.gmra.mxu0 %v3041
        %v4837 = vpop.f32.mrf.mxu0
        %v4838 = vadd.f32 %v4789, %v4837
        %v4839 = vpop.f32.mrf.mxu0
        %v4840 = vadd.f32 %v4791, %v4839
        %4841 = vmatmul.bf16.gmra.mxu0 %v3049
        %v4842 = vpop.f32.mrf.mxu0
        %v4843 = vadd.f32 %v4794, %v4842
        %v4844 = vpop.f32.mrf.mxu0
        %v4845 = vadd.f32 %v4796, %v4844
        %4846 = vmatmul.bf16.gmra.mxu0 %v3057
        %v4847 = vpop.f32.mrf.mxu0
        %v4848 = vadd.f32 %v4799, %v4847
        %v4849 = vpop.f32.mrf.mxu0
        %v4850 = vadd.f32 %v4801, %v4849
        %4851 = vdwg.mxu0
        %4852 = vmatpush.bf16.msra.mxu0 %v4283
        %4853 = vmatpush.bf16.msra.mxu0 %v4279
        %4854 = vmatpush.bf16.msra.mxu0 %v4275
        %4855 = vmatpush.bf16.msra.mxu0 %v4271
        %4856 = vmatpush.bf16.msra.mxu0 %v4267
        %4857 = vmatpush.bf16.msra.mxu0 %v4263
        %4858 = vmatpush.bf16.msra.mxu0 %v4259
        %4859 = vmatpush.bf16.msra.mxu0 %v4255
        %4860 = vmatmul.bf16.gmra.mxu0 %v3002
        %v4861 = vpop.f32.mrf.mxu0
        %v4862 = vadd.f32 %v4813, %v4861
        %v4863 = vpop.f32.mrf.mxu0
        %v4864 = vadd.f32 %v4815, %v4863
        %4865 = vmatmul.bf16.gmra.mxu0 %v3010
        %v4866 = vpop.f32.mrf.mxu0
        %v4867 = vadd.f32 %v4818, %v4866
        %v4868 = vpop.f32.mrf.mxu0
        %v4869 = vadd.f32 %v4820, %v4868
        %4870 = vmatmul.bf16.gmra.mxu0 %v3018
        %v4871 = vpop.f32.mrf.mxu0
        %v4872 = vadd.f32 %v4823, %v4871
        %v4873 = vpop.f32.mrf.mxu0
        %v4874 = vadd.f32 %v4825, %v4873
        %4875 = vmatmul.bf16.gmra.mxu0 %v3026
        %v4876 = vpop.f32.mrf.mxu0
        %v4877 = vadd.f32 %v4828, %v4876
        %v4878 = vpop.f32.mrf.mxu0
        %v4879 = vadd.f32 %v4830, %v4878
        %4880 = vmatmul.bf16.gmra.mxu0 %v3034
        %v4881 = vpop.f32.mrf.mxu0
        %v4882 = vadd.f32 %v4833, %v4881
        %v4883 = vpop.f32.mrf.mxu0
        %v4884 = vadd.f32 %v4835, %v4883
        %4885 = vmatmul.bf16.gmra.mxu0 %v3042
        %v4886 = vpop.f32.mrf.mxu0
        %v4887 = vadd.f32 %v4838, %v4886
        %v4888 = vpop.f32.mrf.mxu0
        %v4889 = vadd.f32 %v4840, %v4888
        %4890 = vmatmul.bf16.gmra.mxu0 %v3050
        %v4891 = vpop.f32.mrf.mxu0
        %v4892 = vadd.f32 %v4843, %v4891
        %v4893 = vpop.f32.mrf.mxu0
        %v4894 = vadd.f32 %v4845, %v4893
        %4895 = vmatmul.bf16.gmra.mxu0 %v3058
        %v4896 = vpop.f32.mrf.mxu0
        %v4897 = vadd.f32 %v4848, %v4896
        %v4898 = vpop.f32.mrf.mxu0
        %v4899 = vadd.f32 %v4850, %v4898
        %4900 = vdwg.mxu0
        %4901 = vmatpush.bf16.msra.mxu0 %v4315
        %4902 = vmatpush.bf16.msra.mxu0 %v4311
        %4903 = vmatpush.bf16.msra.mxu0 %v4307
        %4904 = vmatpush.bf16.msra.mxu0 %v4303
        %4905 = vmatpush.bf16.msra.mxu0 %v4299
        %4906 = vmatpush.bf16.msra.mxu0 %v4295
        %4907 = vmatpush.bf16.msra.mxu0 %v4291
        %4908 = vmatpush.bf16.msra.mxu0 %v4287
        %4909 = vmatmul.bf16.gmra.mxu0 %v3003
        %v4910 = vpop.f32.mrf.mxu0
        %v4911 = vadd.f32 %v4862, %v4910
        %v4912 = vpop.f32.mrf.mxu0
        %v4913 = vadd.f32 %v4864, %v4912
        %4914 = vmatmul.bf16.gmra.mxu0 %v3011
        %v4915 = vpop.f32.mrf.mxu0
        %v4916 = vadd.f32 %v4867, %v4915
        %v4917 = vpop.f32.mrf.mxu0
        %v4918 = vadd.f32 %v4869, %v4917
        %4919 = vmatmul.bf16.gmra.mxu0 %v3019
        %v4920 = vpop.f32.mrf.mxu0
        %v4921 = vadd.f32 %v4872, %v4920
        %v4922 = vpop.f32.mrf.mxu0
        %v4923 = vadd.f32 %v4874, %v4922
        %4924 = vmatmul.bf16.gmra.mxu0 %v3027
        %v4925 = vpop.f32.mrf.mxu0
        %v4926 = vadd.f32 %v4877, %v4925
        %v4927 = vpop.f32.mrf.mxu0
        %v4928 = vadd.f32 %v4879, %v4927
        %4929 = vmatmul.bf16.gmra.mxu0 %v3035
        %v4930 = vpop.f32.mrf.mxu0
        %v4931 = vadd.f32 %v4882, %v4930
        %v4932 = vpop.f32.mrf.mxu0
        %v4933 = vadd.f32 %v4884, %v4932
        %4934 = vmatmul.bf16.gmra.mxu0 %v3043
        %v4935 = vpop.f32.mrf.mxu0
        %v4936 = vadd.f32 %v4887, %v4935
        %v4937 = vpop.f32.mrf.mxu0
        %v4938 = vadd.f32 %v4889, %v4937
        %4939 = vmatmul.bf16.gmra.mxu0 %v3051
        %v4940 = vpop.f32.mrf.mxu0
        %v4941 = vadd.f32 %v4892, %v4940
        %v4942 = vpop.f32.mrf.mxu0
        %v4943 = vadd.f32 %v4894, %v4942
        %4944 = vmatmul.bf16.gmra.mxu0 %v3059
        %v4945 = vpop.f32.mrf.mxu0
        %v4946 = vadd.f32 %v4897, %v4945
        %v4947 = vpop.f32.mrf.mxu0
        %v4948 = vadd.f32 %v4899, %v4947
        %4949 = vdwg.mxu0
        %4950 = vmatpush.bf16.msra.mxu0 %v4347
        %4951 = vmatpush.bf16.msra.mxu0 %v4343
        %4952 = vmatpush.bf16.msra.mxu0 %v4339
        %4953 = vmatpush.bf16.msra.mxu0 %v4335
        %4954 = vmatpush.bf16.msra.mxu0 %v4331
        %4955 = vmatpush.bf16.msra.mxu0 %v4327
        %4956 = vmatpush.bf16.msra.mxu0 %v4323
        %4957 = vmatpush.bf16.msra.mxu0 %v4319
        %4958 = vmatmul.bf16.gmra.mxu0 %v3004
        %v4959 = vpop.f32.mrf.mxu0
        %v4960 = vadd.f32 %v4911, %v4959
        %v4961 = vpop.f32.mrf.mxu0
        %v4962 = vadd.f32 %v4913, %v4961
        %4963 = vmatmul.bf16.gmra.mxu0 %v3012
        %v4964 = vpop.f32.mrf.mxu0
        %v4965 = vadd.f32 %v4916, %v4964
        %v4966 = vpop.f32.mrf.mxu0
        %v4967 = vadd.f32 %v4918, %v4966
        %4968 = vmatmul.bf16.gmra.mxu0 %v3020
        %v4969 = vpop.f32.mrf.mxu0
        %v4970 = vadd.f32 %v4921, %v4969
        %v4971 = vpop.f32.mrf.mxu0
        %v4972 = vadd.f32 %v4923, %v4971
        %4973 = vmatmul.bf16.gmra.mxu0 %v3028
        %v4974 = vpop.f32.mrf.mxu0
        %v4975 = vadd.f32 %v4926, %v4974
        %v4976 = vpop.f32.mrf.mxu0
        %v4977 = vadd.f32 %v4928, %v4976
        %4978 = vmatmul.bf16.gmra.mxu0 %v3036
        %v4979 = vpop.f32.mrf.mxu0
        %v4980 = vadd.f32 %v4931, %v4979
        %v4981 = vpop.f32.mrf.mxu0
        %v4982 = vadd.f32 %v4933, %v4981
        %4983 = vmatmul.bf16.gmra.mxu0 %v3044
        %v4984 = vpop.f32.mrf.mxu0
        %v4985 = vadd.f32 %v4936, %v4984
        %v4986 = vpop.f32.mrf.mxu0
        %v4987 = vadd.f32 %v4938, %v4986
        %4988 = vmatmul.bf16.gmra.mxu0 %v3052
        %v4989 = vpop.f32.mrf.mxu0
        %v4990 = vadd.f32 %v4941, %v4989
        %v4991 = vpop.f32.mrf.mxu0
        %v4992 = vadd.f32 %v4943, %v4991
        %4993 = vmatmul.bf16.gmra.mxu0 %v3060
        %v4994 = vpop.f32.mrf.mxu0
        %v4995 = vadd.f32 %v4946, %v4994
        %v4996 = vpop.f32.mrf.mxu0
        %v4997 = vadd.f32 %v4948, %v4996
        %4998 = vdwg.mxu0
        %4999 = vmatpush.bf16.msra.mxu0 %v4124
        %5000 = vmatpush.bf16.msra.mxu0 %v4120
        %5001 = vmatpush.bf16.msra.mxu0 %v4116
        %5002 = vmatpush.bf16.msra.mxu0 %v4112
        %5003 = vmatpush.bf16.msra.mxu0 %v4108
        %5004 = vmatpush.bf16.msra.mxu0 %v4104
        %5005 = vmatpush.bf16.msra.mxu0 %v4100
        %5006 = vmatpush.bf16.msra.mxu0 %v4096
        %5007 = vmatmul.bf16.gmra.mxu0 %v2997
        %v5008 = vpop.f32.mrf.mxu0
        %v5009 = vadd.f32 %v3320, %v5008
        %v5010 = vpop.f32.mrf.mxu0
        %v5011 = vadd.f32 %v3320, %v5010
        %5012 = vmatmul.bf16.gmra.mxu0 %v3005
        %v5013 = vpop.f32.mrf.mxu0
        %v5014 = vadd.f32 %v3320, %v5013
        %v5015 = vpop.f32.mrf.mxu0
        %v5016 = vadd.f32 %v3320, %v5015
        %5017 = vmatmul.bf16.gmra.mxu0 %v3013
        %v5018 = vpop.f32.mrf.mxu0
        %v5019 = vadd.f32 %v3320, %v5018
        %v5020 = vpop.f32.mrf.mxu0
        %v5021 = vadd.f32 %v3320, %v5020
        %5022 = vmatmul.bf16.gmra.mxu0 %v3021
        %v5023 = vpop.f32.mrf.mxu0
        %v5024 = vadd.f32 %v3320, %v5023
        %v5025 = vpop.f32.mrf.mxu0
        %v5026 = vadd.f32 %v3320, %v5025
        %5027 = vmatmul.bf16.gmra.mxu0 %v3029
        %v5028 = vpop.f32.mrf.mxu0
        %v5029 = vadd.f32 %v3320, %v5028
        %v5030 = vpop.f32.mrf.mxu0
        %v5031 = vadd.f32 %v3320, %v5030
        %5032 = vmatmul.bf16.gmra.mxu0 %v3037
        %v5033 = vpop.f32.mrf.mxu0
        %v5034 = vadd.f32 %v3320, %v5033
        %v5035 = vpop.f32.mrf.mxu0
        %v5036 = vadd.f32 %v3320, %v5035
        %5037 = vmatmul.bf16.gmra.mxu0 %v3045
        %v5038 = vpop.f32.mrf.mxu0
        %v5039 = vadd.f32 %v3320, %v5038
        %v5040 = vpop.f32.mrf.mxu0
        %v5041 = vadd.f32 %v3320, %v5040
        %5042 = vmatmul.bf16.gmra.mxu0 %v3053
        %v5043 = vpop.f32.mrf.mxu0
        %v5044 = vadd.f32 %v3320, %v5043
        %v5045 = vpop.f32.mrf.mxu0
        %v5046 = vadd.f32 %v3320, %v5045
        %5047 = vdwg.mxu0
        %5048 = vmatpush.bf16.msra.mxu0 %v4156
        %5049 = vmatpush.bf16.msra.mxu0 %v4152
        %5050 = vmatpush.bf16.msra.mxu0 %v4148
        %5051 = vmatpush.bf16.msra.mxu0 %v4144
        %5052 = vmatpush.bf16.msra.mxu0 %v4140
        %5053 = vmatpush.bf16.msra.mxu0 %v4136
        %5054 = vmatpush.bf16.msra.mxu0 %v4132
        %5055 = vmatpush.bf16.msra.mxu0 %v4128
        %5056 = vmatmul.bf16.gmra.mxu0 %v2998
        %v5057 = vpop.f32.mrf.mxu0
        %v5058 = vadd.f32 %v5009, %v5057
        %v5059 = vpop.f32.mrf.mxu0
        %v5060 = vadd.f32 %v5011, %v5059
        %5061 = vmatmul.bf16.gmra.mxu0 %v3006
        %v5062 = vpop.f32.mrf.mxu0
        %v5063 = vadd.f32 %v5014, %v5062
        %v5064 = vpop.f32.mrf.mxu0
        %v5065 = vadd.f32 %v5016, %v5064
        %5066 = vmatmul.bf16.gmra.mxu0 %v3014
        %v5067 = vpop.f32.mrf.mxu0
        %v5068 = vadd.f32 %v5019, %v5067
        %v5069 = vpop.f32.mrf.mxu0
        %v5070 = vadd.f32 %v5021, %v5069
        %5071 = vmatmul.bf16.gmra.mxu0 %v3022
        %v5072 = vpop.f32.mrf.mxu0
        %v5073 = vadd.f32 %v5024, %v5072
        %v5074 = vpop.f32.mrf.mxu0
        %v5075 = vadd.f32 %v5026, %v5074
        %5076 = vmatmul.bf16.gmra.mxu0 %v3030
        %v5077 = vpop.f32.mrf.mxu0
        %v5078 = vadd.f32 %v5029, %v5077
        %v5079 = vpop.f32.mrf.mxu0
        %v5080 = vadd.f32 %v5031, %v5079
        %5081 = vmatmul.bf16.gmra.mxu0 %v3038
        %v5082 = vpop.f32.mrf.mxu0
        %v5083 = vadd.f32 %v5034, %v5082
        %v5084 = vpop.f32.mrf.mxu0
        %v5085 = vadd.f32 %v5036, %v5084
        %5086 = vmatmul.bf16.gmra.mxu0 %v3046
        %v5087 = vpop.f32.mrf.mxu0
        %v5088 = vadd.f32 %v5039, %v5087
        %v5089 = vpop.f32.mrf.mxu0
        %v5090 = vadd.f32 %v5041, %v5089
        %5091 = vmatmul.bf16.gmra.mxu0 %v3054
        %v5092 = vpop.f32.mrf.mxu0
        %v5093 = vadd.f32 %v5044, %v5092
        %v5094 = vpop.f32.mrf.mxu0
        %v5095 = vadd.f32 %v5046, %v5094
        %5096 = vdwg.mxu0
        %5097 = vmatpush.bf16.msra.mxu0 %v4188
        %5098 = vmatpush.bf16.msra.mxu0 %v4184
        %5099 = vmatpush.bf16.msra.mxu0 %v4180
        %5100 = vmatpush.bf16.msra.mxu0 %v4176
        %5101 = vmatpush.bf16.msra.mxu0 %v4172
        %5102 = vmatpush.bf16.msra.mxu0 %v4168
        %5103 = vmatpush.bf16.msra.mxu0 %v4164
        %5104 = vmatpush.bf16.msra.mxu0 %v4160
        %5105 = vmatmul.bf16.gmra.mxu0 %v2999
        %v5106 = vpop.f32.mrf.mxu0
        %v5107 = vadd.f32 %v5058, %v5106
        %v5108 = vpop.f32.mrf.mxu0
        %v5109 = vadd.f32 %v5060, %v5108
        %5110 = vmatmul.bf16.gmra.mxu0 %v3007
        %v5111 = vpop.f32.mrf.mxu0
        %v5112 = vadd.f32 %v5063, %v5111
        %v5113 = vpop.f32.mrf.mxu0
        %v5114 = vadd.f32 %v5065, %v5113
        %5115 = vmatmul.bf16.gmra.mxu0 %v3015
        %v5116 = vpop.f32.mrf.mxu0
        %v5117 = vadd.f32 %v5068, %v5116
        %v5118 = vpop.f32.mrf.mxu0
        %v5119 = vadd.f32 %v5070, %v5118
        %5120 = vmatmul.bf16.gmra.mxu0 %v3023
        %v5121 = vpop.f32.mrf.mxu0
        %v5122 = vadd.f32 %v5073, %v5121
        %v5123 = vpop.f32.mrf.mxu0
        %v5124 = vadd.f32 %v5075, %v5123
        %5125 = vmatmul.bf16.gmra.mxu0 %v3031
        %v5126 = vpop.f32.mrf.mxu0
        %v5127 = vadd.f32 %v5078, %v5126
        %v5128 = vpop.f32.mrf.mxu0
        %v5129 = vadd.f32 %v5080, %v5128
        %5130 = vmatmul.bf16.gmra.mxu0 %v3039
        %v5131 = vpop.f32.mrf.mxu0
        %v5132 = vadd.f32 %v5083, %v5131
        %v5133 = vpop.f32.mrf.mxu0
        %v5134 = vadd.f32 %v5085, %v5133
        %5135 = vmatmul.bf16.gmra.mxu0 %v3047
        %v5136 = vpop.f32.mrf.mxu0
        %v5137 = vadd.f32 %v5088, %v5136
        %v5138 = vpop.f32.mrf.mxu0
        %v5139 = vadd.f32 %v5090, %v5138
        %5140 = vmatmul.bf16.gmra.mxu0 %v3055
        %v5141 = vpop.f32.mrf.mxu0
        %v5142 = vadd.f32 %v5093, %v5141
        %v5143 = vpop.f32.mrf.mxu0
        %v5144 = vadd.f32 %v5095, %v5143
        %5145 = vdwg.mxu0
        %5146 = vmatpush.bf16.msra.mxu0 %v4220
        %5147 = vmatpush.bf16.msra.mxu0 %v4216
        %5148 = vmatpush.bf16.msra.mxu0 %v4212
        %5149 = vmatpush.bf16.msra.mxu0 %v4208
        %5150 = vmatpush.bf16.msra.mxu0 %v4204
        %5151 = vmatpush.bf16.msra.mxu0 %v4200
        %5152 = vmatpush.bf16.msra.mxu0 %v4196
        %5153 = vmatpush.bf16.msra.mxu0 %v4192
        %5154 = vmatmul.bf16.gmra.mxu0 %v3000
        %v5155 = vpop.f32.mrf.mxu0
        %v5156 = vadd.f32 %v5107, %v5155
        %v5157 = vpop.f32.mrf.mxu0
        %v5158 = vadd.f32 %v5109, %v5157
        %5159 = vmatmul.bf16.gmra.mxu0 %v3008
        %v5160 = vpop.f32.mrf.mxu0
        %v5161 = vadd.f32 %v5112, %v5160
        %v5162 = vpop.f32.mrf.mxu0
        %v5163 = vadd.f32 %v5114, %v5162
        %5164 = vmatmul.bf16.gmra.mxu0 %v3016
        %v5165 = vpop.f32.mrf.mxu0
        %v5166 = vadd.f32 %v5117, %v5165
        %v5167 = vpop.f32.mrf.mxu0
        %v5168 = vadd.f32 %v5119, %v5167
        %5169 = vmatmul.bf16.gmra.mxu0 %v3024
        %v5170 = vpop.f32.mrf.mxu0
        %v5171 = vadd.f32 %v5122, %v5170
        %v5172 = vpop.f32.mrf.mxu0
        %v5173 = vadd.f32 %v5124, %v5172
        %5174 = vmatmul.bf16.gmra.mxu0 %v3032
        %v5175 = vpop.f32.mrf.mxu0
        %v5176 = vadd.f32 %v5127, %v5175
        %v5177 = vpop.f32.mrf.mxu0
        %v5178 = vadd.f32 %v5129, %v5177
        %5179 = vmatmul.bf16.gmra.mxu0 %v3040
        %v5180 = vpop.f32.mrf.mxu0
        %v5181 = vadd.f32 %v5132, %v5180
        %v5182 = vpop.f32.mrf.mxu0
        %v5183 = vadd.f32 %v5134, %v5182
        %5184 = vmatmul.bf16.gmra.mxu0 %v3048
        %v5185 = vpop.f32.mrf.mxu0
        %v5186 = vadd.f32 %v5137, %v5185
        %v5187 = vpop.f32.mrf.mxu0
        %v5188 = vadd.f32 %v5139, %v5187
        %5189 = vmatmul.bf16.gmra.mxu0 %v3056
        %v5190 = vpop.f32.mrf.mxu0
        %v5191 = vadd.f32 %v5142, %v5190
        %v5192 = vpop.f32.mrf.mxu0
        %v5193 = vadd.f32 %v5144, %v5192
        %5194 = vdwg.mxu0
        %5195 = vmatpush.bf16.msra.mxu0 %v4252
        %5196 = vmatpush.bf16.msra.mxu0 %v4248
        %5197 = vmatpush.bf16.msra.mxu0 %v4244
        %5198 = vmatpush.bf16.msra.mxu0 %v4240
        %5199 = vmatpush.bf16.msra.mxu0 %v4236
        %5200 = vmatpush.bf16.msra.mxu0 %v4232
        %5201 = vmatpush.bf16.msra.mxu0 %v4228
        %5202 = vmatpush.bf16.msra.mxu0 %v4224
        %5203 = vmatmul.bf16.gmra.mxu0 %v3001
        %v5204 = vpop.f32.mrf.mxu0
        %v5205 = vadd.f32 %v5156, %v5204
        %v5206 = vpop.f32.mrf.mxu0
        %v5207 = vadd.f32 %v5158, %v5206
        %5208 = vmatmul.bf16.gmra.mxu0 %v3009
        %v5209 = vpop.f32.mrf.mxu0
        %v5210 = vadd.f32 %v5161, %v5209
        %v5211 = vpop.f32.mrf.mxu0
        %v5212 = vadd.f32 %v5163, %v5211
        %5213 = vmatmul.bf16.gmra.mxu0 %v3017
        %v5214 = vpop.f32.mrf.mxu0
        %v5215 = vadd.f32 %v5166, %v5214
        %v5216 = vpop.f32.mrf.mxu0
        %v5217 = vadd.f32 %v5168, %v5216
        %5218 = vmatmul.bf16.gmra.mxu0 %v3025
        %v5219 = vpop.f32.mrf.mxu0
        %v5220 = vadd.f32 %v5171, %v5219
        %v5221 = vpop.f32.mrf.mxu0
        %v5222 = vadd.f32 %v5173, %v5221
        %5223 = vmatmul.bf16.gmra.mxu0 %v3033
        %v5224 = vpop.f32.mrf.mxu0
        %v5225 = vadd.f32 %v5176, %v5224
        %v5226 = vpop.f32.mrf.mxu0
        %v5227 = vadd.f32 %v5178, %v5226
        %5228 = vmatmul.bf16.gmra.mxu0 %v3041
        %v5229 = vpop.f32.mrf.mxu0
        %v5230 = vadd.f32 %v5181, %v5229
        %v5231 = vpop.f32.mrf.mxu0
        %v5232 = vadd.f32 %v5183, %v5231
        %5233 = vmatmul.bf16.gmra.mxu0 %v3049
        %v5234 = vpop.f32.mrf.mxu0
        %v5235 = vadd.f32 %v5186, %v5234
        %v5236 = vpop.f32.mrf.mxu0
        %v5237 = vadd.f32 %v5188, %v5236
        %5238 = vmatmul.bf16.gmra.mxu0 %v3057
        %v5239 = vpop.f32.mrf.mxu0
        %v5240 = vadd.f32 %v5191, %v5239
        %v5241 = vpop.f32.mrf.mxu0
        %v5242 = vadd.f32 %v5193, %v5241
        %5243 = vdwg.mxu0
        %5244 = vmatpush.bf16.msra.mxu0 %v4284
        %5245 = vmatpush.bf16.msra.mxu0 %v4280
        %5246 = vmatpush.bf16.msra.mxu0 %v4276
        %5247 = vmatpush.bf16.msra.mxu0 %v4272
        %5248 = vmatpush.bf16.msra.mxu0 %v4268
        %5249 = vmatpush.bf16.msra.mxu0 %v4264
        %5250 = vmatpush.bf16.msra.mxu0 %v4260
        %5251 = vmatpush.bf16.msra.mxu0 %v4256
        %5252 = vmatmul.bf16.gmra.mxu0 %v3002
        %v5253 = vpop.f32.mrf.mxu0
        %v5254 = vadd.f32 %v5205, %v5253
        %v5255 = vpop.f32.mrf.mxu0
        %v5256 = vadd.f32 %v5207, %v5255
        %5257 = vmatmul.bf16.gmra.mxu0 %v3010
        %v5258 = vpop.f32.mrf.mxu0
        %v5259 = vadd.f32 %v5210, %v5258
        %v5260 = vpop.f32.mrf.mxu0
        %v5261 = vadd.f32 %v5212, %v5260
        %5262 = vmatmul.bf16.gmra.mxu0 %v3018
        %v5263 = vpop.f32.mrf.mxu0
        %v5264 = vadd.f32 %v5215, %v5263
        %v5265 = vpop.f32.mrf.mxu0
        %v5266 = vadd.f32 %v5217, %v5265
        %5267 = vmatmul.bf16.gmra.mxu0 %v3026
        %v5268 = vpop.f32.mrf.mxu0
        %v5269 = vadd.f32 %v5220, %v5268
        %v5270 = vpop.f32.mrf.mxu0
        %v5271 = vadd.f32 %v5222, %v5270
        %5272 = vmatmul.bf16.gmra.mxu0 %v3034
        %v5273 = vpop.f32.mrf.mxu0
        %v5274 = vadd.f32 %v5225, %v5273
        %v5275 = vpop.f32.mrf.mxu0
        %v5276 = vadd.f32 %v5227, %v5275
        %5277 = vmatmul.bf16.gmra.mxu0 %v3042
        %v5278 = vpop.f32.mrf.mxu0
        %v5279 = vadd.f32 %v5230, %v5278
        %v5280 = vpop.f32.mrf.mxu0
        %v5281 = vadd.f32 %v5232, %v5280
        %5282 = vmatmul.bf16.gmra.mxu0 %v3050
        %v5283 = vpop.f32.mrf.mxu0
        %v5284 = vadd.f32 %v5235, %v5283
        %v5285 = vpop.f32.mrf.mxu0
        %v5286 = vadd.f32 %v5237, %v5285
        %5287 = vmatmul.bf16.gmra.mxu0 %v3058
        %v5288 = vpop.f32.mrf.mxu0
        %v5289 = vadd.f32 %v5240, %v5288
        %v5290 = vpop.f32.mrf.mxu0
        %v5291 = vadd.f32 %v5242, %v5290
        %5292 = vdwg.mxu0
        %5293 = vmatpush.bf16.msra.mxu0 %v4316
        %5294 = vmatpush.bf16.msra.mxu0 %v4312
        %5295 = vmatpush.bf16.msra.mxu0 %v4308
        %5296 = vmatpush.bf16.msra.mxu0 %v4304
        %5297 = vmatpush.bf16.msra.mxu0 %v4300
        %5298 = vmatpush.bf16.msra.mxu0 %v4296
        %5299 = vmatpush.bf16.msra.mxu0 %v4292
        %5300 = vmatpush.bf16.msra.mxu0 %v4288
        %5301 = vmatmul.bf16.gmra.mxu0 %v3003
        %v5302 = vpop.f32.mrf.mxu0
        %v5303 = vadd.f32 %v5254, %v5302
        %v5304 = vpop.f32.mrf.mxu0
        %v5305 = vadd.f32 %v5256, %v5304
        %5306 = vmatmul.bf16.gmra.mxu0 %v3011
        %v5307 = vpop.f32.mrf.mxu0
        %v5308 = vadd.f32 %v5259, %v5307
        %v5309 = vpop.f32.mrf.mxu0
        %v5310 = vadd.f32 %v5261, %v5309
        %5311 = vmatmul.bf16.gmra.mxu0 %v3019
        %v5312 = vpop.f32.mrf.mxu0
        %v5313 = vadd.f32 %v5264, %v5312
        %v5314 = vpop.f32.mrf.mxu0
        %v5315 = vadd.f32 %v5266, %v5314
        %5316 = vmatmul.bf16.gmra.mxu0 %v3027
        %v5317 = vpop.f32.mrf.mxu0
        %v5318 = vadd.f32 %v5269, %v5317
        %v5319 = vpop.f32.mrf.mxu0
        %v5320 = vadd.f32 %v5271, %v5319
        %5321 = vmatmul.bf16.gmra.mxu0 %v3035
        %v5322 = vpop.f32.mrf.mxu0
        %v5323 = vadd.f32 %v5274, %v5322
        %v5324 = vpop.f32.mrf.mxu0
        %v5325 = vadd.f32 %v5276, %v5324
        %5326 = vmatmul.bf16.gmra.mxu0 %v3043
        %v5327 = vpop.f32.mrf.mxu0
        %v5328 = vadd.f32 %v5279, %v5327
        %v5329 = vpop.f32.mrf.mxu0
        %v5330 = vadd.f32 %v5281, %v5329
        %5331 = vmatmul.bf16.gmra.mxu0 %v3051
        %v5332 = vpop.f32.mrf.mxu0
        %v5333 = vadd.f32 %v5284, %v5332
        %v5334 = vpop.f32.mrf.mxu0
        %v5335 = vadd.f32 %v5286, %v5334
        %5336 = vmatmul.bf16.gmra.mxu0 %v3059
        %v5337 = vpop.f32.mrf.mxu0
        %v5338 = vadd.f32 %v5289, %v5337
        %v5339 = vpop.f32.mrf.mxu0
        %v5340 = vadd.f32 %v5291, %v5339
        %5341 = vdwg.mxu0
        %5342 = vmatpush.bf16.msra.mxu0 %v4348
        %5343 = vmatpush.bf16.msra.mxu0 %v4344
        %5344 = vmatpush.bf16.msra.mxu0 %v4340
        %5345 = vmatpush.bf16.msra.mxu0 %v4336
        %5346 = vmatpush.bf16.msra.mxu0 %v4332
        %5347 = vmatpush.bf16.msra.mxu0 %v4328
        %5348 = vmatpush.bf16.msra.mxu0 %v4324
        %5349 = vmatpush.bf16.msra.mxu0 %v4320
        %5350 = vmatmul.bf16.gmra.mxu0 %v3004
        %v5351 = vpop.f32.mrf.mxu0
        %v5352 = vadd.f32 %v5303, %v5351
        %v5353 = vpop.f32.mrf.mxu0
        %v5354 = vadd.f32 %v5305, %v5353
        %5355 = vmatmul.bf16.gmra.mxu0 %v3012
        %v5356 = vpop.f32.mrf.mxu0
        %v5357 = vadd.f32 %v5308, %v5356
        %v5358 = vpop.f32.mrf.mxu0
        %v5359 = vadd.f32 %v5310, %v5358
        %5360 = vmatmul.bf16.gmra.mxu0 %v3020
        %v5361 = vpop.f32.mrf.mxu0
        %v5362 = vadd.f32 %v5313, %v5361
        %v5363 = vpop.f32.mrf.mxu0
        %v5364 = vadd.f32 %v5315, %v5363
        %5365 = vmatmul.bf16.gmra.mxu0 %v3028
        %v5366 = vpop.f32.mrf.mxu0
        %v5367 = vadd.f32 %v5318, %v5366
        %v5368 = vpop.f32.mrf.mxu0
        %v5369 = vadd.f32 %v5320, %v5368
        %5370 = vmatmul.bf16.gmra.mxu0 %v3036
        %v5371 = vpop.f32.mrf.mxu0
        %v5372 = vadd.f32 %v5323, %v5371
        %v5373 = vpop.f32.mrf.mxu0
        %v5374 = vadd.f32 %v5325, %v5373
        %5375 = vmatmul.bf16.gmra.mxu0 %v3044
        %v5376 = vpop.f32.mrf.mxu0
        %v5377 = vadd.f32 %v5328, %v5376
        %v5378 = vpop.f32.mrf.mxu0
        %v5379 = vadd.f32 %v5330, %v5378
        %5380 = vmatmul.bf16.gmra.mxu0 %v3052
        %v5381 = vpop.f32.mrf.mxu0
        %v5382 = vadd.f32 %v5333, %v5381
        %v5383 = vpop.f32.mrf.mxu0
        %v5384 = vadd.f32 %v5335, %v5383
        %5385 = vmatmul.bf16.gmra.mxu0 %v3060
        %v5386 = vpop.f32.mrf.mxu0
        %v5387 = vadd.f32 %v5338, %v5386
        %v5388 = vpop.f32.mrf.mxu0
        %v5389 = vadd.f32 %v5340, %v5388
        %5390 = vdwg.mxu0
        %5391 = vmatpush.bf16.msra.mxu0 %v4125
        %5392 = vmatpush.bf16.msra.mxu0 %v4121
        %5393 = vmatpush.bf16.msra.mxu0 %v4117
        %5394 = vmatpush.bf16.msra.mxu0 %v4113
        %5395 = vmatpush.bf16.msra.mxu0 %v4109
        %5396 = vmatpush.bf16.msra.mxu0 %v4105
        %5397 = vmatpush.bf16.msra.mxu0 %v4101
        %5398 = vmatpush.bf16.msra.mxu0 %v4097
        %5399 = vmatmul.bf16.gmra.mxu0 %v2997
        %v5400 = vpop.f32.mrf.mxu0
        %v5401 = vadd.f32 %v3321, %v5400
        %v5402 = vpop.f32.mrf.mxu0
        %v5403 = vadd.f32 %v3321, %v5402
        %5404 = vmatmul.bf16.gmra.mxu0 %v3005
        %v5405 = vpop.f32.mrf.mxu0
        %v5406 = vadd.f32 %v3321, %v5405
        %v5407 = vpop.f32.mrf.mxu0
        %v5408 = vadd.f32 %v3321, %v5407
        %5409 = vmatmul.bf16.gmra.mxu0 %v3013
        %v5410 = vpop.f32.mrf.mxu0
        %v5411 = vadd.f32 %v3321, %v5410
        %v5412 = vpop.f32.mrf.mxu0
        %v5413 = vadd.f32 %v3321, %v5412
        %5414 = vmatmul.bf16.gmra.mxu0 %v3021
        %v5415 = vpop.f32.mrf.mxu0
        %v5416 = vadd.f32 %v3321, %v5415
        %v5417 = vpop.f32.mrf.mxu0
        %v5418 = vadd.f32 %v3321, %v5417
        %5419 = vmatmul.bf16.gmra.mxu0 %v3029
        %v5420 = vpop.f32.mrf.mxu0
        %v5421 = vadd.f32 %v3321, %v5420
        %v5422 = vpop.f32.mrf.mxu0
        %v5423 = vadd.f32 %v3321, %v5422
        %5424 = vmatmul.bf16.gmra.mxu0 %v3037
        %v5425 = vpop.f32.mrf.mxu0
        %v5426 = vadd.f32 %v3321, %v5425
        %v5427 = vpop.f32.mrf.mxu0
        %v5428 = vadd.f32 %v3321, %v5427
        %5429 = vmatmul.bf16.gmra.mxu0 %v3045
        %v5430 = vpop.f32.mrf.mxu0
        %v5431 = vadd.f32 %v3321, %v5430
        %v5432 = vpop.f32.mrf.mxu0
        %v5433 = vadd.f32 %v3321, %v5432
        %5434 = vmatmul.bf16.gmra.mxu0 %v3053
        %v5435 = vpop.f32.mrf.mxu0
        %v5436 = vadd.f32 %v3321, %v5435
        %v5437 = vpop.f32.mrf.mxu0
        %v5438 = vadd.f32 %v3321, %v5437
        %5439 = vdwg.mxu0
        %5440 = vmatpush.bf16.msra.mxu0 %v4157
        %5441 = vmatpush.bf16.msra.mxu0 %v4153
        %5442 = vmatpush.bf16.msra.mxu0 %v4149
        %5443 = vmatpush.bf16.msra.mxu0 %v4145
        %5444 = vmatpush.bf16.msra.mxu0 %v4141
        %5445 = vmatpush.bf16.msra.mxu0 %v4137
        %5446 = vmatpush.bf16.msra.mxu0 %v4133
        %5447 = vmatpush.bf16.msra.mxu0 %v4129
        %5448 = vmatmul.bf16.gmra.mxu0 %v2998
        %v5449 = vpop.f32.mrf.mxu0
        %v5450 = vadd.f32 %v5401, %v5449
        %v5451 = vpop.f32.mrf.mxu0
        %v5452 = vadd.f32 %v5403, %v5451
        %5453 = vmatmul.bf16.gmra.mxu0 %v3006
        %v5454 = vpop.f32.mrf.mxu0
        %v5455 = vadd.f32 %v5406, %v5454
        %v5456 = vpop.f32.mrf.mxu0
        %v5457 = vadd.f32 %v5408, %v5456
        %5458 = vmatmul.bf16.gmra.mxu0 %v3014
        %v5459 = vpop.f32.mrf.mxu0
        %v5460 = vadd.f32 %v5411, %v5459
        %v5461 = vpop.f32.mrf.mxu0
        %v5462 = vadd.f32 %v5413, %v5461
        %5463 = vmatmul.bf16.gmra.mxu0 %v3022
        %v5464 = vpop.f32.mrf.mxu0
        %v5465 = vadd.f32 %v5416, %v5464
        %v5466 = vpop.f32.mrf.mxu0
        %v5467 = vadd.f32 %v5418, %v5466
        %5468 = vmatmul.bf16.gmra.mxu0 %v3030
        %v5469 = vpop.f32.mrf.mxu0
        %v5470 = vadd.f32 %v5421, %v5469
        %v5471 = vpop.f32.mrf.mxu0
        %v5472 = vadd.f32 %v5423, %v5471
        %5473 = vmatmul.bf16.gmra.mxu0 %v3038
        %v5474 = vpop.f32.mrf.mxu0
        %v5475 = vadd.f32 %v5426, %v5474
        %v5476 = vpop.f32.mrf.mxu0
        %v5477 = vadd.f32 %v5428, %v5476
        %5478 = vmatmul.bf16.gmra.mxu0 %v3046
        %v5479 = vpop.f32.mrf.mxu0
        %v5480 = vadd.f32 %v5431, %v5479
        %v5481 = vpop.f32.mrf.mxu0
        %v5482 = vadd.f32 %v5433, %v5481
        %5483 = vmatmul.bf16.gmra.mxu0 %v3054
        %v5484 = vpop.f32.mrf.mxu0
        %v5485 = vadd.f32 %v5436, %v5484
        %v5486 = vpop.f32.mrf.mxu0
        %v5487 = vadd.f32 %v5438, %v5486
        %5488 = vdwg.mxu0
        %5489 = vmatpush.bf16.msra.mxu0 %v4189
        %5490 = vmatpush.bf16.msra.mxu0 %v4185
        %5491 = vmatpush.bf16.msra.mxu0 %v4181
        %5492 = vmatpush.bf16.msra.mxu0 %v4177
        %5493 = vmatpush.bf16.msra.mxu0 %v4173
        %5494 = vmatpush.bf16.msra.mxu0 %v4169
        %5495 = vmatpush.bf16.msra.mxu0 %v4165
        %5496 = vmatpush.bf16.msra.mxu0 %v4161
        %5497 = vmatmul.bf16.gmra.mxu0 %v2999
        %v5498 = vpop.f32.mrf.mxu0
        %v5499 = vadd.f32 %v5450, %v5498
        %v5500 = vpop.f32.mrf.mxu0
        %v5501 = vadd.f32 %v5452, %v5500
        %5502 = vmatmul.bf16.gmra.mxu0 %v3007
        %v5503 = vpop.f32.mrf.mxu0
        %v5504 = vadd.f32 %v5455, %v5503
        %v5505 = vpop.f32.mrf.mxu0
        %v5506 = vadd.f32 %v5457, %v5505
        %5507 = vmatmul.bf16.gmra.mxu0 %v3015
        %v5508 = vpop.f32.mrf.mxu0
        %v5509 = vadd.f32 %v5460, %v5508
        %v5510 = vpop.f32.mrf.mxu0
        %v5511 = vadd.f32 %v5462, %v5510
        %5512 = vmatmul.bf16.gmra.mxu0 %v3023
        %v5513 = vpop.f32.mrf.mxu0
        %v5514 = vadd.f32 %v5465, %v5513
        %v5515 = vpop.f32.mrf.mxu0
        %v5516 = vadd.f32 %v5467, %v5515
        %5517 = vmatmul.bf16.gmra.mxu0 %v3031
        %v5518 = vpop.f32.mrf.mxu0
        %v5519 = vadd.f32 %v5470, %v5518
        %v5520 = vpop.f32.mrf.mxu0
        %v5521 = vadd.f32 %v5472, %v5520
        %5522 = vmatmul.bf16.gmra.mxu0 %v3039
        %v5523 = vpop.f32.mrf.mxu0
        %v5524 = vadd.f32 %v5475, %v5523
        %v5525 = vpop.f32.mrf.mxu0
        %v5526 = vadd.f32 %v5477, %v5525
        %5527 = vmatmul.bf16.gmra.mxu0 %v3047
        %v5528 = vpop.f32.mrf.mxu0
        %v5529 = vadd.f32 %v5480, %v5528
        %v5530 = vpop.f32.mrf.mxu0
        %v5531 = vadd.f32 %v5482, %v5530
        %5532 = vmatmul.bf16.gmra.mxu0 %v3055
        %v5533 = vpop.f32.mrf.mxu0
        %v5534 = vadd.f32 %v5485, %v5533
        %v5535 = vpop.f32.mrf.mxu0
        %v5536 = vadd.f32 %v5487, %v5535
        %5537 = vdwg.mxu0
        %5538 = vmatpush.bf16.msra.mxu0 %v4221
        %5539 = vmatpush.bf16.msra.mxu0 %v4217
        %5540 = vmatpush.bf16.msra.mxu0 %v4213
        %5541 = vmatpush.bf16.msra.mxu0 %v4209
        %5542 = vmatpush.bf16.msra.mxu0 %v4205
        %5543 = vmatpush.bf16.msra.mxu0 %v4201
        %5544 = vmatpush.bf16.msra.mxu0 %v4197
        %5545 = vmatpush.bf16.msra.mxu0 %v4193
        %5546 = vmatmul.bf16.gmra.mxu0 %v3000
        %v5547 = vpop.f32.mrf.mxu0
        %v5548 = vadd.f32 %v5499, %v5547
        %v5549 = vpop.f32.mrf.mxu0
        %v5550 = vadd.f32 %v5501, %v5549
        %5551 = vmatmul.bf16.gmra.mxu0 %v3008
        %v5552 = vpop.f32.mrf.mxu0
        %v5553 = vadd.f32 %v5504, %v5552
        %v5554 = vpop.f32.mrf.mxu0
        %v5555 = vadd.f32 %v5506, %v5554
        %5556 = vmatmul.bf16.gmra.mxu0 %v3016
        %v5557 = vpop.f32.mrf.mxu0
        %v5558 = vadd.f32 %v5509, %v5557
        %v5559 = vpop.f32.mrf.mxu0
        %v5560 = vadd.f32 %v5511, %v5559
        %5561 = vmatmul.bf16.gmra.mxu0 %v3024
        %v5562 = vpop.f32.mrf.mxu0
        %v5563 = vadd.f32 %v5514, %v5562
        %v5564 = vpop.f32.mrf.mxu0
        %v5565 = vadd.f32 %v5516, %v5564
        %5566 = vmatmul.bf16.gmra.mxu0 %v3032
        %v5567 = vpop.f32.mrf.mxu0
        %v5568 = vadd.f32 %v5519, %v5567
        %v5569 = vpop.f32.mrf.mxu0
        %v5570 = vadd.f32 %v5521, %v5569
        %5571 = vmatmul.bf16.gmra.mxu0 %v3040
        %v5572 = vpop.f32.mrf.mxu0
        %v5573 = vadd.f32 %v5524, %v5572
        %v5574 = vpop.f32.mrf.mxu0
        %v5575 = vadd.f32 %v5526, %v5574
        %5576 = vmatmul.bf16.gmra.mxu0 %v3048
        %v5577 = vpop.f32.mrf.mxu0
        %v5578 = vadd.f32 %v5529, %v5577
        %v5579 = vpop.f32.mrf.mxu0
        %v5580 = vadd.f32 %v5531, %v5579
        %5581 = vmatmul.bf16.gmra.mxu0 %v3056
        %v5582 = vpop.f32.mrf.mxu0
        %v5583 = vadd.f32 %v5534, %v5582
        %v5584 = vpop.f32.mrf.mxu0
        %v5585 = vadd.f32 %v5536, %v5584
        %5586 = vdwg.mxu0
        %5587 = vmatpush.bf16.msra.mxu0 %v4253
        %5588 = vmatpush.bf16.msra.mxu0 %v4249
        %5589 = vmatpush.bf16.msra.mxu0 %v4245
        %5590 = vmatpush.bf16.msra.mxu0 %v4241
        %5591 = vmatpush.bf16.msra.mxu0 %v4237
        %5592 = vmatpush.bf16.msra.mxu0 %v4233
        %5593 = vmatpush.bf16.msra.mxu0 %v4229
        %5594 = vmatpush.bf16.msra.mxu0 %v4225
        %5595 = vmatmul.bf16.gmra.mxu0 %v3001
        %v5596 = vpop.f32.mrf.mxu0
        %v5597 = vadd.f32 %v5548, %v5596
        %v5598 = vpop.f32.mrf.mxu0
        %v5599 = vadd.f32 %v5550, %v5598
        %5600 = vmatmul.bf16.gmra.mxu0 %v3009
        %v5601 = vpop.f32.mrf.mxu0
        %v5602 = vadd.f32 %v5553, %v5601
        %v5603 = vpop.f32.mrf.mxu0
        %v5604 = vadd.f32 %v5555, %v5603
        %5605 = vmatmul.bf16.gmra.mxu0 %v3017
        %v5606 = vpop.f32.mrf.mxu0
        %v5607 = vadd.f32 %v5558, %v5606
        %v5608 = vpop.f32.mrf.mxu0
        %v5609 = vadd.f32 %v5560, %v5608
        %5610 = vmatmul.bf16.gmra.mxu0 %v3025
        %v5611 = vpop.f32.mrf.mxu0
        %v5612 = vadd.f32 %v5563, %v5611
        %v5613 = vpop.f32.mrf.mxu0
        %v5614 = vadd.f32 %v5565, %v5613
        %5615 = vmatmul.bf16.gmra.mxu0 %v3033
        %v5616 = vpop.f32.mrf.mxu0
        %v5617 = vadd.f32 %v5568, %v5616
        %v5618 = vpop.f32.mrf.mxu0
        %v5619 = vadd.f32 %v5570, %v5618
        %5620 = vmatmul.bf16.gmra.mxu0 %v3041
        %v5621 = vpop.f32.mrf.mxu0
        %v5622 = vadd.f32 %v5573, %v5621
        %v5623 = vpop.f32.mrf.mxu0
        %v5624 = vadd.f32 %v5575, %v5623
        %5625 = vmatmul.bf16.gmra.mxu0 %v3049
        %v5626 = vpop.f32.mrf.mxu0
        %v5627 = vadd.f32 %v5578, %v5626
        %v5628 = vpop.f32.mrf.mxu0
        %v5629 = vadd.f32 %v5580, %v5628
        %5630 = vmatmul.bf16.gmra.mxu0 %v3057
        %v5631 = vpop.f32.mrf.mxu0
        %v5632 = vadd.f32 %v5583, %v5631
        %v5633 = vpop.f32.mrf.mxu0
        %v5634 = vadd.f32 %v5585, %v5633
        %5635 = vdwg.mxu0
        %5636 = vmatpush.bf16.msra.mxu0 %v4285
        %5637 = vmatpush.bf16.msra.mxu0 %v4281
        %5638 = vmatpush.bf16.msra.mxu0 %v4277
        %5639 = vmatpush.bf16.msra.mxu0 %v4273
        %5640 = vmatpush.bf16.msra.mxu0 %v4269
        %5641 = vmatpush.bf16.msra.mxu0 %v4265
        %5642 = vmatpush.bf16.msra.mxu0 %v4261
        %5643 = vmatpush.bf16.msra.mxu0 %v4257
        %5644 = vmatmul.bf16.gmra.mxu0 %v3002
        %v5645 = vpop.f32.mrf.mxu0
        %v5646 = vadd.f32 %v5597, %v5645
        %v5647 = vpop.f32.mrf.mxu0
        %v5648 = vadd.f32 %v5599, %v5647
        %5649 = vmatmul.bf16.gmra.mxu0 %v3010
        %v5650 = vpop.f32.mrf.mxu0
        %v5651 = vadd.f32 %v5602, %v5650
        %v5652 = vpop.f32.mrf.mxu0
        %v5653 = vadd.f32 %v5604, %v5652
        %5654 = vmatmul.bf16.gmra.mxu0 %v3018
        %v5655 = vpop.f32.mrf.mxu0
        %v5656 = vadd.f32 %v5607, %v5655
        %v5657 = vpop.f32.mrf.mxu0
        %v5658 = vadd.f32 %v5609, %v5657
        %5659 = vmatmul.bf16.gmra.mxu0 %v3026
        %v5660 = vpop.f32.mrf.mxu0
        %v5661 = vadd.f32 %v5612, %v5660
        %v5662 = vpop.f32.mrf.mxu0
        %v5663 = vadd.f32 %v5614, %v5662
        %5664 = vmatmul.bf16.gmra.mxu0 %v3034
        %v5665 = vpop.f32.mrf.mxu0
        %v5666 = vadd.f32 %v5617, %v5665
        %v5667 = vpop.f32.mrf.mxu0
        %v5668 = vadd.f32 %v5619, %v5667
        %5669 = vmatmul.bf16.gmra.mxu0 %v3042
        %v5670 = vpop.f32.mrf.mxu0
        %v5671 = vadd.f32 %v5622, %v5670
        %v5672 = vpop.f32.mrf.mxu0
        %v5673 = vadd.f32 %v5624, %v5672
        %5674 = vmatmul.bf16.gmra.mxu0 %v3050
        %v5675 = vpop.f32.mrf.mxu0
        %v5676 = vadd.f32 %v5627, %v5675
        %v5677 = vpop.f32.mrf.mxu0
        %v5678 = vadd.f32 %v5629, %v5677
        %5679 = vmatmul.bf16.gmra.mxu0 %v3058
        %v5680 = vpop.f32.mrf.mxu0
        %v5681 = vadd.f32 %v5632, %v5680
        %v5682 = vpop.f32.mrf.mxu0
        %v5683 = vadd.f32 %v5634, %v5682
        %5684 = vdwg.mxu0
        %5685 = vmatpush.bf16.msra.mxu0 %v4317
        %5686 = vmatpush.bf16.msra.mxu0 %v4313
        %5687 = vmatpush.bf16.msra.mxu0 %v4309
        %5688 = vmatpush.bf16.msra.mxu0 %v4305
        %5689 = vmatpush.bf16.msra.mxu0 %v4301
        %5690 = vmatpush.bf16.msra.mxu0 %v4297
        %5691 = vmatpush.bf16.msra.mxu0 %v4293
        %5692 = vmatpush.bf16.msra.mxu0 %v4289
        %5693 = vmatmul.bf16.gmra.mxu0 %v3003
        %v5694 = vpop.f32.mrf.mxu0
        %v5695 = vadd.f32 %v5646, %v5694
        %v5696 = vpop.f32.mrf.mxu0
        %v5697 = vadd.f32 %v5648, %v5696
        %5698 = vmatmul.bf16.gmra.mxu0 %v3011
        %v5699 = vpop.f32.mrf.mxu0
        %v5700 = vadd.f32 %v5651, %v5699
        %v5701 = vpop.f32.mrf.mxu0
        %v5702 = vadd.f32 %v5653, %v5701
        %5703 = vmatmul.bf16.gmra.mxu0 %v3019
        %v5704 = vpop.f32.mrf.mxu0
        %v5705 = vadd.f32 %v5656, %v5704
        %v5706 = vpop.f32.mrf.mxu0
        %v5707 = vadd.f32 %v5658, %v5706
        %5708 = vmatmul.bf16.gmra.mxu0 %v3027
        %v5709 = vpop.f32.mrf.mxu0
        %v5710 = vadd.f32 %v5661, %v5709
        %v5711 = vpop.f32.mrf.mxu0
        %v5712 = vadd.f32 %v5663, %v5711
        %5713 = vmatmul.bf16.gmra.mxu0 %v3035
        %v5714 = vpop.f32.mrf.mxu0
        %v5715 = vadd.f32 %v5666, %v5714
        %v5716 = vpop.f32.mrf.mxu0
        %v5717 = vadd.f32 %v5668, %v5716
        %5718 = vmatmul.bf16.gmra.mxu0 %v3043
        %v5719 = vpop.f32.mrf.mxu0
        %v5720 = vadd.f32 %v5671, %v5719
        %v5721 = vpop.f32.mrf.mxu0
        %v5722 = vadd.f32 %v5673, %v5721
        %5723 = vmatmul.bf16.gmra.mxu0 %v3051
        %v5724 = vpop.f32.mrf.mxu0
        %v5725 = vadd.f32 %v5676, %v5724
        %v5726 = vpop.f32.mrf.mxu0
        %v5727 = vadd.f32 %v5678, %v5726
        %5728 = vmatmul.bf16.gmra.mxu0 %v3059
        %v5729 = vpop.f32.mrf.mxu0
        %v5730 = vadd.f32 %v5681, %v5729
        %v5731 = vpop.f32.mrf.mxu0
        %v5732 = vadd.f32 %v5683, %v5731
        %5733 = vdwg.mxu0
        %5734 = vmatpush.bf16.msra.mxu0 %v4349
        %5735 = vmatpush.bf16.msra.mxu0 %v4345
        %5736 = vmatpush.bf16.msra.mxu0 %v4341
        %5737 = vmatpush.bf16.msra.mxu0 %v4337
        %5738 = vmatpush.bf16.msra.mxu0 %v4333
        %5739 = vmatpush.bf16.msra.mxu0 %v4329
        %5740 = vmatpush.bf16.msra.mxu0 %v4325
        %5741 = vmatpush.bf16.msra.mxu0 %v4321
        %5742 = vmatmul.bf16.gmra.mxu0 %v3004
        %v5743 = vpop.f32.mrf.mxu0
        %v5744 = vadd.f32 %v5695, %v5743
        %v5745 = vpop.f32.mrf.mxu0
        %v5746 = vadd.f32 %v5697, %v5745
        %5747 = vmatmul.bf16.gmra.mxu0 %v3012
        %v5748 = vpop.f32.mrf.mxu0
        %v5749 = vadd.f32 %v5700, %v5748
        %v5750 = vpop.f32.mrf.mxu0
        %v5751 = vadd.f32 %v5702, %v5750
        %5752 = vmatmul.bf16.gmra.mxu0 %v3020
        %v5753 = vpop.f32.mrf.mxu0
        %v5754 = vadd.f32 %v5705, %v5753
        %v5755 = vpop.f32.mrf.mxu0
        %v5756 = vadd.f32 %v5707, %v5755
        %5757 = vmatmul.bf16.gmra.mxu0 %v3028
        %v5758 = vpop.f32.mrf.mxu0
        %v5759 = vadd.f32 %v5710, %v5758
        %v5760 = vpop.f32.mrf.mxu0
        %v5761 = vadd.f32 %v5712, %v5760
        %5762 = vmatmul.bf16.gmra.mxu0 %v3036
        %v5763 = vpop.f32.mrf.mxu0
        %v5764 = vadd.f32 %v5715, %v5763
        %v5765 = vpop.f32.mrf.mxu0
        %v5766 = vadd.f32 %v5717, %v5765
        %5767 = vmatmul.bf16.gmra.mxu0 %v3044
        %v5768 = vpop.f32.mrf.mxu0
        %v5769 = vadd.f32 %v5720, %v5768
        %v5770 = vpop.f32.mrf.mxu0
        %v5771 = vadd.f32 %v5722, %v5770
        %5772 = vmatmul.bf16.gmra.mxu0 %v3052
        %v5773 = vpop.f32.mrf.mxu0
        %v5774 = vadd.f32 %v5725, %v5773
        %v5775 = vpop.f32.mrf.mxu0
        %v5776 = vadd.f32 %v5727, %v5775
        %5777 = vmatmul.bf16.gmra.mxu0 %v3060
        %v5778 = vpop.f32.mrf.mxu0
        %v5779 = vadd.f32 %v5730, %v5778
        %v5780 = vpop.f32.mrf.mxu0
        %v5781 = vadd.f32 %v5732, %v5780
        %5782 = vdwg.mxu0
        %5783 = vmatpush.bf16.msra.mxu0 %v4126
        %5784 = vmatpush.bf16.msra.mxu0 %v4122
        %5785 = vmatpush.bf16.msra.mxu0 %v4118
        %5786 = vmatpush.bf16.msra.mxu0 %v4114
        %5787 = vmatpush.bf16.msra.mxu0 %v4110
        %5788 = vmatpush.bf16.msra.mxu0 %v4106
        %5789 = vmatpush.bf16.msra.mxu0 %v4102
        %5790 = vmatpush.bf16.msra.mxu0 %v4098
        %5791 = vmatmul.bf16.gmra.mxu0 %v2997
        %v5792 = vpop.f32.mrf.mxu0
        %v5793 = vadd.f32 %v3322, %v5792
        %v5794 = vpop.f32.mrf.mxu0
        %v5795 = vadd.f32 %v3322, %v5794
        %5796 = vmatmul.bf16.gmra.mxu0 %v3005
        %v5797 = vpop.f32.mrf.mxu0
        %v5798 = vadd.f32 %v3322, %v5797
        %v5799 = vpop.f32.mrf.mxu0
        %v5800 = vadd.f32 %v3322, %v5799
        %5801 = vmatmul.bf16.gmra.mxu0 %v3013
        %v5802 = vpop.f32.mrf.mxu0
        %v5803 = vadd.f32 %v3322, %v5802
        %v5804 = vpop.f32.mrf.mxu0
        %v5805 = vadd.f32 %v3322, %v5804
        %5806 = vmatmul.bf16.gmra.mxu0 %v3021
        %v5807 = vpop.f32.mrf.mxu0
        %v5808 = vadd.f32 %v3322, %v5807
        %v5809 = vpop.f32.mrf.mxu0
        %v5810 = vadd.f32 %v3322, %v5809
        %5811 = vmatmul.bf16.gmra.mxu0 %v3029
        %v5812 = vpop.f32.mrf.mxu0
        %v5813 = vadd.f32 %v3322, %v5812
        %v5814 = vpop.f32.mrf.mxu0
        %v5815 = vadd.f32 %v3322, %v5814
        %5816 = vmatmul.bf16.gmra.mxu0 %v3037
        %v5817 = vpop.f32.mrf.mxu0
        %v5818 = vadd.f32 %v3322, %v5817
        %v5819 = vpop.f32.mrf.mxu0
        %v5820 = vadd.f32 %v3322, %v5819
        %5821 = vmatmul.bf16.gmra.mxu0 %v3045
        %v5822 = vpop.f32.mrf.mxu0
        %v5823 = vadd.f32 %v3322, %v5822
        %v5824 = vpop.f32.mrf.mxu0
        %v5825 = vadd.f32 %v3322, %v5824
        %5826 = vmatmul.bf16.gmra.mxu0 %v3053
        %v5827 = vpop.f32.mrf.mxu0
        %v5828 = vadd.f32 %v3322, %v5827
        %v5829 = vpop.f32.mrf.mxu0
        %v5830 = vadd.f32 %v3322, %v5829
        %5831 = vdwg.mxu0
        %5832 = vmatpush.bf16.msra.mxu0 %v4158
        %5833 = vmatpush.bf16.msra.mxu0 %v4154
        %5834 = vmatpush.bf16.msra.mxu0 %v4150
        %5835 = vmatpush.bf16.msra.mxu0 %v4146
        %5836 = vmatpush.bf16.msra.mxu0 %v4142
        %5837 = vmatpush.bf16.msra.mxu0 %v4138
        %5838 = vmatpush.bf16.msra.mxu0 %v4134
        %5839 = vmatpush.bf16.msra.mxu0 %v4130
        %5840 = vmatmul.bf16.gmra.mxu0 %v2998
        %v5841 = vpop.f32.mrf.mxu0
        %v5842 = vadd.f32 %v5793, %v5841
        %v5843 = vpop.f32.mrf.mxu0
        %v5844 = vadd.f32 %v5795, %v5843
        %5845 = vmatmul.bf16.gmra.mxu0 %v3006
        %v5846 = vpop.f32.mrf.mxu0
        %v5847 = vadd.f32 %v5798, %v5846
        %v5848 = vpop.f32.mrf.mxu0
        %v5849 = vadd.f32 %v5800, %v5848
        %5850 = vmatmul.bf16.gmra.mxu0 %v3014
        %v5851 = vpop.f32.mrf.mxu0
        %v5852 = vadd.f32 %v5803, %v5851
        %v5853 = vpop.f32.mrf.mxu0
        %v5854 = vadd.f32 %v5805, %v5853
        %5855 = vmatmul.bf16.gmra.mxu0 %v3022
        %v5856 = vpop.f32.mrf.mxu0
        %v5857 = vadd.f32 %v5808, %v5856
        %v5858 = vpop.f32.mrf.mxu0
        %v5859 = vadd.f32 %v5810, %v5858
        %5860 = vmatmul.bf16.gmra.mxu0 %v3030
        %v5861 = vpop.f32.mrf.mxu0
        %v5862 = vadd.f32 %v5813, %v5861
        %v5863 = vpop.f32.mrf.mxu0
        %v5864 = vadd.f32 %v5815, %v5863
        %5865 = vmatmul.bf16.gmra.mxu0 %v3038
        %v5866 = vpop.f32.mrf.mxu0
        %v5867 = vadd.f32 %v5818, %v5866
        %v5868 = vpop.f32.mrf.mxu0
        %v5869 = vadd.f32 %v5820, %v5868
        %5870 = vmatmul.bf16.gmra.mxu0 %v3046
        %v5871 = vpop.f32.mrf.mxu0
        %v5872 = vadd.f32 %v5823, %v5871
        %v5873 = vpop.f32.mrf.mxu0
        %v5874 = vadd.f32 %v5825, %v5873
        %5875 = vmatmul.bf16.gmra.mxu0 %v3054
        %v5876 = vpop.f32.mrf.mxu0
        %v5877 = vadd.f32 %v5828, %v5876
        %v5878 = vpop.f32.mrf.mxu0
        %v5879 = vadd.f32 %v5830, %v5878
        %5880 = vdwg.mxu0
        %5881 = vmatpush.bf16.msra.mxu0 %v4190
        %5882 = vmatpush.bf16.msra.mxu0 %v4186
        %5883 = vmatpush.bf16.msra.mxu0 %v4182
        %5884 = vmatpush.bf16.msra.mxu0 %v4178
        %5885 = vmatpush.bf16.msra.mxu0 %v4174
        %5886 = vmatpush.bf16.msra.mxu0 %v4170
        %5887 = vmatpush.bf16.msra.mxu0 %v4166
        %5888 = vmatpush.bf16.msra.mxu0 %v4162
        %5889 = vmatmul.bf16.gmra.mxu0 %v2999
        %v5890 = vpop.f32.mrf.mxu0
        %v5891 = vadd.f32 %v5842, %v5890
        %v5892 = vpop.f32.mrf.mxu0
        %v5893 = vadd.f32 %v5844, %v5892
        %5894 = vmatmul.bf16.gmra.mxu0 %v3007
        %v5895 = vpop.f32.mrf.mxu0
        %v5896 = vadd.f32 %v5847, %v5895
        %v5897 = vpop.f32.mrf.mxu0
        %v5898 = vadd.f32 %v5849, %v5897
        %5899 = vmatmul.bf16.gmra.mxu0 %v3015
        %v5900 = vpop.f32.mrf.mxu0
        %v5901 = vadd.f32 %v5852, %v5900
        %v5902 = vpop.f32.mrf.mxu0
        %v5903 = vadd.f32 %v5854, %v5902
        %5904 = vmatmul.bf16.gmra.mxu0 %v3023
        %v5905 = vpop.f32.mrf.mxu0
        %v5906 = vadd.f32 %v5857, %v5905
        %v5907 = vpop.f32.mrf.mxu0
        %v5908 = vadd.f32 %v5859, %v5907
        %5909 = vmatmul.bf16.gmra.mxu0 %v3031
        %v5910 = vpop.f32.mrf.mxu0
        %v5911 = vadd.f32 %v5862, %v5910
        %v5912 = vpop.f32.mrf.mxu0
        %v5913 = vadd.f32 %v5864, %v5912
        %5914 = vmatmul.bf16.gmra.mxu0 %v3039
        %v5915 = vpop.f32.mrf.mxu0
        %v5916 = vadd.f32 %v5867, %v5915
        %v5917 = vpop.f32.mrf.mxu0
        %v5918 = vadd.f32 %v5869, %v5917
        %5919 = vmatmul.bf16.gmra.mxu0 %v3047
        %v5920 = vpop.f32.mrf.mxu0
        %v5921 = vadd.f32 %v5872, %v5920
        %v5922 = vpop.f32.mrf.mxu0
        %v5923 = vadd.f32 %v5874, %v5922
        %5924 = vmatmul.bf16.gmra.mxu0 %v3055
        %v5925 = vpop.f32.mrf.mxu0
        %v5926 = vadd.f32 %v5877, %v5925
        %v5927 = vpop.f32.mrf.mxu0
        %v5928 = vadd.f32 %v5879, %v5927
        %5929 = vdwg.mxu0
        %5930 = vmatpush.bf16.msra.mxu0 %v4222
        %5931 = vmatpush.bf16.msra.mxu0 %v4218
        %5932 = vmatpush.bf16.msra.mxu0 %v4214
        %5933 = vmatpush.bf16.msra.mxu0 %v4210
        %5934 = vmatpush.bf16.msra.mxu0 %v4206
        %5935 = vmatpush.bf16.msra.mxu0 %v4202
        %5936 = vmatpush.bf16.msra.mxu0 %v4198
        %5937 = vmatpush.bf16.msra.mxu0 %v4194
        %5938 = vmatmul.bf16.gmra.mxu0 %v3000
        %v5939 = vpop.f32.mrf.mxu0
        %v5940 = vadd.f32 %v5891, %v5939
        %v5941 = vpop.f32.mrf.mxu0
        %v5942 = vadd.f32 %v5893, %v5941
        %5943 = vmatmul.bf16.gmra.mxu0 %v3008
        %v5944 = vpop.f32.mrf.mxu0
        %v5945 = vadd.f32 %v5896, %v5944
        %v5946 = vpop.f32.mrf.mxu0
        %v5947 = vadd.f32 %v5898, %v5946
        %5948 = vmatmul.bf16.gmra.mxu0 %v3016
        %v5949 = vpop.f32.mrf.mxu0
        %v5950 = vadd.f32 %v5901, %v5949
        %v5951 = vpop.f32.mrf.mxu0
        %v5952 = vadd.f32 %v5903, %v5951
        %5953 = vmatmul.bf16.gmra.mxu0 %v3024
        %v5954 = vpop.f32.mrf.mxu0
        %v5955 = vadd.f32 %v5906, %v5954
        %v5956 = vpop.f32.mrf.mxu0
        %v5957 = vadd.f32 %v5908, %v5956
        %5958 = vmatmul.bf16.gmra.mxu0 %v3032
        %v5959 = vpop.f32.mrf.mxu0
        %v5960 = vadd.f32 %v5911, %v5959
        %v5961 = vpop.f32.mrf.mxu0
        %v5962 = vadd.f32 %v5913, %v5961
        %5963 = vmatmul.bf16.gmra.mxu0 %v3040
        %v5964 = vpop.f32.mrf.mxu0
        %v5965 = vadd.f32 %v5916, %v5964
        %v5966 = vpop.f32.mrf.mxu0
        %v5967 = vadd.f32 %v5918, %v5966
        %5968 = vmatmul.bf16.gmra.mxu0 %v3048
        %v5969 = vpop.f32.mrf.mxu0
        %v5970 = vadd.f32 %v5921, %v5969
        %v5971 = vpop.f32.mrf.mxu0
        %v5972 = vadd.f32 %v5923, %v5971
        %5973 = vmatmul.bf16.gmra.mxu0 %v3056
        %v5974 = vpop.f32.mrf.mxu0
        %v5975 = vadd.f32 %v5926, %v5974
        %v5976 = vpop.f32.mrf.mxu0
        %v5977 = vadd.f32 %v5928, %v5976
        %5978 = vdwg.mxu0
        %5979 = vmatpush.bf16.msra.mxu0 %v4254
        %5980 = vmatpush.bf16.msra.mxu0 %v4250
        %5981 = vmatpush.bf16.msra.mxu0 %v4246
        %5982 = vmatpush.bf16.msra.mxu0 %v4242
        %5983 = vmatpush.bf16.msra.mxu0 %v4238
        %5984 = vmatpush.bf16.msra.mxu0 %v4234
        %5985 = vmatpush.bf16.msra.mxu0 %v4230
        %5986 = vmatpush.bf16.msra.mxu0 %v4226
        %5987 = vmatmul.bf16.gmra.mxu0 %v3001
        %v5988 = vpop.f32.mrf.mxu0
        %v5989 = vadd.f32 %v5940, %v5988
        %v5990 = vpop.f32.mrf.mxu0
        %v5991 = vadd.f32 %v5942, %v5990
        %5992 = vmatmul.bf16.gmra.mxu0 %v3009
        %v5993 = vpop.f32.mrf.mxu0
        %v5994 = vadd.f32 %v5945, %v5993
        %v5995 = vpop.f32.mrf.mxu0
        %v5996 = vadd.f32 %v5947, %v5995
        %5997 = vmatmul.bf16.gmra.mxu0 %v3017
        %v5998 = vpop.f32.mrf.mxu0
        %v5999 = vadd.f32 %v5950, %v5998
        %v6000 = vpop.f32.mrf.mxu0
        %v6001 = vadd.f32 %v5952, %v6000
        %6002 = vmatmul.bf16.gmra.mxu0 %v3025
        %v6003 = vpop.f32.mrf.mxu0
        %v6004 = vadd.f32 %v5955, %v6003
        %v6005 = vpop.f32.mrf.mxu0
        %v6006 = vadd.f32 %v5957, %v6005
        %6007 = vmatmul.bf16.gmra.mxu0 %v3033
        %v6008 = vpop.f32.mrf.mxu0
        %v6009 = vadd.f32 %v5960, %v6008
        %v6010 = vpop.f32.mrf.mxu0
        %v6011 = vadd.f32 %v5962, %v6010
        %6012 = vmatmul.bf16.gmra.mxu0 %v3041
        %v6013 = vpop.f32.mrf.mxu0
        %v6014 = vadd.f32 %v5965, %v6013
        %v6015 = vpop.f32.mrf.mxu0
        %v6016 = vadd.f32 %v5967, %v6015
        %6017 = vmatmul.bf16.gmra.mxu0 %v3049
        %v6018 = vpop.f32.mrf.mxu0
        %v6019 = vadd.f32 %v5970, %v6018
        %v6020 = vpop.f32.mrf.mxu0
        %v6021 = vadd.f32 %v5972, %v6020
        %6022 = vmatmul.bf16.gmra.mxu0 %v3057
        %v6023 = vpop.f32.mrf.mxu0
        %v6024 = vadd.f32 %v5975, %v6023
        %v6025 = vpop.f32.mrf.mxu0
        %v6026 = vadd.f32 %v5977, %v6025
        %6027 = vdwg.mxu0
        %6028 = vmatpush.bf16.msra.mxu0 %v4286
        %6029 = vmatpush.bf16.msra.mxu0 %v4282
        %6030 = vmatpush.bf16.msra.mxu0 %v4278
        %6031 = vmatpush.bf16.msra.mxu0 %v4274
        %6032 = vmatpush.bf16.msra.mxu0 %v4270
        %6033 = vmatpush.bf16.msra.mxu0 %v4266
        %6034 = vmatpush.bf16.msra.mxu0 %v4262
        %6035 = vmatpush.bf16.msra.mxu0 %v4258
        %6036 = vmatmul.bf16.gmra.mxu0 %v3002
        %v6037 = vpop.f32.mrf.mxu0
        %v6038 = vadd.f32 %v5989, %v6037
        %v6039 = vpop.f32.mrf.mxu0
        %v6040 = vadd.f32 %v5991, %v6039
        %6041 = vmatmul.bf16.gmra.mxu0 %v3010
        %v6042 = vpop.f32.mrf.mxu0
        %v6043 = vadd.f32 %v5994, %v6042
        %v6044 = vpop.f32.mrf.mxu0
        %v6045 = vadd.f32 %v5996, %v6044
        %6046 = vmatmul.bf16.gmra.mxu0 %v3018
        %v6047 = vpop.f32.mrf.mxu0
        %v6048 = vadd.f32 %v5999, %v6047
        %v6049 = vpop.f32.mrf.mxu0
        %v6050 = vadd.f32 %v6001, %v6049
        %6051 = vmatmul.bf16.gmra.mxu0 %v3026
        %v6052 = vpop.f32.mrf.mxu0
        %v6053 = vadd.f32 %v6004, %v6052
        %v6054 = vpop.f32.mrf.mxu0
        %v6055 = vadd.f32 %v6006, %v6054
        %6056 = vmatmul.bf16.gmra.mxu0 %v3034
        %v6057 = vpop.f32.mrf.mxu0
        %v6058 = vadd.f32 %v6009, %v6057
        %v6059 = vpop.f32.mrf.mxu0
        %v6060 = vadd.f32 %v6011, %v6059
        %6061 = vmatmul.bf16.gmra.mxu0 %v3042
        %v6062 = vpop.f32.mrf.mxu0
        %v6063 = vadd.f32 %v6014, %v6062
        %v6064 = vpop.f32.mrf.mxu0
        %v6065 = vadd.f32 %v6016, %v6064
        %6066 = vmatmul.bf16.gmra.mxu0 %v3050
        %v6067 = vpop.f32.mrf.mxu0
        %v6068 = vadd.f32 %v6019, %v6067
        %v6069 = vpop.f32.mrf.mxu0
        %v6070 = vadd.f32 %v6021, %v6069
        %6071 = vmatmul.bf16.gmra.mxu0 %v3058
        %v6072 = vpop.f32.mrf.mxu0
        %v6073 = vadd.f32 %v6024, %v6072
        %v6074 = vpop.f32.mrf.mxu0
        %v6075 = vadd.f32 %v6026, %v6074
        %6076 = vdwg.mxu0
        %6077 = vmatpush.bf16.msra.mxu0 %v4318
        %6078 = vmatpush.bf16.msra.mxu0 %v4314
        %6079 = vmatpush.bf16.msra.mxu0 %v4310
        %6080 = vmatpush.bf16.msra.mxu0 %v4306
        %6081 = vmatpush.bf16.msra.mxu0 %v4302
        %6082 = vmatpush.bf16.msra.mxu0 %v4298
        %6083 = vmatpush.bf16.msra.mxu0 %v4294
        %6084 = vmatpush.bf16.msra.mxu0 %v4290
        %6085 = vmatmul.bf16.gmra.mxu0 %v3003
        %v6086 = vpop.f32.mrf.mxu0
        %v6087 = vadd.f32 %v6038, %v6086
        %v6088 = vpop.f32.mrf.mxu0
        %v6089 = vadd.f32 %v6040, %v6088
        %6090 = vmatmul.bf16.gmra.mxu0 %v3011
        %v6091 = vpop.f32.mrf.mxu0
        %v6092 = vadd.f32 %v6043, %v6091
        %v6093 = vpop.f32.mrf.mxu0
        %v6094 = vadd.f32 %v6045, %v6093
        %6095 = vmatmul.bf16.gmra.mxu0 %v3019
        %v6096 = vpop.f32.mrf.mxu0
        %v6097 = vadd.f32 %v6048, %v6096
        %v6098 = vpop.f32.mrf.mxu0
        %v6099 = vadd.f32 %v6050, %v6098
        %6100 = vmatmul.bf16.gmra.mxu0 %v3027
        %v6101 = vpop.f32.mrf.mxu0
        %v6102 = vadd.f32 %v6053, %v6101
        %v6103 = vpop.f32.mrf.mxu0
        %v6104 = vadd.f32 %v6055, %v6103
        %6105 = vmatmul.bf16.gmra.mxu0 %v3035
        %v6106 = vpop.f32.mrf.mxu0
        %v6107 = vadd.f32 %v6058, %v6106
        %v6108 = vpop.f32.mrf.mxu0
        %v6109 = vadd.f32 %v6060, %v6108
        %6110 = vmatmul.bf16.gmra.mxu0 %v3043
        %v6111 = vpop.f32.mrf.mxu0
        %v6112 = vadd.f32 %v6063, %v6111
        %v6113 = vpop.f32.mrf.mxu0
        %v6114 = vadd.f32 %v6065, %v6113
        %6115 = vmatmul.bf16.gmra.mxu0 %v3051
        %v6116 = vpop.f32.mrf.mxu0
        %v6117 = vadd.f32 %v6068, %v6116
        %v6118 = vpop.f32.mrf.mxu0
        %v6119 = vadd.f32 %v6070, %v6118
        %6120 = vmatmul.bf16.gmra.mxu0 %v3059
        %v6121 = vpop.f32.mrf.mxu0
        %v6122 = vadd.f32 %v6073, %v6121
        %v6123 = vpop.f32.mrf.mxu0
        %v6124 = vadd.f32 %v6075, %v6123
        %6125 = vdwg.mxu0
        %6126 = vmatpush.bf16.msra.mxu0 %v4350
        %6127 = vmatpush.bf16.msra.mxu0 %v4346
        %6128 = vmatpush.bf16.msra.mxu0 %v4342
        %6129 = vmatpush.bf16.msra.mxu0 %v4338
        %6130 = vmatpush.bf16.msra.mxu0 %v4334
        %6131 = vmatpush.bf16.msra.mxu0 %v4330
        %6132 = vmatpush.bf16.msra.mxu0 %v4326
        %6133 = vmatpush.bf16.msra.mxu0 %v4322
        %6134 = vmatmul.bf16.gmra.mxu0 %v3004
        %v6135 = vpop.f32.mrf.mxu0
        %v6136 = vadd.f32 %v6087, %v6135
        %v6137 = vpop.f32.mrf.mxu0
        %v6138 = vadd.f32 %v6089, %v6137
        %6139 = vmatmul.bf16.gmra.mxu0 %v3012
        %v6140 = vpop.f32.mrf.mxu0
        %v6141 = vadd.f32 %v6092, %v6140
        %v6142 = vpop.f32.mrf.mxu0
        %v6143 = vadd.f32 %v6094, %v6142
        %6144 = vmatmul.bf16.gmra.mxu0 %v3020
        %v6145 = vpop.f32.mrf.mxu0
        %v6146 = vadd.f32 %v6097, %v6145
        %v6147 = vpop.f32.mrf.mxu0
        %v6148 = vadd.f32 %v6099, %v6147
        %6149 = vmatmul.bf16.gmra.mxu0 %v3028
        %v6150 = vpop.f32.mrf.mxu0
        %v6151 = vadd.f32 %v6102, %v6150
        %v6152 = vpop.f32.mrf.mxu0
        %v6153 = vadd.f32 %v6104, %v6152
        %6154 = vmatmul.bf16.gmra.mxu0 %v3036
        %v6155 = vpop.f32.mrf.mxu0
        %v6156 = vadd.f32 %v6107, %v6155
        %v6157 = vpop.f32.mrf.mxu0
        %v6158 = vadd.f32 %v6109, %v6157
        %6159 = vmatmul.bf16.gmra.mxu0 %v3044
        %v6160 = vpop.f32.mrf.mxu0
        %v6161 = vadd.f32 %v6112, %v6160
        %v6162 = vpop.f32.mrf.mxu0
        %v6163 = vadd.f32 %v6114, %v6162
        %6164 = vmatmul.bf16.gmra.mxu0 %v3052
        %v6165 = vpop.f32.mrf.mxu0
        %v6166 = vadd.f32 %v6117, %v6165
        %v6167 = vpop.f32.mrf.mxu0
        %v6168 = vadd.f32 %v6119, %v6167
        %6169 = vmatmul.bf16.gmra.mxu0 %v3060
        %v6170 = vpop.f32.mrf.mxu0
        %v6171 = vadd.f32 %v6122, %v6170
        %v6172 = vpop.f32.mrf.mxu0
        %v6173 = vadd.f32 %v6124, %v6172
        %6174 = vdwg.mxu0
        %v6175 = vmax.f32 %v4960, 0.0
        %v6176 = vmax.f32 %v5352, 0.0
        %v6177 = vmax.f32 %v5744, 0.0
        %v6178 = vmax.f32 %v6136, 0.0
        %v6179 = vmax.f32 %v4962, 0.0
        %v6180 = vmax.f32 %v5354, 0.0
        %v6181 = vmax.f32 %v5746, 0.0
        %v6182 = vmax.f32 %v6138, 0.0
        %v6183 = vmax.f32 %v4965, 0.0
        %v6184 = vmax.f32 %v5357, 0.0
        %v6185 = vmax.f32 %v5749, 0.0
        %v6186 = vmax.f32 %v6141, 0.0
        %v6187 = vmax.f32 %v4967, 0.0
        %v6188 = vmax.f32 %v5359, 0.0
        %v6189 = vmax.f32 %v5751, 0.0
        %v6190 = vmax.f32 %v6143, 0.0
        %v6191 = vmax.f32 %v4970, 0.0
        %v6192 = vmax.f32 %v5362, 0.0
        %v6193 = vmax.f32 %v5754, 0.0
        %v6194 = vmax.f32 %v6146, 0.0
        %v6195 = vmax.f32 %v4972, 0.0
        %v6196 = vmax.f32 %v5364, 0.0
        %v6197 = vmax.f32 %v5756, 0.0
        %v6198 = vmax.f32 %v6148, 0.0
        %v6199 = vmax.f32 %v4975, 0.0
        %v6200 = vmax.f32 %v5367, 0.0
        %v6201 = vmax.f32 %v5759, 0.0
        %v6202 = vmax.f32 %v6151, 0.0
        %v6203 = vmax.f32 %v4977, 0.0
        %v6204 = vmax.f32 %v5369, 0.0
        %v6205 = vmax.f32 %v5761, 0.0
        %v6206 = vmax.f32 %v6153, 0.0
        %v6207 = vmax.f32 %v4980, 0.0
        %v6208 = vmax.f32 %v5372, 0.0
        %v6209 = vmax.f32 %v5764, 0.0
        %v6210 = vmax.f32 %v6156, 0.0
        %v6211 = vmax.f32 %v4982, 0.0
        %v6212 = vmax.f32 %v5374, 0.0
        %v6213 = vmax.f32 %v5766, 0.0
        %v6214 = vmax.f32 %v6158, 0.0
        %v6215 = vmax.f32 %v4985, 0.0
        %v6216 = vmax.f32 %v5377, 0.0
        %v6217 = vmax.f32 %v5769, 0.0
        %v6218 = vmax.f32 %v6161, 0.0
        %v6219 = vmax.f32 %v4987, 0.0
        %v6220 = vmax.f32 %v5379, 0.0
        %v6221 = vmax.f32 %v5771, 0.0
        %v6222 = vmax.f32 %v6163, 0.0
        %v6223 = vmax.f32 %v4990, 0.0
        %v6224 = vmax.f32 %v5382, 0.0
        %v6225 = vmax.f32 %v5774, 0.0
        %v6226 = vmax.f32 %v6166, 0.0
        %v6227 = vmax.f32 %v4992, 0.0
        %v6228 = vmax.f32 %v5384, 0.0
        %v6229 = vmax.f32 %v5776, 0.0
        %v6230 = vmax.f32 %v6168, 0.0
        %v6231 = vmax.f32 %v4995, 0.0
        %v6232 = vmax.f32 %v5387, 0.0
        %v6233 = vmax.f32 %v5779, 0.0
        %v6234 = vmax.f32 %v6171, 0.0
        %v6235 = vmax.f32 %v4997, 0.0
        %v6236 = vmax.f32 %v5389, 0.0
        %v6237 = vmax.f32 %v5781, 0.0
        %v6238 = vmax.f32 %v6173, 0.0
        %v6239 = vpack.c.bf16 %v6179, %v6175
        %v6240 = vpack.c.bf16 %v6180, %v6176
        %v6241 = vpack.c.bf16 %v6181, %v6177
        %v6242 = vpack.c.bf16 %v6182, %v6178
        %v6243 = vpack.c.bf16 %v6187, %v6183
        %v6244 = vpack.c.bf16 %v6188, %v6184
        %v6245 = vpack.c.bf16 %v6189, %v6185
        %v6246 = vpack.c.bf16 %v6190, %v6186
        %v6247 = vpack.c.bf16 %v6195, %v6191
        %v6248 = vpack.c.bf16 %v6196, %v6192
        %v6249 = vpack.c.bf16 %v6197, %v6193
        %v6250 = vpack.c.bf16 %v6198, %v6194
        %v6251 = vpack.c.bf16 %v6203, %v6199
        %v6252 = vpack.c.bf16 %v6204, %v6200
        %v6253 = vpack.c.bf16 %v6205, %v6201
        %v6254 = vpack.c.bf16 %v6206, %v6202
        %v6255 = vpack.c.bf16 %v6211, %v6207
        %v6256 = vpack.c.bf16 %v6212, %v6208
        %v6257 = vpack.c.bf16 %v6213, %v6209
        %v6258 = vpack.c.bf16 %v6214, %v6210
        %v6259 = vpack.c.bf16 %v6219, %v6215
        %v6260 = vpack.c.bf16 %v6220, %v6216
        %v6261 = vpack.c.bf16 %v6221, %v6217
        %v6262 = vpack.c.bf16 %v6222, %v6218
        %v6263 = vpack.c.bf16 %v6227, %v6223
        %v6264 = vpack.c.bf16 %v6228, %v6224
        %v6265 = vpack.c.bf16 %v6229, %v6225
        %v6266 = vpack.c.bf16 %v6230, %v6226
        %v6267 = vpack.c.bf16 %v6235, %v6231
        %v6268 = vpack.c.bf16 %v6236, %v6232
        %v6269 = vpack.c.bf16 %v6237, %v6233
        %v6270 = vpack.c.bf16 %v6238, %v6234
        %v6271 = vld [vmem:[#allocation11] sm:$0xff]
        %v6272 = vld [vmem:[#allocation11 + $0x8] sm:$0xff]
        %v6273 = vld [vmem:[#allocation11 + $0x10] sm:$0xff]
        %v6274 = vld [vmem:[#allocation11 + $0x18] sm:$0xff]
        %v6275 = vld [vmem:[#allocation11 + $0x20] sm:$0xff]
        %v6276 = vld [vmem:[#allocation11 + $0x28] sm:$0xff]
        %v6277 = vld [vmem:[#allocation11 + $0x30] sm:$0xff]
        %v6278 = vld [vmem:[#allocation11 + $0x38] sm:$0xff]
        %v6279 = vld [vmem:[#allocation11 + $0x40] sm:$0xff]
        %v6280 = vld [vmem:[#allocation11 + $0x48] sm:$0xff]
        %v6281 = vld [vmem:[#allocation11 + $0x50] sm:$0xff]
        %v6282 = vld [vmem:[#allocation11 + $0x58] sm:$0xff]
        %v6283 = vld [vmem:[#allocation11 + $0x60] sm:$0xff]
        %v6284 = vld [vmem:[#allocation11 + $0x68] sm:$0xff]
        %v6285 = vld [vmem:[#allocation11 + $0x70] sm:$0xff]
        %v6286 = vld [vmem:[#allocation11 + $0x78] sm:$0xff]
        %v6287 = vld [vmem:[#allocation11 + $0x80] sm:$0xff]
        %v6288 = vld [vmem:[#allocation11 + $0x88] sm:$0xff]
        %v6289 = vld [vmem:[#allocation11 + $0x90] sm:$0xff]
        %v6290 = vld [vmem:[#allocation11 + $0x98] sm:$0xff]
        %v6291 = vld [vmem:[#allocation11 + $0xa0] sm:$0xff]
        %v6292 = vld [vmem:[#allocation11 + $0xa8] sm:$0xff]
        %v6293 = vld [vmem:[#allocation11 + $0xb0] sm:$0xff]
        %v6294 = vld [vmem:[#allocation11 + $0xb8] sm:$0xff]
        %v6295 = vld [vmem:[#allocation11 + $0xc0] sm:$0xff]
        %v6296 = vld [vmem:[#allocation11 + $0xc8] sm:$0xff]
        %v6297 = vld [vmem:[#allocation11 + $0xd0] sm:$0xff]
        %v6298 = vld [vmem:[#allocation11 + $0xd8] sm:$0xff]
        %v6299 = vld [vmem:[#allocation11 + $0xe0] sm:$0xff]
        %v6300 = vld [vmem:[#allocation11 + $0xe8] sm:$0xff]
        %v6301 = vld [vmem:[#allocation11 + $0xf0] sm:$0xff]
        %v6302 = vld [vmem:[#allocation11 + $0xf8] sm:$0xff]
        %v6303 = vld [vmem:[#allocation11 + $0x100] sm:$0xff]
        %v6304 = vld [vmem:[#allocation11 + $0x108] sm:$0xff]
        %v6305 = vld [vmem:[#allocation11 + $0x110] sm:$0xff]
        %v6306 = vld [vmem:[#allocation11 + $0x118] sm:$0xff]
        %v6307 = vld [vmem:[#allocation11 + $0x120] sm:$0xff]
        %v6308 = vld [vmem:[#allocation11 + $0x128] sm:$0xff]
        %v6309 = vld [vmem:[#allocation11 + $0x130] sm:$0xff]
        %v6310 = vld [vmem:[#allocation11 + $0x138] sm:$0xff]
        %v6311 = vld [vmem:[#allocation11 + $0x140] sm:$0xff]
        %v6312 = vld [vmem:[#allocation11 + $0x148] sm:$0xff]
        %v6313 = vld [vmem:[#allocation11 + $0x150] sm:$0xff]
        %v6314 = vld [vmem:[#allocation11 + $0x158] sm:$0xff]
        %v6315 = vld [vmem:[#allocation11 + $0x160] sm:$0xff]
        %v6316 = vld [vmem:[#allocation11 + $0x168] sm:$0xff]
        %v6317 = vld [vmem:[#allocation11 + $0x170] sm:$0xff]
        %v6318 = vld [vmem:[#allocation11 + $0x178] sm:$0xff]
        %v6319 = vld [vmem:[#allocation11 + $0x180] sm:$0xff]
        %v6320 = vld [vmem:[#allocation11 + $0x188] sm:$0xff]
        %v6321 = vld [vmem:[#allocation11 + $0x190] sm:$0xff]
        %v6322 = vld [vmem:[#allocation11 + $0x198] sm:$0xff]
        %v6323 = vld [vmem:[#allocation11 + $0x1a0] sm:$0xff]
        %v6324 = vld [vmem:[#allocation11 + $0x1a8] sm:$0xff]
        %v6325 = vld [vmem:[#allocation11 + $0x1b0] sm:$0xff]
        %v6326 = vld [vmem:[#allocation11 + $0x1b8] sm:$0xff]
        %v6327 = vld [vmem:[#allocation11 + $0x1c0] sm:$0xff]
        %v6328 = vld [vmem:[#allocation11 + $0x1c8] sm:$0xff]
        %v6329 = vld [vmem:[#allocation11 + $0x1d0] sm:$0xff]
        %v6330 = vld [vmem:[#allocation11 + $0x1d8] sm:$0xff]
        %v6331 = vld [vmem:[#allocation11 + $0x1e0] sm:$0xff]
        %v6332 = vld [vmem:[#allocation11 + $0x1e8] sm:$0xff]
        %v6333 = vld [vmem:[#allocation11 + $0x1f0] sm:$0xff]
        %v6334 = vld [vmem:[#allocation11 + $0x1f8] sm:$0xff]
        %v6335 = vld [vmem:[%s6] sm:$0x3]
        %v6337 = vperm.slane %v6335, 0
        %v6338 = vperm.slane %v6335, 1
        %v6405 = vunpack.c.l.b16 %v6271
        %v6406 = vunpack.c.h.b16 %v6271
        %v6407 = vunpack.c.l.b16 %v6272
        %v6408 = vunpack.c.h.b16 %v6272
        %v6409 = vunpack.c.l.b16 %v6273
        %v6410 = vunpack.c.h.b16 %v6273
        %v6411 = vunpack.c.l.b16 %v6274
        %v6412 = vunpack.c.h.b16 %v6274
        %v6413 = vunpack.c.l.b16 %v6275
        %v6414 = vunpack.c.h.b16 %v6275
        %v6415 = vunpack.c.l.b16 %v6276
        %v6416 = vunpack.c.h.b16 %v6276
        %v6417 = vunpack.c.l.b16 %v6277
        %v6418 = vunpack.c.h.b16 %v6277
        %v6419 = vunpack.c.l.b16 %v6278
        %v6420 = vunpack.c.h.b16 %v6278
        %v6421 = vunpack.c.l.b16 %v6279
        %v6422 = vunpack.c.h.b16 %v6279
        %v6423 = vunpack.c.l.b16 %v6280
        %v6424 = vunpack.c.h.b16 %v6280
        %v6425 = vunpack.c.l.b16 %v6281
        %v6426 = vunpack.c.h.b16 %v6281
        %v6427 = vunpack.c.l.b16 %v6282
        %v6428 = vunpack.c.h.b16 %v6282
        %v6429 = vunpack.c.l.b16 %v6283
        %v6430 = vunpack.c.h.b16 %v6283
        %v6431 = vunpack.c.l.b16 %v6284
        %v6432 = vunpack.c.h.b16 %v6284
        %v6433 = vunpack.c.l.b16 %v6285
        %v6434 = vunpack.c.h.b16 %v6285
        %v6435 = vunpack.c.l.b16 %v6286
        %v6436 = vunpack.c.h.b16 %v6286
        %v6437 = vunpack.c.l.b16 %v6287
        %v6438 = vunpack.c.h.b16 %v6287
        %v6439 = vunpack.c.l.b16 %v6288
        %v6440 = vunpack.c.h.b16 %v6288
        %v6441 = vunpack.c.l.b16 %v6289
        %v6442 = vunpack.c.h.b16 %v6289
        %v6443 = vunpack.c.l.b16 %v6290
        %v6444 = vunpack.c.h.b16 %v6290
        %v6445 = vunpack.c.l.b16 %v6291
        %v6446 = vunpack.c.h.b16 %v6291
        %v6447 = vunpack.c.l.b16 %v6292
        %v6448 = vunpack.c.h.b16 %v6292
        %v6449 = vunpack.c.l.b16 %v6293
        %v6450 = vunpack.c.h.b16 %v6293
        %v6451 = vunpack.c.l.b16 %v6294
        %v6452 = vunpack.c.h.b16 %v6294
        %v6453 = vunpack.c.l.b16 %v6295
        %v6454 = vunpack.c.h.b16 %v6295
        %v6455 = vunpack.c.l.b16 %v6296
        %v6456 = vunpack.c.h.b16 %v6296
        %v6457 = vunpack.c.l.b16 %v6297
        %v6458 = vunpack.c.h.b16 %v6297
        %v6459 = vunpack.c.l.b16 %v6298
        %v6460 = vunpack.c.h.b16 %v6298
        %v6461 = vunpack.c.l.b16 %v6299
        %v6462 = vunpack.c.h.b16 %v6299
        %v6463 = vunpack.c.l.b16 %v6300
        %v6464 = vunpack.c.h.b16 %v6300
        %v6465 = vunpack.c.l.b16 %v6301
        %v6466 = vunpack.c.h.b16 %v6301
        %v6467 = vunpack.c.l.b16 %v6302
        %v6468 = vunpack.c.h.b16 %v6302
        %v6469 = vunpack.c.l.b16 %v6303
        %v6470 = vunpack.c.h.b16 %v6303
        %v6471 = vunpack.c.l.b16 %v6304
        %v6472 = vunpack.c.h.b16 %v6304
        %v6473 = vunpack.c.l.b16 %v6305
        %v6474 = vunpack.c.h.b16 %v6305
        %v6475 = vunpack.c.l.b16 %v6306
        %v6476 = vunpack.c.h.b16 %v6306
        %v6477 = vunpack.c.l.b16 %v6307
        %v6478 = vunpack.c.h.b16 %v6307
        %v6479 = vunpack.c.l.b16 %v6308
        %v6480 = vunpack.c.h.b16 %v6308
        %v6481 = vunpack.c.l.b16 %v6309
        %v6482 = vunpack.c.h.b16 %v6309
        %v6483 = vunpack.c.l.b16 %v6310
        %v6484 = vunpack.c.h.b16 %v6310
        %v6485 = vunpack.c.l.b16 %v6311
        %v6486 = vunpack.c.h.b16 %v6311
        %v6487 = vunpack.c.l.b16 %v6312
        %v6488 = vunpack.c.h.b16 %v6312
        %v6489 = vunpack.c.l.b16 %v6313
        %v6490 = vunpack.c.h.b16 %v6313
        %v6491 = vunpack.c.l.b16 %v6314
        %v6492 = vunpack.c.h.b16 %v6314
        %v6493 = vunpack.c.l.b16 %v6315
        %v6494 = vunpack.c.h.b16 %v6315
        %v6495 = vunpack.c.l.b16 %v6316
        %v6496 = vunpack.c.h.b16 %v6316
        %v6497 = vunpack.c.l.b16 %v6317
        %v6498 = vunpack.c.h.b16 %v6317
        %v6499 = vunpack.c.l.b16 %v6318
        %v6500 = vunpack.c.h.b16 %v6318
        %v6501 = vunpack.c.l.b16 %v6319
        %v6502 = vunpack.c.h.b16 %v6319
        %v6503 = vunpack.c.l.b16 %v6320
        %v6504 = vunpack.c.h.b16 %v6320
        %v6505 = vunpack.c.l.b16 %v6321
        %v6506 = vunpack.c.h.b16 %v6321
        %v6507 = vunpack.c.l.b16 %v6322
        %v6508 = vunpack.c.h.b16 %v6322
        %v6509 = vunpack.c.l.b16 %v6323
        %v6510 = vunpack.c.h.b16 %v6323
        %v6511 = vunpack.c.l.b16 %v6324
        %v6512 = vunpack.c.h.b16 %v6324
        %v6513 = vunpack.c.l.b16 %v6325
        %v6514 = vunpack.c.h.b16 %v6325
        %v6515 = vunpack.c.l.b16 %v6326
        %v6516 = vunpack.c.h.b16 %v6326
        %v6517 = vunpack.c.l.b16 %v6327
        %v6518 = vunpack.c.h.b16 %v6327
        %v6519 = vunpack.c.l.b16 %v6328
        %v6520 = vunpack.c.h.b16 %v6328
        %v6521 = vunpack.c.l.b16 %v6329
        %v6522 = vunpack.c.h.b16 %v6329
        %v6523 = vunpack.c.l.b16 %v6330
        %v6524 = vunpack.c.h.b16 %v6330
        %v6525 = vunpack.c.l.b16 %v6331
        %v6526 = vunpack.c.h.b16 %v6331
        %v6527 = vunpack.c.l.b16 %v6332
        %v6528 = vunpack.c.h.b16 %v6332
        %v6529 = vunpack.c.l.b16 %v6333
        %v6530 = vunpack.c.h.b16 %v6333
        %v6531 = vunpack.c.l.b16 %v6334
        %v6532 = vunpack.c.h.b16 %v6334
        %v6533 = vpack.c.b16 %v6407, %v6405
        %v6534 = vpack.c.b16 %v6408, %v6406
        %v6535 = vpack.c.b16 %v6411, %v6409
        %v6536 = vpack.c.b16 %v6412, %v6410
        %v6537 = vpack.c.b16 %v6415, %v6413
        %v6538 = vpack.c.b16 %v6416, %v6414
        %v6539 = vpack.c.b16 %v6419, %v6417
        %v6540 = vpack.c.b16 %v6420, %v6418
        %v6541 = vpack.c.b16 %v6423, %v6421
        %v6542 = vpack.c.b16 %v6424, %v6422
        %v6543 = vpack.c.b16 %v6427, %v6425
        %v6544 = vpack.c.b16 %v6428, %v6426
        %v6545 = vpack.c.b16 %v6431, %v6429
        %v6546 = vpack.c.b16 %v6432, %v6430
        %v6547 = vpack.c.b16 %v6435, %v6433
        %v6548 = vpack.c.b16 %v6436, %v6434
        %v6549 = vpack.c.b16 %v6439, %v6437
        %v6550 = vpack.c.b16 %v6440, %v6438
        %v6551 = vpack.c.b16 %v6443, %v6441
        %v6552 = vpack.c.b16 %v6444, %v6442
        %v6553 = vpack.c.b16 %v6447, %v6445
        %v6554 = vpack.c.b16 %v6448, %v6446
        %v6555 = vpack.c.b16 %v6451, %v6449
        %v6556 = vpack.c.b16 %v6452, %v6450
        %v6557 = vpack.c.b16 %v6455, %v6453
        %v6558 = vpack.c.b16 %v6456, %v6454
        %v6559 = vpack.c.b16 %v6459, %v6457
        %v6560 = vpack.c.b16 %v6460, %v6458
        %v6561 = vpack.c.b16 %v6463, %v6461
        %v6562 = vpack.c.b16 %v6464, %v6462
        %v6563 = vpack.c.b16 %v6467, %v6465
        %v6564 = vpack.c.b16 %v6468, %v6466
        %v6565 = vpack.c.b16 %v6471, %v6469
        %v6566 = vpack.c.b16 %v6472, %v6470
        %v6567 = vpack.c.b16 %v6475, %v6473
        %v6568 = vpack.c.b16 %v6476, %v6474
        %v6569 = vpack.c.b16 %v6479, %v6477
        %v6570 = vpack.c.b16 %v6480, %v6478
        %v6571 = vpack.c.b16 %v6483, %v6481
        %v6572 = vpack.c.b16 %v6484, %v6482
        %v6573 = vpack.c.b16 %v6487, %v6485
        %v6574 = vpack.c.b16 %v6488, %v6486
        %v6575 = vpack.c.b16 %v6491, %v6489
        %v6576 = vpack.c.b16 %v6492, %v6490
        %v6577 = vpack.c.b16 %v6495, %v6493
        %v6578 = vpack.c.b16 %v6496, %v6494
        %v6579 = vpack.c.b16 %v6499, %v6497
        %v6580 = vpack.c.b16 %v6500, %v6498
        %v6581 = vpack.c.b16 %v6503, %v6501
        %v6582 = vpack.c.b16 %v6504, %v6502
        %v6583 = vpack.c.b16 %v6507, %v6505
        %v6584 = vpack.c.b16 %v6508, %v6506
        %v6585 = vpack.c.b16 %v6511, %v6509
        %v6586 = vpack.c.b16 %v6512, %v6510
        %v6587 = vpack.c.b16 %v6515, %v6513
        %v6588 = vpack.c.b16 %v6516, %v6514
        %v6589 = vpack.c.b16 %v6519, %v6517
        %v6590 = vpack.c.b16 %v6520, %v6518
        %v6591 = vpack.c.b16 %v6523, %v6521
        %v6592 = vpack.c.b16 %v6524, %v6522
        %v6593 = vpack.c.b16 %v6527, %v6525
        %v6594 = vpack.c.b16 %v6528, %v6526
        %v6595 = vpack.c.b16 %v6531, %v6529
        %v6596 = vpack.c.b16 %v6532, %v6530
        %6661 = vmatpush.bf16.msra.mxu0 %v6547
        %6662 = vmatpush.bf16.msra.mxu0 %v6545
        %6663 = vmatpush.bf16.msra.mxu0 %v6543
        %6664 = vmatpush.bf16.msra.mxu0 %v6541
        %6665 = vmatpush.bf16.msra.mxu0 %v6539
        %6666 = vmatpush.bf16.msra.mxu0 %v6537
        %6667 = vmatpush.bf16.msra.mxu0 %v6535
        %6668 = vmatpush.bf16.msra.mxu0 %v6533
        %6669 = vmatmul.bf16.gmra.mxu0 %v6239
        %v6670 = vpop.f32.mrf.mxu0
        %v6671 = vadd.f32 %v6337, %v6670
        %v6672 = vpop.f32.mrf.mxu0
        %v6673 = vadd.f32 %v6337, %v6672
        %6674 = vmatmul.bf16.gmra.mxu0 %v6243
        %v6675 = vpop.f32.mrf.mxu0
        %v6676 = vadd.f32 %v6337, %v6675
        %v6677 = vpop.f32.mrf.mxu0
        %v6678 = vadd.f32 %v6337, %v6677
        %6679 = vmatmul.bf16.gmra.mxu0 %v6247
        %v6680 = vpop.f32.mrf.mxu0
        %v6681 = vadd.f32 %v6337, %v6680
        %v6682 = vpop.f32.mrf.mxu0
        %v6683 = vadd.f32 %v6337, %v6682
        %6684 = vmatmul.bf16.gmra.mxu0 %v6251
        %v6685 = vpop.f32.mrf.mxu0
        %v6686 = vadd.f32 %v6337, %v6685
        %v6687 = vpop.f32.mrf.mxu0
        %v6688 = vadd.f32 %v6337, %v6687
        %6689 = vmatmul.bf16.gmra.mxu0 %v6255
        %v6690 = vpop.f32.mrf.mxu0
        %v6691 = vadd.f32 %v6337, %v6690
        %v6692 = vpop.f32.mrf.mxu0
        %v6693 = vadd.f32 %v6337, %v6692
        %6694 = vmatmul.bf16.gmra.mxu0 %v6259
        %v6695 = vpop.f32.mrf.mxu0
        %v6696 = vadd.f32 %v6337, %v6695
        %v6697 = vpop.f32.mrf.mxu0
        %v6698 = vadd.f32 %v6337, %v6697
        %6699 = vmatmul.bf16.gmra.mxu0 %v6263
        %v6700 = vpop.f32.mrf.mxu0
        %v6701 = vadd.f32 %v6337, %v6700
        %v6702 = vpop.f32.mrf.mxu0
        %v6703 = vadd.f32 %v6337, %v6702
        %6704 = vmatmul.bf16.gmra.mxu0 %v6267
        %v6705 = vpop.f32.mrf.mxu0
        %v6706 = vadd.f32 %v6337, %v6705
        %v6707 = vpop.f32.mrf.mxu0
        %v6708 = vadd.f32 %v6337, %v6707
        %6709 = vdwg.mxu0
        %6710 = vmatpush.bf16.msra.mxu0 %v6563
        %6711 = vmatpush.bf16.msra.mxu0 %v6561
        %6712 = vmatpush.bf16.msra.mxu0 %v6559
        %6713 = vmatpush.bf16.msra.mxu0 %v6557
        %6714 = vmatpush.bf16.msra.mxu0 %v6555
        %6715 = vmatpush.bf16.msra.mxu0 %v6553
        %6716 = vmatpush.bf16.msra.mxu0 %v6551
        %6717 = vmatpush.bf16.msra.mxu0 %v6549
        %6718 = vmatmul.bf16.gmra.mxu0 %v6240
        %v6719 = vpop.f32.mrf.mxu0
        %v6720 = vadd.f32 %v6671, %v6719
        %v6721 = vpop.f32.mrf.mxu0
        %v6722 = vadd.f32 %v6673, %v6721
        %6723 = vmatmul.bf16.gmra.mxu0 %v6244
        %v6724 = vpop.f32.mrf.mxu0
        %v6725 = vadd.f32 %v6676, %v6724
        %v6726 = vpop.f32.mrf.mxu0
        %v6727 = vadd.f32 %v6678, %v6726
        %6728 = vmatmul.bf16.gmra.mxu0 %v6248
        %v6729 = vpop.f32.mrf.mxu0
        %v6730 = vadd.f32 %v6681, %v6729
        %v6731 = vpop.f32.mrf.mxu0
        %v6732 = vadd.f32 %v6683, %v6731
        %6733 = vmatmul.bf16.gmra.mxu0 %v6252
        %v6734 = vpop.f32.mrf.mxu0
        %v6735 = vadd.f32 %v6686, %v6734
        %v6736 = vpop.f32.mrf.mxu0
        %v6737 = vadd.f32 %v6688, %v6736
        %6738 = vmatmul.bf16.gmra.mxu0 %v6256
        %v6739 = vpop.f32.mrf.mxu0
        %v6740 = vadd.f32 %v6691, %v6739
        %v6741 = vpop.f32.mrf.mxu0
        %v6742 = vadd.f32 %v6693, %v6741
        %6743 = vmatmul.bf16.gmra.mxu0 %v6260
        %v6744 = vpop.f32.mrf.mxu0
        %v6745 = vadd.f32 %v6696, %v6744
        %v6746 = vpop.f32.mrf.mxu0
        %v6747 = vadd.f32 %v6698, %v6746
        %6748 = vmatmul.bf16.gmra.mxu0 %v6264
        %v6749 = vpop.f32.mrf.mxu0
        %v6750 = vadd.f32 %v6701, %v6749
        %v6751 = vpop.f32.mrf.mxu0
        %v6752 = vadd.f32 %v6703, %v6751
        %6753 = vmatmul.bf16.gmra.mxu0 %v6268
        %v6754 = vpop.f32.mrf.mxu0
        %v6755 = vadd.f32 %v6706, %v6754
        %v6756 = vpop.f32.mrf.mxu0
        %v6757 = vadd.f32 %v6708, %v6756
        %6758 = vdwg.mxu0
        %6759 = vmatpush.bf16.msra.mxu0 %v6579
        %6760 = vmatpush.bf16.msra.mxu0 %v6577
        %6761 = vmatpush.bf16.msra.mxu0 %v6575
        %6762 = vmatpush.bf16.msra.mxu0 %v6573
        %6763 = vmatpush.bf16.msra.mxu0 %v6571
        %6764 = vmatpush.bf16.msra.mxu0 %v6569
        %6765 = vmatpush.bf16.msra.mxu0 %v6567
        %6766 = vmatpush.bf16.msra.mxu0 %v6565
        %6767 = vmatmul.bf16.gmra.mxu0 %v6241
        %v6768 = vpop.f32.mrf.mxu0
        %v6769 = vadd.f32 %v6720, %v6768
        %v6770 = vpop.f32.mrf.mxu0
        %v6771 = vadd.f32 %v6722, %v6770
        %6772 = vmatmul.bf16.gmra.mxu0 %v6245
        %v6773 = vpop.f32.mrf.mxu0
        %v6774 = vadd.f32 %v6725, %v6773
        %v6775 = vpop.f32.mrf.mxu0
        %v6776 = vadd.f32 %v6727, %v6775
        %6777 = vmatmul.bf16.gmra.mxu0 %v6249
        %v6778 = vpop.f32.mrf.mxu0
        %v6779 = vadd.f32 %v6730, %v6778
        %v6780 = vpop.f32.mrf.mxu0
        %v6781 = vadd.f32 %v6732, %v6780
        %6782 = vmatmul.bf16.gmra.mxu0 %v6253
        %v6783 = vpop.f32.mrf.mxu0
        %v6784 = vadd.f32 %v6735, %v6783
        %v6785 = vpop.f32.mrf.mxu0
        %v6786 = vadd.f32 %v6737, %v6785
        %6787 = vmatmul.bf16.gmra.mxu0 %v6257
        %v6788 = vpop.f32.mrf.mxu0
        %v6789 = vadd.f32 %v6740, %v6788
        %v6790 = vpop.f32.mrf.mxu0
        %v6791 = vadd.f32 %v6742, %v6790
        %6792 = vmatmul.bf16.gmra.mxu0 %v6261
        %v6793 = vpop.f32.mrf.mxu0
        %v6794 = vadd.f32 %v6745, %v6793
        %v6795 = vpop.f32.mrf.mxu0
        %v6796 = vadd.f32 %v6747, %v6795
        %6797 = vmatmul.bf16.gmra.mxu0 %v6265
        %v6798 = vpop.f32.mrf.mxu0
        %v6799 = vadd.f32 %v6750, %v6798
        %v6800 = vpop.f32.mrf.mxu0
        %v6801 = vadd.f32 %v6752, %v6800
        %6802 = vmatmul.bf16.gmra.mxu0 %v6269
        %v6803 = vpop.f32.mrf.mxu0
        %v6804 = vadd.f32 %v6755, %v6803
        %v6805 = vpop.f32.mrf.mxu0
        %v6806 = vadd.f32 %v6757, %v6805
        %6807 = vdwg.mxu0
        %6808 = vmatpush.bf16.msra.mxu0 %v6595
        %6809 = vmatpush.bf16.msra.mxu0 %v6593
        %6810 = vmatpush.bf16.msra.mxu0 %v6591
        %6811 = vmatpush.bf16.msra.mxu0 %v6589
        %6812 = vmatpush.bf16.msra.mxu0 %v6587
        %6813 = vmatpush.bf16.msra.mxu0 %v6585
        %6814 = vmatpush.bf16.msra.mxu0 %v6583
        %6815 = vmatpush.bf16.msra.mxu0 %v6581
        %6816 = vmatmul.bf16.gmra.mxu0 %v6242
        %v6817 = vpop.f32.mrf.mxu0
        %v6818 = vadd.f32 %v6769, %v6817
        %v6819 = vpop.f32.mrf.mxu0
        %v6820 = vadd.f32 %v6771, %v6819
        %6821 = vmatmul.bf16.gmra.mxu0 %v6246
        %v6822 = vpop.f32.mrf.mxu0
        %v6823 = vadd.f32 %v6774, %v6822
        %v6824 = vpop.f32.mrf.mxu0
        %v6825 = vadd.f32 %v6776, %v6824
        %6826 = vmatmul.bf16.gmra.mxu0 %v6250
        %v6827 = vpop.f32.mrf.mxu0
        %v6828 = vadd.f32 %v6779, %v6827
        %v6829 = vpop.f32.mrf.mxu0
        %v6830 = vadd.f32 %v6781, %v6829
        %6831 = vmatmul.bf16.gmra.mxu0 %v6254
        %v6832 = vpop.f32.mrf.mxu0
        %v6833 = vadd.f32 %v6784, %v6832
        %v6834 = vpop.f32.mrf.mxu0
        %v6835 = vadd.f32 %v6786, %v6834
        %6836 = vmatmul.bf16.gmra.mxu0 %v6258
        %v6837 = vpop.f32.mrf.mxu0
        %v6838 = vadd.f32 %v6789, %v6837
        %v6839 = vpop.f32.mrf.mxu0
        %v6840 = vadd.f32 %v6791, %v6839
        %6841 = vmatmul.bf16.gmra.mxu0 %v6262
        %v6842 = vpop.f32.mrf.mxu0
        %v6843 = vadd.f32 %v6794, %v6842
        %v6844 = vpop.f32.mrf.mxu0
        %v6845 = vadd.f32 %v6796, %v6844
        %6846 = vmatmul.bf16.gmra.mxu0 %v6266
        %v6847 = vpop.f32.mrf.mxu0
        %v6848 = vadd.f32 %v6799, %v6847
        %v6849 = vpop.f32.mrf.mxu0
        %v6850 = vadd.f32 %v6801, %v6849
        %6851 = vmatmul.bf16.gmra.mxu0 %v6270
        %v6852 = vpop.f32.mrf.mxu0
        %v6853 = vadd.f32 %v6804, %v6852
        %v6854 = vpop.f32.mrf.mxu0
        %v6855 = vadd.f32 %v6806, %v6854
        %6856 = vdwg.mxu0
        %6857 = vmatpush.bf16.msra.mxu0 %v6548
        %6858 = vmatpush.bf16.msra.mxu0 %v6546
        %6859 = vmatpush.bf16.msra.mxu0 %v6544
        %6860 = vmatpush.bf16.msra.mxu0 %v6542
        %6861 = vmatpush.bf16.msra.mxu0 %v6540
        %6862 = vmatpush.bf16.msra.mxu0 %v6538
        %6863 = vmatpush.bf16.msra.mxu0 %v6536
        %6864 = vmatpush.bf16.msra.mxu0 %v6534
        %6865 = vmatmul.bf16.gmra.mxu0 %v6239
        %v6866 = vpop.f32.mrf.mxu0
        %v6867 = vadd.f32 %v6338, %v6866
        %v6868 = vpop.f32.mrf.mxu0
        %v6869 = vadd.f32 %v6338, %v6868
        %6870 = vmatmul.bf16.gmra.mxu0 %v6243
        %v6871 = vpop.f32.mrf.mxu0
        %v6872 = vadd.f32 %v6338, %v6871
        %v6873 = vpop.f32.mrf.mxu0
        %v6874 = vadd.f32 %v6338, %v6873
        %6875 = vmatmul.bf16.gmra.mxu0 %v6247
        %v6876 = vpop.f32.mrf.mxu0
        %v6877 = vadd.f32 %v6338, %v6876
        %v6878 = vpop.f32.mrf.mxu0
        %v6879 = vadd.f32 %v6338, %v6878
        %6880 = vmatmul.bf16.gmra.mxu0 %v6251
        %v6881 = vpop.f32.mrf.mxu0
        %v6882 = vadd.f32 %v6338, %v6881
        %v6883 = vpop.f32.mrf.mxu0
        %v6884 = vadd.f32 %v6338, %v6883
        %6885 = vmatmul.bf16.gmra.mxu0 %v6255
        %v6886 = vpop.f32.mrf.mxu0
        %v6887 = vadd.f32 %v6338, %v6886
        %v6888 = vpop.f32.mrf.mxu0
        %v6889 = vadd.f32 %v6338, %v6888
        %6890 = vmatmul.bf16.gmra.mxu0 %v6259
        %v6891 = vpop.f32.mrf.mxu0
        %v6892 = vadd.f32 %v6338, %v6891
        %v6893 = vpop.f32.mrf.mxu0
        %v6894 = vadd.f32 %v6338, %v6893
        %6895 = vmatmul.bf16.gmra.mxu0 %v6263
        %v6896 = vpop.f32.mrf.mxu0
        %v6897 = vadd.f32 %v6338, %v6896
        %v6898 = vpop.f32.mrf.mxu0
        %v6899 = vadd.f32 %v6338, %v6898
        %6900 = vmatmul.bf16.gmra.mxu0 %v6267
        %v6901 = vpop.f32.mrf.mxu0
        %v6902 = vadd.f32 %v6338, %v6901
        %v6903 = vpop.f32.mrf.mxu0
        %v6904 = vadd.f32 %v6338, %v6903
        %6905 = vdwg.mxu0
        %6906 = vmatpush.bf16.msra.mxu0 %v6564
        %6907 = vmatpush.bf16.msra.mxu0 %v6562
        %6908 = vmatpush.bf16.msra.mxu0 %v6560
        %6909 = vmatpush.bf16.msra.mxu0 %v6558
        %6910 = vmatpush.bf16.msra.mxu0 %v6556
        %6911 = vmatpush.bf16.msra.mxu0 %v6554
        %6912 = vmatpush.bf16.msra.mxu0 %v6552
        %6913 = vmatpush.bf16.msra.mxu0 %v6550
        %6914 = vmatmul.bf16.gmra.mxu0 %v6240
        %v6915 = vpop.f32.mrf.mxu0
        %v6916 = vadd.f32 %v6867, %v6915
        %v6917 = vpop.f32.mrf.mxu0
        %v6918 = vadd.f32 %v6869, %v6917
        %6919 = vmatmul.bf16.gmra.mxu0 %v6244
        %v6920 = vpop.f32.mrf.mxu0
        %v6921 = vadd.f32 %v6872, %v6920
        %v6922 = vpop.f32.mrf.mxu0
        %v6923 = vadd.f32 %v6874, %v6922
        %6924 = vmatmul.bf16.gmra.mxu0 %v6248
        %v6925 = vpop.f32.mrf.mxu0
        %v6926 = vadd.f32 %v6877, %v6925
        %v6927 = vpop.f32.mrf.mxu0
        %v6928 = vadd.f32 %v6879, %v6927
        %6929 = vmatmul.bf16.gmra.mxu0 %v6252
        %v6930 = vpop.f32.mrf.mxu0
        %v6931 = vadd.f32 %v6882, %v6930
        %v6932 = vpop.f32.mrf.mxu0
        %v6933 = vadd.f32 %v6884, %v6932
        %6934 = vmatmul.bf16.gmra.mxu0 %v6256
        %v6935 = vpop.f32.mrf.mxu0
        %v6936 = vadd.f32 %v6887, %v6935
        %v6937 = vpop.f32.mrf.mxu0
        %v6938 = vadd.f32 %v6889, %v6937
        %6939 = vmatmul.bf16.gmra.mxu0 %v6260
        %v6940 = vpop.f32.mrf.mxu0
        %v6941 = vadd.f32 %v6892, %v6940
        %v6942 = vpop.f32.mrf.mxu0
        %v6943 = vadd.f32 %v6894, %v6942
        %6944 = vmatmul.bf16.gmra.mxu0 %v6264
        %v6945 = vpop.f32.mrf.mxu0
        %v6946 = vadd.f32 %v6897, %v6945
        %v6947 = vpop.f32.mrf.mxu0
        %v6948 = vadd.f32 %v6899, %v6947
        %6949 = vmatmul.bf16.gmra.mxu0 %v6268
        %v6950 = vpop.f32.mrf.mxu0
        %v6951 = vadd.f32 %v6902, %v6950
        %v6952 = vpop.f32.mrf.mxu0
        %v6953 = vadd.f32 %v6904, %v6952
        %6954 = vdwg.mxu0
        %6955 = vmatpush.bf16.msra.mxu0 %v6580
        %6956 = vmatpush.bf16.msra.mxu0 %v6578
        %6957 = vmatpush.bf16.msra.mxu0 %v6576
        %6958 = vmatpush.bf16.msra.mxu0 %v6574
        %6959 = vmatpush.bf16.msra.mxu0 %v6572
        %6960 = vmatpush.bf16.msra.mxu0 %v6570
        %6961 = vmatpush.bf16.msra.mxu0 %v6568
        %6962 = vmatpush.bf16.msra.mxu0 %v6566
        %6963 = vmatmul.bf16.gmra.mxu0 %v6241
        %v6964 = vpop.f32.mrf.mxu0
        %v6965 = vadd.f32 %v6916, %v6964
        %v6966 = vpop.f32.mrf.mxu0
        %v6967 = vadd.f32 %v6918, %v6966
        %6968 = vmatmul.bf16.gmra.mxu0 %v6245
        %v6969 = vpop.f32.mrf.mxu0
        %v6970 = vadd.f32 %v6921, %v6969
        %v6971 = vpop.f32.mrf.mxu0
        %v6972 = vadd.f32 %v6923, %v6971
        %6973 = vmatmul.bf16.gmra.mxu0 %v6249
        %v6974 = vpop.f32.mrf.mxu0
        %v6975 = vadd.f32 %v6926, %v6974
        %v6976 = vpop.f32.mrf.mxu0
        %v6977 = vadd.f32 %v6928, %v6976
        %6978 = vmatmul.bf16.gmra.mxu0 %v6253
        %v6979 = vpop.f32.mrf.mxu0
        %v6980 = vadd.f32 %v6931, %v6979
        %v6981 = vpop.f32.mrf.mxu0
        %v6982 = vadd.f32 %v6933, %v6981
        %6983 = vmatmul.bf16.gmra.mxu0 %v6257
        %v6984 = vpop.f32.mrf.mxu0
        %v6985 = vadd.f32 %v6936, %v6984
        %v6986 = vpop.f32.mrf.mxu0
        %v6987 = vadd.f32 %v6938, %v6986
        %6988 = vmatmul.bf16.gmra.mxu0 %v6261
        %v6989 = vpop.f32.mrf.mxu0
        %v6990 = vadd.f32 %v6941, %v6989
        %v6991 = vpop.f32.mrf.mxu0
        %v6992 = vadd.f32 %v6943, %v6991
        %6993 = vmatmul.bf16.gmra.mxu0 %v6265
        %v6994 = vpop.f32.mrf.mxu0
        %v6995 = vadd.f32 %v6946, %v6994
        %v6996 = vpop.f32.mrf.mxu0
        %v6997 = vadd.f32 %v6948, %v6996
        %6998 = vmatmul.bf16.gmra.mxu0 %v6269
        %v6999 = vpop.f32.mrf.mxu0
        %v7000 = vadd.f32 %v6951, %v6999
        %v7001 = vpop.f32.mrf.mxu0
        %v7002 = vadd.f32 %v6953, %v7001
        %7003 = vdwg.mxu0
        %7004 = vmatpush.bf16.msra.mxu0 %v6596
        %7005 = vmatpush.bf16.msra.mxu0 %v6594
        %7006 = vmatpush.bf16.msra.mxu0 %v6592
        %7007 = vmatpush.bf16.msra.mxu0 %v6590
        %7008 = vmatpush.bf16.msra.mxu0 %v6588
        %7009 = vmatpush.bf16.msra.mxu0 %v6586
        %7010 = vmatpush.bf16.msra.mxu0 %v6584
        %7011 = vmatpush.bf16.msra.mxu0 %v6582
        %7012 = vmatmul.bf16.gmra.mxu0 %v6242
        %v7013 = vpop.f32.mrf.mxu0
        %v7014 = vadd.f32 %v6965, %v7013
        %v7015 = vpop.f32.mrf.mxu0
        %v7016 = vadd.f32 %v6967, %v7015
        %7017 = vmatmul.bf16.gmra.mxu0 %v6246
        %v7018 = vpop.f32.mrf.mxu0
        %v7019 = vadd.f32 %v6970, %v7018
        %v7020 = vpop.f32.mrf.mxu0
        %v7021 = vadd.f32 %v6972, %v7020
        %7022 = vmatmul.bf16.gmra.mxu0 %v6250
        %v7023 = vpop.f32.mrf.mxu0
        %v7024 = vadd.f32 %v6975, %v7023
        %v7025 = vpop.f32.mrf.mxu0
        %v7026 = vadd.f32 %v6977, %v7025
        %7027 = vmatmul.bf16.gmra.mxu0 %v6254
        %v7028 = vpop.f32.mrf.mxu0
        %v7029 = vadd.f32 %v6980, %v7028
        %v7030 = vpop.f32.mrf.mxu0
        %v7031 = vadd.f32 %v6982, %v7030
        %7032 = vmatmul.bf16.gmra.mxu0 %v6258
        %v7033 = vpop.f32.mrf.mxu0
        %v7034 = vadd.f32 %v6985, %v7033
        %v7035 = vpop.f32.mrf.mxu0
        %v7036 = vadd.f32 %v6987, %v7035
        %7037 = vmatmul.bf16.gmra.mxu0 %v6262
        %v7038 = vpop.f32.mrf.mxu0
        %v7039 = vadd.f32 %v6990, %v7038
        %v7040 = vpop.f32.mrf.mxu0
        %v7041 = vadd.f32 %v6992, %v7040
        %7042 = vmatmul.bf16.gmra.mxu0 %v6266
        %v7043 = vpop.f32.mrf.mxu0
        %v7044 = vadd.f32 %v6995, %v7043
        %v7045 = vpop.f32.mrf.mxu0
        %v7046 = vadd.f32 %v6997, %v7045
        %7047 = vmatmul.bf16.gmra.mxu0 %v6270
        %v7048 = vpop.f32.mrf.mxu0
        %v7049 = vadd.f32 %v7000, %v7048
        %v7050 = vpop.f32.mrf.mxu0
        %v7051 = vadd.f32 %v7002, %v7050
        %7052 = vdwg.mxu0
        %v7053 = vmax.f32 %v6818, 0.0
        %v7054 = vmax.f32 %v7014, 0.0
        %v7055 = vmax.f32 %v6820, 0.0
        %v7056 = vmax.f32 %v7016, 0.0
        %v7057 = vmax.f32 %v6823, 0.0
        %v7058 = vmax.f32 %v7019, 0.0
        %v7059 = vmax.f32 %v6825, 0.0
        %v7060 = vmax.f32 %v7021, 0.0
        %v7061 = vmax.f32 %v6828, 0.0
        %v7062 = vmax.f32 %v7024, 0.0
        %v7063 = vmax.f32 %v6830, 0.0
        %v7064 = vmax.f32 %v7026, 0.0
        %v7065 = vmax.f32 %v6833, 0.0
        %v7066 = vmax.f32 %v7029, 0.0
        %v7067 = vmax.f32 %v6835, 0.0
        %v7068 = vmax.f32 %v7031, 0.0
        %v7069 = vmax.f32 %v6838, 0.0
        %v7070 = vmax.f32 %v7034, 0.0
        %v7071 = vmax.f32 %v6840, 0.0
        %v7072 = vmax.f32 %v7036, 0.0
        %v7073 = vmax.f32 %v6843, 0.0
        %v7074 = vmax.f32 %v7039, 0.0
        %v7075 = vmax.f32 %v6845, 0.0
        %v7076 = vmax.f32 %v7041, 0.0
        %v7077 = vmax.f32 %v6848, 0.0
        %v7078 = vmax.f32 %v7044, 0.0
        %v7079 = vmax.f32 %v6850, 0.0
        %v7080 = vmax.f32 %v7046, 0.0
        %v7081 = vmax.f32 %v6853, 0.0
        %v7082 = vmax.f32 %v7049, 0.0
        %v7083 = vmax.f32 %v6855, 0.0
        %v7084 = vmax.f32 %v7051, 0.0
        %v7085 = vpack.c.bf16 %v7055, %v7053
        %v7086 = vpack.c.bf16 %v7056, %v7054
        %v7087 = vpack.c.bf16 %v7059, %v7057
        %v7088 = vpack.c.bf16 %v7060, %v7058
        %v7089 = vpack.c.bf16 %v7063, %v7061
        %v7090 = vpack.c.bf16 %v7064, %v7062
        %v7091 = vpack.c.bf16 %v7067, %v7065
        %v7092 = vpack.c.bf16 %v7068, %v7066
        %v7093 = vpack.c.bf16 %v7071, %v7069
        %v7094 = vpack.c.bf16 %v7072, %v7070
        %v7095 = vpack.c.bf16 %v7075, %v7073
        %v7096 = vpack.c.bf16 %v7076, %v7074
        %v7097 = vpack.c.bf16 %v7079, %v7077
        %v7098 = vpack.c.bf16 %v7080, %v7078
        %v7099 = vpack.c.bf16 %v7083, %v7081
        %v7100 = vpack.c.bf16 %v7084, %v7082
        %v7101 = vld [vmem:[#allocation13] sm:$0xf]
        %v7102 = vld [vmem:[#allocation13 + $0x4] sm:$0xf]
        %v7103 = vld [vmem:[#allocation13 + $0x8] sm:$0xf]
        %v7104 = vld [vmem:[#allocation13 + $0xc] sm:$0xf]
        %v7105 = vld [vmem:[#allocation13 + $0x10] sm:$0xf]
        %v7106 = vld [vmem:[#allocation13 + $0x14] sm:$0xf]
        %v7107 = vld [vmem:[#allocation13 + $0x18] sm:$0xf]
        %v7108 = vld [vmem:[#allocation13 + $0x1c] sm:$0xf]
        %v7109 = vld [vmem:[#allocation13 + $0x20] sm:$0xf]
        %v7110 = vld [vmem:[#allocation13 + $0x24] sm:$0xf]
        %v7111 = vld [vmem:[#allocation13 + $0x28] sm:$0xf]
        %v7112 = vld [vmem:[#allocation13 + $0x2c] sm:$0xf]
        %v7113 = vld [vmem:[#allocation13 + $0x30] sm:$0xf]
        %v7114 = vld [vmem:[#allocation13 + $0x34] sm:$0xf]
        %v7115 = vld [vmem:[#allocation13 + $0x38] sm:$0xf]
        %v7116 = vld [vmem:[#allocation13 + $0x3c] sm:$0xf]
        %v7117 = vld [vmem:[#allocation13 + $0x40] sm:$0xf]
        %v7118 = vld [vmem:[#allocation13 + $0x44] sm:$0xf]
        %v7119 = vld [vmem:[#allocation13 + $0x48] sm:$0xf]
        %v7120 = vld [vmem:[#allocation13 + $0x4c] sm:$0xf]
        %v7121 = vld [vmem:[#allocation13 + $0x50] sm:$0xf]
        %v7122 = vld [vmem:[#allocation13 + $0x54] sm:$0xf]
        %v7123 = vld [vmem:[#allocation13 + $0x58] sm:$0xf]
        %v7124 = vld [vmem:[#allocation13 + $0x5c] sm:$0xf]
        %v7125 = vld [vmem:[#allocation13 + $0x60] sm:$0xf]
        %v7126 = vld [vmem:[#allocation13 + $0x64] sm:$0xf]
        %v7127 = vld [vmem:[#allocation13 + $0x68] sm:$0xf]
        %v7128 = vld [vmem:[#allocation13 + $0x6c] sm:$0xf]
        %v7129 = vld [vmem:[#allocation13 + $0x70] sm:$0xf]
        %v7130 = vld [vmem:[#allocation13 + $0x74] sm:$0xf]
        %v7131 = vld [vmem:[#allocation13 + $0x78] sm:$0xf]
        %v7132 = vld [vmem:[#allocation13 + $0x7c] sm:$0xf]
        %v7133 = vld [vmem:[%s8] sm:$0x1]
        %v7135 = vperm.slane %v7133, 0
        %v7169 = vunpack.c.l.b16 %v7101
        %v7170 = vunpack.c.l.b16 %v7102
        %v7171 = vunpack.c.l.b16 %v7103
        %v7172 = vunpack.c.l.b16 %v7104
        %v7173 = vunpack.c.l.b16 %v7105
        %v7174 = vunpack.c.l.b16 %v7106
        %v7175 = vunpack.c.l.b16 %v7107
        %v7176 = vunpack.c.l.b16 %v7108
        %v7177 = vunpack.c.l.b16 %v7109
        %v7178 = vunpack.c.l.b16 %v7110
        %v7179 = vunpack.c.l.b16 %v7111
        %v7180 = vunpack.c.l.b16 %v7112
        %v7181 = vunpack.c.l.b16 %v7113
        %v7182 = vunpack.c.l.b16 %v7114
        %v7183 = vunpack.c.l.b16 %v7115
        %v7184 = vunpack.c.l.b16 %v7116
        %v7185 = vunpack.c.l.b16 %v7117
        %v7186 = vunpack.c.l.b16 %v7118
        %v7187 = vunpack.c.l.b16 %v7119
        %v7188 = vunpack.c.l.b16 %v7120
        %v7189 = vunpack.c.l.b16 %v7121
        %v7190 = vunpack.c.l.b16 %v7122
        %v7191 = vunpack.c.l.b16 %v7123
        %v7192 = vunpack.c.l.b16 %v7124
        %v7193 = vunpack.c.l.b16 %v7125
        %v7194 = vunpack.c.l.b16 %v7126
        %v7195 = vunpack.c.l.b16 %v7127
        %v7196 = vunpack.c.l.b16 %v7128
        %v7197 = vunpack.c.l.b16 %v7129
        %v7198 = vunpack.c.l.b16 %v7130
        %v7199 = vunpack.c.l.b16 %v7131
        %v7200 = vunpack.c.l.b16 %v7132
        %v7201 = vpack.c.b16 %v7170, %v7169
        %v7202 = vpack.c.b16 %v7172, %v7171
        %v7203 = vpack.c.b16 %v7174, %v7173
        %v7204 = vpack.c.b16 %v7176, %v7175
        %v7205 = vpack.c.b16 %v7178, %v7177
        %v7206 = vpack.c.b16 %v7180, %v7179
        %v7207 = vpack.c.b16 %v7182, %v7181
        %v7208 = vpack.c.b16 %v7184, %v7183
        %v7209 = vpack.c.b16 %v7186, %v7185
        %v7210 = vpack.c.b16 %v7188, %v7187
        %v7211 = vpack.c.b16 %v7190, %v7189
        %v7212 = vpack.c.b16 %v7192, %v7191
        %v7213 = vpack.c.b16 %v7194, %v7193
        %v7214 = vpack.c.b16 %v7196, %v7195
        %v7215 = vpack.c.b16 %v7198, %v7197
        %v7216 = vpack.c.b16 %v7200, %v7199
        %7233 = vmatpush.bf16.msra.mxu0 %v7208
        %7234 = vmatpush.bf16.msra.mxu0 %v7207
        %7235 = vmatpush.bf16.msra.mxu0 %v7206
        %7236 = vmatpush.bf16.msra.mxu0 %v7205
        %7237 = vmatpush.bf16.msra.mxu0 %v7204
        %7238 = vmatpush.bf16.msra.mxu0 %v7203
        %7239 = vmatpush.bf16.msra.mxu0 %v7202
        %7240 = vmatpush.bf16.msra.mxu0 %v7201
        %7241 = vmatmul.bf16.gmra.mxu0 %v7085
        %v7242 = vpop.f32.mrf.mxu0
        %v7243 = vadd.f32 %v7135, %v7242
        %v7244 = vpop.f32.mrf.mxu0
        %v7245 = vadd.f32 %v7135, %v7244
        %7246 = vmatmul.bf16.gmra.mxu0 %v7087
        %v7247 = vpop.f32.mrf.mxu0
        %v7248 = vadd.f32 %v7135, %v7247
        %v7249 = vpop.f32.mrf.mxu0
        %v7250 = vadd.f32 %v7135, %v7249
        %7251 = vmatmul.bf16.gmra.mxu0 %v7089
        %v7252 = vpop.f32.mrf.mxu0
        %v7253 = vadd.f32 %v7135, %v7252
        %v7254 = vpop.f32.mrf.mxu0
        %v7255 = vadd.f32 %v7135, %v7254
        %7256 = vmatmul.bf16.gmra.mxu0 %v7091
        %v7257 = vpop.f32.mrf.mxu0
        %v7258 = vadd.f32 %v7135, %v7257
        %v7259 = vpop.f32.mrf.mxu0
        %v7260 = vadd.f32 %v7135, %v7259
        %7261 = vmatmul.bf16.gmra.mxu0 %v7093
        %v7262 = vpop.f32.mrf.mxu0
        %v7263 = vadd.f32 %v7135, %v7262
        %v7264 = vpop.f32.mrf.mxu0
        %v7265 = vadd.f32 %v7135, %v7264
        %7266 = vmatmul.bf16.gmra.mxu0 %v7095
        %v7267 = vpop.f32.mrf.mxu0
        %v7268 = vadd.f32 %v7135, %v7267
        %v7269 = vpop.f32.mrf.mxu0
        %v7270 = vadd.f32 %v7135, %v7269
        %7271 = vmatmul.bf16.gmra.mxu0 %v7097
        %v7272 = vpop.f32.mrf.mxu0
        %v7273 = vadd.f32 %v7135, %v7272
        %v7274 = vpop.f32.mrf.mxu0
        %v7275 = vadd.f32 %v7135, %v7274
        %7276 = vmatmul.bf16.gmra.mxu0 %v7099
        %v7277 = vpop.f32.mrf.mxu0
        %v7278 = vadd.f32 %v7135, %v7277
        %v7279 = vpop.f32.mrf.mxu0
        %v7280 = vadd.f32 %v7135, %v7279
        %7281 = vdwg.mxu0
        %7282 = vmatpush.bf16.msra.mxu0 %v7216
        %7283 = vmatpush.bf16.msra.mxu0 %v7215
        %7284 = vmatpush.bf16.msra.mxu0 %v7214
        %7285 = vmatpush.bf16.msra.mxu0 %v7213
        %7286 = vmatpush.bf16.msra.mxu0 %v7212
        %7287 = vmatpush.bf16.msra.mxu0 %v7211
        %7288 = vmatpush.bf16.msra.mxu0 %v7210
        %7289 = vmatpush.bf16.msra.mxu0 %v7209
        %7290 = vmatmul.bf16.gmra.mxu0 %v7086
        %v7291 = vpop.f32.mrf.mxu0
        %v7292 = vadd.f32 %v7243, %v7291
        %v7293 = vpop.f32.mrf.mxu0
        %v7294 = vadd.f32 %v7245, %v7293
        %7295 = vmatmul.bf16.gmra.mxu0 %v7088
        %v7296 = vpop.f32.mrf.mxu0
        %v7297 = vadd.f32 %v7248, %v7296
        %v7298 = vpop.f32.mrf.mxu0
        %v7299 = vadd.f32 %v7250, %v7298
        %7300 = vmatmul.bf16.gmra.mxu0 %v7090
        %v7301 = vpop.f32.mrf.mxu0
        %v7302 = vadd.f32 %v7253, %v7301
        %v7303 = vpop.f32.mrf.mxu0
        %v7304 = vadd.f32 %v7255, %v7303
        %7305 = vmatmul.bf16.gmra.mxu0 %v7092
        %v7306 = vpop.f32.mrf.mxu0
        %v7307 = vadd.f32 %v7258, %v7306
        %v7308 = vpop.f32.mrf.mxu0
        %v7309 = vadd.f32 %v7260, %v7308
        %7310 = vmatmul.bf16.gmra.mxu0 %v7094
        %v7311 = vpop.f32.mrf.mxu0
        %v7312 = vadd.f32 %v7263, %v7311
        %v7313 = vpop.f32.mrf.mxu0
        %v7314 = vadd.f32 %v7265, %v7313
        %7315 = vmatmul.bf16.gmra.mxu0 %v7096
        %v7316 = vpop.f32.mrf.mxu0
        %v7317 = vadd.f32 %v7268, %v7316
        %v7318 = vpop.f32.mrf.mxu0
        %v7319 = vadd.f32 %v7270, %v7318
        %7320 = vmatmul.bf16.gmra.mxu0 %v7098
        %v7321 = vpop.f32.mrf.mxu0
        %v7322 = vadd.f32 %v7273, %v7321
        %v7323 = vpop.f32.mrf.mxu0
        %v7324 = vadd.f32 %v7275, %v7323
        %7325 = vmatmul.bf16.gmra.mxu0 %v7100
        %v7326 = vpop.f32.mrf.mxu0
        %v7327 = vadd.f32 %v7278, %v7326
        %v7328 = vpop.f32.mrf.mxu0
        %v7329 = vadd.f32 %v7280, %v7328
        %7330 = vdwg.mxu0
        %v7331 = vpack.c.bf16 %v7292, %v7292
        %v7332 = vpack.c.bf16 %v7294, %v7294
        %v7333 = vpack.c.bf16 %v7297, %v7297
        %v7334 = vpack.c.bf16 %v7299, %v7299
        %v7335 = vpack.c.bf16 %v7302, %v7302
        %v7336 = vpack.c.bf16 %v7304, %v7304
        %v7337 = vpack.c.bf16 %v7307, %v7307
        %v7338 = vpack.c.bf16 %v7309, %v7309
        %v7339 = vpack.c.bf16 %v7312, %v7312
        %v7340 = vpack.c.bf16 %v7314, %v7314
        %v7341 = vpack.c.bf16 %v7317, %v7317
        %v7342 = vpack.c.bf16 %v7319, %v7319
        %v7343 = vpack.c.bf16 %v7322, %v7322
        %v7344 = vpack.c.bf16 %v7324, %v7324
        %v7345 = vpack.c.bf16 %v7327, %v7327
        %v7346 = vpack.c.bf16 %v7329, %v7329
        %7347 = vst [vmem:[%s448] sm:$0xf] %v7331
        %7348 = vst [vmem:[%s448 + $0x4] sm:$0xf] %v7332
        %7349 = vst [vmem:[%s448 + $0x8] sm:$0xf] %v7333
        %7350 = vst [vmem:[%s448 + $0xc] sm:$0xf] %v7334
        %7351 = vst [vmem:[%s448 + $0x10] sm:$0xf] %v7335
        %7352 = vst [vmem:[%s448 + $0x14] sm:$0xf] %v7336
        %7353 = vst [vmem:[%s448 + $0x18] sm:$0xf] %v7337
        %7354 = vst [vmem:[%s448 + $0x1c] sm:$0xf] %v7338
        %7355 = vst [vmem:[%s448 + $0x20] sm:$0xf] %v7339
        %7356 = vst [vmem:[%s448 + $0x24] sm:$0xf] %v7340
        %7357 = vst [vmem:[%s448 + $0x28] sm:$0xf] %v7341
        %7358 = vst [vmem:[%s448 + $0x2c] sm:$0xf] %v7342
        %7359 = vst [vmem:[%s448 + $0x30] sm:$0xf] %v7343
        %7360 = vst [vmem:[%s448 + $0x34] sm:$0xf] %v7344
        %7361 = vst [vmem:[%s448 + $0x38] sm:$0xf] %v7345
        %7362 = vst [vmem:[%s448 + $0x3c] sm:$0xf] %v7346
        %s7363 = sand.u32 %s231, 1
        %s7364 = scalar_lea.sflag [#allocation4], %s7363
        %s7365 = sand.u32 %s231, 1
        %s7366 = smul.addr %s7365, 64
        %s7367 = scalar_lea.vmem [#allocation14], %s7366
        // Predicated region
        $region85: #{tpu_custom_call.1} parent=55 // pred_check
          %p7368 = pneg %p241
        $region86: #{tpu_custom_call.1} parent=55 // pred_check_branch
          %7370 = sbr.rel (%p7368) target = $region88
        $region87: #{tpu_custom_call.1} parent=55 // pred_region
          %s7371 = smul.u32 16, %s29
          %7373 = vsyncadd %s7364, 0
          %s7374 = smul.addr %s7371, 4
          %s7375 = scalar_lea.hbm %s9, %s7374
          %s7376 = sshll.u32 %s7367, 4
          %s7377 = int_to_ptr.vmem [resolvable:$true] %s7376
          %s7378 = sshll.u32 %s7375, 4
          %s7379 = int_to_ptr.hbm [resolvable:$true] %s7378
          %7384 = dma.vmem_to_hbm [thread:$0]  %s7377, 1024, %s7379, %s7364, 64, 64, 4
        $region88: #{tpu_custom_call.1} parent=55 // pred_fallthru
          _
      $region56: #{tpu_custom_call.1} parent=5 // pred_fallthru
        _
      %p7385 = scmp.le.s32.totalorder 2, %s24
      // Predicated region
      $region89: #{tpu_custom_call.1} parent=5 // pred_check
        %p7386 = pneg %p7385
      $region90: #{tpu_custom_call.1} parent=5 // pred_check_branch
        %7388 = sbr.rel (%p7386) target = $region92
      $region91: #{tpu_custom_call.1} parent=5 // pred_region
        %s7389 = ssub.s32 %s24, 2
        // Predicated region
        $region93: #{tpu_custom_call.1} parent=91 // pred_check
          %p7390 = pneg %p247
        $region94: #{tpu_custom_call.1} parent=91 // pred_check_branch
          %7392 = sbr.rel (%p7390) target = $region96
        $region95: #{tpu_custom_call.1} parent=91 // pred_region
          %s7393 = sand.u32 %s232, 1
          %s7394 = scalar_lea.sflag [#allocation4], %s7393
          %s7395 = sand.u32 %s232, 1
          %s7396 = smul.addr %s7395, 64
          %s7397 = scalar_lea.vmem [#allocation14], %s7396
          %7399 = dma.done %s7394, 1024
        $region96: #{tpu_custom_call.1} parent=91 // pred_fallthru
          _
      $region92: #{tpu_custom_call.1} parent=5 // pred_fallthru
        _
    $region6: #{tpu_custom_call.1} parent=1 // loop_footer
      %s28 = sadd.s32 1, %s24
    $region7: #{tpu_custom_call.1} parent=1 // loop_footer_branch
      %23 = sbr.rel target = $region3
    $region8: #{tpu_custom_call.1} parent=1 // loop_exit
      _
    %7400 = vsyncpa [#allocation3], 1
    %s7401 = scalar_lea.sflag [#allocation3], 1
    %7402 = vsyncpa %s7401, 1
    %7403 = vsyncpa [#allocation6], 1
    %7404 = vsyncpa [#allocation9], 1
    %7405 = vsyncpa [#allocation12], 1
    %7406 = vsyncpa [#allocation4], 1
    %s7407 = scalar_lea.sflag [#allocation4], 1
    %7408 = vsyncpa %s7407, 1

</llo_original>
